<compile_context>
chip_gen: v5e
topology: v5e:2x2
jax: 0.10.0
libtpu: 0.0.40
codegen_flags: <defaults>
</compile_context>

<pallas_src>
import numpy as np
import jax
import jax.numpy as jnp
from jax import lax
from jax.experimental import pallas as pl
from jax.experimental.pallas import tpu as pltpu


# -----------------------------------------------------------------------------
# Host-side constant operators (small, O(H_in*H_out) / O(W_in*W_out))
# -----------------------------------------------------------------------------
def _interp_matrix(in_size, out_size):
    """PyTorch bilinear (align_corners=False) interpolation matrix (out, in)."""
    scale = in_size / out_size
    A = np.zeros((out_size, in_size), np.float32)
    for o in range(out_size):
        src = (o + 0.5) * scale - 0.5
        src = max(src, 0.0)
        i0 = min(int(np.floor(src)), in_size - 1)
        i1 = min(i0 + 1, in_size - 1)
        l1 = src - i0
        A[o, i0] += 1.0 - l1
        A[o, i1] += l1
    return A


# -----------------------------------------------------------------------------
# Fused decoder kernel
# -----------------------------------------------------------------------------
def _make_decoder_kernel(L, hw, C):
    """L levels; hw[l]=(H,W) and C[l]=channels of feature map l (NHWC-flat)."""
    n_fm = L
    n_in = n_fm + 4 * (L - 1) + 4      # fmaps + per-level (kup,w,scale,bias) + tail
    H0, W0 = hw[0]

    def kernel(*refs):
        in_refs = refs[:n_in]
        out_ref = refs[n_in]
        halo_ref, l2d_ref = refs[n_in + 1], refs[n_in + 2]

        # feature maps as f32 values, NHWC-flat (H*W, C)
        fm = [in_refs[l][0] for l in range(L)]

        pos = n_fm
        for i in range(L - 1, 0, -1):
            kup_ref, w_ref, scale_ref, bias_ref = in_refs[pos:pos + 4]
            pos += 4
            Ho, Wo = hw[i - 1]
            HWo = Ho * Wo
            c_lo, c_hi = C[i - 1], C[i]
            c_cat = c_lo + c_hi
            cout = C[i - 1]

            high_bf = fm[i].astype(jnp.bfloat16)          # (HiWi, c_hi)
            low_bf = fm[i - 1].astype(jnp.bfloat16)       # (HWo,  c_lo)

            # bilinear x2 upsample of the high map: one small MXU dot.
            up_bf = jnp.dot(kup_ref[...], high_bf,
                            preferred_element_type=jnp.float32
                            ).astype(jnp.bfloat16)        # (HWo, c_hi)

            # zero-haloed, channel-concatenated map in VMEM:
            #   halo[r, :] = cat([low, up])[r - (Wo+1), :]   (zeros outside)
            rows = HWo + 2 * (Wo + 1)
            zero_band = jnp.zeros((Wo + 1, c_cat), jnp.bfloat16)
            halo_ref[0:Wo + 1, 0:c_cat] = zero_band
            halo_ref[Wo + 1 + HWo:rows, 0:c_cat] = zero_band
            halo_ref[Wo + 1:Wo + 1 + HWo, 0:c_lo] = low_bf
            halo_ref[Wo + 1:Wo + 1 + HWo, c_lo:c_cat] = up_bf

            # column-boundary masks (hoisted out of the 9-tap loop)
            col = lax.broadcasted_iota(jnp.int32, (HWo, 1), 0) % Wo
            mask_l = (col > 0).astype(jnp.bfloat16)
            mask_r = (col < (Wo - 1)).astype(jnp.bfloat16)

            # 3x3 conv: 9 shifted-view dots accumulated in f32 (no im2col).
            acc = jnp.zeros((HWo, cout), jnp.float32)
            for dy in range(3):
                for dx in range(3):
                    k = dy * 3 + dx
                    start = dy * Wo + dx
                    view = halo_ref[start:start + HWo, 0:c_cat]   # (HWo, c_cat)
                    if dx == 0:
                        view = view * mask_l
                    elif dx == 2:
                        view = view * mask_r
                    acc = acc + jnp.dot(view, w_ref[k],
                                        preferred_element_type=jnp.float32)

            y = acc * scale_ref[...] + bias_ref[...]      # folded BatchNorm (eval)
            fm[i - 1] = jnp.maximum(y, 0.0)               # ReLU

        # ---- tail: 1x1 logit conv + separable bilinear x`upscale` upsample ----
        logit_w_ref, logit_b_ref, a_hup_ref, a_wupT_ref = in_refs[pos:pos + 4]
        fm0_bf = fm[0].astype(jnp.bfloat16)               # (HW0, C0)
        # logits^T (1, HW0): contract the channel (minor) dims of both operands
        lfT = lax.dot_general(logit_w_ref[...], fm0_bf,
                              dimension_numbers=(((1,), (1,)), ((), ())),
                              preferred_element_type=jnp.float32)
        lfT = lfT + logit_b_ref[...]                      # (1, HW0)

        # un-flatten (1, H0*W0) -> (H0, W0): H0 lane-slice row stores
        for yy in range(H0):
            l2d_ref[yy:yy + 1, :] = lfT[:, yy * W0:(yy + 1) * W0]
        l2d_bf = l2d_ref[...].astype(jnp.bfloat16)        # (H0, W0)

        # separable upsample: (Hup,H0) @ L2D @ (W0,Wup) -- lane-dense output
        mid = jnp.dot(l2d_bf, a_wupT_ref[...],
                      preferred_element_type=jnp.float32)           # (H0, Wup)
        mask = jnp.dot(a_hup_ref[...], mid.astype(jnp.bfloat16),
                       preferred_element_type=jnp.float32)          # (Hup, Wup)
        out_ref[0, 0] = mask.astype(out_ref.dtype)

    return kernel


def _vmem_limit_bytes():
    """Generation-aware scoped-VMEM limit (falls back to 64 MiB)."""
    try:
        cap = pltpu.get_tpu_info().vmem_capacity_bytes
        return int(min(cap * 3 // 4, 100 * 1024 * 1024))
    except Exception:
        return 64 * 1024 * 1024


def decoder_forward(feature_maps, params, upscale):
    """feature_maps: list of NCHW arrays (encoder_dims[i] channels, spatial
    halved per level).  Returns (N, 1, H0*upscale, W0*upscale)."""
    L = len(feature_maps)
    N = int(feature_maps[0].shape[0])
    dtype = feature_maps[0].dtype
    hw = [(int(f.shape[2]), int(f.shape[3])) for f in feature_maps]
    C = [int(f.shape[1]) for f in feature_maps]
    H0, W0 = hw[0]
    Hup, Wup = H0 * upscale, W0 * upscale

    def _const_spec(shape):
        rank = len(shape)
        return pl.BlockSpec(tuple(shape), lambda n: (0,) * rank,
                            pipeline_mode=pl.Buffered(1))   # single-buffered

    inputs, in_specs = [], []

    # feature maps as NHWC-flat (N, H*W, C) -- host-side layout change only
    for l in range(L):
        H, W = hw[l]
        x = jnp.transpose(feature_maps[l], (0, 2, 3, 1)).reshape(N, H * W, C[l])
        inputs.append(x)
        in_specs.append(pl.BlockSpec((1, H * W, C[l]), lambda n: (n, 0, 0)))

    # per-level constants (processing order: high -> low)
    max_rows, max_ccat = 16, 128
    for i in range(L - 1, 0, -1):
        Hi, Wi = hw[i]
        Ho, Wo = hw[i - 1]
        assert Ho == 2 * Hi and Wo == 2 * Wi, "decoder expects x2 spatial steps"
        kup = np.kron(_interp_matrix(Hi, Ho), _interp_matrix(Wi, Wo))  # (HoWo, HiWi)
        p = params["convs"][i - 1]
        lvl = [jnp.asarray(kup, jnp.bfloat16), p["w"], p["scale"], p["bias"]]
        inputs += lvl
        in_specs += [_const_spec(a.shape) for a in lvl]
        max_rows = max(max_rows, Ho * Wo + 2 * (Wo + 1))
        max_ccat = max(max_ccat, C[i - 1] + C[i])

    # tail constants: 1x1 logit conv + separable final-upsample operators
    a_hup = jnp.asarray(_interp_matrix(H0, Hup), jnp.bfloat16)       # (Hup, H0)
    a_wupT = jnp.asarray(_interp_matrix(W0, Wup).T, jnp.bfloat16)    # (W0, Wup)
    tail = [params["logit_w"], params["logit_b"], a_hup, a_wupT]
    inputs += tail
    in_specs += [_const_spec(a.shape) for a in tail]

    scratch_shapes = [
        pltpu.VMEM((max_rows, max_ccat), jnp.bfloat16),   # shared halo scratch
        pltpu.VMEM((H0, W0), jnp.float32),                # 2-D logits tile
    ]

    out = pl.pallas_call(
        _make_decoder_kernel(L, hw, C),
        out_shape=jax.ShapeDtypeStruct((N, 1, Hup, Wup), dtype),
        grid=(N,),
        in_specs=in_specs,
        out_specs=pl.BlockSpec((1, 1, Hup, Wup), lambda n: (n, 0, 0, 0)),
        scratch_shapes=scratch_shapes,
        compiler_params=pltpu.CompilerParams(
            dimension_semantics=("parallel",),            # v7x: batch over 2 TCs
            vmem_limit_bytes=_vmem_limit_bytes()),
    )(*inputs)
    return out


# -----------------------------------------------------------------------------
# Parameters (PyTorch layout + packed/folded forms consumed by the kernel)
# -----------------------------------------------------------------------------
def init_decoder_params(key, encoder_dims):
    eps = 1e-5
    params = {"convs": []}
    for i in range(1, len(encoder_dims)):
        cin = encoder_dims[i] + encoder_dims[i - 1]     # cat([low, upsampled(high)])
        cout = encoder_dims[i - 1]
        key, k1, k2, k3 = jax.random.split(key, 4)
        w_raw = jax.random.normal(k1, (cout, cin, 3, 3), jnp.float32) / np.sqrt(9.0 * cin)
        # packed for the kernel: (9, cin, cout), k = dy*3+dx, bf16 MXU operand.
        w = jnp.transpose(w_raw, (2, 3, 1, 0)).reshape(9, cin, cout).astype(jnp.bfloat16)
        gamma = 1.0 + 0.1 * jax.random.normal(k2, (cout,), jnp.float32)
        beta = 0.1 * jax.random.normal(k3, (cout,), jnp.float32)
        running_mean = jnp.zeros((cout,), jnp.float32)
        running_var = jnp.ones((cout,), jnp.float32)
        scale = gamma / jnp.sqrt(running_var + eps)      # folded BN (eval mode)
        bias = beta - running_mean * scale
        params["convs"].append({"w_raw": w_raw, "w": w,
                                "scale": scale.reshape(1, cout),
                                "bias": bias.reshape(1, cout)})
    key, k1, k2 = jax.random.split(key, 3)
    logit_w = (jax.random.normal(k1, (1, encoder_dims[0]), jnp.float32)
               / np.sqrt(encoder_dims[0]))
    params["logit_w_raw"] = logit_w
    params["logit_w"] = logit_w.astype(jnp.bfloat16)
    params["logit_b"] = 0.1 * jax.random.normal(k2, (1, 1), jnp.float32)
    return params


# -----------------------------------------------------------------------------
# Pure-JAX reference (same math, straightforward NCHW) for a self-check
# -----------------------------------------------------------------------------
def _resize_ref(x, out_h, out_w):
    ah = jnp.asarray(_interp_matrix(x.shape[2], out_h))
    aw = jnp.asarray(_interp_matrix(x.shape[3], out_w))
    return jnp.einsum('ph,nchw,qw->ncpq', ah, x, aw,
                      precision=jax.lax.Precision.HIGHEST)


def _conv3x3_ref(x, w):
    H, W = x.shape[2], x.shape[3]
    xp = jnp.pad(x, ((0, 0), (0, 0), (1, 1), (1, 1)))
    out = 0.0
    for dy in range(3):
        for dx in range(3):
            out = out + jnp.einsum('oc,nchw->nohw', w[:, :, dy, dx],
                                   xp[:, :, dy:dy + H, dx:dx + W],
                                   precision=jax.lax.Precision.HIGHEST)
    return out


def _ref_decoder_forward(feature_maps, params, upscale):
    fmaps = list(feature_maps)
    for i in range(len(fmaps) - 1, 0, -1):
        _, _, H, W = fmaps[i].shape
        f_up = _resize_ref(fmaps[i], 2 * H, 2 * W)
        f = jnp.concatenate([fmaps[i - 1], f_up], axis=1)
        p = params["convs"][i - 1]
        y = _conv3x3_ref(f, p["w_raw"])
        y = y * p["scale"].reshape(1, -1, 1, 1) + p["bias"].reshape(1, -1, 1, 1)
        fmaps[i - 1] = jnp.maximum(y, 0.0)
    x = jnp.einsum('oc,nchw->nohw', params["logit_w_raw"], fmaps[0],
                   precision=jax.lax.Precision.HIGHEST)
    x = x + params["logit_b"].reshape(1, 1, 1, 1)
    _, _, H0, W0 = x.shape
    return _resize_ref(x, H0 * upscale, W0 * upscale)


# -----------------------------------------------------------------------------
if __name__ == "__main__":
    encoder_dims = [4, 8, 16]
    upscale = 4
    N, H0 = 2, 16

    key = jax.random.PRNGKey(0)
    key, kp = jax.random.split(key)
    params = init_decoder_params(kp, encoder_dims)

    feature_maps = []
    for lvl, c in enumerate(encoder_dims):
        key, kf = jax.random.split(key)
        h = H0 // (2 ** lvl)
        feature_maps.append(jax.random.normal(kf, (N, c, h, h), jnp.float32))

    mask = decoder_forward(feature_maps, params, upscale)
    mask = jax.block_until_ready(mask)

    assert mask.shape == (N, 1, H0 * upscale, H0 * upscale), mask.shape
    assert bool(jnp.all(jnp.isfinite(mask)))

    # correctness self-check against the pure-JAX reference of the same module
    ref = jax.block_until_ready(_ref_decoder_forward(feature_maps, params, upscale))
    np.testing.assert_allclose(np.asarray(mask), np.asarray(ref),
                               rtol=5e-2, atol=5e-2)

    print("KERNEL_OK")
</pallas_src>

<mosaic_0001>
module attributes {stable_mosaic.version = 11 : i64} {
  func.func @kernel(%arg0: i32, %arg1: memref<1x256x4xf32, #tpu.memory_space<vmem>>, %arg2: memref<1x64x8xf32, #tpu.memory_space<vmem>>, %arg3: memref<1x16x16xf32, #tpu.memory_space<vmem>>, %arg4: memref<64x16xbf16, #tpu.memory_space<vmem>>, %arg5: memref<9x24x8xbf16, #tpu.memory_space<vmem>>, %arg6: memref<1x8xf32, #tpu.memory_space<vmem>>, %arg7: memref<1x8xf32, #tpu.memory_space<vmem>>, %arg8: memref<256x64xbf16, #tpu.memory_space<vmem>>, %arg9: memref<9x12x4xbf16, #tpu.memory_space<vmem>>, %arg10: memref<1x4xf32, #tpu.memory_space<vmem>>, %arg11: memref<1x4xf32, #tpu.memory_space<vmem>>, %arg12: memref<1x4xbf16, #tpu.memory_space<vmem>>, %arg13: memref<1x1xf32, #tpu.memory_space<vmem>>, %arg14: memref<64x16xbf16, #tpu.memory_space<vmem>>, %arg15: memref<16x64xbf16, #tpu.memory_space<vmem>>, %arg16: memref<1x1x64x64xf32, #tpu.memory_space<vmem>>, %arg17: memref<290x128xbf16, #tpu.memory_space<vmem>>, %arg18: memref<16x16xf32, #tpu.memory_space<vmem>>) attributes {dimension_semantics = [#tpu.dimension_semantics<parallel>], iteration_bounds = array<i64: 2>, scalar_prefetch = 0 : i64, scratch_operands = 2 : i64, tpu.core_type = #tpu.core_type<tc>, window_params = [{transform_indices = @transform_0, window_bounds = array<i64: 1, 256, 4>}, {transform_indices = @transform_1, window_bounds = array<i64: 1, 64, 8>}, {transform_indices = @transform_2, window_bounds = array<i64: 1, 16, 16>}, {pipeline_mode = #tpu.pipeline_mode<synchronous>, transform_indices = @transform_3, window_bounds = array<i64: 64, 16>}, {pipeline_mode = #tpu.pipeline_mode<synchronous>, transform_indices = @transform_4, window_bounds = array<i64: 9, 24, 8>}, {pipeline_mode = #tpu.pipeline_mode<synchronous>, transform_indices = @transform_5, window_bounds = array<i64: 1, 8>}, {pipeline_mode = #tpu.pipeline_mode<synchronous>, transform_indices = @transform_6, window_bounds = array<i64: 1, 8>}, {pipeline_mode = #tpu.pipeline_mode<synchronous>, transform_indices = @transform_7, window_bounds = array<i64: 256, 64>}, {pipeline_mode = #tpu.pipeline_mode<synchronous>, transform_indices = @transform_8, window_bounds = array<i64: 9, 12, 4>}, {pipeline_mode = #tpu.pipeline_mode<synchronous>, transform_indices = @transform_9, window_bounds = array<i64: 1, 4>}, {pipeline_mode = #tpu.pipeline_mode<synchronous>, transform_indices = @transform_10, window_bounds = array<i64: 1, 4>}, {pipeline_mode = #tpu.pipeline_mode<synchronous>, transform_indices = @transform_11, window_bounds = array<i64: 1, 4>}, {pipeline_mode = #tpu.pipeline_mode<synchronous>, transform_indices = @transform_12, window_bounds = array<i64: 1, 1>}, {pipeline_mode = #tpu.pipeline_mode<synchronous>, transform_indices = @transform_13, window_bounds = array<i64: 64, 16>}, {pipeline_mode = #tpu.pipeline_mode<synchronous>, transform_indices = @transform_14, window_bounds = array<i64: 16, 64>}, {transform_indices = @transform_15, window_bounds = array<i64: 1, 1, 64, 64>}]} {
    %c0 = arith.constant 0 : index
    %c0_0 = arith.constant 0 : index
    %c0_1 = arith.constant 0 : index
    %0 = vector.load %arg1[%c0, %c0_0, %c0_1] : memref<1x256x4xf32, #tpu.memory_space<vmem>>, vector<1x256x4xf32>
    %1 = vector.shape_cast %0 : vector<1x256x4xf32> to vector<256x4xf32>
    %c0_2 = arith.constant 0 : index
    %c0_3 = arith.constant 0 : index
    %c0_4 = arith.constant 0 : index
    %2 = vector.load %arg2[%c0_2, %c0_3, %c0_4] : memref<1x64x8xf32, #tpu.memory_space<vmem>>, vector<1x64x8xf32>
    %3 = vector.shape_cast %2 : vector<1x64x8xf32> to vector<64x8xf32>
    %c0_5 = arith.constant 0 : index
    %c0_6 = arith.constant 0 : index
    %c0_7 = arith.constant 0 : index
    %4 = vector.load %arg3[%c0_5, %c0_6, %c0_7] : memref<1x16x16xf32, #tpu.memory_space<vmem>>, vector<1x16x16xf32>
    %5 = vector.shape_cast %4 : vector<1x16x16xf32> to vector<16x16xf32>
    %6 = arith.truncf %5 : vector<16x16xf32> to vector<16x16xbf16>
    %7 = arith.truncf %3 : vector<64x8xf32> to vector<64x8xbf16>
    %c0_8 = arith.constant 0 : index
    %c0_9 = arith.constant 0 : index
    %8 = vector.load %arg4[%c0_8, %c0_9] : memref<64x16xbf16, #tpu.memory_space<vmem>>, vector<64x16xbf16>
    %cst = arith.constant dense<0.000000e+00> : vector<64x16xf32>
    %9 = tpu.matmul %8, %6, %cst {dimension_numbers = #tpu.dot_dimension_numbers<[1], [0], [0], [1], [0, 0, 1, 1], [], []>} : vector<64x16xbf16>, vector<16x16xbf16>, vector<64x16xf32> -> vector<64x16xf32>
    %10 = arith.truncf %9 : vector<64x16xf32> to vector<64x16xbf16>
    %cst_10 = arith.constant 0.000000e+00 : bf16
    %11 = vector.broadcast %cst_10 : bf16 to vector<9x24xbf16>
    %c0_11 = arith.constant 0 : index
    %c0_12 = arith.constant 0 : index
    %12 = vector.load %arg17[%c0_11, %c0_12] : memref<290x128xbf16, #tpu.memory_space<vmem>>, vector<9x24xbf16>
    tpu.vector_store %arg17[%c0_11, %c0_12], %11 {strides = array<i32>} : memref<290x128xbf16, #tpu.memory_space<vmem>>, vector<9x24xbf16>,
    %c73 = arith.constant 73 : index
    %c0_13 = arith.constant 0 : index
    %13 = vector.load %arg17[%c73, %c0_13] : memref<290x128xbf16, #tpu.memory_space<vmem>>, vector<9x24xbf16>
    tpu.vector_store %arg17[%c73, %c0_13], %11 {strides = array<i32>} : memref<290x128xbf16, #tpu.memory_space<vmem>>, vector<9x24xbf16>,
    %c9 = arith.constant 9 : index
    %c0_14 = arith.constant 0 : index
    %14 = vector.load %arg17[%c9, %c0_14] : memref<290x128xbf16, #tpu.memory_space<vmem>>, vector<64x8xbf16>
    tpu.vector_store %arg17[%c9, %c0_14], %7 {strides = array<i32>} : memref<290x128xbf16, #tpu.memory_space<vmem>>, vector<64x8xbf16>,
    %c9_15 = arith.constant 9 : index
    %c8 = arith.constant 8 : index
    %15 = vector.load %arg17[%c9_15, %c8] : memref<290x128xbf16, #tpu.memory_space<vmem>>, vector<64x16xbf16>
    tpu.vector_store %arg17[%c9_15, %c8], %10 {strides = array<i32>} : memref<290x128xbf16, #tpu.memory_space<vmem>>, vector<64x16xbf16>,
    %16 = tpu.iota {dimensions = array<i32: 0>} : vector<64x1xi32>
    %c8_i32 = arith.constant 8 : i32
    %c0_i32 = arith.constant 0 : i32
    %17 = arith.cmpi eq, %c8_i32, %c0_i32 : i32
    %c1_i32 = arith.constant 1 : i32
    %18 = arith.select %17, %c1_i32, %c8_i32 : i32
    %19 = vector.broadcast %18 : i32 to vector<64x1xi32>
    %20 = arith.remsi %16, %19 : vector<64x1xi32>
    %c0_i32_16 = arith.constant 0 : i32
    %21 = vector.broadcast %c0_i32_16 : i32 to vector<64x1xi32>
    %22 = arith.cmpi ne, %20, %21 : vector<64x1xi32>
    %c0_i32_17 = arith.constant 0 : i32
    %23 = vector.broadcast %c0_i32_17 : i32 to vector<64x1xi32>
    %24 = arith.cmpi slt, %20, %23 : vector<64x1xi32>
    %c0_i32_18 = arith.constant 0 : i32
    %25 = arith.cmpi slt, %18, %c0_i32_18 : i32
    %26 = vector.broadcast %25 : i1 to vector<64x1xi1>
    %27 = vector.broadcast %26 : vector<64x1xi1> to vector<64x1xi1>
    %28 = arith.xori %24, %27 : vector<64x1xi1>
    %29 = arith.andi %28, %22 : vector<64x1xi1>
    %30 = vector.broadcast %18 : i32 to vector<64x1xi32>
    %31 = arith.addi %20, %30 : vector<64x1xi32>
    %32 = arith.select %29, %31, %20 : vector<64x1xi1>, vector<64x1xi32>
    %c0_i32_19 = arith.constant 0 : i32
    %33 = vector.broadcast %c0_i32_19 : i32 to vector<64x1xi32>
    %34 = arith.cmpi sgt, %32, %33 : vector<64x1xi32>
    %35 = arith.extui %34 : vector<64x1xi1> to vector<64x1xi32>
    %36 = arith.sitofp %35 : vector<64x1xi32> to vector<64x1xf32>
    %37 = arith.truncf %36 : vector<64x1xf32> to vector<64x1xbf16>
    %c7_i32 = arith.constant 7 : i32
    %38 = vector.broadcast %c7_i32 : i32 to vector<64x1xi32>
    %39 = arith.cmpi slt, %32, %38 : vector<64x1xi32>
    %40 = arith.extui %39 : vector<64x1xi1> to vector<64x1xi32>
    %41 = arith.sitofp %40 : vector<64x1xi32> to vector<64x1xf32>
    %42 = arith.truncf %41 : vector<64x1xf32> to vector<64x1xbf16>
    %cst_20 = arith.constant 0.000000e+00 : f32
    %43 = vector.broadcast %cst_20 : f32 to vector<64x8xf32>
    %c0_21 = arith.constant 0 : index
    %c0_22 = arith.constant 0 : index
    %44 = vector.load %arg17[%c0_21, %c0_22] : memref<290x128xbf16, #tpu.memory_space<vmem>>, vector<64x24xbf16>
    %45 = vector.broadcast %37 : vector<64x1xbf16> to vector<64x24xbf16>
    %46 = arith.mulf %44, %45 : vector<64x24xbf16>
    %c0_23 = arith.constant 0 : index
    %c0_24 = arith.constant 0 : index
    %c0_25 = arith.constant 0 : index
    %47 = vector.load %arg5[%c0_23, %c0_24, %c0_25] : memref<9x24x8xbf16, #tpu.memory_space<vmem>>, vector<1x24x8xbf16>
    %48 = vector.shape_cast %47 : vector<1x24x8xbf16> to vector<24x8xbf16>
    %cst_26 = arith.constant dense<0.000000e+00> : vector<64x8xf32>
    %49 = tpu.matmul %46, %48, %cst_26 {dimension_numbers = #tpu.dot_dimension_numbers<[1], [0], [0], [1], [0, 0, 1, 1], [], []>} : vector<64x24xbf16>, vector<24x8xbf16>, vector<64x8xf32> -> vector<64x8xf32>
    %50 = arith.addf %43, %49 : vector<64x8xf32>
    %c1 = arith.constant 1 : index
    %c0_27 = arith.constant 0 : index
    %51 = vector.load %arg17[%c1, %c0_27] : memref<290x128xbf16, #tpu.memory_space<vmem>>, vector<64x24xbf16>
    %c1_28 = arith.constant 1 : index
    %c0_29 = arith.constant 0 : index
    %c0_30 = arith.constant 0 : index
    %52 = vector.load %arg5[%c1_28, %c0_29, %c0_30] : memref<9x24x8xbf16, #tpu.memory_space<vmem>>, vector<1x24x8xbf16>
    %53 = vector.shape_cast %52 : vector<1x24x8xbf16> to vector<24x8xbf16>
    %cst_31 = arith.constant dense<0.000000e+00> : vector<64x8xf32>
    %54 = tpu.matmul %51, %53, %cst_31 {dimension_numbers = #tpu.dot_dimension_numbers<[1], [0], [0], [1], [0, 0, 1, 1], [], []>} : vector<64x24xbf16>, vector<24x8xbf16>, vector<64x8xf32> -> vector<64x8xf32>
    %55 = arith.addf %50, %54 : vector<64x8xf32>
    %c2 = arith.constant 2 : index
    %c0_32 = arith.constant 0 : index
    %56 = vector.load %arg17[%c2, %c0_32] : memref<290x128xbf16, #tpu.memory_space<vmem>>, vector<64x24xbf16>
    %57 = vector.broadcast %42 : vector<64x1xbf16> to vector<64x24xbf16>
    %58 = arith.mulf %56, %57 : vector<64x24xbf16>
    %c2_33 = arith.constant 2 : index
    %c0_34 = arith.constant 0 : index
    %c0_35 = arith.constant 0 : index
    %59 = vector.load %arg5[%c2_33, %c0_34, %c0_35] : memref<9x24x8xbf16, #tpu.memory_space<vmem>>, vector<1x24x8xbf16>
    %60 = vector.shape_cast %59 : vector<1x24x8xbf16> to vector<24x8xbf16>
    %cst_36 = arith.constant dense<0.000000e+00> : vector<64x8xf32>
    %61 = tpu.matmul %58, %60, %cst_36 {dimension_numbers = #tpu.dot_dimension_numbers<[1], [0], [0], [1], [0, 0, 1, 1], [], []>} : vector<64x24xbf16>, vector<24x8xbf16>, vector<64x8xf32> -> vector<64x8xf32>
    %62 = arith.addf %55, %61 : vector<64x8xf32>
    %c8_37 = arith.constant 8 : index
    %c0_38 = arith.constant 0 : index
    %63 = vector.load %arg17[%c8_37, %c0_38] : memref<290x128xbf16, #tpu.memory_space<vmem>>, vector<64x24xbf16>
    %64 = vector.broadcast %37 : vector<64x1xbf16> to vector<64x24xbf16>
    %65 = arith.mulf %63, %64 : vector<64x24xbf16>
    %c3 = arith.constant 3 : index
    %c0_39 = arith.constant 0 : index
    %c0_40 = arith.constant 0 : index
    %66 = vector.load %arg5[%c3, %c0_39, %c0_40] : memref<9x24x8xbf16, #tpu.memory_space<vmem>>, vector<1x24x8xbf16>
    %67 = vector.shape_cast %66 : vector<1x24x8xbf16> to vector<24x8xbf16>
    %cst_41 = arith.constant dense<0.000000e+00> : vector<64x8xf32>
    %68 = tpu.matmul %65, %67, %cst_41 {dimension_numbers = #tpu.dot_dimension_numbers<[1], [0], [0], [1], [0, 0, 1, 1], [], []>} : vector<64x24xbf16>, vector<24x8xbf16>, vector<64x8xf32> -> vector<64x8xf32>
    %69 = arith.addf %62, %68 : vector<64x8xf32>
    %c9_42 = arith.constant 9 : index
    %c0_43 = arith.constant 0 : index
    %70 = vector.load %arg17[%c9_42, %c0_43] : memref<290x128xbf16, #tpu.memory_space<vmem>>, vector<64x24xbf16>
    %c4 = arith.constant 4 : index
    %c0_44 = arith.constant 0 : index
    %c0_45 = arith.constant 0 : index
    %71 = vector.load %arg5[%c4, %c0_44, %c0_45] : memref<9x24x8xbf16, #tpu.memory_space<vmem>>, vector<1x24x8xbf16>
    %72 = vector.shape_cast %71 : vector<1x24x8xbf16> to vector<24x8xbf16>
    %cst_46 = arith.constant dense<0.000000e+00> : vector<64x8xf32>
    %73 = tpu.matmul %70, %72, %cst_46 {dimension_numbers = #tpu.dot_dimension_numbers<[1], [0], [0], [1], [0, 0, 1, 1], [], []>} : vector<64x24xbf16>, vector<24x8xbf16>, vector<64x8xf32> -> vector<64x8xf32>
    %74 = arith.addf %69, %73 : vector<64x8xf32>
    %c10 = arith.constant 10 : index
    %c0_47 = arith.constant 0 : index
    %75 = vector.load %arg17[%c10, %c0_47] : memref<290x128xbf16, #tpu.memory_space<vmem>>, vector<64x24xbf16>
    %76 = vector.broadcast %42 : vector<64x1xbf16> to vector<64x24xbf16>
    %77 = arith.mulf %75, %76 : vector<64x24xbf16>
    %c5 = arith.constant 5 : index
    %c0_48 = arith.constant 0 : index
    %c0_49 = arith.constant 0 : index
    %78 = vector.load %arg5[%c5, %c0_48, %c0_49] : memref<9x24x8xbf16, #tpu.memory_space<vmem>>, vector<1x24x8xbf16>
    %79 = vector.shape_cast %78 : vector<1x24x8xbf16> to vector<24x8xbf16>
    %cst_50 = arith.constant dense<0.000000e+00> : vector<64x8xf32>
    %80 = tpu.matmul %77, %79, %cst_50 {dimension_numbers = #tpu.dot_dimension_numbers<[1], [0], [0], [1], [0, 0, 1, 1], [], []>} : vector<64x24xbf16>, vector<24x8xbf16>, vector<64x8xf32> -> vector<64x8xf32>
    %81 = arith.addf %74, %80 : vector<64x8xf32>
    %c16 = arith.constant 16 : index
    %c0_51 = arith.constant 0 : index
    %82 = vector.load %arg17[%c16, %c0_51] : memref<290x128xbf16, #tpu.memory_space<vmem>>, vector<64x24xbf16>
    %83 = vector.broadcast %37 : vector<64x1xbf16> to vector<64x24xbf16>
    %84 = arith.mulf %82, %83 : vector<64x24xbf16>
    %c6 = arith.constant 6 : index
    %c0_52 = arith.constant 0 : index
    %c0_53 = arith.constant 0 : index
    %85 = vector.load %arg5[%c6, %c0_52, %c0_53] : memref<9x24x8xbf16, #tpu.memory_space<vmem>>, vector<1x24x8xbf16>
    %86 = vector.shape_cast %85 : vector<1x24x8xbf16> to vector<24x8xbf16>
    %cst_54 = arith.constant dense<0.000000e+00> : vector<64x8xf32>
    %87 = tpu.matmul %84, %86, %cst_54 {dimension_numbers = #tpu.dot_dimension_numbers<[1], [0], [0], [1], [0, 0, 1, 1], [], []>} : vector<64x24xbf16>, vector<24x8xbf16>, vector<64x8xf32> -> vector<64x8xf32>
    %88 = arith.addf %81, %87 : vector<64x8xf32>
    %c17 = arith.constant 17 : index
    %c0_55 = arith.constant 0 : index
    %89 = vector.load %arg17[%c17, %c0_55] : memref<290x128xbf16, #tpu.memory_space<vmem>>, vector<64x24xbf16>
    %c7 = arith.constant 7 : index
    %c0_56 = arith.constant 0 : index
    %c0_57 = arith.constant 0 : index
    %90 = vector.load %arg5[%c7, %c0_56, %c0_57] : memref<9x24x8xbf16, #tpu.memory_space<vmem>>, vector<1x24x8xbf16>
    %91 = vector.shape_cast %90 : vector<1x24x8xbf16> to vector<24x8xbf16>
    %cst_58 = arith.constant dense<0.000000e+00> : vector<64x8xf32>
    %92 = tpu.matmul %89, %91, %cst_58 {dimension_numbers = #tpu.dot_dimension_numbers<[1], [0], [0], [1], [0, 0, 1, 1], [], []>} : vector<64x24xbf16>, vector<24x8xbf16>, vector<64x8xf32> -> vector<64x8xf32>
    %93 = arith.addf %88, %92 : vector<64x8xf32>
    %c18 = arith.constant 18 : index
    %c0_59 = arith.constant 0 : index
    %94 = vector.load %arg17[%c18, %c0_59] : memref<290x128xbf16, #tpu.memory_space<vmem>>, vector<64x24xbf16>
    %95 = vector.broadcast %42 : vector<64x1xbf16> to vector<64x24xbf16>
    %96 = arith.mulf %94, %95 : vector<64x24xbf16>
    %c8_60 = arith.constant 8 : index
    %c0_61 = arith.constant 0 : index
    %c0_62 = arith.constant 0 : index
    %97 = vector.load %arg5[%c8_60, %c0_61, %c0_62] : memref<9x24x8xbf16, #tpu.memory_space<vmem>>, vector<1x24x8xbf16>
    %98 = vector.shape_cast %97 : vector<1x24x8xbf16> to vector<24x8xbf16>
    %cst_63 = arith.constant dense<0.000000e+00> : vector<64x8xf32>
    %99 = tpu.matmul %96, %98, %cst_63 {dimension_numbers = #tpu.dot_dimension_numbers<[1], [0], [0], [1], [0, 0, 1, 1], [], []>} : vector<64x24xbf16>, vector<24x8xbf16>, vector<64x8xf32> -> vector<64x8xf32>
    %100 = arith.addf %93, %99 : vector<64x8xf32>
    %c0_64 = arith.constant 0 : index
    %c0_65 = arith.constant 0 : index
    %101 = vector.load %arg6[%c0_64, %c0_65] : memref<1x8xf32, #tpu.memory_space<vmem>>, vector<1x8xf32>
    %102 = vector.broadcast %101 : vector<1x8xf32> to vector<64x8xf32>
    %103 = arith.mulf %100, %102 : vector<64x8xf32>
    %c0_66 = arith.constant 0 : index
    %c0_67 = arith.constant 0 : index
    %104 = vector.load %arg7[%c0_66, %c0_67] : memref<1x8xf32, #tpu.memory_space<vmem>>, vector<1x8xf32>
    %105 = vector.broadcast %104 : vector<1x8xf32> to vector<64x8xf32>
    %106 = arith.addf %103, %105 : vector<64x8xf32>
    %cst_68 = arith.constant 0.000000e+00 : f32
    %107 = vector.broadcast %cst_68 : f32 to vector<64x8xf32>
    %108 = arith.maximumf %106, %107 : vector<64x8xf32>
    %109 = arith.truncf %108 : vector<64x8xf32> to vector<64x8xbf16>
    %110 = arith.truncf %1 : vector<256x4xf32> to vector<256x4xbf16>
    %c0_69 = arith.constant 0 : index
    %c0_70 = arith.constant 0 : index
    %111 = vector.load %arg8[%c0_69, %c0_70] : memref<256x64xbf16, #tpu.memory_space<vmem>>, vector<256x64xbf16>
    %cst_71 = arith.constant dense<0.000000e+00> : vector<256x8xf32>
    %112 = tpu.matmul %111, %109, %cst_71 {dimension_numbers = #tpu.dot_dimension_numbers<[1], [0], [0], [1], [0, 0, 1, 1], [], []>} : vector<256x64xbf16>, vector<64x8xbf16>, vector<256x8xf32> -> vector<256x8xf32>
    %113 = arith.truncf %112 : vector<256x8xf32> to vector<256x8xbf16>
    %cst_72 = arith.constant 0.000000e+00 : bf16
    %114 = vector.broadcast %cst_72 : bf16 to vector<17x12xbf16>
    %c0_73 = arith.constant 0 : index
    %c0_74 = arith.constant 0 : index
    %115 = vector.load %arg17[%c0_73, %c0_74] : memref<290x128xbf16, #tpu.memory_space<vmem>>, vector<17x12xbf16>
    tpu.vector_store %arg17[%c0_73, %c0_74], %114 {strides = array<i32>} : memref<290x128xbf16, #tpu.memory_space<vmem>>, vector<17x12xbf16>,
    %c273 = arith.constant 273 : index
    %c0_75 = arith.constant 0 : index
    %116 = vector.load %arg17[%c273, %c0_75] : memref<290x128xbf16, #tpu.memory_space<vmem>>, vector<17x12xbf16>
    tpu.vector_store %arg17[%c273, %c0_75], %114 {strides = array<i32>} : memref<290x128xbf16, #tpu.memory_space<vmem>>, vector<17x12xbf16>,
    %c17_76 = arith.constant 17 : index
    %c0_77 = arith.constant 0 : index
    %117 = vector.load %arg17[%c17_76, %c0_77] : memref<290x128xbf16, #tpu.memory_space<vmem>>, vector<256x4xbf16>
    tpu.vector_store %arg17[%c17_76, %c0_77], %110 {strides = array<i32>} : memref<290x128xbf16, #tpu.memory_space<vmem>>, vector<256x4xbf16>,
    %c17_78 = arith.constant 17 : index
    %c4_79 = arith.constant 4 : index
    %118 = vector.load %arg17[%c17_78, %c4_79] : memref<290x128xbf16, #tpu.memory_space<vmem>>, vector<256x8xbf16>
    tpu.vector_store %arg17[%c17_78, %c4_79], %113 {strides = array<i32>} : memref<290x128xbf16, #tpu.memory_space<vmem>>, vector<256x8xbf16>,
    %119 = tpu.iota {dimensions = array<i32: 0>} : vector<256x1xi32>
    %c16_i32 = arith.constant 16 : i32
    %c0_i32_80 = arith.constant 0 : i32
    %120 = arith.cmpi eq, %c16_i32, %c0_i32_80 : i32
    %c1_i32_81 = arith.constant 1 : i32
    %121 = arith.select %120, %c1_i32_81, %c16_i32 : i32
    %122 = vector.broadcast %121 : i32 to vector<256x1xi32>
    %123 = arith.remsi %119, %122 : vector<256x1xi32>
    %c0_i32_82 = arith.constant 0 : i32
    %124 = vector.broadcast %c0_i32_82 : i32 to vector<256x1xi32>
    %125 = arith.cmpi ne, %123, %124 : vector<256x1xi32>
    %c0_i32_83 = arith.constant 0 : i32
    %126 = vector.broadcast %c0_i32_83 : i32 to vector<256x1xi32>
    %127 = arith.cmpi slt, %123, %126 : vector<256x1xi32>
    %c0_i32_84 = arith.constant 0 : i32
    %128 = arith.cmpi slt, %121, %c0_i32_84 : i32
    %129 = vector.broadcast %128 : i1 to vector<256x1xi1>
    %130 = vector.broadcast %129 : vector<256x1xi1> to vector<256x1xi1>
    %131 = arith.xori %127, %130 : vector<256x1xi1>
    %132 = arith.andi %131, %125 : vector<256x1xi1>
    %133 = vector.broadcast %121 : i32 to vector<256x1xi32>
    %134 = arith.addi %123, %133 : vector<256x1xi32>
    %135 = arith.select %132, %134, %123 : vector<256x1xi1>, vector<256x1xi32>
    %c0_i32_85 = arith.constant 0 : i32
    %136 = vector.broadcast %c0_i32_85 : i32 to vector<256x1xi32>
    %137 = arith.cmpi sgt, %135, %136 : vector<256x1xi32>
    %138 = arith.extui %137 : vector<256x1xi1> to vector<256x1xi32>
    %139 = arith.sitofp %138 : vector<256x1xi32> to vector<256x1xf32>
    %140 = arith.truncf %139 : vector<256x1xf32> to vector<256x1xbf16>
    %c15_i32 = arith.constant 15 : i32
    %141 = vector.broadcast %c15_i32 : i32 to vector<256x1xi32>
    %142 = arith.cmpi slt, %135, %141 : vector<256x1xi32>
    %143 = arith.extui %142 : vector<256x1xi1> to vector<256x1xi32>
    %144 = arith.sitofp %143 : vector<256x1xi32> to vector<256x1xf32>
    %145 = arith.truncf %144 : vector<256x1xf32> to vector<256x1xbf16>
    %cst_86 = arith.constant 0.000000e+00 : f32
    %146 = vector.broadcast %cst_86 : f32 to vector<256x4xf32>
    %c0_87 = arith.constant 0 : index
    %c0_88 = arith.constant 0 : index
    %147 = vector.load %arg17[%c0_87, %c0_88] : memref<290x128xbf16, #tpu.memory_space<vmem>>, vector<256x12xbf16>
    %148 = vector.broadcast %140 : vector<256x1xbf16> to vector<256x12xbf16>
    %149 = arith.mulf %147, %148 : vector<256x12xbf16>
    %c0_89 = arith.constant 0 : index
    %c0_90 = arith.constant 0 : index
    %c0_91 = arith.constant 0 : index
    %150 = vector.load %arg9[%c0_89, %c0_90, %c0_91] : memref<9x12x4xbf16, #tpu.memory_space<vmem>>, vector<1x12x4xbf16>
    %151 = vector.shape_cast %150 : vector<1x12x4xbf16> to vector<12x4xbf16>
    %cst_92 = arith.constant dense<0.000000e+00> : vector<256x4xf32>
    %152 = tpu.matmul %149, %151, %cst_92 {dimension_numbers = #tpu.dot_dimension_numbers<[1], [0], [0], [1], [0, 0, 1, 1], [], []>} : vector<256x12xbf16>, vector<12x4xbf16>, vector<256x4xf32> -> vector<256x4xf32>
    %153 = arith.addf %146, %152 : vector<256x4xf32>
    %c1_93 = arith.constant 1 : index
    %c0_94 = arith.constant 0 : index
    %154 = vector.load %arg17[%c1_93, %c0_94] : memref<290x128xbf16, #tpu.memory_space<vmem>>, vector<256x12xbf16>
    %c1_95 = arith.constant 1 : index
    %c0_96 = arith.constant 0 : index
    %c0_97 = arith.constant 0 : index
    %155 = vector.load %arg9[%c1_95, %c0_96, %c0_97] : memref<9x12x4xbf16, #tpu.memory_space<vmem>>, vector<1x12x4xbf16>
    %156 = vector.shape_cast %155 : vector<1x12x4xbf16> to vector<12x4xbf16>
    %cst_98 = arith.constant dense<0.000000e+00> : vector<256x4xf32>
    %157 = tpu.matmul %154, %156, %cst_98 {dimension_numbers = #tpu.dot_dimension_numbers<[1], [0], [0], [1], [0, 0, 1, 1], [], []>} : vector<256x12xbf16>, vector<12x4xbf16>, vector<256x4xf32> -> vector<256x4xf32>
    %158 = arith.addf %153, %157 : vector<256x4xf32>
    %c2_99 = arith.constant 2 : index
    %c0_100 = arith.constant 0 : index
    %159 = vector.load %arg17[%c2_99, %c0_100] : memref<290x128xbf16, #tpu.memory_space<vmem>>, vector<256x12xbf16>
    %160 = vector.broadcast %145 : vector<256x1xbf16> to vector<256x12xbf16>
    %161 = arith.mulf %159, %160 : vector<256x12xbf16>
    %c2_101 = arith.constant 2 : index
    %c0_102 = arith.constant 0 : index
    %c0_103 = arith.constant 0 : index
    %162 = vector.load %arg9[%c2_101, %c0_102, %c0_103] : memref<9x12x4xbf16, #tpu.memory_space<vmem>>, vector<1x12x4xbf16>
    %163 = vector.shape_cast %162 : vector<1x12x4xbf16> to vector<12x4xbf16>
    %cst_104 = arith.constant dense<0.000000e+00> : vector<256x4xf32>
    %164 = tpu.matmul %161, %163, %cst_104 {dimension_numbers = #tpu.dot_dimension_numbers<[1], [0], [0], [1], [0, 0, 1, 1], [], []>} : vector<256x12xbf16>, vector<12x4xbf16>, vector<256x4xf32> -> vector<256x4xf32>
    %165 = arith.addf %158, %164 : vector<256x4xf32>
    %c16_105 = arith.constant 16 : index
    %c0_106 = arith.constant 0 : index
    %166 = vector.load %arg17[%c16_105, %c0_106] : memref<290x128xbf16, #tpu.memory_space<vmem>>, vector<256x12xbf16>
    %167 = vector.broadcast %140 : vector<256x1xbf16> to vector<256x12xbf16>
    %168 = arith.mulf %166, %167 : vector<256x12xbf16>
    %c3_107 = arith.constant 3 : index
    %c0_108 = arith.constant 0 : index
    %c0_109 = arith.constant 0 : index
    %169 = vector.load %arg9[%c3_107, %c0_108, %c0_109] : memref<9x12x4xbf16, #tpu.memory_space<vmem>>, vector<1x12x4xbf16>
    %170 = vector.shape_cast %169 : vector<1x12x4xbf16> to vector<12x4xbf16>
    %cst_110 = arith.constant dense<0.000000e+00> : vector<256x4xf32>
    %171 = tpu.matmul %168, %170, %cst_110 {dimension_numbers = #tpu.dot_dimension_numbers<[1], [0], [0], [1], [0, 0, 1, 1], [], []>} : vector<256x12xbf16>, vector<12x4xbf16>, vector<256x4xf32> -> vector<256x4xf32>
    %172 = arith.addf %165, %171 : vector<256x4xf32>
    %c17_111 = arith.constant 17 : index
    %c0_112 = arith.constant 0 : index
    %173 = vector.load %arg17[%c17_111, %c0_112] : memref<290x128xbf16, #tpu.memory_space<vmem>>, vector<256x12xbf16>
    %c4_113 = arith.constant 4 : index
    %c0_114 = arith.constant 0 : index
    %c0_115 = arith.constant 0 : index
    %174 = vector.load %arg9[%c4_113, %c0_114, %c0_115] : memref<9x12x4xbf16, #tpu.memory_space<vmem>>, vector<1x12x4xbf16>
    %175 = vector.shape_cast %174 : vector<1x12x4xbf16> to vector<12x4xbf16>
    %cst_116 = arith.constant dense<0.000000e+00> : vector<256x4xf32>
    %176 = tpu.matmul %173, %175, %cst_116 {dimension_numbers = #tpu.dot_dimension_numbers<[1], [0], [0], [1], [0, 0, 1, 1], [], []>} : vector<256x12xbf16>, vector<12x4xbf16>, vector<256x4xf32> -> vector<256x4xf32>
    %177 = arith.addf %172, %176 : vector<256x4xf32>
    %c18_117 = arith.constant 18 : index
    %c0_118 = arith.constant 0 : index
    %178 = vector.load %arg17[%c18_117, %c0_118] : memref<290x128xbf16, #tpu.memory_space<vmem>>, vector<256x12xbf16>
    %179 = vector.broadcast %145 : vector<256x1xbf16> to vector<256x12xbf16>
    %180 = arith.mulf %178, %179 : vector<256x12xbf16>
    %c5_119 = arith.constant 5 : index
    %c0_120 = arith.constant 0 : index
    %c0_121 = arith.constant 0 : index
    %181 = vector.load %arg9[%c5_119, %c0_120, %c0_121] : memref<9x12x4xbf16, #tpu.memory_space<vmem>>, vector<1x12x4xbf16>
    %182 = vector.shape_cast %181 : vector<1x12x4xbf16> to vector<12x4xbf16>
    %cst_122 = arith.constant dense<0.000000e+00> : vector<256x4xf32>
    %183 = tpu.matmul %180, %182, %cst_122 {dimension_numbers = #tpu.dot_dimension_numbers<[1], [0], [0], [1], [0, 0, 1, 1], [], []>} : vector<256x12xbf16>, vector<12x4xbf16>, vector<256x4xf32> -> vector<256x4xf32>
    %184 = arith.addf %177, %183 : vector<256x4xf32>
    %c32 = arith.constant 32 : index
    %c0_123 = arith.constant 0 : index
    %185 = vector.load %arg17[%c32, %c0_123] : memref<290x128xbf16, #tpu.memory_space<vmem>>, vector<256x12xbf16>
    %186 = vector.broadcast %140 : vector<256x1xbf16> to vector<256x12xbf16>
    %187 = arith.mulf %185, %186 : vector<256x12xbf16>
    %c6_124 = arith.constant 6 : index
    %c0_125 = arith.constant 0 : index
    %c0_126 = arith.constant 0 : index
    %188 = vector.load %arg9[%c6_124, %c0_125, %c0_126] : memref<9x12x4xbf16, #tpu.memory_space<vmem>>, vector<1x12x4xbf16>
    %189 = vector.shape_cast %188 : vector<1x12x4xbf16> to vector<12x4xbf16>
    %cst_127 = arith.constant dense<0.000000e+00> : vector<256x4xf32>
    %190 = tpu.matmul %187, %189, %cst_127 {dimension_numbers = #tpu.dot_dimension_numbers<[1], [0], [0], [1], [0, 0, 1, 1], [], []>} : vector<256x12xbf16>, vector<12x4xbf16>, vector<256x4xf32> -> vector<256x4xf32>
    %191 = arith.addf %184, %190 : vector<256x4xf32>
    %c33 = arith.constant 33 : index
    %c0_128 = arith.constant 0 : index
    %192 = vector.load %arg17[%c33, %c0_128] : memref<290x128xbf16, #tpu.memory_space<vmem>>, vector<256x12xbf16>
    %c7_129 = arith.constant 7 : index
    %c0_130 = arith.constant 0 : index
    %c0_131 = arith.constant 0 : index
    %193 = vector.load %arg9[%c7_129, %c0_130, %c0_131] : memref<9x12x4xbf16, #tpu.memory_space<vmem>>, vector<1x12x4xbf16>
    %194 = vector.shape_cast %193 : vector<1x12x4xbf16> to vector<12x4xbf16>
    %cst_132 = arith.constant dense<0.000000e+00> : vector<256x4xf32>
    %195 = tpu.matmul %192, %194, %cst_132 {dimension_numbers = #tpu.dot_dimension_numbers<[1], [0], [0], [1], [0, 0, 1, 1], [], []>} : vector<256x12xbf16>, vector<12x4xbf16>, vector<256x4xf32> -> vector<256x4xf32>
    %196 = arith.addf %191, %195 : vector<256x4xf32>
    %c34 = arith.constant 34 : index
    %c0_133 = arith.constant 0 : index
    %197 = vector.load %arg17[%c34, %c0_133] : memref<290x128xbf16, #tpu.memory_space<vmem>>, vector<256x12xbf16>
    %198 = vector.broadcast %145 : vector<256x1xbf16> to vector<256x12xbf16>
    %199 = arith.mulf %197, %198 : vector<256x12xbf16>
    %c8_134 = arith.constant 8 : index
    %c0_135 = arith.constant 0 : index
    %c0_136 = arith.constant 0 : index
    %200 = vector.load %arg9[%c8_134, %c0_135, %c0_136] : memref<9x12x4xbf16, #tpu.memory_space<vmem>>, vector<1x12x4xbf16>
    %201 = vector.shape_cast %200 : vector<1x12x4xbf16> to vector<12x4xbf16>
    %cst_137 = arith.constant dense<0.000000e+00> : vector<256x4xf32>
    %202 = tpu.matmul %199, %201, %cst_137 {dimension_numbers = #tpu.dot_dimension_numbers<[1], [0], [0], [1], [0, 0, 1, 1], [], []>} : vector<256x12xbf16>, vector<12x4xbf16>, vector<256x4xf32> -> vector<256x4xf32>
    %203 = arith.addf %196, %202 : vector<256x4xf32>
    %c0_138 = arith.constant 0 : index
    %c0_139 = arith.constant 0 : index
    %204 = vector.load %arg10[%c0_138, %c0_139] : memref<1x4xf32, #tpu.memory_space<vmem>>, vector<1x4xf32>
    %205 = vector.broadcast %204 : vector<1x4xf32> to vector<256x4xf32>
    %206 = arith.mulf %203, %205 : vector<256x4xf32>
    %c0_140 = arith.constant 0 : index
    %c0_141 = arith.constant 0 : index
    %207 = vector.load %arg11[%c0_140, %c0_141] : memref<1x4xf32, #tpu.memory_space<vmem>>, vector<1x4xf32>
    %208 = vector.broadcast %207 : vector<1x4xf32> to vector<256x4xf32>
    %209 = arith.addf %206, %208 : vector<256x4xf32>
    %cst_142 = arith.constant 0.000000e+00 : f32
    %210 = vector.broadcast %cst_142 : f32 to vector<256x4xf32>
    %211 = arith.maximumf %209, %210 : vector<256x4xf32>
    %212 = arith.truncf %211 : vector<256x4xf32> to vector<256x4xbf16>
    %c0_143 = arith.constant 0 : index
    %c0_144 = arith.constant 0 : index
    %213 = vector.load %arg12[%c0_143, %c0_144] : memref<1x4xbf16, #tpu.memory_space<vmem>>, vector<1x4xbf16>
    %cst_145 = arith.constant dense<0.000000e+00> : vector<1x256xf32>
    %214 = tpu.matmul %213, %212, %cst_145 {dimension_numbers = #tpu.dot_dimension_numbers<[1], [1], [0], [0], [0, 0, 1, 0], [], []>} : vector<1x4xbf16>, vector<256x4xbf16>, vector<1x256xf32> -> vector<1x256xf32>
    %c0_146 = arith.constant 0 : index
    %c0_147 = arith.constant 0 : index
    %215 = vector.load %arg13[%c0_146, %c0_147] : memref<1x1xf32, #tpu.memory_space<vmem>>, vector<1x1xf32>
    %216 = vector.broadcast %215 : vector<1x1xf32> to vector<1x256xf32>
    %217 = arith.addf %214, %216 : vector<1x256xf32>
    %218 = vector.extract_strided_slice %217 {offsets = [0, 0], sizes = [1, 16], strides = [1, 1]} : vector<1x256xf32> to vector<1x16xf32>
    %c0_148 = arith.constant 0 : index
    %c0_149 = arith.constant 0 : index
    %219 = vector.load %arg18[%c0_148, %c0_149] : memref<16x16xf32, #tpu.memory_space<vmem>>, vector<1x16xf32>
    tpu.vector_store %arg18[%c0_148, %c0_149], %218 {strides = array<i32>} : memref<16x16xf32, #tpu.memory_space<vmem>>, vector<1x16xf32>,
    %220 = vector.extract_strided_slice %217 {offsets = [0, 16], sizes = [1, 16], strides = [1, 1]} : vector<1x256xf32> to vector<1x16xf32>
    %c1_150 = arith.constant 1 : index
    %c0_151 = arith.constant 0 : index
    %221 = vector.load %arg18[%c1_150, %c0_151] : memref<16x16xf32, #tpu.memory_space<vmem>>, vector<1x16xf32>
    tpu.vector_store %arg18[%c1_150, %c0_151], %220 {strides = array<i32>} : memref<16x16xf32, #tpu.memory_space<vmem>>, vector<1x16xf32>,
    %222 = vector.extract_strided_slice %217 {offsets = [0, 32], sizes = [1, 16], strides = [1, 1]} : vector<1x256xf32> to vector<1x16xf32>
    %c2_152 = arith.constant 2 : index
    %c0_153 = arith.constant 0 : index
    %223 = vector.load %arg18[%c2_152, %c0_153] : memref<16x16xf32, #tpu.memory_space<vmem>>, vector<1x16xf32>
    tpu.vector_store %arg18[%c2_152, %c0_153], %222 {strides = array<i32>} : memref<16x16xf32, #tpu.memory_space<vmem>>, vector<1x16xf32>,
    %224 = vector.extract_strided_slice %217 {offsets = [0, 48], sizes = [1, 16], strides = [1, 1]} : vector<1x256xf32> to vector<1x16xf32>
    %c3_154 = arith.constant 3 : index
    %c0_155 = arith.constant 0 : index
    %225 = vector.load %arg18[%c3_154, %c0_155] : memref<16x16xf32, #tpu.memory_space<vmem>>, vector<1x16xf32>
    tpu.vector_store %arg18[%c3_154, %c0_155], %224 {strides = array<i32>} : memref<16x16xf32, #tpu.memory_space<vmem>>, vector<1x16xf32>,
    %226 = vector.extract_strided_slice %217 {offsets = [0, 64], sizes = [1, 16], strides = [1, 1]} : vector<1x256xf32> to vector<1x16xf32>
    %c4_156 = arith.constant 4 : index
    %c0_157 = arith.constant 0 : index
    %227 = vector.load %arg18[%c4_156, %c0_157] : memref<16x16xf32, #tpu.memory_space<vmem>>, vector<1x16xf32>
    tpu.vector_store %arg18[%c4_156, %c0_157], %226 {strides = array<i32>} : memref<16x16xf32, #tpu.memory_space<vmem>>, vector<1x16xf32>,
    %228 = vector.extract_strided_slice %217 {offsets = [0, 80], sizes = [1, 16], strides = [1, 1]} : vector<1x256xf32> to vector<1x16xf32>
    %c5_158 = arith.constant 5 : index
    %c0_159 = arith.constant 0 : index
    %229 = vector.load %arg18[%c5_158, %c0_159] : memref<16x16xf32, #tpu.memory_space<vmem>>, vector<1x16xf32>
    tpu.vector_store %arg18[%c5_158, %c0_159], %228 {strides = array<i32>} : memref<16x16xf32, #tpu.memory_space<vmem>>, vector<1x16xf32>,
    %230 = vector.extract_strided_slice %217 {offsets = [0, 96], sizes = [1, 16], strides = [1, 1]} : vector<1x256xf32> to vector<1x16xf32>
    %c6_160 = arith.constant 6 : index
    %c0_161 = arith.constant 0 : index
    %231 = vector.load %arg18[%c6_160, %c0_161] : memref<16x16xf32, #tpu.memory_space<vmem>>, vector<1x16xf32>
    tpu.vector_store %arg18[%c6_160, %c0_161], %230 {strides = array<i32>} : memref<16x16xf32, #tpu.memory_space<vmem>>, vector<1x16xf32>,
    %232 = vector.extract_strided_slice %217 {offsets = [0, 112], sizes = [1, 16], strides = [1, 1]} : vector<1x256xf32> to vector<1x16xf32>
    %c7_162 = arith.constant 7 : index
    %c0_163 = arith.constant 0 : index
    %233 = vector.load %arg18[%c7_162, %c0_163] : memref<16x16xf32, #tpu.memory_space<vmem>>, vector<1x16xf32>
    tpu.vector_store %arg18[%c7_162, %c0_163], %232 {strides = array<i32>} : memref<16x16xf32, #tpu.memory_space<vmem>>, vector<1x16xf32>,
    %234 = vector.extract_strided_slice %217 {offsets = [0, 128], sizes = [1, 16], strides = [1, 1]} : vector<1x256xf32> to vector<1x16xf32>
    %c8_164 = arith.constant 8 : index
    %c0_165 = arith.constant 0 : index
    %235 = vector.load %arg18[%c8_164, %c0_165] : memref<16x16xf32, #tpu.memory_space<vmem>>, vector<1x16xf32>
    tpu.vector_store %arg18[%c8_164, %c0_165], %234 {strides = array<i32>} : memref<16x16xf32, #tpu.memory_space<vmem>>, vector<1x16xf32>,
    %236 = vector.extract_strided_slice %217 {offsets = [0, 144], sizes = [1, 16], strides = [1, 1]} : vector<1x256xf32> to vector<1x16xf32>
    %c9_166 = arith.constant 9 : index
    %c0_167 = arith.constant 0 : index
    %237 = vector.load %arg18[%c9_166, %c0_167] : memref<16x16xf32, #tpu.memory_space<vmem>>, vector<1x16xf32>
    tpu.vector_store %arg18[%c9_166, %c0_167], %236 {strides = array<i32>} : memref<16x16xf32, #tpu.memory_space<vmem>>, vector<1x16xf32>,
    %238 = vector.extract_strided_slice %217 {offsets = [0, 160], sizes = [1, 16], strides = [1, 1]} : vector<1x256xf32> to vector<1x16xf32>
    %c10_168 = arith.constant 10 : index
    %c0_169 = arith.constant 0 : index
    %239 = vector.load %arg18[%c10_168, %c0_169] : memref<16x16xf32, #tpu.memory_space<vmem>>, vector<1x16xf32>
    tpu.vector_store %arg18[%c10_168, %c0_169], %238 {strides = array<i32>} : memref<16x16xf32, #tpu.memory_space<vmem>>, vector<1x16xf32>,
    %240 = vector.extract_strided_slice %217 {offsets = [0, 176], sizes = [1, 16], strides = [1, 1]} : vector<1x256xf32> to vector<1x16xf32>
    %c11 = arith.constant 11 : index
    %c0_170 = arith.constant 0 : index
    %241 = vector.load %arg18[%c11, %c0_170] : memref<16x16xf32, #tpu.memory_space<vmem>>, vector<1x16xf32>
    tpu.vector_store %arg18[%c11, %c0_170], %240 {strides = array<i32>} : memref<16x16xf32, #tpu.memory_space<vmem>>, vector<1x16xf32>,
    %242 = vector.extract_strided_slice %217 {offsets = [0, 192], sizes = [1, 16], strides = [1, 1]} : vector<1x256xf32> to vector<1x16xf32>
    %c12 = arith.constant 12 : index
    %c0_171 = arith.constant 0 : index
    %243 = vector.load %arg18[%c12, %c0_171] : memref<16x16xf32, #tpu.memory_space<vmem>>, vector<1x16xf32>
    tpu.vector_store %arg18[%c12, %c0_171], %242 {strides = array<i32>} : memref<16x16xf32, #tpu.memory_space<vmem>>, vector<1x16xf32>,
    %244 = vector.extract_strided_slice %217 {offsets = [0, 208], sizes = [1, 16], strides = [1, 1]} : vector<1x256xf32> to vector<1x16xf32>
    %c13 = arith.constant 13 : index
    %c0_172 = arith.constant 0 : index
    %245 = vector.load %arg18[%c13, %c0_172] : memref<16x16xf32, #tpu.memory_space<vmem>>, vector<1x16xf32>
    tpu.vector_store %arg18[%c13, %c0_172], %244 {strides = array<i32>} : memref<16x16xf32, #tpu.memory_space<vmem>>, vector<1x16xf32>,
    %246 = vector.extract_strided_slice %217 {offsets = [0, 224], sizes = [1, 16], strides = [1, 1]} : vector<1x256xf32> to vector<1x16xf32>
    %c14 = arith.constant 14 : index
    %c0_173 = arith.constant 0 : index
    %247 = vector.load %arg18[%c14, %c0_173] : memref<16x16xf32, #tpu.memory_space<vmem>>, vector<1x16xf32>
    tpu.vector_store %arg18[%c14, %c0_173], %246 {strides = array<i32>} : memref<16x16xf32, #tpu.memory_space<vmem>>, vector<1x16xf32>,
    %248 = vector.extract_strided_slice %217 {offsets = [0, 240], sizes = [1, 16], strides = [1, 1]} : vector<1x256xf32> to vector<1x16xf32>
    %c15 = arith.constant 15 : index
    %c0_174 = arith.constant 0 : index
    %249 = vector.load %arg18[%c15, %c0_174] : memref<16x16xf32, #tpu.memory_space<vmem>>, vector<1x16xf32>
    tpu.vector_store %arg18[%c15, %c0_174], %248 {strides = array<i32>} : memref<16x16xf32, #tpu.memory_space<vmem>>, vector<1x16xf32>,
    %c0_175 = arith.constant 0 : index
    %c0_176 = arith.constant 0 : index
    %250 = vector.load %arg18[%c0_175, %c0_176] : memref<16x16xf32, #tpu.memory_space<vmem>>, vector<16x16xf32>
    %251 = arith.truncf %250 : vector<16x16xf32> to vector<16x16xbf16>
    %c0_177 = arith.constant 0 : index
    %c0_178 = arith.constant 0 : index
    %252 = vector.load %arg15[%c0_177, %c0_178] : memref<16x64xbf16, #tpu.memory_space<vmem>>, vector<16x64xbf16>
    %cst_179 = arith.constant dense<0.000000e+00> : vector<16x64xf32>
    %253 = tpu.matmul %251, %252, %cst_179 {dimension_numbers = #tpu.dot_dimension_numbers<[1], [0], [0], [1], [0, 0, 1, 1], [], []>} : vector<16x16xbf16>, vector<16x64xbf16>, vector<16x64xf32> -> vector<16x64xf32>
    %c0_180 = arith.constant 0 : index
    %c0_181 = arith.constant 0 : index
    %254 = vector.load %arg14[%c0_180, %c0_181] : memref<64x16xbf16, #tpu.memory_space<vmem>>, vector<64x16xbf16>
    %255 = arith.truncf %253 : vector<16x64xf32> to vector<16x64xbf16>
    %cst_182 = arith.constant dense<0.000000e+00> : vector<64x64xf32>
    %256 = tpu.matmul %254, %255, %cst_182 {dimension_numbers = #tpu.dot_dimension_numbers<[1], [0], [0], [1], [0, 0, 1, 1], [], []>} : vector<64x16xbf16>, vector<16x64xbf16>, vector<64x64xf32> -> vector<64x64xf32>
    %c0_183 = arith.constant 0 : index
    %c0_184 = arith.constant 0 : index
    %c0_185 = arith.constant 0 : index
    %c0_186 = arith.constant 0 : index
    %257 = vector.load %arg16[%c0_183, %c0_184, %c0_185, %c0_186] : memref<1x1x64x64xf32, #tpu.memory_space<vmem>>, vector<1x1x64x64xf32>
    %258 = vector.shape_cast %257 : vector<1x1x64x64xf32> to vector<64x64xf32>
    %259 = vector.shape_cast %256 : vector<64x64xf32> to vector<1x1x64x64xf32>
    tpu.vector_store %arg16[%c0_183, %c0_184, %c0_185, %c0_186], %259 {strides = array<i32>} : memref<1x1x64x64xf32, #tpu.memory_space<vmem>>, vector<1x1x64x64xf32>,
    return
  }
  func.func @transform_0(%arg0: i32) -> (i32, i32, i32) {
    %c0_i32 = arith.constant 0 : i32
    %c0_i32_0 = arith.constant 0 : i32
    %c0_i32_1 = arith.constant 0 : i32
    return %arg0, %c0_i32, %c0_i32_0 : i32, i32, i32
  }
  func.func @transform_1(%arg0: i32) -> (i32, i32, i32) {
    %c0_i32 = arith.constant 0 : i32
    %c0_i32_0 = arith.constant 0 : i32
    %c0_i32_1 = arith.constant 0 : i32
    return %arg0, %c0_i32, %c0_i32_0 : i32, i32, i32
  }
  func.func @transform_2(%arg0: i32) -> (i32, i32, i32) {
    %c0_i32 = arith.constant 0 : i32
    %c0_i32_0 = arith.constant 0 : i32
    %c0_i32_1 = arith.constant 0 : i32
    return %arg0, %c0_i32, %c0_i32_0 : i32, i32, i32
  }
  func.func @transform_3(%arg0: i32) -> (i32, i32) {
    %c0_i32 = arith.constant 0 : i32
    %c0_i32_0 = arith.constant 0 : i32
    %c0_i32_1 = arith.constant 0 : i32
    return %c0_i32, %c0_i32_0 : i32, i32
  }
  func.func @transform_4(%arg0: i32) -> (i32, i32, i32) {
    %c0_i32 = arith.constant 0 : i32
    %c0_i32_0 = arith.constant 0 : i32
    %c0_i32_1 = arith.constant 0 : i32
    %c0_i32_2 = arith.constant 0 : i32
    return %c0_i32, %c0_i32_0, %c0_i32_1 : i32, i32, i32
  }
  func.func @transform_5(%arg0: i32) -> (i32, i32) {
    %c0_i32 = arith.constant 0 : i32
    %c0_i32_0 = arith.constant 0 : i32
    %c0_i32_1 = arith.constant 0 : i32
    return %c0_i32, %c0_i32_0 : i32, i32
  }
  func.func @transform_6(%arg0: i32) -> (i32, i32) {
    %c0_i32 = arith.constant 0 : i32
    %c0_i32_0 = arith.constant 0 : i32
    %c0_i32_1 = arith.constant 0 : i32
    return %c0_i32, %c0_i32_0 : i32, i32
  }
  func.func @transform_7(%arg0: i32) -> (i32, i32) {
    %c0_i32 = arith.constant 0 : i32
    %c0_i32_0 = arith.constant 0 : i32
    %c0_i32_1 = arith.constant 0 : i32
    return %c0_i32, %c0_i32_0 : i32, i32
  }
  func.func @transform_8(%arg0: i32) -> (i32, i32, i32) {
    %c0_i32 = arith.constant 0 : i32
    %c0_i32_0 = arith.constant 0 : i32
    %c0_i32_1 = arith.constant 0 : i32
    %c0_i32_2 = arith.constant 0 : i32
    return %c0_i32, %c0_i32_0, %c0_i32_1 : i32, i32, i32
  }
  func.func @transform_9(%arg0: i32) -> (i32, i32) {
    %c0_i32 = arith.constant 0 : i32
    %c0_i32_0 = arith.constant 0 : i32
    %c0_i32_1 = arith.constant 0 : i32
    return %c0_i32, %c0_i32_0 : i32, i32
  }
  func.func @transform_10(%arg0: i32) -> (i32, i32) {
    %c0_i32 = arith.constant 0 : i32
    %c0_i32_0 = arith.constant 0 : i32
    %c0_i32_1 = arith.constant 0 : i32
    return %c0_i32, %c0_i32_0 : i32, i32
  }
  func.func @transform_11(%arg0: i32) -> (i32, i32) {
    %c0_i32 = arith.constant 0 : i32
    %c0_i32_0 = arith.constant 0 : i32
    %c0_i32_1 = arith.constant 0 : i32
    return %c0_i32, %c0_i32_0 : i32, i32
  }
  func.func @transform_12(%arg0: i32) -> (i32, i32) {
    %c0_i32 = arith.constant 0 : i32
    %c0_i32_0 = arith.constant 0 : i32
    %c0_i32_1 = arith.constant 0 : i32
    return %c0_i32, %c0_i32_0 : i32, i32
  }
  func.func @transform_13(%arg0: i32) -> (i32, i32) {
    %c0_i32 = arith.constant 0 : i32
    %c0_i32_0 = arith.constant 0 : i32
    %c0_i32_1 = arith.constant 0 : i32
    return %c0_i32, %c0_i32_0 : i32, i32
  }
  func.func @transform_14(%arg0: i32) -> (i32, i32) {
    %c0_i32 = arith.constant 0 : i32
    %c0_i32_0 = arith.constant 0 : i32
    %c0_i32_1 = arith.constant 0 : i32
    return %c0_i32, %c0_i32_0 : i32, i32
  }
  func.func @transform_15(%arg0: i32) -> (i32, i32, i32, i32) {
    %c0_i32 = arith.constant 0 : i32
    %c0_i32_0 = arith.constant 0 : i32
    %c0_i32_1 = arith.constant 0 : i32
    %c0_i32_2 = arith.constant 0 : i32
    return %arg0, %c0_i32, %c0_i32_0, %c0_i32_1 : i32, i32, i32, i32
  }
}

</mosaic_0001>

<llo_original>
// kernel: tpu_custom_call.1
$region0: #{tpu_custom_call.1}
  #allocation0 [shape = 'u32[]', space=smem, size = 0x4, offset = 0x4, fixed_abs, tag = 'smem constant byte address 0x4 - core index']
  #allocation1 [shape = 'u32[72,128]{1,0:T(1,128)}', space=vmem, size = 0x9000, scoped, tag = 'internal scratch']
  #allocation2 [shape = 'bf16[290,128]{1,0:T(8,128)(2,1)}', space=vmem, size = 0x12800, scoped, tag = 'scratch operand']
  #allocation3 [shape = 'f32[16,16]{1,0:T(8,128)}', space=vmem, size = 0x2000, scoped, tag = 'scratch operand']
  #allocation4 [shape = 'f32[1,1]{1,0:T(1,128)S(1)}', space=vmem, size = 0x200, scoped, tag = 'scoped memory for tpu_custom_call.1']
  %s0 = inlined_call_operand.vmem [shape: f32[2,256,4], index: 0, kind: input, shape index: {}]
  %s1 = inlined_call_operand.vmem [shape: f32[2,64,8], index: 1, kind: input, shape index: {}]
  %s2 = inlined_call_operand.vmem [shape: f32[2,16,16], index: 2, kind: input, shape index: {}]
  %s3 = inlined_call_operand.vmem [shape: bf16[64,16], index: 3, kind: input, shape index: {}]
  %s4 = inlined_call_operand.vmem [shape: bf16[9,24,8], index: 4, kind: input, shape index: {}]
  %s5 = inlined_call_operand.vmem [shape: f32[1,8], index: 5, kind: input, shape index: {}]
  %s6 = inlined_call_operand.vmem [shape: f32[1,8], index: 6, kind: input, shape index: {}]
  %s7 = inlined_call_operand.vmem [shape: bf16[256,64], index: 7, kind: input, shape index: {}]
  %s8 = inlined_call_operand.vmem [shape: bf16[9,12,4], index: 8, kind: input, shape index: {}]
  %s9 = inlined_call_operand.vmem [shape: f32[1,4], index: 9, kind: input, shape index: {}]
  %s10 = inlined_call_operand.vmem [shape: f32[1,4], index: 10, kind: input, shape index: {}]
  %s11 = inlined_call_operand.vmem [shape: bf16[1,4], index: 11, kind: input, shape index: {}]
  %s12 = inlined_call_operand.<no memory space> [shape: f32[1,1], index: 12, kind: input, shape index: {}]
  %s13 = inlined_call_operand.vmem [shape: bf16[64,16], index: 13, kind: input, shape index: {}]
  %s14 = inlined_call_operand.vmem [shape: bf16[16,64], index: 14, kind: input, shape index: {}]
  %s15 = inlined_call_operand.hbm [shape: f32[2,1,64,64], index: 15, kind: output, shape index: {}]
  %s16 = sld [smem:[#allocation0]]
  $region93: #{tpu_custom_call.1} parent=0
    _
  %s18 = ssub.s32 1, %s16
  %s19 = scalar_select 0, %s18, %s16
  %v20 = vstv %s12
  %21 = vst [vmem:[#allocation4] sm:$0x1] %v20
  $region1: #{tpu_custom_call.1} parent=0
    #allocation5 [shape = 'u8[65536]{0}', space=vmem, size = 0x10000, scoped, tag = 'output window, operand 0']
    #allocation6 [shape = 's32[2]{0}', space=sflag, size = 0x8, scoped, tag = 'scoped memory for tpu_custom_call.1']
    %22 = vsyncpa [#allocation6], 0
    %s23 = scalar_lea.sflag [#allocation6], 1
    %24 = vsyncpa %s23, 0
    loop: start=0, step=1, limit=4
    $region2: #{tpu_custom_call.1} parent=1 // loop_pre_header
      _
    $region3: #{tpu_custom_call.1} parent=1 // loop_header
      %s26 = sphi 0, %s30
      %p27 = scmp.ge.s32.totalorder %s26, 4
      %s36 = sphi 0, %s38
      %s39 = sphi 0, %s36
      %s40 = sphi 0, %s39
      %s56 = sphi 0, %s40
      %s62 = sphi 0, %s64
      %s65 = sphi 0, %s62
      %s66 = sphi 0, %s65
      %s82 = sphi 0, %s66
      %s88 = sphi 0, %s90
      %s91 = sphi 0, %s88
      %s92 = sphi 0, %s91
      %s108 = sphi 0, %s92
      %s112 = sphi 0, %s112
      %s114 = sphi 0, %s112
      %s115 = sphi 0, %s114
      %s129 = sphi 0, %s115
      %s133 = sphi 0, %s133
      %s135 = sphi 0, %s133
      %s136 = sphi 0, %s135
      %s150 = sphi 0, %s136
      %s154 = sphi 0, %s154
      %s156 = sphi 0, %s154
      %s157 = sphi 0, %s156
      %s171 = sphi 0, %s157
      %s175 = sphi 0, %s175
      %s177 = sphi 0, %s175
      %s178 = sphi 0, %s177
      %s192 = sphi 0, %s178
      %s196 = sphi 0, %s196
      %s198 = sphi 0, %s196
      %s199 = sphi 0, %s198
      %s213 = sphi 0, %s199
      %s217 = sphi 0, %s217
      %s219 = sphi 0, %s217
      %s220 = sphi 0, %s219
      %s234 = sphi 0, %s220
      %s238 = sphi 0, %s238
      %s240 = sphi 0, %s238
      %s241 = sphi 0, %s240
      %s255 = sphi 0, %s241
      %s259 = sphi 0, %s259
      %s261 = sphi 0, %s259
      %s262 = sphi 0, %s261
      %s276 = sphi 0, %s262
      %s280 = sphi 0, %s280
      %s282 = sphi 0, %s280
      %s283 = sphi 0, %s282
      %s297 = sphi 0, %s283
      %s301 = sphi 0, %s301
      %s303 = sphi 0, %s301
      %s304 = sphi 0, %s303
      %s318 = sphi 0, %s304
      %s322 = sphi 0, %s322
      %s324 = sphi 0, %s322
      %s325 = sphi 0, %s324
      %s339 = sphi 0, %s325
      %s343 = sphi 0, %s343
      %s345 = sphi 0, %s343
      %s346 = sphi 0, %s345
      %s360 = sphi 0, %s346
      %s366 = sphi 0, %s368
      %s369 = sphi 0, %s366
      %s370 = sphi 0, %s369
      %s386 = sphi 0, %s370
    $region4: #{tpu_custom_call.1} parent=1 // loop_header_branch
      %29 = sbr.rel (%p27) target = $region8
    $region5: #{tpu_custom_call.1} parent=1 // loop_body
      %s31 = ssub.s32 %s26, 1
      %s32 = ssub.s32 %s26, 2
      %s33 = sadd.s32 %s26, 1
      %s34 = ssub.s32 %s26, %s33
      %p35 = scmp.eq.s32.totalorder %s34, 0
      %s37 = sadd.s32 %s36, 1
      %s38 = scalar_select %p35, %s36, %s37
      %p41 = pneg %p35
      %p42 = scmp.eq.s32.totalorder %s26, 1
      %p43 = por %p41, %p42
      %p44 = scmp.ne.s32.totalorder %s36, %s39
      %p45 = scmp.eq.s32.totalorder %s26, 0
      %p46 = por %p44, %p45
      %p47 = scmp.ne.s32.totalorder %s36, %s39
      %p48 = scmp.eq.s32.totalorder %s31, 1
      %p49 = por %p47, %p48
      %p50 = scmp.ne.s32.totalorder %s39, %s40
      %p51 = scmp.eq.s32.totalorder %s31, 0
      %p52 = por %p50, %p51
      %p53 = scmp.ne.s32.totalorder %s39, %s40
      %p54 = scmp.eq.s32.totalorder %s32, 1
      %p55 = por %p53, %p54
      %p57 = scmp.ne.s32.totalorder %s40, %s56
      %p58 = scmp.eq.s32.totalorder %s32, 0
      %p59 = por %p57, %p58
      %s60 = ssub.s32 %s26, %s33
      %p61 = scmp.eq.s32.totalorder %s60, 0
      %s63 = sadd.s32 %s62, 1
      %s64 = scalar_select %p61, %s62, %s63
      %p67 = pneg %p61
      %p68 = scmp.eq.s32.totalorder %s26, 1
      %p69 = por %p67, %p68
      %p70 = scmp.ne.s32.totalorder %s62, %s65
      %p71 = scmp.eq.s32.totalorder %s26, 0
      %p72 = por %p70, %p71
      %p73 = scmp.ne.s32.totalorder %s62, %s65
      %p74 = scmp.eq.s32.totalorder %s31, 1
      %p75 = por %p73, %p74
      %p76 = scmp.ne.s32.totalorder %s65, %s66
      %p77 = scmp.eq.s32.totalorder %s31, 0
      %p78 = por %p76, %p77
      %p79 = scmp.ne.s32.totalorder %s65, %s66
      %p80 = scmp.eq.s32.totalorder %s32, 1
      %p81 = por %p79, %p80
      %p83 = scmp.ne.s32.totalorder %s66, %s82
      %p84 = scmp.eq.s32.totalorder %s32, 0
      %p85 = por %p83, %p84
      %s86 = ssub.s32 %s26, %s33
      %p87 = scmp.eq.s32.totalorder %s86, 0
      %s89 = sadd.s32 %s88, 1
      %s90 = scalar_select %p87, %s88, %s89
      %p93 = pneg %p87
      %p94 = scmp.eq.s32.totalorder %s26, 1
      %p95 = por %p93, %p94
      %p96 = scmp.ne.s32.totalorder %s88, %s91
      %p97 = scmp.eq.s32.totalorder %s26, 0
      %p98 = por %p96, %p97
      %p99 = scmp.ne.s32.totalorder %s88, %s91
      %p100 = scmp.eq.s32.totalorder %s31, 1
      %p101 = por %p99, %p100
      %p102 = scmp.ne.s32.totalorder %s91, %s92
      %p103 = scmp.eq.s32.totalorder %s31, 0
      %p104 = por %p102, %p103
      %p105 = scmp.ne.s32.totalorder %s91, %s92
      %p106 = scmp.eq.s32.totalorder %s32, 1
      %p107 = por %p105, %p106
      %p109 = scmp.ne.s32.totalorder %s92, %s108
      %p110 = scmp.eq.s32.totalorder %s32, 0
      %p111 = por %p109, %p110
      %s113 = sadd.s32 %s112, 1
      %p116 = scmp.eq.s32.totalorder %s26, 1
      %p117 = scmp.ne.s32.totalorder %s112, %s114
      %p118 = scmp.eq.s32.totalorder %s26, 0
      %p119 = por %p117, %p118
      %p120 = scmp.ne.s32.totalorder %s112, %s114
      %p121 = scmp.eq.s32.totalorder %s31, 1
      %p122 = por %p120, %p121
      %p123 = scmp.ne.s32.totalorder %s114, %s115
      %p124 = scmp.eq.s32.totalorder %s31, 0
      %p125 = por %p123, %p124
      %p126 = scmp.ne.s32.totalorder %s114, %s115
      %p127 = scmp.eq.s32.totalorder %s32, 1
      %p128 = por %p126, %p127
      %p130 = scmp.ne.s32.totalorder %s115, %s129
      %p131 = scmp.eq.s32.totalorder %s32, 0
      %p132 = por %p130, %p131
      %s134 = sadd.s32 %s133, 1
      %p137 = scmp.eq.s32.totalorder %s26, 1
      %p138 = scmp.ne.s32.totalorder %s133, %s135
      %p139 = scmp.eq.s32.totalorder %s26, 0
      %p140 = por %p138, %p139
      %p141 = scmp.ne.s32.totalorder %s133, %s135
      %p142 = scmp.eq.s32.totalorder %s31, 1
      %p143 = por %p141, %p142
      %p144 = scmp.ne.s32.totalorder %s135, %s136
      %p145 = scmp.eq.s32.totalorder %s31, 0
      %p146 = por %p144, %p145
      %p147 = scmp.ne.s32.totalorder %s135, %s136
      %p148 = scmp.eq.s32.totalorder %s32, 1
      %p149 = por %p147, %p148
      %p151 = scmp.ne.s32.totalorder %s136, %s150
      %p152 = scmp.eq.s32.totalorder %s32, 0
      %p153 = por %p151, %p152
      %s155 = sadd.s32 %s154, 1
      %p158 = scmp.eq.s32.totalorder %s26, 1
      %p159 = scmp.ne.s32.totalorder %s154, %s156
      %p160 = scmp.eq.s32.totalorder %s26, 0
      %p161 = por %p159, %p160
      %p162 = scmp.ne.s32.totalorder %s154, %s156
      %p163 = scmp.eq.s32.totalorder %s31, 1
      %p164 = por %p162, %p163
      %p165 = scmp.ne.s32.totalorder %s156, %s157
      %p166 = scmp.eq.s32.totalorder %s31, 0
      %p167 = por %p165, %p166
      %p168 = scmp.ne.s32.totalorder %s156, %s157
      %p169 = scmp.eq.s32.totalorder %s32, 1
      %p170 = por %p168, %p169
      %p172 = scmp.ne.s32.totalorder %s157, %s171
      %p173 = scmp.eq.s32.totalorder %s32, 0
      %p174 = por %p172, %p173
      %s176 = sadd.s32 %s175, 1
      %p179 = scmp.eq.s32.totalorder %s26, 1
      %p180 = scmp.ne.s32.totalorder %s175, %s177
      %p181 = scmp.eq.s32.totalorder %s26, 0
      %p182 = por %p180, %p181
      %p183 = scmp.ne.s32.totalorder %s175, %s177
      %p184 = scmp.eq.s32.totalorder %s31, 1
      %p185 = por %p183, %p184
      %p186 = scmp.ne.s32.totalorder %s177, %s178
      %p187 = scmp.eq.s32.totalorder %s31, 0
      %p188 = por %p186, %p187
      %p189 = scmp.ne.s32.totalorder %s177, %s178
      %p190 = scmp.eq.s32.totalorder %s32, 1
      %p191 = por %p189, %p190
      %p193 = scmp.ne.s32.totalorder %s178, %s192
      %p194 = scmp.eq.s32.totalorder %s32, 0
      %p195 = por %p193, %p194
      %s197 = sadd.s32 %s196, 1
      %p200 = scmp.eq.s32.totalorder %s26, 1
      %p201 = scmp.ne.s32.totalorder %s196, %s198
      %p202 = scmp.eq.s32.totalorder %s26, 0
      %p203 = por %p201, %p202
      %p204 = scmp.ne.s32.totalorder %s196, %s198
      %p205 = scmp.eq.s32.totalorder %s31, 1
      %p206 = por %p204, %p205
      %p207 = scmp.ne.s32.totalorder %s198, %s199
      %p208 = scmp.eq.s32.totalorder %s31, 0
      %p209 = por %p207, %p208
      %p210 = scmp.ne.s32.totalorder %s198, %s199
      %p211 = scmp.eq.s32.totalorder %s32, 1
      %p212 = por %p210, %p211
      %p214 = scmp.ne.s32.totalorder %s199, %s213
      %p215 = scmp.eq.s32.totalorder %s32, 0
      %p216 = por %p214, %p215
      %s218 = sadd.s32 %s217, 1
      %p221 = scmp.eq.s32.totalorder %s26, 1
      %p222 = scmp.ne.s32.totalorder %s217, %s219
      %p223 = scmp.eq.s32.totalorder %s26, 0
      %p224 = por %p222, %p223
      %p225 = scmp.ne.s32.totalorder %s217, %s219
      %p226 = scmp.eq.s32.totalorder %s31, 1
      %p227 = por %p225, %p226
      %p228 = scmp.ne.s32.totalorder %s219, %s220
      %p229 = scmp.eq.s32.totalorder %s31, 0
      %p230 = por %p228, %p229
      %p231 = scmp.ne.s32.totalorder %s219, %s220
      %p232 = scmp.eq.s32.totalorder %s32, 1
      %p233 = por %p231, %p232
      %p235 = scmp.ne.s32.totalorder %s220, %s234
      %p236 = scmp.eq.s32.totalorder %s32, 0
      %p237 = por %p235, %p236
      %s239 = sadd.s32 %s238, 1
      %p242 = scmp.eq.s32.totalorder %s26, 1
      %p243 = scmp.ne.s32.totalorder %s238, %s240
      %p244 = scmp.eq.s32.totalorder %s26, 0
      %p245 = por %p243, %p244
      %p246 = scmp.ne.s32.totalorder %s238, %s240
      %p247 = scmp.eq.s32.totalorder %s31, 1
      %p248 = por %p246, %p247
      %p249 = scmp.ne.s32.totalorder %s240, %s241
      %p250 = scmp.eq.s32.totalorder %s31, 0
      %p251 = por %p249, %p250
      %p252 = scmp.ne.s32.totalorder %s240, %s241
      %p253 = scmp.eq.s32.totalorder %s32, 1
      %p254 = por %p252, %p253
      %p256 = scmp.ne.s32.totalorder %s241, %s255
      %p257 = scmp.eq.s32.totalorder %s32, 0
      %p258 = por %p256, %p257
      %s260 = sadd.s32 %s259, 1
      %p263 = scmp.eq.s32.totalorder %s26, 1
      %p264 = scmp.ne.s32.totalorder %s259, %s261
      %p265 = scmp.eq.s32.totalorder %s26, 0
      %p266 = por %p264, %p265
      %p267 = scmp.ne.s32.totalorder %s259, %s261
      %p268 = scmp.eq.s32.totalorder %s31, 1
      %p269 = por %p267, %p268
      %p270 = scmp.ne.s32.totalorder %s261, %s262
      %p271 = scmp.eq.s32.totalorder %s31, 0
      %p272 = por %p270, %p271
      %p273 = scmp.ne.s32.totalorder %s261, %s262
      %p274 = scmp.eq.s32.totalorder %s32, 1
      %p275 = por %p273, %p274
      %p277 = scmp.ne.s32.totalorder %s262, %s276
      %p278 = scmp.eq.s32.totalorder %s32, 0
      %p279 = por %p277, %p278
      %s281 = sadd.s32 %s280, 1
      %p284 = scmp.eq.s32.totalorder %s26, 1
      %p285 = scmp.ne.s32.totalorder %s280, %s282
      %p286 = scmp.eq.s32.totalorder %s26, 0
      %p287 = por %p285, %p286
      %p288 = scmp.ne.s32.totalorder %s280, %s282
      %p289 = scmp.eq.s32.totalorder %s31, 1
      %p290 = por %p288, %p289
      %p291 = scmp.ne.s32.totalorder %s282, %s283
      %p292 = scmp.eq.s32.totalorder %s31, 0
      %p293 = por %p291, %p292
      %p294 = scmp.ne.s32.totalorder %s282, %s283
      %p295 = scmp.eq.s32.totalorder %s32, 1
      %p296 = por %p294, %p295
      %p298 = scmp.ne.s32.totalorder %s283, %s297
      %p299 = scmp.eq.s32.totalorder %s32, 0
      %p300 = por %p298, %p299
      %s302 = sadd.s32 %s301, 1
      %p305 = scmp.eq.s32.totalorder %s26, 1
      %p306 = scmp.ne.s32.totalorder %s301, %s303
      %p307 = scmp.eq.s32.totalorder %s26, 0
      %p308 = por %p306, %p307
      %p309 = scmp.ne.s32.totalorder %s301, %s303
      %p310 = scmp.eq.s32.totalorder %s31, 1
      %p311 = por %p309, %p310
      %p312 = scmp.ne.s32.totalorder %s303, %s304
      %p313 = scmp.eq.s32.totalorder %s31, 0
      %p314 = por %p312, %p313
      %p315 = scmp.ne.s32.totalorder %s303, %s304
      %p316 = scmp.eq.s32.totalorder %s32, 1
      %p317 = por %p315, %p316
      %p319 = scmp.ne.s32.totalorder %s304, %s318
      %p320 = scmp.eq.s32.totalorder %s32, 0
      %p321 = por %p319, %p320
      %s323 = sadd.s32 %s322, 1
      %p326 = scmp.eq.s32.totalorder %s26, 1
      %p327 = scmp.ne.s32.totalorder %s322, %s324
      %p328 = scmp.eq.s32.totalorder %s26, 0
      %p329 = por %p327, %p328
      %p330 = scmp.ne.s32.totalorder %s322, %s324
      %p331 = scmp.eq.s32.totalorder %s31, 1
      %p332 = por %p330, %p331
      %p333 = scmp.ne.s32.totalorder %s324, %s325
      %p334 = scmp.eq.s32.totalorder %s31, 0
      %p335 = por %p333, %p334
      %p336 = scmp.ne.s32.totalorder %s324, %s325
      %p337 = scmp.eq.s32.totalorder %s32, 1
      %p338 = por %p336, %p337
      %p340 = scmp.ne.s32.totalorder %s325, %s339
      %p341 = scmp.eq.s32.totalorder %s32, 0
      %p342 = por %p340, %p341
      %s344 = sadd.s32 %s343, 1
      %p347 = scmp.eq.s32.totalorder %s26, 1
      %p348 = scmp.ne.s32.totalorder %s343, %s345
      %p349 = scmp.eq.s32.totalorder %s26, 0
      %p350 = por %p348, %p349
      %p351 = scmp.ne.s32.totalorder %s343, %s345
      %p352 = scmp.eq.s32.totalorder %s31, 1
      %p353 = por %p351, %p352
      %p354 = scmp.ne.s32.totalorder %s345, %s346
      %p355 = scmp.eq.s32.totalorder %s31, 0
      %p356 = por %p354, %p355
      %p357 = scmp.ne.s32.totalorder %s345, %s346
      %p358 = scmp.eq.s32.totalorder %s32, 1
      %p359 = por %p357, %p358
      %p361 = scmp.ne.s32.totalorder %s346, %s360
      %p362 = scmp.eq.s32.totalorder %s32, 0
      %p363 = por %p361, %p362
      %s364 = ssub.s32 %s26, %s33
      %p365 = scmp.eq.s32.totalorder %s364, 0
      %s367 = sadd.s32 %s366, 1
      %s368 = scalar_select %p365, %s366, %s367
      %p371 = pneg %p365
      %p372 = scmp.eq.s32.totalorder %s26, 1
      %p373 = por %p371, %p372
      %p374 = scmp.ne.s32.totalorder %s366, %s369
      %p375 = scmp.eq.s32.totalorder %s26, 0
      %p376 = por %p374, %p375
      %p377 = scmp.ne.s32.totalorder %s366, %s369
      %p378 = scmp.eq.s32.totalorder %s31, 1
      %p379 = por %p377, %p378
      %p380 = scmp.ne.s32.totalorder %s369, %s370
      %p381 = scmp.eq.s32.totalorder %s31, 0
      %p382 = por %p380, %p381
      %p383 = scmp.ne.s32.totalorder %s369, %s370
      %p384 = scmp.eq.s32.totalorder %s32, 1
      %p385 = por %p383, %p384
      %p387 = scmp.ne.s32.totalorder %s370, %s386
      %p388 = scmp.eq.s32.totalorder %s32, 0
      %p389 = por %p387, %p388
      %p390 = scmp.le.s32.totalorder 1, %s26
      %p391 = scmp.lt.s32.totalorder %s26, 3
      %p392 = pnand %p390, %p391
      %p393 = pneg %p392
      // Predicated region
      $region9: #{tpu_custom_call.1} parent=5 // pred_check
        _
      $region10: #{tpu_custom_call.1} parent=5 // pred_check_branch
        %395 = sbr.rel (%p392) target = $region12
      $region11: #{tpu_custom_call.1} parent=5 // pred_region
        %s396 = ssub.s32 %s26, 1
        // Predicated region
        $region13: #{tpu_custom_call.1} parent=11 // pred_check
          %p397 = pneg %p125
        $region14: #{tpu_custom_call.1} parent=11 // pred_check_branch
          %399 = sbr.rel (%p397) target = $region16
        $region15: #{tpu_custom_call.1} parent=11 // pred_region
          _
        $region16: #{tpu_custom_call.1} parent=11 // pred_fallthru
          _
        // Predicated region
        $region17: #{tpu_custom_call.1} parent=11 // pred_check
          %p400 = pneg %p146
        $region18: #{tpu_custom_call.1} parent=11 // pred_check_branch
          %402 = sbr.rel (%p400) target = $region20
        $region19: #{tpu_custom_call.1} parent=11 // pred_region
          _
        $region20: #{tpu_custom_call.1} parent=11 // pred_fallthru
          _
        // Predicated region
        $region21: #{tpu_custom_call.1} parent=11 // pred_check
          %p403 = pneg %p167
        $region22: #{tpu_custom_call.1} parent=11 // pred_check_branch
          %405 = sbr.rel (%p403) target = $region24
        $region23: #{tpu_custom_call.1} parent=11 // pred_region
          _
        $region24: #{tpu_custom_call.1} parent=11 // pred_fallthru
          _
        // Predicated region
        $region25: #{tpu_custom_call.1} parent=11 // pred_check
          %p406 = pneg %p188
        $region26: #{tpu_custom_call.1} parent=11 // pred_check_branch
          %408 = sbr.rel (%p406) target = $region28
        $region27: #{tpu_custom_call.1} parent=11 // pred_region
          _
        $region28: #{tpu_custom_call.1} parent=11 // pred_fallthru
          _
        // Predicated region
        $region29: #{tpu_custom_call.1} parent=11 // pred_check
          %p409 = pneg %p209
        $region30: #{tpu_custom_call.1} parent=11 // pred_check_branch
          %411 = sbr.rel (%p409) target = $region32
        $region31: #{tpu_custom_call.1} parent=11 // pred_region
          _
        $region32: #{tpu_custom_call.1} parent=11 // pred_fallthru
          _
        // Predicated region
        $region33: #{tpu_custom_call.1} parent=11 // pred_check
          %p412 = pneg %p230
        $region34: #{tpu_custom_call.1} parent=11 // pred_check_branch
          %414 = sbr.rel (%p412) target = $region36
        $region35: #{tpu_custom_call.1} parent=11 // pred_region
          _
        $region36: #{tpu_custom_call.1} parent=11 // pred_fallthru
          _
        // Predicated region
        $region37: #{tpu_custom_call.1} parent=11 // pred_check
          %p415 = pneg %p251
        $region38: #{tpu_custom_call.1} parent=11 // pred_check_branch
          %417 = sbr.rel (%p415) target = $region40
        $region39: #{tpu_custom_call.1} parent=11 // pred_region
          _
        $region40: #{tpu_custom_call.1} parent=11 // pred_fallthru
          _
        // Predicated region
        $region41: #{tpu_custom_call.1} parent=11 // pred_check
          %p418 = pneg %p272
        $region42: #{tpu_custom_call.1} parent=11 // pred_check_branch
          %420 = sbr.rel (%p418) target = $region44
        $region43: #{tpu_custom_call.1} parent=11 // pred_region
          _
        $region44: #{tpu_custom_call.1} parent=11 // pred_fallthru
          _
        // Predicated region
        $region45: #{tpu_custom_call.1} parent=11 // pred_check
          %p421 = pneg %p293
        $region46: #{tpu_custom_call.1} parent=11 // pred_check_branch
          %423 = sbr.rel (%p421) target = $region48
        $region47: #{tpu_custom_call.1} parent=11 // pred_region
          _
        $region48: #{tpu_custom_call.1} parent=11 // pred_fallthru
          _
        // Predicated region
        $region49: #{tpu_custom_call.1} parent=11 // pred_check
          %p424 = pneg %p314
        $region50: #{tpu_custom_call.1} parent=11 // pred_check_branch
          %426 = sbr.rel (%p424) target = $region52
        $region51: #{tpu_custom_call.1} parent=11 // pred_region
          _
        $region52: #{tpu_custom_call.1} parent=11 // pred_fallthru
          _
        // Predicated region
        $region53: #{tpu_custom_call.1} parent=11 // pred_check
          %p427 = pneg %p335
        $region54: #{tpu_custom_call.1} parent=11 // pred_check_branch
          %429 = sbr.rel (%p427) target = $region56
        $region55: #{tpu_custom_call.1} parent=11 // pred_region
          _
        $region56: #{tpu_custom_call.1} parent=11 // pred_fallthru
          _
        // Predicated region
        $region57: #{tpu_custom_call.1} parent=11 // pred_check
          %p430 = pneg %p356
        $region58: #{tpu_custom_call.1} parent=11 // pred_check_branch
          %432 = sbr.rel (%p430) target = $region60
        $region59: #{tpu_custom_call.1} parent=11 // pred_region
          _
        $region60: #{tpu_custom_call.1} parent=11 // pred_fallthru
          _
      $region12: #{tpu_custom_call.1} parent=5 // pred_fallthru
        _
      %p433 = scmp.lt.s32.totalorder %s26, 2
      // Predicated region
      $region61: #{tpu_custom_call.1} parent=5 // pred_check
        %p434 = pneg %p433
      $region62: #{tpu_custom_call.1} parent=5 // pred_check_branch
        %436 = sbr.rel (%p434) target = $region64
      $region63: #{tpu_custom_call.1} parent=5 // pred_region
        // Predicated region
        $region65: #{tpu_custom_call.1} parent=63 // pred_check
          %p437 = pneg %p46
        $region66: #{tpu_custom_call.1} parent=63 // pred_check_branch
          %439 = sbr.rel (%p437) target = $region68
        $region67: #{tpu_custom_call.1} parent=63 // pred_region
          %p440 = scmp.lt.s32.totalorder %s26, 1
          %s441 = scalar_select %p440, %s26, 1
          %s442 = smul.addr %s441, 32
          %s443 = smul.addr %s442, 8
          %s444 = scalar_lea.vmem %s0, %s443
        $region68: #{tpu_custom_call.1} parent=63 // pred_fallthru
          _
        // Predicated region
        $region69: #{tpu_custom_call.1} parent=63 // pred_check
          %p445 = pneg %p72
        $region70: #{tpu_custom_call.1} parent=63 // pred_check_branch
          %447 = sbr.rel (%p445) target = $region72
        $region71: #{tpu_custom_call.1} parent=63 // pred_region
          %p448 = scmp.lt.s32.totalorder %s26, 1
          %s449 = scalar_select %p448, %s26, 1
          %s450 = smul.addr %s449, 8
          %s451 = smul.addr %s450, 8
          %s452 = scalar_lea.vmem %s1, %s451
        $region72: #{tpu_custom_call.1} parent=63 // pred_fallthru
          _
        // Predicated region
        $region73: #{tpu_custom_call.1} parent=63 // pred_check
          %p453 = pneg %p98
        $region74: #{tpu_custom_call.1} parent=63 // pred_check_branch
          %455 = sbr.rel (%p453) target = $region76
        $region75: #{tpu_custom_call.1} parent=63 // pred_region
          %p456 = scmp.lt.s32.totalorder %s26, 1
          %s457 = scalar_select %p456, %s26, 1
          %s458 = smul.addr %s457, 2
          %s459 = smul.addr %s458, 8
          %s460 = scalar_lea.vmem %s2, %s459
        $region76: #{tpu_custom_call.1} parent=63 // pred_fallthru
          _
      $region64: #{tpu_custom_call.1} parent=5 // pred_fallthru
        _
      %p461 = scmp.le.s32.totalorder 1, %s26
      %p462 = scmp.lt.s32.totalorder %s26, 3
      %p463 = pnand %p461, %p462
      %p464 = pneg %p463
      // Predicated region
      $region77: #{tpu_custom_call.1} parent=5 // pred_check
        _
      $region78: #{tpu_custom_call.1} parent=5 // pred_check_branch
        %466 = sbr.rel (%p463) target = $region80
      $region79: #{tpu_custom_call.1} parent=5 // pred_region
        %s467 = ssub.s32 %s26, 1
        %p468 = scmp.lt.s32.totalorder %s31, 1
        %s469 = scalar_select %p468, %s31, 1
        %s470 = smul.addr %s469, 32
        %s471 = smul.addr %s470, 8
        %s472 = scalar_lea.vmem %s0, %s471
        %p473 = pneg %p52
        %p474 = pneg %p49
        %p475 = scmp.lt.s32.totalorder %s31, 1
        %s476 = scalar_select %p475, %s31, 1
        %s477 = smul.addr %s476, 8
        %s478 = smul.addr %s477, 8
        %s479 = scalar_lea.vmem %s1, %s478
        %p480 = pneg %p78
        %p481 = pneg %p75
        %p482 = scmp.lt.s32.totalorder %s31, 1
        %s483 = scalar_select %p482, %s31, 1
        %s484 = smul.addr %s483, 2
        %s485 = smul.addr %s484, 8
        %s486 = scalar_lea.vmem %s2, %s485
        %p487 = pneg %p104
        %p488 = pneg %p101
        %p489 = pneg %p125
        %p490 = pneg %p122
        %p491 = pneg %p146
        %p492 = pneg %p143
        %p493 = pneg %p167
        %p494 = pneg %p164
        %p495 = pneg %p188
        %p496 = pneg %p185
        %p497 = pneg %p209
        %p498 = pneg %p206
        %p499 = pneg %p230
        %p500 = pneg %p227
        %p501 = pneg %p251
        %p502 = pneg %p248
        %p503 = pneg %p272
        %p504 = pneg %p269
        %p505 = pneg %p293
        %p506 = pneg %p290
        %p507 = pneg %p314
        %p508 = pneg %p311
        %p509 = pneg %p335
        %p510 = pneg %p332
        %p511 = pneg %p356
        %p512 = pneg %p353
        %p513 = pneg %p382
        %p514 = pneg %p379
        %s515 = sand.u32 %s369, 1
        %s516 = scalar_lea.sflag [#allocation6], %s515
        %s517 = sand.u32 %s369, 1
        %s518 = smul.addr %s517, 64
        %s519 = scalar_lea.vmem [#allocation5], %s518
        %p520 = scmp.lt.s32.totalorder %s31, 1
        %s521 = scalar_select %p520, %s31, 1
        %s522 = smul.addr %s521, 32
        %s523 = smul.addr %s522, 8
        %s524 = scalar_lea.vmem %s0, %s523
        %p525 = scmp.lt.s32.totalorder %s31, 1
        %s526 = scalar_select %p525, %s31, 1
        %s527 = smul.addr %s526, 8
        %s528 = smul.addr %s527, 8
        %s529 = scalar_lea.vmem %s1, %s528
        %p530 = scmp.lt.s32.totalorder %s31, 1
        %s531 = scalar_select %p530, %s31, 1
        %s532 = smul.addr %s531, 2
        %s533 = smul.addr %s532, 8
        %s534 = scalar_lea.vmem %s2, %s533
        %v536 = vld [vmem:[%s524] sm:$0xff]
        %v537 = vld [vmem:[%s524 + $0x8] sm:$0xff]
        %v538 = vld [vmem:[%s524 + $0x10] sm:$0xff]
        %v539 = vld [vmem:[%s524 + $0x18] sm:$0xff]
        %v540 = vld [vmem:[%s524 + $0x20] sm:$0xff]
        %v541 = vld [vmem:[%s524 + $0x28] sm:$0xff]
        %v542 = vld [vmem:[%s524 + $0x30] sm:$0xff]
        %v543 = vld [vmem:[%s524 + $0x38] sm:$0xff]
        %v544 = vld [vmem:[%s524 + $0x40] sm:$0xff]
        %v545 = vld [vmem:[%s524 + $0x48] sm:$0xff]
        %v546 = vld [vmem:[%s524 + $0x50] sm:$0xff]
        %v547 = vld [vmem:[%s524 + $0x58] sm:$0xff]
        %v548 = vld [vmem:[%s524 + $0x60] sm:$0xff]
        %v549 = vld [vmem:[%s524 + $0x68] sm:$0xff]
        %v550 = vld [vmem:[%s524 + $0x70] sm:$0xff]
        %v551 = vld [vmem:[%s524 + $0x78] sm:$0xff]
        %v552 = vld [vmem:[%s524 + $0x80] sm:$0xff]
        %v553 = vld [vmem:[%s524 + $0x88] sm:$0xff]
        %v554 = vld [vmem:[%s524 + $0x90] sm:$0xff]
        %v555 = vld [vmem:[%s524 + $0x98] sm:$0xff]
        %v556 = vld [vmem:[%s524 + $0xa0] sm:$0xff]
        %v557 = vld [vmem:[%s524 + $0xa8] sm:$0xff]
        %v558 = vld [vmem:[%s524 + $0xb0] sm:$0xff]
        %v559 = vld [vmem:[%s524 + $0xb8] sm:$0xff]
        %v560 = vld [vmem:[%s524 + $0xc0] sm:$0xff]
        %v561 = vld [vmem:[%s524 + $0xc8] sm:$0xff]
        %v562 = vld [vmem:[%s524 + $0xd0] sm:$0xff]
        %v563 = vld [vmem:[%s524 + $0xd8] sm:$0xff]
        %v564 = vld [vmem:[%s524 + $0xe0] sm:$0xff]
        %v565 = vld [vmem:[%s524 + $0xe8] sm:$0xff]
        %v566 = vld [vmem:[%s524 + $0xf0] sm:$0xff]
        %v567 = vld [vmem:[%s524 + $0xf8] sm:$0xff]
        %v568 = vld [vmem:[%s529] sm:$0xff]
        %v569 = vld [vmem:[%s529 + $0x8] sm:$0xff]
        %v570 = vld [vmem:[%s529 + $0x10] sm:$0xff]
        %v571 = vld [vmem:[%s529 + $0x18] sm:$0xff]
        %v572 = vld [vmem:[%s529 + $0x20] sm:$0xff]
        %v573 = vld [vmem:[%s529 + $0x28] sm:$0xff]
        %v574 = vld [vmem:[%s529 + $0x30] sm:$0xff]
        %v575 = vld [vmem:[%s529 + $0x38] sm:$0xff]
        %v576 = vld [vmem:[%s534] sm:$0xff]
        %v577 = vld [vmem:[%s534 + $0x8] sm:$0xff]
        %v578 = vpack.c.bf16 %v577, %v576
        %v579 = vpack.c.bf16 %v568, %v568
        %v580 = vpack.c.bf16 %v569, %v569
        %v581 = vpack.c.bf16 %v570, %v570
        %v582 = vpack.c.bf16 %v571, %v571
        %v583 = vpack.c.bf16 %v572, %v572
        %v584 = vpack.c.bf16 %v573, %v573
        %v585 = vpack.c.bf16 %v574, %v574
        %v586 = vpack.c.bf16 %v575, %v575
        %v587 = vld [vmem:[%s3] sm:$0xf]
        %v588 = vld [vmem:[%s3 + $0x4] sm:$0xf]
        %v589 = vld [vmem:[%s3 + $0x8] sm:$0xf]
        %v590 = vld [vmem:[%s3 + $0xc] sm:$0xf]
        %v591 = vld [vmem:[%s3 + $0x10] sm:$0xf]
        %v592 = vld [vmem:[%s3 + $0x14] sm:$0xf]
        %v593 = vld [vmem:[%s3 + $0x18] sm:$0xf]
        %v594 = vld [vmem:[%s3 + $0x1c] sm:$0xf]
        %v603 = vunpack.c.l.b16 %v587
        %v604 = vunpack.c.l.b16 %v588
        %v605 = vunpack.c.l.b16 %v589
        %v606 = vunpack.c.l.b16 %v590
        %v607 = vunpack.c.l.b16 %v591
        %v608 = vunpack.c.l.b16 %v592
        %v609 = vunpack.c.l.b16 %v593
        %v610 = vunpack.c.l.b16 %v594
        %v611 = vpack.c.b16 %v604, %v603
        %v612 = vpack.c.b16 %v606, %v605
        %v613 = vpack.c.b16 %v608, %v607
        %v614 = vpack.c.b16 %v610, %v609
        %vm615 = vcmask 130048
        %v617 = vsel %vm615, %v611, 0
        %v620 = vsel %vm615, %v612, 0
        %v623 = vsel %vm615, %v613, 0
        %v626 = vsel %vm615, %v614, 0
        %628 = vmatpush.bf16.msra.mxu0 0
        %629 = vmatpush.bf16.msra.mxu0 0
        %630 = vmatpush.bf16.msra.mxu0 0
        %631 = vmatpush.bf16.msra.mxu0 0
        %632 = vmatpush.bf16.msra.mxu0 0
        %633 = vmatpush.bf16.msra.mxu0 0
        %634 = vmatpush.bf16.msra.mxu0 0
        %635 = vmatpush.bf16.msra.mxu0 %v578
        %636 = vmatmul.bf16.gmra.mxu0 %v617
        %v637 = vpop.f32.mrf.mxu0
        %v638 = vadd.f32 0.0, %v637
        %v639 = vpop.f32.mrf.mxu0
        %v640 = vadd.f32 0.0, %v639
        %641 = vmatmul.bf16.gmra.mxu0 %v620
        %v642 = vpop.f32.mrf.mxu0
        %v643 = vadd.f32 0.0, %v642
        %v644 = vpop.f32.mrf.mxu0
        %v645 = vadd.f32 0.0, %v644
        %646 = vmatmul.bf16.gmra.mxu0 %v623
        %v647 = vpop.f32.mrf.mxu0
        %v648 = vadd.f32 0.0, %v647
        %v649 = vpop.f32.mrf.mxu0
        %v650 = vadd.f32 0.0, %v649
        %651 = vmatmul.bf16.gmra.mxu0 %v626
        %v652 = vpop.f32.mrf.mxu0
        %v653 = vadd.f32 0.0, %v652
        %v654 = vpop.f32.mrf.mxu0
        %v655 = vadd.f32 0.0, %v654
        %656 = vdwg.mxu0
        %v657 = vpack.c.bf16 %v638, %v638
        %v658 = vpack.c.bf16 %v640, %v640
        %v659 = vpack.c.bf16 %v643, %v643
        %v660 = vpack.c.bf16 %v645, %v645
        %v661 = vpack.c.bf16 %v648, %v648
        %v662 = vpack.c.bf16 %v650, %v650
        %v663 = vpack.c.bf16 %v653, %v653
        %v664 = vpack.c.bf16 %v655, %v655
        %vm665 = vcmask 191488
        %666 = vst.msk [vmem:[#allocation2] sm:$0xf] %vm665, 0
        %vm667 = vcmask 188416
        %vm668 = vsmask.f32 256
        %vm669 = vmand %vm667, %vm668
        %v670 = vld [vmem:[#allocation2 + $0x4] sm:$0x1]
        %v671 = vsel %vm669, 0, %v670
        %672 = vst [vmem:[#allocation2 + $0x4] sm:$0x1] %v671
        %vm673 = vcmask 191488
        %vm674 = vsmask.f32 7938
        %vm675 = vmand %vm673, %vm674
        %v676 = vld [vmem:[#allocation2 + $0x24] sm:$0xf]
        %v677 = vsel %vm675, 0, %v676
        %678 = vst [vmem:[#allocation2 + $0x24] sm:$0xf] %v677
        %vm679 = vcmask 188416
        %680 = vst.msk [vmem:[#allocation2 + $0x28] sm:$0x1] %vm679, 0
        %vm681 = vsmask.f32 4368
        %vm682 = vmor %vm668, %vm681
        %v684 = vshrl.u32 %v579, 16
        %v686 = vrot.slane %v684, 7
        %v687 = vshll.u32 %v579, 16
        %v689 = vor.u32 %v686, %v687
        %v690 = vrot.slane %v686, 4
        %v692 = vshrl.u32 %v580, 16
        %v694 = vrot.slane %v692, 7
        %v695 = vshll.u32 %v580, 16
        %v697 = vor.u32 %v694, %v695
        %v698 = vsel %vm682, %v690, %v697
        %v699 = vrot.slane %v694, 4
        %v701 = vshrl.u32 %v581, 16
        %v703 = vrot.slane %v701, 7
        %v704 = vshll.u32 %v581, 16
        %v706 = vor.u32 %v703, %v704
        %v707 = vsel %vm682, %v699, %v706
        %v708 = vrot.slane %v703, 4
        %v710 = vshrl.u32 %v582, 16
        %v712 = vrot.slane %v710, 7
        %v713 = vshll.u32 %v582, 16
        %v715 = vor.u32 %v712, %v713
        %v716 = vsel %vm682, %v708, %v715
        %v717 = vrot.slane %v712, 4
        %v719 = vshrl.u32 %v583, 16
        %v721 = vrot.slane %v719, 7
        %v722 = vshll.u32 %v583, 16
        %v724 = vor.u32 %v721, %v722
        %v725 = vsel %vm682, %v717, %v724
        %v726 = vrot.slane %v721, 4
        %v728 = vshrl.u32 %v584, 16
        %v730 = vrot.slane %v728, 7
        %v731 = vshll.u32 %v584, 16
        %v733 = vor.u32 %v730, %v731
        %v734 = vsel %vm682, %v726, %v733
        %v735 = vrot.slane %v730, 4
        %v737 = vshrl.u32 %v585, 16
        %v739 = vrot.slane %v737, 7
        %v740 = vshll.u32 %v585, 16
        %v742 = vor.u32 %v739, %v740
        %v743 = vsel %vm682, %v735, %v742
        %v744 = vrot.slane %v739, 4
        %v746 = vshrl.u32 %v586, 16
        %v748 = vrot.slane %v746, 7
        %v749 = vshll.u32 %v586, 16
        %v751 = vor.u32 %v748, %v749
        %v752 = vsel %vm682, %v744, %v751
        %v753 = vrot.slane %v748, 4
        %vm763 = vcmask 60416
        %vm764 = vmand %vm763, %vm674
        %v765 = vld [vmem:[#allocation2 + $0x4] sm:$0xf]
        %v766 = vsel %vm764, %v689, %v765
        %767 = vst [vmem:[#allocation2 + $0x4] sm:$0xf] %v766
        %vm768 = vcmask 60416
        %769 = vst.msk [vmem:[#allocation2 + $0x8] sm:$0xf] %vm768, %v698
        %770 = vst.msk [vmem:[#allocation2 + $0xc] sm:$0xf] %vm768, %v707
        %771 = vst.msk [vmem:[#allocation2 + $0x10] sm:$0xf] %vm768, %v716
        %772 = vst.msk [vmem:[#allocation2 + $0x14] sm:$0xf] %vm768, %v725
        %773 = vst.msk [vmem:[#allocation2 + $0x18] sm:$0xf] %vm768, %v734
        %774 = vst.msk [vmem:[#allocation2 + $0x1c] sm:$0xf] %vm768, %v743
        %775 = vst.msk [vmem:[#allocation2 + $0x20] sm:$0xf] %vm768, %v752
        %vm776 = vcmask 57344
        %vm777 = vmand %vm776, %vm668
        %v778 = vld [vmem:[#allocation2 + $0x24] sm:$0x1]
        %v779 = vsel %vm777, %v753, %v778
        %780 = vst [vmem:[#allocation2 + $0x24] sm:$0x1] %v779
        %v782 = vshrl.u32 %v657, 16
        %v784 = vrot.slane %v782, 7
        %v785 = vshll.u32 %v657, 16
        %v787 = vor.u32 %v784, %v785
        %v788 = vrot.slane %v784, 4
        %v790 = vshrl.u32 %v658, 16
        %v792 = vrot.slane %v790, 7
        %v793 = vshll.u32 %v658, 16
        %v795 = vor.u32 %v792, %v793
        %v796 = vsel %vm682, %v788, %v795
        %v797 = vrot.slane %v792, 4
        %v799 = vshrl.u32 %v659, 16
        %v801 = vrot.slane %v799, 7
        %v802 = vshll.u32 %v659, 16
        %v804 = vor.u32 %v801, %v802
        %v805 = vsel %vm682, %v797, %v804
        %v806 = vrot.slane %v801, 4
        %v808 = vshrl.u32 %v660, 16
        %v810 = vrot.slane %v808, 7
        %v811 = vshll.u32 %v660, 16
        %v813 = vor.u32 %v810, %v811
        %v814 = vsel %vm682, %v806, %v813
        %v815 = vrot.slane %v810, 4
        %v817 = vshrl.u32 %v661, 16
        %v819 = vrot.slane %v817, 7
        %v820 = vshll.u32 %v661, 16
        %v822 = vor.u32 %v819, %v820
        %v823 = vsel %vm682, %v815, %v822
        %v824 = vrot.slane %v819, 4
        %v826 = vshrl.u32 %v662, 16
        %v828 = vrot.slane %v826, 7
        %v829 = vshll.u32 %v662, 16
        %v831 = vor.u32 %v828, %v829
        %v832 = vsel %vm682, %v824, %v831
        %v833 = vrot.slane %v828, 4
        %v835 = vshrl.u32 %v663, 16
        %v837 = vrot.slane %v835, 7
        %v838 = vshll.u32 %v663, 16
        %v840 = vor.u32 %v837, %v838
        %v841 = vsel %vm682, %v833, %v840
        %v842 = vrot.slane %v837, 4
        %v844 = vshrl.u32 %v664, 16
        %v846 = vrot.slane %v844, 7
        %v847 = vshll.u32 %v664, 16
        %v849 = vor.u32 %v846, %v847
        %v850 = vsel %vm682, %v842, %v849
        %v851 = vrot.slane %v846, 4
        %852 = vrot.lane.b32.xlu0 %v787, 8
        %v853 = vpop.permute.xlu0 %852
        %854 = vrot.lane.b32.xlu0 %v796, 8
        %v855 = vpop.permute.xlu0 %854
        %856 = vrot.lane.b32.xlu0 %v805, 8
        %v857 = vpop.permute.xlu0 %856
        %858 = vrot.lane.b32.xlu0 %v814, 8
        %v859 = vpop.permute.xlu0 %858
        %860 = vrot.lane.b32.xlu0 %v823, 8
        %v861 = vpop.permute.xlu0 %860
        %862 = vrot.lane.b32.xlu0 %v832, 8
        %v863 = vpop.permute.xlu0 %862
        %864 = vrot.lane.b32.xlu0 %v841, 8
        %v865 = vpop.permute.xlu0 %864
        %866 = vrot.lane.b32.xlu0 %v850, 8
        %v867 = vpop.permute.xlu0 %866
        %868 = vrot.lane.b32.xlu0 %v851, 8
        %v869 = vpop.permute.xlu0 %868
        %vm879 = vcmask 191552
        %vm880 = vmand %vm879, %vm674
        %v881 = vld [vmem:[#allocation2 + $0x4] sm:$0xf]
        %v882 = vsel %vm880, %v853, %v881
        %883 = vst [vmem:[#allocation2 + $0x4] sm:$0xf] %v882
        %vm884 = vcmask 191552
        %885 = vst.msk [vmem:[#allocation2 + $0x8] sm:$0xf] %vm884, %v855
        %886 = vst.msk [vmem:[#allocation2 + $0xc] sm:$0xf] %vm884, %v857
        %887 = vst.msk [vmem:[#allocation2 + $0x10] sm:$0xf] %vm884, %v859
        %888 = vst.msk [vmem:[#allocation2 + $0x14] sm:$0xf] %vm884, %v861
        %889 = vst.msk [vmem:[#allocation2 + $0x18] sm:$0xf] %vm884, %v863
        %890 = vst.msk [vmem:[#allocation2 + $0x1c] sm:$0xf] %vm884, %v865
        %891 = vst.msk [vmem:[#allocation2 + $0x20] sm:$0xf] %vm884, %v867
        %vm892 = vcmask 188480
        %vm893 = vmand %vm892, %vm668
        %v894 = vld [vmem:[#allocation2 + $0x24] sm:$0x1]
        %v895 = vsel %vm893, %v869, %v894
        %896 = vst [vmem:[#allocation2 + $0x24] sm:$0x1] %v895
        %v897 = vlaneseq
        %v898 = vshrl.u32 %v897, 7
        %v899 = vadd.s32 %v898, 8
        %v900 = vadd.s32 %v898, 16
        %v901 = vadd.s32 %v898, 24
        %v902 = vadd.s32 %v898, 32
        %v903 = vadd.s32 %v898, 40
        %v904 = vadd.s32 %v898, 48
        %v905 = vadd.s32 %v898, 56
        %vm906 = vcmp.lt.s32.totalorder %v898, 0
        %v907 = vsub.s32 0, %v898
        %v908 = vsel %vm906, %v907, %v898
        %v909 = vshrl.u32 %v908, 3
        %v910 = vand.u32 %v908, 7
        %v911 = vsub.s32 0, %v910
        %v912 = vsel %vm906, %v911, %v910
        %vm913 = vcmp.lt.s32.totalorder %v899, 0
        %v914 = vsub.s32 0, %v899
        %v915 = vsel %vm913, %v914, %v899
        %v916 = vshrl.u32 %v915, 3
        %v917 = vand.u32 %v915, 7
        %v918 = vsub.s32 0, %v917
        %v919 = vsel %vm913, %v918, %v917
        %vm920 = vcmp.lt.s32.totalorder %v900, 0
        %v921 = vsub.s32 0, %v900
        %v922 = vsel %vm920, %v921, %v900
        %v923 = vshrl.u32 %v922, 3
        %v924 = vand.u32 %v922, 7
        %v925 = vsub.s32 0, %v924
        %v926 = vsel %vm920, %v925, %v924
        %vm927 = vcmp.lt.s32.totalorder %v901, 0
        %v928 = vsub.s32 0, %v901
        %v929 = vsel %vm927, %v928, %v901
        %v930 = vshrl.u32 %v929, 3
        %v931 = vand.u32 %v929, 7
        %v932 = vsub.s32 0, %v931
        %v933 = vsel %vm927, %v932, %v931
        %vm934 = vcmp.lt.s32.totalorder %v902, 0
        %v935 = vsub.s32 0, %v902
        %v936 = vsel %vm934, %v935, %v902
        %v937 = vshrl.u32 %v936, 3
        %v938 = vand.u32 %v936, 7
        %v939 = vsub.s32 0, %v938
        %v940 = vsel %vm934, %v939, %v938
        %vm941 = vcmp.lt.s32.totalorder %v903, 0
        %v942 = vsub.s32 0, %v903
        %v943 = vsel %vm941, %v942, %v903
        %v944 = vshrl.u32 %v943, 3
        %v945 = vand.u32 %v943, 7
        %v946 = vsub.s32 0, %v945
        %v947 = vsel %vm941, %v946, %v945
        %vm948 = vcmp.lt.s32.totalorder %v904, 0
        %v949 = vsub.s32 0, %v904
        %v950 = vsel %vm948, %v949, %v904
        %v951 = vshrl.u32 %v950, 3
        %v952 = vand.u32 %v950, 7
        %v953 = vsub.s32 0, %v952
        %v954 = vsel %vm948, %v953, %v952
        %vm955 = vcmp.lt.s32.totalorder %v905, 0
        %v956 = vsub.s32 0, %v905
        %v957 = vsel %vm955, %v956, %v905
        %v958 = vshrl.u32 %v957, 3
        %v959 = vand.u32 %v957, 7
        %v960 = vsub.s32 0, %v959
        %v961 = vsel %vm955, %v960, %v959
        %vm962 = vcmp.ne.s32.totalorder %v912, 0
        %vm963 = vcmp.ne.s32.totalorder %v919, 0
        %vm964 = vcmp.ne.s32.totalorder %v926, 0
        %vm965 = vcmp.ne.s32.totalorder %v933, 0
        %vm966 = vcmp.ne.s32.totalorder %v940, 0
        %vm967 = vcmp.ne.s32.totalorder %v947, 0
        %vm968 = vcmp.ne.s32.totalorder %v954, 0
        %vm969 = vcmp.ne.s32.totalorder %v961, 0
        %vm970 = vcmp.lt.s32.totalorder %v912, 0
        %vm971 = vcmp.lt.s32.totalorder %v919, 0
        %vm972 = vcmp.lt.s32.totalorder %v926, 0
        %vm973 = vcmp.lt.s32.totalorder %v933, 0
        %vm974 = vcmp.lt.s32.totalorder %v940, 0
        %vm975 = vcmp.lt.s32.totalorder %v947, 0
        %vm976 = vcmp.lt.s32.totalorder %v954, 0
        %vm977 = vcmp.lt.s32.totalorder %v961, 0
        %vm978 = vmand %vm970, %vm962
        %vm979 = vmand %vm971, %vm963
        %vm980 = vmand %vm972, %vm964
        %vm981 = vmand %vm973, %vm965
        %vm982 = vmand %vm974, %vm966
        %vm983 = vmand %vm975, %vm967
        %vm984 = vmand %vm976, %vm968
        %vm985 = vmand %vm977, %vm969
        %v986 = vadd.s32 %v912, 8
        %v987 = vadd.s32 %v919, 8
        %v988 = vadd.s32 %v926, 8
        %v989 = vadd.s32 %v933, 8
        %v990 = vadd.s32 %v940, 8
        %v991 = vadd.s32 %v947, 8
        %v992 = vadd.s32 %v954, 8
        %v993 = vadd.s32 %v961, 8
        %v994 = vsel %vm978, %v986, %v912
        %v995 = vsel %vm979, %v987, %v919
        %v996 = vsel %vm980, %v988, %v926
        %v997 = vsel %vm981, %v989, %v933
        %v998 = vsel %vm982, %v990, %v940
        %v999 = vsel %vm983, %v991, %v947
        %v1000 = vsel %vm984, %v992, %v954
        %v1001 = vsel %vm985, %v993, %v961
        %vm1002 = vcmp.gt.s32.totalorder %v994, 0
        %vm1003 = vcmp.gt.s32.totalorder %v995, 0
        %vm1004 = vcmp.gt.s32.totalorder %v996, 0
        %vm1005 = vcmp.gt.s32.totalorder %v997, 0
        %vm1006 = vcmp.gt.s32.totalorder %v998, 0
        %vm1007 = vcmp.gt.s32.totalorder %v999, 0
        %vm1008 = vcmp.gt.s32.totalorder %v1000, 0
        %vm1009 = vcmp.gt.s32.totalorder %v1001, 0
        %v1010 = vsel %vm1002, 1, 0
        %v1011 = vsel %vm1003, 1, 0
        %v1012 = vsel %vm1004, 1, 0
        %v1013 = vsel %vm1005, 1, 0
        %v1014 = vsel %vm1006, 1, 0
        %v1015 = vsel %vm1007, 1, 0
        %v1016 = vsel %vm1008, 1, 0
        %v1017 = vsel %vm1009, 1, 0
        %v1018 = vcvt.s32.f32 %v1010
        %v1019 = vcvt.s32.f32 %v1011
        %v1020 = vcvt.s32.f32 %v1012
        %v1021 = vcvt.s32.f32 %v1013
        %v1022 = vcvt.s32.f32 %v1014
        %v1023 = vcvt.s32.f32 %v1015
        %v1024 = vcvt.s32.f32 %v1016
        %v1025 = vcvt.s32.f32 %v1017
        %v1026 = vpack.c.bf16 %v1018, %v1018
        %v1027 = vpack.c.bf16 %v1019, %v1019
        %v1028 = vpack.c.bf16 %v1020, %v1020
        %v1029 = vpack.c.bf16 %v1021, %v1021
        %v1030 = vpack.c.bf16 %v1022, %v1022
        %v1031 = vpack.c.bf16 %v1023, %v1023
        %v1032 = vpack.c.bf16 %v1024, %v1024
        %v1033 = vpack.c.bf16 %v1025, %v1025
        %vm1034 = vcmp.lt.s32.totalorder %v994, 7
        %vm1035 = vcmp.lt.s32.totalorder %v995, 7
        %vm1036 = vcmp.lt.s32.totalorder %v996, 7
        %vm1037 = vcmp.lt.s32.totalorder %v997, 7
        %vm1038 = vcmp.lt.s32.totalorder %v998, 7
        %vm1039 = vcmp.lt.s32.totalorder %v999, 7
        %vm1040 = vcmp.lt.s32.totalorder %v1000, 7
        %vm1041 = vcmp.lt.s32.totalorder %v1001, 7
        %v1042 = vsel %vm1034, 1, 0
        %v1043 = vsel %vm1035, 1, 0
        %v1044 = vsel %vm1036, 1, 0
        %v1045 = vsel %vm1037, 1, 0
        %v1046 = vsel %vm1038, 1, 0
        %v1047 = vsel %vm1039, 1, 0
        %v1048 = vsel %vm1040, 1, 0
        %v1049 = vsel %vm1041, 1, 0
        %v1050 = vcvt.s32.f32 %v1042
        %v1051 = vcvt.s32.f32 %v1043
        %v1052 = vcvt.s32.f32 %v1044
        %v1053 = vcvt.s32.f32 %v1045
        %v1054 = vcvt.s32.f32 %v1046
        %v1055 = vcvt.s32.f32 %v1047
        %v1056 = vcvt.s32.f32 %v1048
        %v1057 = vcvt.s32.f32 %v1049
        %v1058 = vpack.c.bf16 %v1050, %v1050
        %v1059 = vpack.c.bf16 %v1051, %v1051
        %v1060 = vpack.c.bf16 %v1052, %v1052
        %v1061 = vpack.c.bf16 %v1053, %v1053
        %v1062 = vpack.c.bf16 %v1054, %v1054
        %v1063 = vpack.c.bf16 %v1055, %v1055
        %v1064 = vpack.c.bf16 %v1056, %v1056
        %v1065 = vpack.c.bf16 %v1057, %v1057
        %v1066 = vld [vmem:[#allocation2] sm:$0xf]
        %v1067 = vld [vmem:[#allocation2 + $0x4] sm:$0xf]
        %v1068 = vld [vmem:[#allocation2 + $0x8] sm:$0xf]
        %v1069 = vld [vmem:[#allocation2 + $0xc] sm:$0xf]
        %v1070 = vld [vmem:[#allocation2 + $0x10] sm:$0xf]
        %v1071 = vld [vmem:[#allocation2 + $0x14] sm:$0xf]
        %v1072 = vld [vmem:[#allocation2 + $0x18] sm:$0xf]
        %v1073 = vld [vmem:[#allocation2 + $0x1c] sm:$0xf]
        %v1074 = vunpack.c.l.bf16 %v1066
        %v1075 = vunpack.c.l.bf16 %v1067
        %v1076 = vunpack.c.l.bf16 %v1068
        %v1077 = vunpack.c.l.bf16 %v1069
        %v1078 = vunpack.c.l.bf16 %v1070
        %v1079 = vunpack.c.l.bf16 %v1071
        %v1080 = vunpack.c.l.bf16 %v1072
        %v1081 = vunpack.c.l.bf16 %v1073
        %v1082 = vunpack.c.l.bf16 %v1026
        %v1083 = vunpack.c.l.bf16 %v1027
        %v1084 = vunpack.c.l.bf16 %v1028
        %v1085 = vunpack.c.l.bf16 %v1029
        %v1086 = vunpack.c.l.bf16 %v1030
        %v1087 = vunpack.c.l.bf16 %v1031
        %v1088 = vunpack.c.l.bf16 %v1032
        %v1089 = vunpack.c.l.bf16 %v1033
        %v1090 = vmul.f32 %v1074, %v1082
        %v1091 = vmul.f32 %v1075, %v1083
        %v1092 = vmul.f32 %v1076, %v1084
        %v1093 = vmul.f32 %v1077, %v1085
        %v1094 = vmul.f32 %v1078, %v1086
        %v1095 = vmul.f32 %v1079, %v1087
        %v1096 = vmul.f32 %v1080, %v1088
        %v1097 = vmul.f32 %v1081, %v1089
        %v1098 = vpack.c.bf16 %v1091, %v1090
        %v1099 = vpack.c.bf16 %v1093, %v1092
        %v1100 = vpack.c.bf16 %v1095, %v1094
        %v1101 = vpack.c.bf16 %v1097, %v1096
        %v1102 = vld [vmem:[%s4] sm:$0xf]
        %v1103 = vld [vmem:[%s4 + $0x4] sm:$0xf]
        %v1104 = vld [vmem:[%s4 + $0x8] sm:$0xf]
        %v1105 = vld [vmem:[#allocation2 + $0x20] sm:$0x1]
        %s1106 = scalar_lea.vmem %s4, 12
        %v1107 = vld [vmem:[%s1106] sm:$0xf]
        %v1108 = vld [vmem:[%s1106 + $0x4] sm:$0xf]
        %v1109 = vld [vmem:[%s1106 + $0x8] sm:$0xf]
        %v1119 = vunpack.c.l.b16 %v1066
        %v1120 = vunpack.c.l.b16 %v1067
        %v1121 = vunpack.c.l.b16 %v1068
        %v1122 = vunpack.c.l.b16 %v1069
        %v1123 = vunpack.c.l.b16 %v1070
        %v1124 = vunpack.c.l.b16 %v1071
        %v1125 = vunpack.c.l.b16 %v1072
        %v1126 = vunpack.c.l.b16 %v1073
        %v1127 = vunpack.c.l.b16 %v1105
        %v1128 = vpack.c.b16 %v1120, %v1119
        %v1129 = vpack.c.b16 %v1122, %v1121
        %v1130 = vpack.c.b16 %v1124, %v1123
        %v1131 = vpack.c.b16 %v1126, %v1125
        %v1132 = vpack.c.b16 %v1127, %v1127
        %vm1133 = vsmask.f32 7424
        %v1135 = vshrl.u32 %v1128, 16
        %v1137 = vshll.u32 %v1128, 16
        %v1139 = vrot.slane %v1137, 1
        %v1140 = vor.u32 %v1135, %v1139
        %v1142 = vshll.u32 %v1129, 16
        %v1144 = vrot.slane %v1142, 1
        %v1145 = vsel %vm1133, %v1140, %v1144
        %v1146 = vshrl.u32 %v1129, 16
        %v1148 = vor.u32 %v1146, %v1144
        %v1150 = vshll.u32 %v1130, 16
        %v1152 = vrot.slane %v1150, 1
        %v1153 = vsel %vm1133, %v1148, %v1152
        %v1154 = vshrl.u32 %v1130, 16
        %v1156 = vor.u32 %v1154, %v1152
        %v1158 = vshll.u32 %v1131, 16
        %v1160 = vrot.slane %v1158, 1
        %v1161 = vsel %vm1133, %v1156, %v1160
        %v1162 = vshrl.u32 %v1131, 16
        %v1164 = vor.u32 %v1162, %v1160
        %v1166 = vshll.u32 %v1132, 16
        %v1168 = vrot.slane %v1166, 1
        %v1169 = vsel %vm1133, %v1164, %v1168
        %v1173 = vunpack.c.l.b16 %v1107
        %v1174 = vunpack.c.l.b16 %v1108
        %v1175 = vunpack.c.l.b16 %v1109
        %v1176 = vpack.c.b16 %v1174, %v1173
        %v1177 = vpack.c.b16 %v1175, %v1175
        %vm1179 = vcmask 195584
        %v1181 = vsel %vm1179, %v1145, 0
        %v1184 = vsel %vm1179, %v1153, 0
        %v1187 = vsel %vm1179, %v1161, 0
        %v1190 = vsel %vm1179, %v1169, 0
        %vm1192 = vcmask 1043456
        %v1194 = vsel %vm1192, %v1177, 0
        %1196 = vmatpush.bf16.msra.mxu0 0
        %1197 = vmatpush.bf16.msra.mxu0 0
        %1198 = vmatpush.bf16.msra.mxu0 0
        %1199 = vmatpush.bf16.msra.mxu0 0
        %1200 = vmatpush.bf16.msra.mxu0 0
        %1201 = vmatpush.bf16.msra.mxu0 0
        %1202 = vmatpush.bf16.msra.mxu0 %v1194
        %1203 = vmatpush.bf16.msra.mxu0 %v1176
        %1204 = vmatmul.bf16.gmra.mxu0 %v1181
        %v1205 = vpop.f32.mrf.mxu0
        %v1206 = vadd.f32 0.0, %v1205
        %v1207 = vpop.f32.mrf.mxu0
        %v1208 = vadd.f32 0.0, %v1207
        %1209 = vmatmul.bf16.gmra.mxu0 %v1184
        %v1210 = vpop.f32.mrf.mxu0
        %v1211 = vadd.f32 0.0, %v1210
        %v1212 = vpop.f32.mrf.mxu0
        %v1213 = vadd.f32 0.0, %v1212
        %1214 = vmatmul.bf16.gmra.mxu0 %v1187
        %v1215 = vpop.f32.mrf.mxu0
        %v1216 = vadd.f32 0.0, %v1215
        %v1217 = vpop.f32.mrf.mxu0
        %v1218 = vadd.f32 0.0, %v1217
        %1219 = vmatmul.bf16.gmra.mxu0 %v1190
        %v1220 = vpop.f32.mrf.mxu0
        %v1221 = vadd.f32 0.0, %v1220
        %v1222 = vpop.f32.mrf.mxu0
        %v1223 = vadd.f32 0.0, %v1222
        %1224 = vdwg.mxu0
        %v1228 = vunpack.c.l.b16 %v1102
        %v1229 = vunpack.c.l.b16 %v1103
        %v1230 = vunpack.c.l.b16 %v1104
        %v1231 = vpack.c.b16 %v1229, %v1228
        %v1232 = vpack.c.b16 %v1230, %v1230
        %v1235 = vsel %vm1179, %v1098, 0
        %v1238 = vsel %vm1179, %v1099, 0
        %v1241 = vsel %vm1179, %v1100, 0
        %v1244 = vsel %vm1179, %v1101, 0
        %v1247 = vsel %vm1192, %v1232, 0
        %1249 = vmatpush.bf16.msra.mxu0 0
        %1250 = vmatpush.bf16.msra.mxu0 0
        %1251 = vmatpush.bf16.msra.mxu0 0
        %1252 = vmatpush.bf16.msra.mxu0 0
        %1253 = vmatpush.bf16.msra.mxu0 0
        %1254 = vmatpush.bf16.msra.mxu0 0
        %1255 = vmatpush.bf16.msra.mxu0 %v1247
        %1256 = vmatpush.bf16.msra.mxu0 %v1231
        %1257 = vmatmul.bf16.gmra.mxu0 %v1235
        %v1258 = vpop.f32.mrf.mxu0
        %v1259 = vadd.f32 %v1206, %v1258
        %v1260 = vpop.f32.mrf.mxu0
        %v1261 = vadd.f32 %v1208, %v1260
        %1262 = vmatmul.bf16.gmra.mxu0 %v1238
        %v1263 = vpop.f32.mrf.mxu0
        %v1264 = vadd.f32 %v1211, %v1263
        %v1265 = vpop.f32.mrf.mxu0
        %v1266 = vadd.f32 %v1213, %v1265
        %1267 = vmatmul.bf16.gmra.mxu0 %v1241
        %v1268 = vpop.f32.mrf.mxu0
        %v1269 = vadd.f32 %v1216, %v1268
        %v1270 = vpop.f32.mrf.mxu0
        %v1271 = vadd.f32 %v1218, %v1270
        %1272 = vmatmul.bf16.gmra.mxu0 %v1244
        %v1273 = vpop.f32.mrf.mxu0
        %v1274 = vadd.f32 %v1221, %v1273
        %v1275 = vpop.f32.mrf.mxu0
        %v1276 = vadd.f32 %v1223, %v1275
        %1277 = vdwg.mxu0
        %v1278 = vld [vmem:[#allocation2] sm:$0xe]
        %v1279 = vunpack.c.l.bf16 %v1278
        %v1280 = vunpack.c.l.bf16 %v1105
        %v1281 = vunpack.c.l.bf16 %v1058
        %v1282 = vunpack.c.l.bf16 %v1059
        %v1283 = vunpack.c.l.bf16 %v1060
        %v1284 = vunpack.c.l.bf16 %v1061
        %v1285 = vunpack.c.l.bf16 %v1062
        %v1286 = vunpack.c.l.bf16 %v1063
        %v1287 = vunpack.c.l.bf16 %v1064
        %v1288 = vunpack.c.l.bf16 %v1065
        %vm1297 = vcmask 1041408
        %v1298 = vrot.slane %v1281, 6
        %v1299 = vrot.slane %v1282, 6
        %v1300 = vsel %vm1297, %v1298, %v1299
        %v1301 = vrot.slane %v1283, 6
        %v1302 = vsel %vm1297, %v1299, %v1301
        %v1303 = vrot.slane %v1284, 6
        %v1304 = vsel %vm1297, %v1301, %v1303
        %v1305 = vrot.slane %v1285, 6
        %v1306 = vsel %vm1297, %v1303, %v1305
        %v1307 = vrot.slane %v1286, 6
        %v1308 = vsel %vm1297, %v1305, %v1307
        %v1309 = vrot.slane %v1287, 6
        %v1310 = vsel %vm1297, %v1307, %v1309
        %v1311 = vrot.slane %v1288, 6
        %v1312 = vsel %vm1297, %v1309, %v1311
        %v1322 = vmul.f32 %v1279, %v1298
        %v1323 = vmul.f32 %v1075, %v1300
        %v1324 = vmul.f32 %v1076, %v1302
        %v1325 = vmul.f32 %v1077, %v1304
        %v1326 = vmul.f32 %v1078, %v1306
        %v1327 = vmul.f32 %v1079, %v1308
        %v1328 = vmul.f32 %v1080, %v1310
        %v1329 = vmul.f32 %v1081, %v1312
        %v1330 = vmul.f32 %v1280, %v1311
        %v1331 = vpack.c.bf16 %v1323, %v1322
        %v1332 = vpack.c.bf16 %v1325, %v1324
        %v1333 = vpack.c.bf16 %v1327, %v1326
        %v1334 = vpack.c.bf16 %v1329, %v1328
        %v1335 = vpack.c.bf16 %v1330, %v1330
        %s1336 = scalar_lea.vmem %s4, 24
        %v1337 = vld [vmem:[%s1336] sm:$0xf]
        %v1338 = vld [vmem:[%s1336 + $0x4] sm:$0xf]
        %v1339 = vld [vmem:[%s1336 + $0x8] sm:$0xf]
        %vm1345 = vcmask 1046528
        %v1346 = vrot.slane %v1331, 1
        %v1347 = vrot.slane %v1332, 1
        %v1348 = vsel %vm1345, %v1346, %v1347
        %v1349 = vrot.slane %v1333, 1
        %v1350 = vsel %vm1345, %v1347, %v1349
        %v1351 = vrot.slane %v1334, 1
        %v1352 = vsel %vm1345, %v1349, %v1351
        %v1353 = vrot.slane %v1335, 1
        %v1354 = vsel %vm1345, %v1351, %v1353
        %v1358 = vunpack.c.l.b16 %v1337
        %v1359 = vunpack.c.l.b16 %v1338
        %v1360 = vunpack.c.l.b16 %v1339
        %v1361 = vpack.c.b16 %v1359, %v1358
        %v1362 = vpack.c.b16 %v1360, %v1360
        %v1365 = vsel %vm1179, %v1348, 0
        %v1368 = vsel %vm1179, %v1350, 0
        %v1371 = vsel %vm1179, %v1352, 0
        %v1374 = vsel %vm1179, %v1354, 0
        %v1377 = vsel %vm1192, %v1362, 0
        %1379 = vmatpush.bf16.msra.mxu0 0
        %1380 = vmatpush.bf16.msra.mxu0 0
        %1381 = vmatpush.bf16.msra.mxu0 0
        %1382 = vmatpush.bf16.msra.mxu0 0
        %1383 = vmatpush.bf16.msra.mxu0 0
        %1384 = vmatpush.bf16.msra.mxu0 0
        %1385 = vmatpush.bf16.msra.mxu0 %v1377
        %1386 = vmatpush.bf16.msra.mxu0 %v1361
        %1387 = vmatmul.bf16.gmra.mxu0 %v1365
        %v1388 = vpop.f32.mrf.mxu0
        %v1389 = vadd.f32 0.0, %v1388
        %v1390 = vpop.f32.mrf.mxu0
        %v1391 = vadd.f32 0.0, %v1390
        %1392 = vmatmul.bf16.gmra.mxu0 %v1368
        %v1393 = vpop.f32.mrf.mxu0
        %v1394 = vadd.f32 0.0, %v1393
        %v1395 = vpop.f32.mrf.mxu0
        %v1396 = vadd.f32 0.0, %v1395
        %1397 = vmatmul.bf16.gmra.mxu0 %v1371
        %v1398 = vpop.f32.mrf.mxu0
        %v1399 = vadd.f32 0.0, %v1398
        %v1400 = vpop.f32.mrf.mxu0
        %v1401 = vadd.f32 0.0, %v1400
        %1402 = vmatmul.bf16.gmra.mxu0 %v1374
        %v1403 = vpop.f32.mrf.mxu0
        %v1404 = vadd.f32 0.0, %v1403
        %v1405 = vpop.f32.mrf.mxu0
        %v1406 = vadd.f32 0.0, %v1405
        %1407 = vdwg.mxu0
        %v1408 = vadd.f32 %v1259, %v1389
        %v1409 = vadd.f32 %v1261, %v1391
        %v1410 = vadd.f32 %v1264, %v1394
        %v1411 = vadd.f32 %v1266, %v1396
        %v1412 = vadd.f32 %v1269, %v1399
        %v1413 = vadd.f32 %v1271, %v1401
        %v1414 = vadd.f32 %v1274, %v1404
        %v1415 = vadd.f32 %v1276, %v1406
        %v1416 = vld [vmem:[#allocation2 + $0x20] sm:$0xf]
        %v1417 = vunpack.c.l.bf16 %v1416
        %v1418 = vmul.f32 %v1075, %v1082
        %v1419 = vmul.f32 %v1076, %v1083
        %v1420 = vmul.f32 %v1077, %v1084
        %v1421 = vmul.f32 %v1078, %v1085
        %v1422 = vmul.f32 %v1079, %v1086
        %v1423 = vmul.f32 %v1080, %v1087
        %v1424 = vmul.f32 %v1081, %v1088
        %v1425 = vmul.f32 %v1417, %v1089
        %v1426 = vpack.c.bf16 %v1419, %v1418
        %v1427 = vpack.c.bf16 %v1421, %v1420
        %v1428 = vpack.c.bf16 %v1423, %v1422
        %v1429 = vpack.c.bf16 %v1425, %v1424
        %s1430 = scalar_lea.vmem %s4, 36
        %v1431 = vld [vmem:[%s1430] sm:$0xf]
        %v1432 = vld [vmem:[%s1430 + $0x4] sm:$0xf]
        %v1433 = vld [vmem:[%s1430 + $0x8] sm:$0xf]
        %v1437 = vunpack.c.l.b16 %v1431
        %v1438 = vunpack.c.l.b16 %v1432
        %v1439 = vunpack.c.l.b16 %v1433
        %v1440 = vpack.c.b16 %v1438, %v1437
        %v1441 = vpack.c.b16 %v1439, %v1439
        %v1444 = vsel %vm1179, %v1426, 0
        %v1447 = vsel %vm1179, %v1427, 0
        %v1450 = vsel %vm1179, %v1428, 0
        %v1453 = vsel %vm1179, %v1429, 0
        %v1456 = vsel %vm1192, %v1441, 0
        %1458 = vmatpush.bf16.msra.mxu0 0
        %1459 = vmatpush.bf16.msra.mxu0 0
        %1460 = vmatpush.bf16.msra.mxu0 0
        %1461 = vmatpush.bf16.msra.mxu0 0
        %1462 = vmatpush.bf16.msra.mxu0 0
        %1463 = vmatpush.bf16.msra.mxu0 0
        %1464 = vmatpush.bf16.msra.mxu0 %v1456
        %1465 = vmatpush.bf16.msra.mxu0 %v1440
        %1466 = vmatmul.bf16.gmra.mxu0 %v1444
        %v1467 = vpop.f32.mrf.mxu0
        %v1468 = vadd.f32 0.0, %v1467
        %v1469 = vpop.f32.mrf.mxu0
        %v1470 = vadd.f32 0.0, %v1469
        %1471 = vmatmul.bf16.gmra.mxu0 %v1447
        %v1472 = vpop.f32.mrf.mxu0
        %v1473 = vadd.f32 0.0, %v1472
        %v1474 = vpop.f32.mrf.mxu0
        %v1475 = vadd.f32 0.0, %v1474
        %1476 = vmatmul.bf16.gmra.mxu0 %v1450
        %v1477 = vpop.f32.mrf.mxu0
        %v1478 = vadd.f32 0.0, %v1477
        %v1479 = vpop.f32.mrf.mxu0
        %v1480 = vadd.f32 0.0, %v1479
        %1481 = vmatmul.bf16.gmra.mxu0 %v1453
        %v1482 = vpop.f32.mrf.mxu0
        %v1483 = vadd.f32 0.0, %v1482
        %v1484 = vpop.f32.mrf.mxu0
        %v1485 = vadd.f32 0.0, %v1484
        %1486 = vdwg.mxu0
        %v1487 = vadd.f32 %v1408, %v1468
        %v1488 = vadd.f32 %v1409, %v1470
        %v1489 = vadd.f32 %v1410, %v1473
        %v1490 = vadd.f32 %v1411, %v1475
        %v1491 = vadd.f32 %v1412, %v1478
        %v1492 = vadd.f32 %v1413, %v1480
        %v1493 = vadd.f32 %v1414, %v1483
        %v1494 = vadd.f32 %v1415, %v1485
        %v1495 = vld [vmem:[#allocation2 + $0x4] sm:$0xf]
        %v1496 = vld [vmem:[#allocation2 + $0x8] sm:$0xf]
        %v1497 = vld [vmem:[#allocation2 + $0xc] sm:$0xf]
        %v1498 = vld [vmem:[#allocation2 + $0x10] sm:$0xf]
        %v1499 = vld [vmem:[#allocation2 + $0x14] sm:$0xf]
        %v1500 = vld [vmem:[#allocation2 + $0x18] sm:$0xf]
        %v1501 = vld [vmem:[#allocation2 + $0x1c] sm:$0xf]
        %v1502 = vld [vmem:[#allocation2 + $0x20] sm:$0xf]
        %v1503 = vld [vmem:[#allocation2 + $0x24] sm:$0x1]
        %s1504 = scalar_lea.vmem %s4, 48
        %v1505 = vld [vmem:[%s1504] sm:$0xf]
        %v1506 = vld [vmem:[%s1504 + $0x4] sm:$0xf]
        %v1507 = vld [vmem:[%s1504 + $0x8] sm:$0xf]
        %v1517 = vunpack.c.l.b16 %v1495
        %v1518 = vunpack.c.l.b16 %v1496
        %v1519 = vunpack.c.l.b16 %v1497
        %v1520 = vunpack.c.l.b16 %v1498
        %v1521 = vunpack.c.l.b16 %v1499
        %v1522 = vunpack.c.l.b16 %v1500
        %v1523 = vunpack.c.l.b16 %v1501
        %v1524 = vunpack.c.l.b16 %v1502
        %v1525 = vunpack.c.l.b16 %v1503
        %v1526 = vpack.c.b16 %v1518, %v1517
        %v1527 = vpack.c.b16 %v1520, %v1519
        %v1528 = vpack.c.b16 %v1522, %v1521
        %v1529 = vpack.c.b16 %v1524, %v1523
        %v1530 = vpack.c.b16 %v1525, %v1525
        %v1532 = vshrl.u32 %v1526, 16
        %v1534 = vshll.u32 %v1526, 16
        %v1536 = vrot.slane %v1534, 1
        %v1537 = vor.u32 %v1532, %v1536
        %v1539 = vshll.u32 %v1527, 16
        %v1541 = vrot.slane %v1539, 1
        %v1542 = vsel %vm1133, %v1537, %v1541
        %v1543 = vshrl.u32 %v1527, 16
        %v1545 = vor.u32 %v1543, %v1541
        %v1547 = vshll.u32 %v1528, 16
        %v1549 = vrot.slane %v1547, 1
        %v1550 = vsel %vm1133, %v1545, %v1549
        %v1551 = vshrl.u32 %v1528, 16
        %v1553 = vor.u32 %v1551, %v1549
        %v1555 = vshll.u32 %v1529, 16
        %v1557 = vrot.slane %v1555, 1
        %v1558 = vsel %vm1133, %v1553, %v1557
        %v1559 = vshrl.u32 %v1529, 16
        %v1561 = vor.u32 %v1559, %v1557
        %v1563 = vshll.u32 %v1530, 16
        %v1565 = vrot.slane %v1563, 1
        %v1566 = vsel %vm1133, %v1561, %v1565
        %v1570 = vunpack.c.l.b16 %v1505
        %v1571 = vunpack.c.l.b16 %v1506
        %v1572 = vunpack.c.l.b16 %v1507
        %v1573 = vpack.c.b16 %v1571, %v1570
        %v1574 = vpack.c.b16 %v1572, %v1572
        %v1577 = vsel %vm1179, %v1542, 0
        %v1580 = vsel %vm1179, %v1550, 0
        %v1583 = vsel %vm1179, %v1558, 0
        %v1586 = vsel %vm1179, %v1566, 0
        %v1589 = vsel %vm1192, %v1574, 0
        %1591 = vmatpush.bf16.msra.mxu0 0
        %1592 = vmatpush.bf16.msra.mxu0 0
        %1593 = vmatpush.bf16.msra.mxu0 0
        %1594 = vmatpush.bf16.msra.mxu0 0
        %1595 = vmatpush.bf16.msra.mxu0 0
        %1596 = vmatpush.bf16.msra.mxu0 0
        %1597 = vmatpush.bf16.msra.mxu0 %v1589
        %1598 = vmatpush.bf16.msra.mxu0 %v1573
        %1599 = vmatmul.bf16.gmra.mxu0 %v1577
        %v1600 = vpop.f32.mrf.mxu0
        %v1601 = vadd.f32 0.0, %v1600
        %v1602 = vpop.f32.mrf.mxu0
        %v1603 = vadd.f32 0.0, %v1602
        %1604 = vmatmul.bf16.gmra.mxu0 %v1580
        %v1605 = vpop.f32.mrf.mxu0
        %v1606 = vadd.f32 0.0, %v1605
        %v1607 = vpop.f32.mrf.mxu0
        %v1608 = vadd.f32 0.0, %v1607
        %1609 = vmatmul.bf16.gmra.mxu0 %v1583
        %v1610 = vpop.f32.mrf.mxu0
        %v1611 = vadd.f32 0.0, %v1610
        %v1612 = vpop.f32.mrf.mxu0
        %v1613 = vadd.f32 0.0, %v1612
        %1614 = vmatmul.bf16.gmra.mxu0 %v1586
        %v1615 = vpop.f32.mrf.mxu0
        %v1616 = vadd.f32 0.0, %v1615
        %v1617 = vpop.f32.mrf.mxu0
        %v1618 = vadd.f32 0.0, %v1617
        %1619 = vdwg.mxu0
        %v1620 = vadd.f32 %v1487, %v1601
        %v1621 = vadd.f32 %v1488, %v1603
        %v1622 = vadd.f32 %v1489, %v1606
        %v1623 = vadd.f32 %v1490, %v1608
        %v1624 = vadd.f32 %v1491, %v1611
        %v1625 = vadd.f32 %v1492, %v1613
        %v1626 = vadd.f32 %v1493, %v1616
        %v1627 = vadd.f32 %v1494, %v1618
        %v1628 = vld [vmem:[#allocation2 + $0x4] sm:$0xe]
        %v1629 = vunpack.c.l.bf16 %v1628
        %v1630 = vunpack.c.l.bf16 %v1496
        %v1631 = vunpack.c.l.bf16 %v1497
        %v1632 = vunpack.c.l.bf16 %v1498
        %v1633 = vunpack.c.l.bf16 %v1499
        %v1634 = vunpack.c.l.bf16 %v1500
        %v1635 = vunpack.c.l.bf16 %v1501
        %v1636 = vunpack.c.l.bf16 %v1502
        %v1637 = vunpack.c.l.bf16 %v1503
        %v1638 = vmul.f32 %v1629, %v1298
        %v1639 = vmul.f32 %v1630, %v1300
        %v1640 = vmul.f32 %v1631, %v1302
        %v1641 = vmul.f32 %v1632, %v1304
        %v1642 = vmul.f32 %v1633, %v1306
        %v1643 = vmul.f32 %v1634, %v1308
        %v1644 = vmul.f32 %v1635, %v1310
        %v1645 = vmul.f32 %v1636, %v1312
        %v1646 = vmul.f32 %v1637, %v1311
        %v1647 = vpack.c.bf16 %v1639, %v1638
        %v1648 = vpack.c.bf16 %v1641, %v1640
        %v1649 = vpack.c.bf16 %v1643, %v1642
        %v1650 = vpack.c.bf16 %v1645, %v1644
        %v1651 = vpack.c.bf16 %v1646, %v1646
        %s1652 = scalar_lea.vmem %s4, 60
        %v1653 = vld [vmem:[%s1652] sm:$0xf]
        %v1654 = vld [vmem:[%s1652 + $0x4] sm:$0xf]
        %v1655 = vld [vmem:[%s1652 + $0x8] sm:$0xf]
        %v1661 = vrot.slane %v1647, 1
        %v1662 = vrot.slane %v1648, 1
        %v1663 = vsel %vm1345, %v1661, %v1662
        %v1664 = vrot.slane %v1649, 1
        %v1665 = vsel %vm1345, %v1662, %v1664
        %v1666 = vrot.slane %v1650, 1
        %v1667 = vsel %vm1345, %v1664, %v1666
        %v1668 = vrot.slane %v1651, 1
        %v1669 = vsel %vm1345, %v1666, %v1668
        %v1673 = vunpack.c.l.b16 %v1653
        %v1674 = vunpack.c.l.b16 %v1654
        %v1675 = vunpack.c.l.b16 %v1655
        %v1676 = vpack.c.b16 %v1674, %v1673
        %v1677 = vpack.c.b16 %v1675, %v1675
        %v1680 = vsel %vm1179, %v1663, 0
        %v1683 = vsel %vm1179, %v1665, 0
        %v1686 = vsel %vm1179, %v1667, 0
        %v1689 = vsel %vm1179, %v1669, 0
        %v1692 = vsel %vm1192, %v1677, 0
        %1694 = vmatpush.bf16.msra.mxu0 0
        %1695 = vmatpush.bf16.msra.mxu0 0
        %1696 = vmatpush.bf16.msra.mxu0 0
        %1697 = vmatpush.bf16.msra.mxu0 0
        %1698 = vmatpush.bf16.msra.mxu0 0
        %1699 = vmatpush.bf16.msra.mxu0 0
        %1700 = vmatpush.bf16.msra.mxu0 %v1692
        %1701 = vmatpush.bf16.msra.mxu0 %v1676
        %1702 = vmatmul.bf16.gmra.mxu0 %v1680
        %v1703 = vpop.f32.mrf.mxu0
        %v1704 = vadd.f32 0.0, %v1703
        %v1705 = vpop.f32.mrf.mxu0
        %v1706 = vadd.f32 0.0, %v1705
        %1707 = vmatmul.bf16.gmra.mxu0 %v1683
        %v1708 = vpop.f32.mrf.mxu0
        %v1709 = vadd.f32 0.0, %v1708
        %v1710 = vpop.f32.mrf.mxu0
        %v1711 = vadd.f32 0.0, %v1710
        %1712 = vmatmul.bf16.gmra.mxu0 %v1686
        %v1713 = vpop.f32.mrf.mxu0
        %v1714 = vadd.f32 0.0, %v1713
        %v1715 = vpop.f32.mrf.mxu0
        %v1716 = vadd.f32 0.0, %v1715
        %1717 = vmatmul.bf16.gmra.mxu0 %v1689
        %v1718 = vpop.f32.mrf.mxu0
        %v1719 = vadd.f32 0.0, %v1718
        %v1720 = vpop.f32.mrf.mxu0
        %v1721 = vadd.f32 0.0, %v1720
        %1722 = vdwg.mxu0
        %v1723 = vadd.f32 %v1620, %v1704
        %v1724 = vadd.f32 %v1621, %v1706
        %v1725 = vadd.f32 %v1622, %v1709
        %v1726 = vadd.f32 %v1623, %v1711
        %v1727 = vadd.f32 %v1624, %v1714
        %v1728 = vadd.f32 %v1625, %v1716
        %v1729 = vadd.f32 %v1626, %v1719
        %v1730 = vadd.f32 %v1627, %v1721
        %v1731 = vld [vmem:[#allocation2 + $0x24] sm:$0xf]
        %v1732 = vunpack.c.l.bf16 %v1731
        %v1733 = vmul.f32 %v1630, %v1082
        %v1734 = vmul.f32 %v1631, %v1083
        %v1735 = vmul.f32 %v1632, %v1084
        %v1736 = vmul.f32 %v1633, %v1085
        %v1737 = vmul.f32 %v1634, %v1086
        %v1738 = vmul.f32 %v1635, %v1087
        %v1739 = vmul.f32 %v1636, %v1088
        %v1740 = vmul.f32 %v1732, %v1089
        %v1741 = vpack.c.bf16 %v1734, %v1733
        %v1742 = vpack.c.bf16 %v1736, %v1735
        %v1743 = vpack.c.bf16 %v1738, %v1737
        %v1744 = vpack.c.bf16 %v1740, %v1739
        %s1745 = scalar_lea.vmem %s4, 72
        %v1746 = vld [vmem:[%s1745] sm:$0xf]
        %v1747 = vld [vmem:[%s1745 + $0x4] sm:$0xf]
        %v1748 = vld [vmem:[%s1745 + $0x8] sm:$0xf]
        %v1752 = vunpack.c.l.b16 %v1746
        %v1753 = vunpack.c.l.b16 %v1747
        %v1754 = vunpack.c.l.b16 %v1748
        %v1755 = vpack.c.b16 %v1753, %v1752
        %v1756 = vpack.c.b16 %v1754, %v1754
        %v1759 = vsel %vm1179, %v1741, 0
        %v1762 = vsel %vm1179, %v1742, 0
        %v1765 = vsel %vm1179, %v1743, 0
        %v1768 = vsel %vm1179, %v1744, 0
        %v1771 = vsel %vm1192, %v1756, 0
        %1773 = vmatpush.bf16.msra.mxu0 0
        %1774 = vmatpush.bf16.msra.mxu0 0
        %1775 = vmatpush.bf16.msra.mxu0 0
        %1776 = vmatpush.bf16.msra.mxu0 0
        %1777 = vmatpush.bf16.msra.mxu0 0
        %1778 = vmatpush.bf16.msra.mxu0 0
        %1779 = vmatpush.bf16.msra.mxu0 %v1771
        %1780 = vmatpush.bf16.msra.mxu0 %v1755
        %1781 = vmatmul.bf16.gmra.mxu0 %v1759
        %v1782 = vpop.f32.mrf.mxu0
        %v1783 = vadd.f32 0.0, %v1782
        %v1784 = vpop.f32.mrf.mxu0
        %v1785 = vadd.f32 0.0, %v1784
        %1786 = vmatmul.bf16.gmra.mxu0 %v1762
        %v1787 = vpop.f32.mrf.mxu0
        %v1788 = vadd.f32 0.0, %v1787
        %v1789 = vpop.f32.mrf.mxu0
        %v1790 = vadd.f32 0.0, %v1789
        %1791 = vmatmul.bf16.gmra.mxu0 %v1765
        %v1792 = vpop.f32.mrf.mxu0
        %v1793 = vadd.f32 0.0, %v1792
        %v1794 = vpop.f32.mrf.mxu0
        %v1795 = vadd.f32 0.0, %v1794
        %1796 = vmatmul.bf16.gmra.mxu0 %v1768
        %v1797 = vpop.f32.mrf.mxu0
        %v1798 = vadd.f32 0.0, %v1797
        %v1799 = vpop.f32.mrf.mxu0
        %v1800 = vadd.f32 0.0, %v1799
        %1801 = vdwg.mxu0
        %v1802 = vadd.f32 %v1723, %v1783
        %v1803 = vadd.f32 %v1724, %v1785
        %v1804 = vadd.f32 %v1725, %v1788
        %v1805 = vadd.f32 %v1726, %v1790
        %v1806 = vadd.f32 %v1727, %v1793
        %v1807 = vadd.f32 %v1728, %v1795
        %v1808 = vadd.f32 %v1729, %v1798
        %v1809 = vadd.f32 %v1730, %v1800
        %v1810 = vld [vmem:[#allocation2 + $0x8] sm:$0xf]
        %v1811 = vld [vmem:[#allocation2 + $0xc] sm:$0xf]
        %v1812 = vld [vmem:[#allocation2 + $0x10] sm:$0xf]
        %v1813 = vld [vmem:[#allocation2 + $0x14] sm:$0xf]
        %v1814 = vld [vmem:[#allocation2 + $0x18] sm:$0xf]
        %v1815 = vld [vmem:[#allocation2 + $0x1c] sm:$0xf]
        %v1816 = vld [vmem:[#allocation2 + $0x20] sm:$0xf]
        %v1817 = vld [vmem:[#allocation2 + $0x24] sm:$0xf]
        %v1818 = vld [vmem:[#allocation2 + $0x28] sm:$0x1]
        %s1819 = scalar_lea.vmem %s4, 84
        %v1820 = vld [vmem:[%s1819] sm:$0xf]
        %v1821 = vld [vmem:[%s1819 + $0x4] sm:$0xf]
        %v1822 = vld [vmem:[%s1819 + $0x8] sm:$0xf]
        %v1832 = vunpack.c.l.b16 %v1810
        %v1833 = vunpack.c.l.b16 %v1811
        %v1834 = vunpack.c.l.b16 %v1812
        %v1835 = vunpack.c.l.b16 %v1813
        %v1836 = vunpack.c.l.b16 %v1814
        %v1837 = vunpack.c.l.b16 %v1815
        %v1838 = vunpack.c.l.b16 %v1816
        %v1839 = vunpack.c.l.b16 %v1817
        %v1840 = vunpack.c.l.b16 %v1818
        %v1841 = vpack.c.b16 %v1833, %v1832
        %v1842 = vpack.c.b16 %v1835, %v1834
        %v1843 = vpack.c.b16 %v1837, %v1836
        %v1844 = vpack.c.b16 %v1839, %v1838
        %v1845 = vpack.c.b16 %v1840, %v1840
        %v1847 = vshrl.u32 %v1841, 16
        %v1849 = vshll.u32 %v1841, 16
        %v1851 = vrot.slane %v1849, 1
        %v1852 = vor.u32 %v1847, %v1851
        %v1854 = vshll.u32 %v1842, 16
        %v1856 = vrot.slane %v1854, 1
        %v1857 = vsel %vm1133, %v1852, %v1856
        %v1858 = vshrl.u32 %v1842, 16
        %v1860 = vor.u32 %v1858, %v1856
        %v1862 = vshll.u32 %v1843, 16
        %v1864 = vrot.slane %v1862, 1
        %v1865 = vsel %vm1133, %v1860, %v1864
        %v1866 = vshrl.u32 %v1843, 16
        %v1868 = vor.u32 %v1866, %v1864
        %v1870 = vshll.u32 %v1844, 16
        %v1872 = vrot.slane %v1870, 1
        %v1873 = vsel %vm1133, %v1868, %v1872
        %v1874 = vshrl.u32 %v1844, 16
        %v1876 = vor.u32 %v1874, %v1872
        %v1878 = vshll.u32 %v1845, 16
        %v1880 = vrot.slane %v1878, 1
        %v1881 = vsel %vm1133, %v1876, %v1880
        %v1885 = vunpack.c.l.b16 %v1820
        %v1886 = vunpack.c.l.b16 %v1821
        %v1887 = vunpack.c.l.b16 %v1822
        %v1888 = vpack.c.b16 %v1886, %v1885
        %v1889 = vpack.c.b16 %v1887, %v1887
        %v1892 = vsel %vm1179, %v1857, 0
        %v1895 = vsel %vm1179, %v1865, 0
        %v1898 = vsel %vm1179, %v1873, 0
        %v1901 = vsel %vm1179, %v1881, 0
        %v1904 = vsel %vm1192, %v1889, 0
        %1906 = vmatpush.bf16.msra.mxu0 0
        %1907 = vmatpush.bf16.msra.mxu0 0
        %1908 = vmatpush.bf16.msra.mxu0 0
        %1909 = vmatpush.bf16.msra.mxu0 0
        %1910 = vmatpush.bf16.msra.mxu0 0
        %1911 = vmatpush.bf16.msra.mxu0 0
        %1912 = vmatpush.bf16.msra.mxu0 %v1904
        %1913 = vmatpush.bf16.msra.mxu0 %v1888
        %1914 = vmatmul.bf16.gmra.mxu0 %v1892
        %v1915 = vpop.f32.mrf.mxu0
        %v1916 = vadd.f32 0.0, %v1915
        %v1917 = vpop.f32.mrf.mxu0
        %v1918 = vadd.f32 0.0, %v1917
        %1919 = vmatmul.bf16.gmra.mxu0 %v1895
        %v1920 = vpop.f32.mrf.mxu0
        %v1921 = vadd.f32 0.0, %v1920
        %v1922 = vpop.f32.mrf.mxu0
        %v1923 = vadd.f32 0.0, %v1922
        %1924 = vmatmul.bf16.gmra.mxu0 %v1898
        %v1925 = vpop.f32.mrf.mxu0
        %v1926 = vadd.f32 0.0, %v1925
        %v1927 = vpop.f32.mrf.mxu0
        %v1928 = vadd.f32 0.0, %v1927
        %1929 = vmatmul.bf16.gmra.mxu0 %v1901
        %v1930 = vpop.f32.mrf.mxu0
        %v1931 = vadd.f32 0.0, %v1930
        %v1932 = vpop.f32.mrf.mxu0
        %v1933 = vadd.f32 0.0, %v1932
        %1934 = vdwg.mxu0
        %v1935 = vadd.f32 %v1802, %v1916
        %v1936 = vadd.f32 %v1803, %v1918
        %v1937 = vadd.f32 %v1804, %v1921
        %v1938 = vadd.f32 %v1805, %v1923
        %v1939 = vadd.f32 %v1806, %v1926
        %v1940 = vadd.f32 %v1807, %v1928
        %v1941 = vadd.f32 %v1808, %v1931
        %v1942 = vadd.f32 %v1809, %v1933
        %v1943 = vld [vmem:[#allocation2 + $0x8] sm:$0xe]
        %v1944 = vunpack.c.l.bf16 %v1943
        %v1945 = vunpack.c.l.bf16 %v1811
        %v1946 = vunpack.c.l.bf16 %v1812
        %v1947 = vunpack.c.l.bf16 %v1813
        %v1948 = vunpack.c.l.bf16 %v1814
        %v1949 = vunpack.c.l.bf16 %v1815
        %v1950 = vunpack.c.l.bf16 %v1816
        %v1951 = vunpack.c.l.bf16 %v1817
        %v1952 = vunpack.c.l.bf16 %v1818
        %v1953 = vmul.f32 %v1944, %v1298
        %v1954 = vmul.f32 %v1945, %v1300
        %v1955 = vmul.f32 %v1946, %v1302
        %v1956 = vmul.f32 %v1947, %v1304
        %v1957 = vmul.f32 %v1948, %v1306
        %v1958 = vmul.f32 %v1949, %v1308
        %v1959 = vmul.f32 %v1950, %v1310
        %v1960 = vmul.f32 %v1951, %v1312
        %v1961 = vmul.f32 %v1952, %v1311
        %v1962 = vpack.c.bf16 %v1954, %v1953
        %v1963 = vpack.c.bf16 %v1956, %v1955
        %v1964 = vpack.c.bf16 %v1958, %v1957
        %v1965 = vpack.c.bf16 %v1960, %v1959
        %v1966 = vpack.c.bf16 %v1961, %v1961
        %s1967 = scalar_lea.vmem %s4, 96
        %v1968 = vld [vmem:[%s1967] sm:$0xf]
        %v1969 = vld [vmem:[%s1967 + $0x4] sm:$0xf]
        %v1970 = vld [vmem:[%s1967 + $0x8] sm:$0xf]
        %v1976 = vrot.slane %v1962, 1
        %v1977 = vrot.slane %v1963, 1
        %v1978 = vsel %vm1345, %v1976, %v1977
        %v1979 = vrot.slane %v1964, 1
        %v1980 = vsel %vm1345, %v1977, %v1979
        %v1981 = vrot.slane %v1965, 1
        %v1982 = vsel %vm1345, %v1979, %v1981
        %v1983 = vrot.slane %v1966, 1
        %v1984 = vsel %vm1345, %v1981, %v1983
        %v1988 = vunpack.c.l.b16 %v1968
        %v1989 = vunpack.c.l.b16 %v1969
        %v1990 = vunpack.c.l.b16 %v1970
        %v1991 = vpack.c.b16 %v1989, %v1988
        %v1992 = vpack.c.b16 %v1990, %v1990
        %v1995 = vsel %vm1179, %v1978, 0
        %v1998 = vsel %vm1179, %v1980, 0
        %v2001 = vsel %vm1179, %v1982, 0
        %v2004 = vsel %vm1179, %v1984, 0
        %v2007 = vsel %vm1192, %v1992, 0
        %2009 = vmatpush.bf16.msra.mxu0 0
        %2010 = vmatpush.bf16.msra.mxu0 0
        %2011 = vmatpush.bf16.msra.mxu0 0
        %2012 = vmatpush.bf16.msra.mxu0 0
        %2013 = vmatpush.bf16.msra.mxu0 0
        %2014 = vmatpush.bf16.msra.mxu0 0
        %2015 = vmatpush.bf16.msra.mxu0 %v2007
        %2016 = vmatpush.bf16.msra.mxu0 %v1991
        %2017 = vmatmul.bf16.gmra.mxu0 %v1995
        %v2018 = vpop.f32.mrf.mxu0
        %v2019 = vadd.f32 0.0, %v2018
        %v2020 = vpop.f32.mrf.mxu0
        %v2021 = vadd.f32 0.0, %v2020
        %2022 = vmatmul.bf16.gmra.mxu0 %v1998
        %v2023 = vpop.f32.mrf.mxu0
        %v2024 = vadd.f32 0.0, %v2023
        %v2025 = vpop.f32.mrf.mxu0
        %v2026 = vadd.f32 0.0, %v2025
        %2027 = vmatmul.bf16.gmra.mxu0 %v2001
        %v2028 = vpop.f32.mrf.mxu0
        %v2029 = vadd.f32 0.0, %v2028
        %v2030 = vpop.f32.mrf.mxu0
        %v2031 = vadd.f32 0.0, %v2030
        %2032 = vmatmul.bf16.gmra.mxu0 %v2004
        %v2033 = vpop.f32.mrf.mxu0
        %v2034 = vadd.f32 0.0, %v2033
        %v2035 = vpop.f32.mrf.mxu0
        %v2036 = vadd.f32 0.0, %v2035
        %2037 = vdwg.mxu0
        %v2038 = vadd.f32 %v1935, %v2019
        %v2039 = vadd.f32 %v1936, %v2021
        %v2040 = vadd.f32 %v1937, %v2024
        %v2041 = vadd.f32 %v1938, %v2026
        %v2042 = vadd.f32 %v1939, %v2029
        %v2043 = vadd.f32 %v1940, %v2031
        %v2044 = vadd.f32 %v1941, %v2034
        %v2045 = vadd.f32 %v1942, %v2036
        %v2046 = vld [vmem:[%s5] sm:$0x1]
        %v2048 = vperm.slane %v2046, 0
        %v2050 = vmul.f32 %v2038, %v2048
        %v2051 = vmul.f32 %v2039, %v2048
        %v2052 = vmul.f32 %v2040, %v2048
        %v2053 = vmul.f32 %v2041, %v2048
        %v2054 = vmul.f32 %v2042, %v2048
        %v2055 = vmul.f32 %v2043, %v2048
        %v2056 = vmul.f32 %v2044, %v2048
        %v2057 = vmul.f32 %v2045, %v2048
        %v2058 = vld [vmem:[%s6] sm:$0x1]
        %v2060 = vperm.slane %v2058, 0
        %v2062 = vadd.f32 %v2050, %v2060
        %v2063 = vadd.f32 %v2051, %v2060
        %v2064 = vadd.f32 %v2052, %v2060
        %v2065 = vadd.f32 %v2053, %v2060
        %v2066 = vadd.f32 %v2054, %v2060
        %v2067 = vadd.f32 %v2055, %v2060
        %v2068 = vadd.f32 %v2056, %v2060
        %v2069 = vadd.f32 %v2057, %v2060
        %v2070 = vmax.f32 %v2062, 0.0
        %v2071 = vmax.f32 %v2063, 0.0
        %v2072 = vmax.f32 %v2064, 0.0
        %v2073 = vmax.f32 %v2065, 0.0
        %v2074 = vmax.f32 %v2066, 0.0
        %v2075 = vmax.f32 %v2067, 0.0
        %v2076 = vmax.f32 %v2068, 0.0
        %v2077 = vmax.f32 %v2069, 0.0
        %v2078 = vpack.c.bf16 %v2071, %v2070
        %v2079 = vpack.c.bf16 %v2073, %v2072
        %v2080 = vpack.c.bf16 %v2075, %v2074
        %v2081 = vpack.c.bf16 %v2077, %v2076
        %v2082 = vpack.c.bf16 %v536, %v536
        %v2083 = vpack.c.bf16 %v537, %v537
        %v2084 = vpack.c.bf16 %v538, %v538
        %v2085 = vpack.c.bf16 %v539, %v539
        %v2086 = vpack.c.bf16 %v540, %v540
        %v2087 = vpack.c.bf16 %v541, %v541
        %v2088 = vpack.c.bf16 %v542, %v542
        %v2089 = vpack.c.bf16 %v543, %v543
        %v2090 = vpack.c.bf16 %v544, %v544
        %v2091 = vpack.c.bf16 %v545, %v545
        %v2092 = vpack.c.bf16 %v546, %v546
        %v2093 = vpack.c.bf16 %v547, %v547
        %v2094 = vpack.c.bf16 %v548, %v548
        %v2095 = vpack.c.bf16 %v549, %v549
        %v2096 = vpack.c.bf16 %v550, %v550
        %v2097 = vpack.c.bf16 %v551, %v551
        %v2098 = vpack.c.bf16 %v552, %v552
        %v2099 = vpack.c.bf16 %v553, %v553
        %v2100 = vpack.c.bf16 %v554, %v554
        %v2101 = vpack.c.bf16 %v555, %v555
        %v2102 = vpack.c.bf16 %v556, %v556
        %v2103 = vpack.c.bf16 %v557, %v557
        %v2104 = vpack.c.bf16 %v558, %v558
        %v2105 = vpack.c.bf16 %v559, %v559
        %v2106 = vpack.c.bf16 %v560, %v560
        %v2107 = vpack.c.bf16 %v561, %v561
        %v2108 = vpack.c.bf16 %v562, %v562
        %v2109 = vpack.c.bf16 %v563, %v563
        %v2110 = vpack.c.bf16 %v564, %v564
        %v2111 = vpack.c.bf16 %v565, %v565
        %v2112 = vpack.c.bf16 %v566, %v566
        %v2113 = vpack.c.bf16 %v567, %v567
        %v2114 = vld [vmem:[%s7] sm:$0xf]
        %v2115 = vld [vmem:[%s7 + $0x4] sm:$0xf]
        %v2116 = vld [vmem:[%s7 + $0x8] sm:$0xf]
        %v2117 = vld [vmem:[%s7 + $0xc] sm:$0xf]
        %v2118 = vld [vmem:[%s7 + $0x10] sm:$0xf]
        %v2119 = vld [vmem:[%s7 + $0x14] sm:$0xf]
        %v2120 = vld [vmem:[%s7 + $0x18] sm:$0xf]
        %v2121 = vld [vmem:[%s7 + $0x1c] sm:$0xf]
        %v2122 = vld [vmem:[%s7 + $0x20] sm:$0xf]
        %v2123 = vld [vmem:[%s7 + $0x24] sm:$0xf]
        %v2124 = vld [vmem:[%s7 + $0x28] sm:$0xf]
        %v2125 = vld [vmem:[%s7 + $0x2c] sm:$0xf]
        %v2126 = vld [vmem:[%s7 + $0x30] sm:$0xf]
        %v2127 = vld [vmem:[%s7 + $0x34] sm:$0xf]
        %v2128 = vld [vmem:[%s7 + $0x38] sm:$0xf]
        %v2129 = vld [vmem:[%s7 + $0x3c] sm:$0xf]
        %v2130 = vld [vmem:[%s7 + $0x40] sm:$0xf]
        %v2131 = vld [vmem:[%s7 + $0x44] sm:$0xf]
        %v2132 = vld [vmem:[%s7 + $0x48] sm:$0xf]
        %v2133 = vld [vmem:[%s7 + $0x4c] sm:$0xf]
        %v2134 = vld [vmem:[%s7 + $0x50] sm:$0xf]
        %v2135 = vld [vmem:[%s7 + $0x54] sm:$0xf]
        %v2136 = vld [vmem:[%s7 + $0x58] sm:$0xf]
        %v2137 = vld [vmem:[%s7 + $0x5c] sm:$0xf]
        %v2138 = vld [vmem:[%s7 + $0x60] sm:$0xf]
        %v2139 = vld [vmem:[%s7 + $0x64] sm:$0xf]
        %v2140 = vld [vmem:[%s7 + $0x68] sm:$0xf]
        %v2141 = vld [vmem:[%s7 + $0x6c] sm:$0xf]
        %v2142 = vld [vmem:[%s7 + $0x70] sm:$0xf]
        %v2143 = vld [vmem:[%s7 + $0x74] sm:$0xf]
        %v2144 = vld [vmem:[%s7 + $0x78] sm:$0xf]
        %v2145 = vld [vmem:[%s7 + $0x7c] sm:$0xf]
        %v2178 = vunpack.c.l.b16 %v2114
        %v2179 = vunpack.c.l.b16 %v2115
        %v2180 = vunpack.c.l.b16 %v2116
        %v2181 = vunpack.c.l.b16 %v2117
        %v2182 = vunpack.c.l.b16 %v2118
        %v2183 = vunpack.c.l.b16 %v2119
        %v2184 = vunpack.c.l.b16 %v2120
        %v2185 = vunpack.c.l.b16 %v2121
        %v2186 = vunpack.c.l.b16 %v2122
        %v2187 = vunpack.c.l.b16 %v2123
        %v2188 = vunpack.c.l.b16 %v2124
        %v2189 = vunpack.c.l.b16 %v2125
        %v2190 = vunpack.c.l.b16 %v2126
        %v2191 = vunpack.c.l.b16 %v2127
        %v2192 = vunpack.c.l.b16 %v2128
        %v2193 = vunpack.c.l.b16 %v2129
        %v2194 = vunpack.c.l.b16 %v2130
        %v2195 = vunpack.c.l.b16 %v2131
        %v2196 = vunpack.c.l.b16 %v2132
        %v2197 = vunpack.c.l.b16 %v2133
        %v2198 = vunpack.c.l.b16 %v2134
        %v2199 = vunpack.c.l.b16 %v2135
        %v2200 = vunpack.c.l.b16 %v2136
        %v2201 = vunpack.c.l.b16 %v2137
        %v2202 = vunpack.c.l.b16 %v2138
        %v2203 = vunpack.c.l.b16 %v2139
        %v2204 = vunpack.c.l.b16 %v2140
        %v2205 = vunpack.c.l.b16 %v2141
        %v2206 = vunpack.c.l.b16 %v2142
        %v2207 = vunpack.c.l.b16 %v2143
        %v2208 = vunpack.c.l.b16 %v2144
        %v2209 = vunpack.c.l.b16 %v2145
        %v2210 = vpack.c.b16 %v2179, %v2178
        %v2211 = vpack.c.b16 %v2181, %v2180
        %v2212 = vpack.c.b16 %v2183, %v2182
        %v2213 = vpack.c.b16 %v2185, %v2184
        %v2214 = vpack.c.b16 %v2187, %v2186
        %v2215 = vpack.c.b16 %v2189, %v2188
        %v2216 = vpack.c.b16 %v2191, %v2190
        %v2217 = vpack.c.b16 %v2193, %v2192
        %v2218 = vpack.c.b16 %v2195, %v2194
        %v2219 = vpack.c.b16 %v2197, %v2196
        %v2220 = vpack.c.b16 %v2199, %v2198
        %v2221 = vpack.c.b16 %v2201, %v2200
        %v2222 = vpack.c.b16 %v2203, %v2202
        %v2223 = vpack.c.b16 %v2205, %v2204
        %v2224 = vpack.c.b16 %v2207, %v2206
        %v2225 = vpack.c.b16 %v2209, %v2208
        %vm2226 = vcmask 523264
        %v2228 = vsel %vm2226, %v2210, 0
        %v2231 = vsel %vm2226, %v2211, 0
        %v2234 = vsel %vm2226, %v2212, 0
        %v2237 = vsel %vm2226, %v2213, 0
        %v2240 = vsel %vm2226, %v2214, 0
        %v2243 = vsel %vm2226, %v2215, 0
        %v2246 = vsel %vm2226, %v2216, 0
        %v2249 = vsel %vm2226, %v2217, 0
        %v2252 = vsel %vm2226, %v2218, 0
        %v2255 = vsel %vm2226, %v2219, 0
        %v2258 = vsel %vm2226, %v2220, 0
        %v2261 = vsel %vm2226, %v2221, 0
        %v2264 = vsel %vm2226, %v2222, 0
        %v2267 = vsel %vm2226, %v2223, 0
        %v2270 = vsel %vm2226, %v2224, 0
        %v2273 = vsel %vm2226, %v2225, 0
        %2275 = vmatpush.bf16.msra.mxu0 0
        %2276 = vmatpush.bf16.msra.mxu0 0
        %2277 = vmatpush.bf16.msra.mxu0 0
        %2278 = vmatpush.bf16.msra.mxu0 0
        %2279 = vmatpush.bf16.msra.mxu0 %v2081
        %2280 = vmatpush.bf16.msra.mxu0 %v2080
        %2281 = vmatpush.bf16.msra.mxu0 %v2079
        %2282 = vmatpush.bf16.msra.mxu0 %v2078
        %2283 = vmatmul.bf16.gmra.mxu0 %v2228
        %v2284 = vpop.f32.mrf.mxu0
        %v2285 = vadd.f32 0.0, %v2284
        %v2286 = vpop.f32.mrf.mxu0
        %v2287 = vadd.f32 0.0, %v2286
        %2288 = vmatmul.bf16.gmra.mxu0 %v2231
        %v2289 = vpop.f32.mrf.mxu0
        %v2290 = vadd.f32 0.0, %v2289
        %v2291 = vpop.f32.mrf.mxu0
        %v2292 = vadd.f32 0.0, %v2291
        %2293 = vmatmul.bf16.gmra.mxu0 %v2234
        %v2294 = vpop.f32.mrf.mxu0
        %v2295 = vadd.f32 0.0, %v2294
        %v2296 = vpop.f32.mrf.mxu0
        %v2297 = vadd.f32 0.0, %v2296
        %2298 = vmatmul.bf16.gmra.mxu0 %v2237
        %v2299 = vpop.f32.mrf.mxu0
        %v2300 = vadd.f32 0.0, %v2299
        %v2301 = vpop.f32.mrf.mxu0
        %v2302 = vadd.f32 0.0, %v2301
        %2303 = vmatmul.bf16.gmra.mxu0 %v2240
        %v2304 = vpop.f32.mrf.mxu0
        %v2305 = vadd.f32 0.0, %v2304
        %v2306 = vpop.f32.mrf.mxu0
        %v2307 = vadd.f32 0.0, %v2306
        %2308 = vmatmul.bf16.gmra.mxu0 %v2243
        %v2309 = vpop.f32.mrf.mxu0
        %v2310 = vadd.f32 0.0, %v2309
        %v2311 = vpop.f32.mrf.mxu0
        %v2312 = vadd.f32 0.0, %v2311
        %2313 = vmatmul.bf16.gmra.mxu0 %v2246
        %v2314 = vpop.f32.mrf.mxu0
        %v2315 = vadd.f32 0.0, %v2314
        %v2316 = vpop.f32.mrf.mxu0
        %v2317 = vadd.f32 0.0, %v2316
        %2318 = vmatmul.bf16.gmra.mxu0 %v2249
        %v2319 = vpop.f32.mrf.mxu0
        %v2320 = vadd.f32 0.0, %v2319
        %v2321 = vpop.f32.mrf.mxu0
        %v2322 = vadd.f32 0.0, %v2321
        %2323 = vmatmul.bf16.gmra.mxu0 %v2252
        %v2324 = vpop.f32.mrf.mxu0
        %v2325 = vadd.f32 0.0, %v2324
        %v2326 = vpop.f32.mrf.mxu0
        %v2327 = vadd.f32 0.0, %v2326
        %2328 = vmatmul.bf16.gmra.mxu0 %v2255
        %v2329 = vpop.f32.mrf.mxu0
        %v2330 = vadd.f32 0.0, %v2329
        %v2331 = vpop.f32.mrf.mxu0
        %v2332 = vadd.f32 0.0, %v2331
        %2333 = vmatmul.bf16.gmra.mxu0 %v2258
        %v2334 = vpop.f32.mrf.mxu0
        %v2335 = vadd.f32 0.0, %v2334
        %v2336 = vpop.f32.mrf.mxu0
        %v2337 = vadd.f32 0.0, %v2336
        %2338 = vmatmul.bf16.gmra.mxu0 %v2261
        %v2339 = vpop.f32.mrf.mxu0
        %v2340 = vadd.f32 0.0, %v2339
        %v2341 = vpop.f32.mrf.mxu0
        %v2342 = vadd.f32 0.0, %v2341
        %2343 = vmatmul.bf16.gmra.mxu0 %v2264
        %v2344 = vpop.f32.mrf.mxu0
        %v2345 = vadd.f32 0.0, %v2344
        %v2346 = vpop.f32.mrf.mxu0
        %v2347 = vadd.f32 0.0, %v2346
        %2348 = vmatmul.bf16.gmra.mxu0 %v2267
        %v2349 = vpop.f32.mrf.mxu0
        %v2350 = vadd.f32 0.0, %v2349
        %v2351 = vpop.f32.mrf.mxu0
        %v2352 = vadd.f32 0.0, %v2351
        %2353 = vmatmul.bf16.gmra.mxu0 %v2270
        %v2354 = vpop.f32.mrf.mxu0
        %v2355 = vadd.f32 0.0, %v2354
        %v2356 = vpop.f32.mrf.mxu0
        %v2357 = vadd.f32 0.0, %v2356
        %2358 = vmatmul.bf16.gmra.mxu0 %v2273
        %v2359 = vpop.f32.mrf.mxu0
        %v2360 = vadd.f32 0.0, %v2359
        %v2361 = vpop.f32.mrf.mxu0
        %v2362 = vadd.f32 0.0, %v2361
        %2363 = vdwg.mxu0
        %v2364 = vpack.c.bf16 %v2285, %v2285
        %v2365 = vpack.c.bf16 %v2287, %v2287
        %v2366 = vpack.c.bf16 %v2290, %v2290
        %v2367 = vpack.c.bf16 %v2292, %v2292
        %v2368 = vpack.c.bf16 %v2295, %v2295
        %v2369 = vpack.c.bf16 %v2297, %v2297
        %v2370 = vpack.c.bf16 %v2300, %v2300
        %v2371 = vpack.c.bf16 %v2302, %v2302
        %v2372 = vpack.c.bf16 %v2305, %v2305
        %v2373 = vpack.c.bf16 %v2307, %v2307
        %v2374 = vpack.c.bf16 %v2310, %v2310
        %v2375 = vpack.c.bf16 %v2312, %v2312
        %v2376 = vpack.c.bf16 %v2315, %v2315
        %v2377 = vpack.c.bf16 %v2317, %v2317
        %v2378 = vpack.c.bf16 %v2320, %v2320
        %v2379 = vpack.c.bf16 %v2322, %v2322
        %v2380 = vpack.c.bf16 %v2325, %v2325
        %v2381 = vpack.c.bf16 %v2327, %v2327
        %v2382 = vpack.c.bf16 %v2330, %v2330
        %v2383 = vpack.c.bf16 %v2332, %v2332
        %v2384 = vpack.c.bf16 %v2335, %v2335
        %v2385 = vpack.c.bf16 %v2337, %v2337
        %v2386 = vpack.c.bf16 %v2340, %v2340
        %v2387 = vpack.c.bf16 %v2342, %v2342
        %v2388 = vpack.c.bf16 %v2345, %v2345
        %v2389 = vpack.c.bf16 %v2347, %v2347
        %v2390 = vpack.c.bf16 %v2350, %v2350
        %v2391 = vpack.c.bf16 %v2352, %v2352
        %v2392 = vpack.c.bf16 %v2355, %v2355
        %v2393 = vpack.c.bf16 %v2357, %v2357
        %v2394 = vpack.c.bf16 %v2360, %v2360
        %v2395 = vpack.c.bf16 %v2362, %v2362
        %vm2396 = vcmask 93184
        %2397 = vst.msk [vmem:[#allocation2] sm:$0xf] %vm2396, 0
        %2398 = vst.msk [vmem:[#allocation2 + $0x4] sm:$0xf] %vm2396, 0
        %vm2399 = vcmask 90112
        %vm2400 = vmand %vm2399, %vm668
        %v2401 = vld [vmem:[#allocation2 + $0x8] sm:$0x1]
        %v2402 = vsel %vm2400, 0, %v2401
        %2403 = vst [vmem:[#allocation2 + $0x8] sm:$0x1] %v2402
        %vm2404 = vcmask 93184
        %vm2405 = vmand %vm2404, %vm674
        %v2406 = vld [vmem:[#allocation2 + $0x88] sm:$0xf]
        %v2407 = vsel %vm2405, 0, %v2406
        %2408 = vst [vmem:[#allocation2 + $0x88] sm:$0xf] %v2407
        %2409 = vst.msk [vmem:[#allocation2 + $0x8c] sm:$0xf] %vm2396, 0
        %vm2410 = vcmask 90112
        %2411 = vst.msk [vmem:[#allocation2 + $0x90] sm:$0x1] %vm2410, 0
        %v2413 = vshrl.u32 %v2082, 16
        %v2415 = vrot.slane %v2413, 7
        %v2416 = vshll.u32 %v2082, 16
        %v2418 = vor.u32 %v2415, %v2416
        %v2419 = vrot.slane %v2415, 4
        %v2421 = vshrl.u32 %v2083, 16
        %v2423 = vrot.slane %v2421, 7
        %v2424 = vshll.u32 %v2083, 16
        %v2426 = vor.u32 %v2423, %v2424
        %v2427 = vsel %vm682, %v2419, %v2426
        %v2428 = vrot.slane %v2423, 4
        %v2430 = vshrl.u32 %v2084, 16
        %v2432 = vrot.slane %v2430, 7
        %v2433 = vshll.u32 %v2084, 16
        %v2435 = vor.u32 %v2432, %v2433
        %v2436 = vsel %vm682, %v2428, %v2435
        %v2437 = vrot.slane %v2432, 4
        %v2439 = vshrl.u32 %v2085, 16
        %v2441 = vrot.slane %v2439, 7
        %v2442 = vshll.u32 %v2085, 16
        %v2444 = vor.u32 %v2441, %v2442
        %v2445 = vsel %vm682, %v2437, %v2444
        %v2446 = vrot.slane %v2441, 4
        %v2448 = vshrl.u32 %v2086, 16
        %v2450 = vrot.slane %v2448, 7
        %v2451 = vshll.u32 %v2086, 16
        %v2453 = vor.u32 %v2450, %v2451
        %v2454 = vsel %vm682, %v2446, %v2453
        %v2455 = vrot.slane %v2450, 4
        %v2457 = vshrl.u32 %v2087, 16
        %v2459 = vrot.slane %v2457, 7
        %v2460 = vshll.u32 %v2087, 16
        %v2462 = vor.u32 %v2459, %v2460
        %v2463 = vsel %vm682, %v2455, %v2462
        %v2464 = vrot.slane %v2459, 4
        %v2466 = vshrl.u32 %v2088, 16
        %v2468 = vrot.slane %v2466, 7
        %v2469 = vshll.u32 %v2088, 16
        %v2471 = vor.u32 %v2468, %v2469
        %v2472 = vsel %vm682, %v2464, %v2471
        %v2473 = vrot.slane %v2468, 4
        %v2475 = vshrl.u32 %v2089, 16
        %v2477 = vrot.slane %v2475, 7
        %v2478 = vshll.u32 %v2089, 16
        %v2480 = vor.u32 %v2477, %v2478
        %v2481 = vsel %vm682, %v2473, %v2480
        %v2482 = vrot.slane %v2477, 4
        %v2484 = vshrl.u32 %v2090, 16
        %v2486 = vrot.slane %v2484, 7
        %v2487 = vshll.u32 %v2090, 16
        %v2489 = vor.u32 %v2486, %v2487
        %v2490 = vsel %vm682, %v2482, %v2489
        %v2491 = vrot.slane %v2486, 4
        %v2493 = vshrl.u32 %v2091, 16
        %v2495 = vrot.slane %v2493, 7
        %v2496 = vshll.u32 %v2091, 16
        %v2498 = vor.u32 %v2495, %v2496
        %v2499 = vsel %vm682, %v2491, %v2498
        %v2500 = vrot.slane %v2495, 4
        %v2502 = vshrl.u32 %v2092, 16
        %v2504 = vrot.slane %v2502, 7
        %v2505 = vshll.u32 %v2092, 16
        %v2507 = vor.u32 %v2504, %v2505
        %v2508 = vsel %vm682, %v2500, %v2507
        %v2509 = vrot.slane %v2504, 4
        %v2511 = vshrl.u32 %v2093, 16
        %v2513 = vrot.slane %v2511, 7
        %v2514 = vshll.u32 %v2093, 16
        %v2516 = vor.u32 %v2513, %v2514
        %v2517 = vsel %vm682, %v2509, %v2516
        %v2518 = vrot.slane %v2513, 4
        %v2520 = vshrl.u32 %v2094, 16
        %v2522 = vrot.slane %v2520, 7
        %v2523 = vshll.u32 %v2094, 16
        %v2525 = vor.u32 %v2522, %v2523
        %v2526 = vsel %vm682, %v2518, %v2525
        %v2527 = vrot.slane %v2522, 4
        %v2529 = vshrl.u32 %v2095, 16
        %v2531 = vrot.slane %v2529, 7
        %v2532 = vshll.u32 %v2095, 16
        %v2534 = vor.u32 %v2531, %v2532
        %v2535 = vsel %vm682, %v2527, %v2534
        %v2536 = vrot.slane %v2531, 4
        %v2538 = vshrl.u32 %v2096, 16
        %v2540 = vrot.slane %v2538, 7
        %v2541 = vshll.u32 %v2096, 16
        %v2543 = vor.u32 %v2540, %v2541
        %v2544 = vsel %vm682, %v2536, %v2543
        %v2545 = vrot.slane %v2540, 4
        %v2547 = vshrl.u32 %v2097, 16
        %v2549 = vrot.slane %v2547, 7
        %v2550 = vshll.u32 %v2097, 16
        %v2552 = vor.u32 %v2549, %v2550
        %v2553 = vsel %vm682, %v2545, %v2552
        %v2554 = vrot.slane %v2549, 4
        %v2556 = vshrl.u32 %v2098, 16
        %v2558 = vrot.slane %v2556, 7
        %v2559 = vshll.u32 %v2098, 16
        %v2561 = vor.u32 %v2558, %v2559
        %v2562 = vsel %vm682, %v2554, %v2561
        %v2563 = vrot.slane %v2558, 4
        %v2565 = vshrl.u32 %v2099, 16
        %v2567 = vrot.slane %v2565, 7
        %v2568 = vshll.u32 %v2099, 16
        %v2570 = vor.u32 %v2567, %v2568
        %v2571 = vsel %vm682, %v2563, %v2570
        %v2572 = vrot.slane %v2567, 4
        %v2574 = vshrl.u32 %v2100, 16
        %v2576 = vrot.slane %v2574, 7
        %v2577 = vshll.u32 %v2100, 16
        %v2579 = vor.u32 %v2576, %v2577
        %v2580 = vsel %vm682, %v2572, %v2579
        %v2581 = vrot.slane %v2576, 4
        %v2583 = vshrl.u32 %v2101, 16
        %v2585 = vrot.slane %v2583, 7
        %v2586 = vshll.u32 %v2101, 16
        %v2588 = vor.u32 %v2585, %v2586
        %v2589 = vsel %vm682, %v2581, %v2588
        %v2590 = vrot.slane %v2585, 4
        %v2592 = vshrl.u32 %v2102, 16
        %v2594 = vrot.slane %v2592, 7
        %v2595 = vshll.u32 %v2102, 16
        %v2597 = vor.u32 %v2594, %v2595
        %v2598 = vsel %vm682, %v2590, %v2597
        %v2599 = vrot.slane %v2594, 4
        %v2601 = vshrl.u32 %v2103, 16
        %v2603 = vrot.slane %v2601, 7
        %v2604 = vshll.u32 %v2103, 16
        %v2606 = vor.u32 %v2603, %v2604
        %v2607 = vsel %vm682, %v2599, %v2606
        %v2608 = vrot.slane %v2603, 4
        %v2610 = vshrl.u32 %v2104, 16
        %v2612 = vrot.slane %v2610, 7
        %v2613 = vshll.u32 %v2104, 16
        %v2615 = vor.u32 %v2612, %v2613
        %v2616 = vsel %vm682, %v2608, %v2615
        %v2617 = vrot.slane %v2612, 4
        %v2619 = vshrl.u32 %v2105, 16
        %v2621 = vrot.slane %v2619, 7
        %v2622 = vshll.u32 %v2105, 16
        %v2624 = vor.u32 %v2621, %v2622
        %v2625 = vsel %vm682, %v2617, %v2624
        %v2626 = vrot.slane %v2621, 4
        %v2628 = vshrl.u32 %v2106, 16
        %v2630 = vrot.slane %v2628, 7
        %v2631 = vshll.u32 %v2106, 16
        %v2633 = vor.u32 %v2630, %v2631
        %v2634 = vsel %vm682, %v2626, %v2633
        %v2635 = vrot.slane %v2630, 4
        %v2637 = vshrl.u32 %v2107, 16
        %v2639 = vrot.slane %v2637, 7
        %v2640 = vshll.u32 %v2107, 16
        %v2642 = vor.u32 %v2639, %v2640
        %v2643 = vsel %vm682, %v2635, %v2642
        %v2644 = vrot.slane %v2639, 4
        %v2646 = vshrl.u32 %v2108, 16
        %v2648 = vrot.slane %v2646, 7
        %v2649 = vshll.u32 %v2108, 16
        %v2651 = vor.u32 %v2648, %v2649
        %v2652 = vsel %vm682, %v2644, %v2651
        %v2653 = vrot.slane %v2648, 4
        %v2655 = vshrl.u32 %v2109, 16
        %v2657 = vrot.slane %v2655, 7
        %v2658 = vshll.u32 %v2109, 16
        %v2660 = vor.u32 %v2657, %v2658
        %v2661 = vsel %vm682, %v2653, %v2660
        %v2662 = vrot.slane %v2657, 4
        %v2664 = vshrl.u32 %v2110, 16
        %v2666 = vrot.slane %v2664, 7
        %v2667 = vshll.u32 %v2110, 16
        %v2669 = vor.u32 %v2666, %v2667
        %v2670 = vsel %vm682, %v2662, %v2669
        %v2671 = vrot.slane %v2666, 4
        %v2673 = vshrl.u32 %v2111, 16
        %v2675 = vrot.slane %v2673, 7
        %v2676 = vshll.u32 %v2111, 16
        %v2678 = vor.u32 %v2675, %v2676
        %v2679 = vsel %vm682, %v2671, %v2678
        %v2680 = vrot.slane %v2675, 4
        %v2682 = vshrl.u32 %v2112, 16
        %v2684 = vrot.slane %v2682, 7
        %v2685 = vshll.u32 %v2112, 16
        %v2687 = vor.u32 %v2684, %v2685
        %v2688 = vsel %vm682, %v2680, %v2687
        %v2689 = vrot.slane %v2684, 4
        %v2691 = vshrl.u32 %v2113, 16
        %v2693 = vrot.slane %v2691, 7
        %v2694 = vshll.u32 %v2113, 16
        %v2696 = vor.u32 %v2693, %v2694
        %v2697 = vsel %vm682, %v2689, %v2696
        %v2698 = vrot.slane %v2693, 4
        %vm2732 = vcmask 27648
        %vm2733 = vmand %vm2732, %vm674
        %v2734 = vld [vmem:[#allocation2 + $0x8] sm:$0xf]
        %v2735 = vsel %vm2733, %v2418, %v2734
        %2736 = vst [vmem:[#allocation2 + $0x8] sm:$0xf] %v2735
        %vm2737 = vcmask 27648
        %2738 = vst.msk [vmem:[#allocation2 + $0xc] sm:$0xf] %vm2737, %v2427
        %2739 = vst.msk [vmem:[#allocation2 + $0x10] sm:$0xf] %vm2737, %v2436
        %2740 = vst.msk [vmem:[#allocation2 + $0x14] sm:$0xf] %vm2737, %v2445
        %2741 = vst.msk [vmem:[#allocation2 + $0x18] sm:$0xf] %vm2737, %v2454
        %2742 = vst.msk [vmem:[#allocation2 + $0x1c] sm:$0xf] %vm2737, %v2463
        %2743 = vst.msk [vmem:[#allocation2 + $0x20] sm:$0xf] %vm2737, %v2472
        %2744 = vst.msk [vmem:[#allocation2 + $0x24] sm:$0xf] %vm2737, %v2481
        %2745 = vst.msk [vmem:[#allocation2 + $0x28] sm:$0xf] %vm2737, %v2490
        %2746 = vst.msk [vmem:[#allocation2 + $0x2c] sm:$0xf] %vm2737, %v2499
        %2747 = vst.msk [vmem:[#allocation2 + $0x30] sm:$0xf] %vm2737, %v2508
        %2748 = vst.msk [vmem:[#allocation2 + $0x34] sm:$0xf] %vm2737, %v2517
        %2749 = vst.msk [vmem:[#allocation2 + $0x38] sm:$0xf] %vm2737, %v2526
        %2750 = vst.msk [vmem:[#allocation2 + $0x3c] sm:$0xf] %vm2737, %v2535
        %2751 = vst.msk [vmem:[#allocation2 + $0x40] sm:$0xf] %vm2737, %v2544
        %2752 = vst.msk [vmem:[#allocation2 + $0x44] sm:$0xf] %vm2737, %v2553
        %2753 = vst.msk [vmem:[#allocation2 + $0x48] sm:$0xf] %vm2737, %v2562
        %2754 = vst.msk [vmem:[#allocation2 + $0x4c] sm:$0xf] %vm2737, %v2571
        %2755 = vst.msk [vmem:[#allocation2 + $0x50] sm:$0xf] %vm2737, %v2580
        %2756 = vst.msk [vmem:[#allocation2 + $0x54] sm:$0xf] %vm2737, %v2589
        %2757 = vst.msk [vmem:[#allocation2 + $0x58] sm:$0xf] %vm2737, %v2598
        %2758 = vst.msk [vmem:[#allocation2 + $0x5c] sm:$0xf] %vm2737, %v2607
        %2759 = vst.msk [vmem:[#allocation2 + $0x60] sm:$0xf] %vm2737, %v2616
        %2760 = vst.msk [vmem:[#allocation2 + $0x64] sm:$0xf] %vm2737, %v2625
        %2761 = vst.msk [vmem:[#allocation2 + $0x68] sm:$0xf] %vm2737, %v2634
        %2762 = vst.msk [vmem:[#allocation2 + $0x6c] sm:$0xf] %vm2737, %v2643
        %2763 = vst.msk [vmem:[#allocation2 + $0x70] sm:$0xf] %vm2737, %v2652
        %2764 = vst.msk [vmem:[#allocation2 + $0x74] sm:$0xf] %vm2737, %v2661
        %2765 = vst.msk [vmem:[#allocation2 + $0x78] sm:$0xf] %vm2737, %v2670
        %2766 = vst.msk [vmem:[#allocation2 + $0x7c] sm:$0xf] %vm2737, %v2679
        %2767 = vst.msk [vmem:[#allocation2 + $0x80] sm:$0xf] %vm2737, %v2688
        %2768 = vst.msk [vmem:[#allocation2 + $0x84] sm:$0xf] %vm2737, %v2697
        %vm2769 = vcmask 24576
        %vm2770 = vmand %vm2769, %vm668
        %v2771 = vld [vmem:[#allocation2 + $0x88] sm:$0x1]
        %v2772 = vsel %vm2770, %v2698, %v2771
        %2773 = vst [vmem:[#allocation2 + $0x88] sm:$0x1] %v2772
        %v2775 = vshrl.u32 %v2364, 16
        %v2777 = vrot.slane %v2775, 7
        %v2778 = vshll.u32 %v2364, 16
        %v2780 = vor.u32 %v2777, %v2778
        %v2781 = vrot.slane %v2777, 4
        %v2783 = vshrl.u32 %v2365, 16
        %v2785 = vrot.slane %v2783, 7
        %v2786 = vshll.u32 %v2365, 16
        %v2788 = vor.u32 %v2785, %v2786
        %v2789 = vsel %vm682, %v2781, %v2788
        %v2790 = vrot.slane %v2785, 4
        %v2792 = vshrl.u32 %v2366, 16
        %v2794 = vrot.slane %v2792, 7
        %v2795 = vshll.u32 %v2366, 16
        %v2797 = vor.u32 %v2794, %v2795
        %v2798 = vsel %vm682, %v2790, %v2797
        %v2799 = vrot.slane %v2794, 4
        %v2801 = vshrl.u32 %v2367, 16
        %v2803 = vrot.slane %v2801, 7
        %v2804 = vshll.u32 %v2367, 16
        %v2806 = vor.u32 %v2803, %v2804
        %v2807 = vsel %vm682, %v2799, %v2806
        %v2808 = vrot.slane %v2803, 4
        %v2810 = vshrl.u32 %v2368, 16
        %v2812 = vrot.slane %v2810, 7
        %v2813 = vshll.u32 %v2368, 16
        %v2815 = vor.u32 %v2812, %v2813
        %v2816 = vsel %vm682, %v2808, %v2815
        %v2817 = vrot.slane %v2812, 4
        %v2819 = vshrl.u32 %v2369, 16
        %v2821 = vrot.slane %v2819, 7
        %v2822 = vshll.u32 %v2369, 16
        %v2824 = vor.u32 %v2821, %v2822
        %v2825 = vsel %vm682, %v2817, %v2824
        %v2826 = vrot.slane %v2821, 4
        %v2828 = vshrl.u32 %v2370, 16
        %v2830 = vrot.slane %v2828, 7
        %v2831 = vshll.u32 %v2370, 16
        %v2833 = vor.u32 %v2830, %v2831
        %v2834 = vsel %vm682, %v2826, %v2833
        %v2835 = vrot.slane %v2830, 4
        %v2837 = vshrl.u32 %v2371, 16
        %v2839 = vrot.slane %v2837, 7
        %v2840 = vshll.u32 %v2371, 16
        %v2842 = vor.u32 %v2839, %v2840
        %v2843 = vsel %vm682, %v2835, %v2842
        %v2844 = vrot.slane %v2839, 4
        %v2846 = vshrl.u32 %v2372, 16
        %v2848 = vrot.slane %v2846, 7
        %v2849 = vshll.u32 %v2372, 16
        %v2851 = vor.u32 %v2848, %v2849
        %v2852 = vsel %vm682, %v2844, %v2851
        %v2853 = vrot.slane %v2848, 4
        %v2855 = vshrl.u32 %v2373, 16
        %v2857 = vrot.slane %v2855, 7
        %v2858 = vshll.u32 %v2373, 16
        %v2860 = vor.u32 %v2857, %v2858
        %v2861 = vsel %vm682, %v2853, %v2860
        %v2862 = vrot.slane %v2857, 4
        %v2864 = vshrl.u32 %v2374, 16
        %v2866 = vrot.slane %v2864, 7
        %v2867 = vshll.u32 %v2374, 16
        %v2869 = vor.u32 %v2866, %v2867
        %v2870 = vsel %vm682, %v2862, %v2869
        %v2871 = vrot.slane %v2866, 4
        %v2873 = vshrl.u32 %v2375, 16
        %v2875 = vrot.slane %v2873, 7
        %v2876 = vshll.u32 %v2375, 16
        %v2878 = vor.u32 %v2875, %v2876
        %v2879 = vsel %vm682, %v2871, %v2878
        %v2880 = vrot.slane %v2875, 4
        %v2882 = vshrl.u32 %v2376, 16
        %v2884 = vrot.slane %v2882, 7
        %v2885 = vshll.u32 %v2376, 16
        %v2887 = vor.u32 %v2884, %v2885
        %v2888 = vsel %vm682, %v2880, %v2887
        %v2889 = vrot.slane %v2884, 4
        %v2891 = vshrl.u32 %v2377, 16
        %v2893 = vrot.slane %v2891, 7
        %v2894 = vshll.u32 %v2377, 16
        %v2896 = vor.u32 %v2893, %v2894
        %v2897 = vsel %vm682, %v2889, %v2896
        %v2898 = vrot.slane %v2893, 4
        %v2900 = vshrl.u32 %v2378, 16
        %v2902 = vrot.slane %v2900, 7
        %v2903 = vshll.u32 %v2378, 16
        %v2905 = vor.u32 %v2902, %v2903
        %v2906 = vsel %vm682, %v2898, %v2905
        %v2907 = vrot.slane %v2902, 4
        %v2909 = vshrl.u32 %v2379, 16
        %v2911 = vrot.slane %v2909, 7
        %v2912 = vshll.u32 %v2379, 16
        %v2914 = vor.u32 %v2911, %v2912
        %v2915 = vsel %vm682, %v2907, %v2914
        %v2916 = vrot.slane %v2911, 4
        %v2918 = vshrl.u32 %v2380, 16
        %v2920 = vrot.slane %v2918, 7
        %v2921 = vshll.u32 %v2380, 16
        %v2923 = vor.u32 %v2920, %v2921
        %v2924 = vsel %vm682, %v2916, %v2923
        %v2925 = vrot.slane %v2920, 4
        %v2927 = vshrl.u32 %v2381, 16
        %v2929 = vrot.slane %v2927, 7
        %v2930 = vshll.u32 %v2381, 16
        %v2932 = vor.u32 %v2929, %v2930
        %v2933 = vsel %vm682, %v2925, %v2932
        %v2934 = vrot.slane %v2929, 4
        %v2936 = vshrl.u32 %v2382, 16
        %v2938 = vrot.slane %v2936, 7
        %v2939 = vshll.u32 %v2382, 16
        %v2941 = vor.u32 %v2938, %v2939
        %v2942 = vsel %vm682, %v2934, %v2941
        %v2943 = vrot.slane %v2938, 4
        %v2945 = vshrl.u32 %v2383, 16
        %v2947 = vrot.slane %v2945, 7
        %v2948 = vshll.u32 %v2383, 16
        %v2950 = vor.u32 %v2947, %v2948
        %v2951 = vsel %vm682, %v2943, %v2950
        %v2952 = vrot.slane %v2947, 4
        %v2954 = vshrl.u32 %v2384, 16
        %v2956 = vrot.slane %v2954, 7
        %v2957 = vshll.u32 %v2384, 16
        %v2959 = vor.u32 %v2956, %v2957
        %v2960 = vsel %vm682, %v2952, %v2959
        %v2961 = vrot.slane %v2956, 4
        %v2963 = vshrl.u32 %v2385, 16
        %v2965 = vrot.slane %v2963, 7
        %v2966 = vshll.u32 %v2385, 16
        %v2968 = vor.u32 %v2965, %v2966
        %v2969 = vsel %vm682, %v2961, %v2968
        %v2970 = vrot.slane %v2965, 4
        %v2972 = vshrl.u32 %v2386, 16
        %v2974 = vrot.slane %v2972, 7
        %v2975 = vshll.u32 %v2386, 16
        %v2977 = vor.u32 %v2974, %v2975
        %v2978 = vsel %vm682, %v2970, %v2977
        %v2979 = vrot.slane %v2974, 4
        %v2981 = vshrl.u32 %v2387, 16
        %v2983 = vrot.slane %v2981, 7
        %v2984 = vshll.u32 %v2387, 16
        %v2986 = vor.u32 %v2983, %v2984
        %v2987 = vsel %vm682, %v2979, %v2986
        %v2988 = vrot.slane %v2983, 4
        %v2990 = vshrl.u32 %v2388, 16
        %v2992 = vrot.slane %v2990, 7
        %v2993 = vshll.u32 %v2388, 16
        %v2995 = vor.u32 %v2992, %v2993
        %v2996 = vsel %vm682, %v2988, %v2995
        %v2997 = vrot.slane %v2992, 4
        %v2999 = vshrl.u32 %v2389, 16
        %v3001 = vrot.slane %v2999, 7
        %v3002 = vshll.u32 %v2389, 16
        %v3004 = vor.u32 %v3001, %v3002
        %v3005 = vsel %vm682, %v2997, %v3004
        %v3006 = vrot.slane %v3001, 4
        %v3008 = vshrl.u32 %v2390, 16
        %v3010 = vrot.slane %v3008, 7
        %v3011 = vshll.u32 %v2390, 16
        %v3013 = vor.u32 %v3010, %v3011
        %v3014 = vsel %vm682, %v3006, %v3013
        %v3015 = vrot.slane %v3010, 4
        %v3017 = vshrl.u32 %v2391, 16
        %v3019 = vrot.slane %v3017, 7
        %v3020 = vshll.u32 %v2391, 16
        %v3022 = vor.u32 %v3019, %v3020
        %v3023 = vsel %vm682, %v3015, %v3022
        %v3024 = vrot.slane %v3019, 4
        %v3026 = vshrl.u32 %v2392, 16
        %v3028 = vrot.slane %v3026, 7
        %v3029 = vshll.u32 %v2392, 16
        %v3031 = vor.u32 %v3028, %v3029
        %v3032 = vsel %vm682, %v3024, %v3031
        %v3033 = vrot.slane %v3028, 4
        %v3035 = vshrl.u32 %v2393, 16
        %v3037 = vrot.slane %v3035, 7
        %v3038 = vshll.u32 %v2393, 16
        %v3040 = vor.u32 %v3037, %v3038
        %v3041 = vsel %vm682, %v3033, %v3040
        %v3042 = vrot.slane %v3037, 4
        %v3044 = vshrl.u32 %v2394, 16
        %v3046 = vrot.slane %v3044, 7
        %v3047 = vshll.u32 %v2394, 16
        %v3049 = vor.u32 %v3046, %v3047
        %v3050 = vsel %vm682, %v3042, %v3049
        %v3051 = vrot.slane %v3046, 4
        %v3053 = vshrl.u32 %v2395, 16
        %v3055 = vrot.slane %v3053, 7
        %v3056 = vshll.u32 %v2395, 16
        %v3058 = vor.u32 %v3055, %v3056
        %v3059 = vsel %vm682, %v3051, %v3058
        %v3060 = vrot.slane %v3055, 4
        %3061 = vrot.lane.b32.xlu0 %v2780, 4
        %v3062 = vpop.permute.xlu0 %3061
        %3063 = vrot.lane.b32.xlu0 %v2789, 4
        %v3064 = vpop.permute.xlu0 %3063
        %3065 = vrot.lane.b32.xlu0 %v2798, 4
        %v3066 = vpop.permute.xlu0 %3065
        %3067 = vrot.lane.b32.xlu0 %v2807, 4
        %v3068 = vpop.permute.xlu0 %3067
        %3069 = vrot.lane.b32.xlu0 %v2816, 4
        %v3070 = vpop.permute.xlu0 %3069
        %3071 = vrot.lane.b32.xlu0 %v2825, 4
        %v3072 = vpop.permute.xlu0 %3071
        %3073 = vrot.lane.b32.xlu0 %v2834, 4
        %v3074 = vpop.permute.xlu0 %3073
        %3075 = vrot.lane.b32.xlu0 %v2843, 4
        %v3076 = vpop.permute.xlu0 %3075
        %3077 = vrot.lane.b32.xlu0 %v2852, 4
        %v3078 = vpop.permute.xlu0 %3077
        %3079 = vrot.lane.b32.xlu0 %v2861, 4
        %v3080 = vpop.permute.xlu0 %3079
        %3081 = vrot.lane.b32.xlu0 %v2870, 4
        %v3082 = vpop.permute.xlu0 %3081
        %3083 = vrot.lane.b32.xlu0 %v2879, 4
        %v3084 = vpop.permute.xlu0 %3083
        %3085 = vrot.lane.b32.xlu0 %v2888, 4
        %v3086 = vpop.permute.xlu0 %3085
        %3087 = vrot.lane.b32.xlu0 %v2897, 4
        %v3088 = vpop.permute.xlu0 %3087
        %3089 = vrot.lane.b32.xlu0 %v2906, 4
        %v3090 = vpop.permute.xlu0 %3089
        %3091 = vrot.lane.b32.xlu0 %v2915, 4
        %v3092 = vpop.permute.xlu0 %3091
        %3093 = vrot.lane.b32.xlu0 %v2924, 4
        %v3094 = vpop.permute.xlu0 %3093
        %3095 = vrot.lane.b32.xlu0 %v2933, 4
        %v3096 = vpop.permute.xlu0 %3095
        %3097 = vrot.lane.b32.xlu0 %v2942, 4
        %v3098 = vpop.permute.xlu0 %3097
        %3099 = vrot.lane.b32.xlu0 %v2951, 4
        %v3100 = vpop.permute.xlu0 %3099
        %3101 = vrot.lane.b32.xlu0 %v2960, 4
        %v3102 = vpop.permute.xlu0 %3101
        %3103 = vrot.lane.b32.xlu0 %v2969, 4
        %v3104 = vpop.permute.xlu0 %3103
        %3105 = vrot.lane.b32.xlu0 %v2978, 4
        %v3106 = vpop.permute.xlu0 %3105
        %3107 = vrot.lane.b32.xlu0 %v2987, 4
        %v3108 = vpop.permute.xlu0 %3107
        %3109 = vrot.lane.b32.xlu0 %v2996, 4
        %v3110 = vpop.permute.xlu0 %3109
        %3111 = vrot.lane.b32.xlu0 %v3005, 4
        %v3112 = vpop.permute.xlu0 %3111
        %3113 = vrot.lane.b32.xlu0 %v3014, 4
        %v3114 = vpop.permute.xlu0 %3113
        %3115 = vrot.lane.b32.xlu0 %v3023, 4
        %v3116 = vpop.permute.xlu0 %3115
        %3117 = vrot.lane.b32.xlu0 %v3032, 4
        %v3118 = vpop.permute.xlu0 %3117
        %3119 = vrot.lane.b32.xlu0 %v3041, 4
        %v3120 = vpop.permute.xlu0 %3119
        %3121 = vrot.lane.b32.xlu0 %v3050, 4
        %v3122 = vpop.permute.xlu0 %3121
        %3123 = vrot.lane.b32.xlu0 %v3059, 4
        %v3124 = vpop.permute.xlu0 %3123
        %3125 = vrot.lane.b32.xlu0 %v3060, 4
        %v3126 = vpop.permute.xlu0 %3125
        %vm3160 = vcmask 93216
        %vm3161 = vmand %vm3160, %vm674
        %v3162 = vld [vmem:[#allocation2 + $0x8] sm:$0xf]
        %v3163 = vsel %vm3161, %v3062, %v3162
        %3164 = vst [vmem:[#allocation2 + $0x8] sm:$0xf] %v3163
        %vm3165 = vcmask 93216
        %3166 = vst.msk [vmem:[#allocation2 + $0xc] sm:$0xf] %vm3165, %v3064
        %3167 = vst.msk [vmem:[#allocation2 + $0x10] sm:$0xf] %vm3165, %v3066
        %3168 = vst.msk [vmem:[#allocation2 + $0x14] sm:$0xf] %vm3165, %v3068
        %3169 = vst.msk [vmem:[#allocation2 + $0x18] sm:$0xf] %vm3165, %v3070
        %3170 = vst.msk [vmem:[#allocation2 + $0x1c] sm:$0xf] %vm3165, %v3072
        %3171 = vst.msk [vmem:[#allocation2 + $0x20] sm:$0xf] %vm3165, %v3074
        %3172 = vst.msk [vmem:[#allocation2 + $0x24] sm:$0xf] %vm3165, %v3076
        %3173 = vst.msk [vmem:[#allocation2 + $0x28] sm:$0xf] %vm3165, %v3078
        %3174 = vst.msk [vmem:[#allocation2 + $0x2c] sm:$0xf] %vm3165, %v3080
        %3175 = vst.msk [vmem:[#allocation2 + $0x30] sm:$0xf] %vm3165, %v3082
        %3176 = vst.msk [vmem:[#allocation2 + $0x34] sm:$0xf] %vm3165, %v3084
        %3177 = vst.msk [vmem:[#allocation2 + $0x38] sm:$0xf] %vm3165, %v3086
        %3178 = vst.msk [vmem:[#allocation2 + $0x3c] sm:$0xf] %vm3165, %v3088
        %3179 = vst.msk [vmem:[#allocation2 + $0x40] sm:$0xf] %vm3165, %v3090
        %3180 = vst.msk [vmem:[#allocation2 + $0x44] sm:$0xf] %vm3165, %v3092
        %3181 = vst.msk [vmem:[#allocation2 + $0x48] sm:$0xf] %vm3165, %v3094
        %3182 = vst.msk [vmem:[#allocation2 + $0x4c] sm:$0xf] %vm3165, %v3096
        %3183 = vst.msk [vmem:[#allocation2 + $0x50] sm:$0xf] %vm3165, %v3098
        %3184 = vst.msk [vmem:[#allocation2 + $0x54] sm:$0xf] %vm3165, %v3100
        %3185 = vst.msk [vmem:[#allocation2 + $0x58] sm:$0xf] %vm3165, %v3102
        %3186 = vst.msk [vmem:[#allocation2 + $0x5c] sm:$0xf] %vm3165, %v3104
        %3187 = vst.msk [vmem:[#allocation2 + $0x60] sm:$0xf] %vm3165, %v3106
        %3188 = vst.msk [vmem:[#allocation2 + $0x64] sm:$0xf] %vm3165, %v3108
        %3189 = vst.msk [vmem:[#allocation2 + $0x68] sm:$0xf] %vm3165, %v3110
        %3190 = vst.msk [vmem:[#allocation2 + $0x6c] sm:$0xf] %vm3165, %v3112
        %3191 = vst.msk [vmem:[#allocation2 + $0x70] sm:$0xf] %vm3165, %v3114
        %3192 = vst.msk [vmem:[#allocation2 + $0x74] sm:$0xf] %vm3165, %v3116
        %3193 = vst.msk [vmem:[#allocation2 + $0x78] sm:$0xf] %vm3165, %v3118
        %3194 = vst.msk [vmem:[#allocation2 + $0x7c] sm:$0xf] %vm3165, %v3120
        %3195 = vst.msk [vmem:[#allocation2 + $0x80] sm:$0xf] %vm3165, %v3122
        %3196 = vst.msk [vmem:[#allocation2 + $0x84] sm:$0xf] %vm3165, %v3124
        %vm3197 = vcmask 90144
        %vm3198 = vmand %vm3197, %vm668
        %v3199 = vld [vmem:[#allocation2 + $0x88] sm:$0x1]
        %v3200 = vsel %vm3198, %v3126, %v3199
        %3201 = vst [vmem:[#allocation2 + $0x88] sm:$0x1] %v3200
        %v3202 = vadd.s32 %v898, 64
        %v3203 = vadd.s32 %v898, 72
        %v3204 = vadd.s32 %v898, 80
        %v3205 = vadd.s32 %v898, 88
        %v3206 = vadd.s32 %v898, 96
        %v3207 = vadd.s32 %v898, 104
        %v3208 = vadd.s32 %v898, 112
        %v3209 = vadd.s32 %v898, 120
        %v3210 = vadd.s32 %v898, 128
        %v3211 = vadd.s32 %v898, 136
        %v3212 = vadd.s32 %v898, 144
        %v3213 = vadd.s32 %v898, 152
        %v3214 = vadd.s32 %v898, 160
        %v3215 = vadd.s32 %v898, 168
        %v3216 = vadd.s32 %v898, 176
        %v3217 = vadd.s32 %v898, 184
        %v3218 = vadd.s32 %v898, 192
        %v3219 = vadd.s32 %v898, 200
        %v3220 = vadd.s32 %v898, 208
        %v3221 = vadd.s32 %v898, 216
        %v3222 = vadd.s32 %v898, 224
        %v3223 = vadd.s32 %v898, 232
        %v3224 = vadd.s32 %v898, 240
        %v3225 = vadd.s32 %v898, 248
        %vm3226 = vcmp.lt.s32.totalorder %v898, 0
        %v3227 = vsub.s32 0, %v898
        %v3228 = vsel %vm3226, %v3227, %v898
        %v3229 = vshrl.u32 %v3228, 4
        %v3230 = vand.u32 %v3228, 15
        %v3231 = vsub.s32 0, %v3230
        %v3232 = vsel %vm3226, %v3231, %v3230
        %vm3233 = vcmp.lt.s32.totalorder %v899, 0
        %v3234 = vsub.s32 0, %v899
        %v3235 = vsel %vm3233, %v3234, %v899
        %v3236 = vshrl.u32 %v3235, 4
        %v3237 = vand.u32 %v3235, 15
        %v3238 = vsub.s32 0, %v3237
        %v3239 = vsel %vm3233, %v3238, %v3237
        %vm3240 = vcmp.lt.s32.totalorder %v900, 0
        %v3241 = vsub.s32 0, %v900
        %v3242 = vsel %vm3240, %v3241, %v900
        %v3243 = vshrl.u32 %v3242, 4
        %v3244 = vand.u32 %v3242, 15
        %v3245 = vsub.s32 0, %v3244
        %v3246 = vsel %vm3240, %v3245, %v3244
        %vm3247 = vcmp.lt.s32.totalorder %v901, 0
        %v3248 = vsub.s32 0, %v901
        %v3249 = vsel %vm3247, %v3248, %v901
        %v3250 = vshrl.u32 %v3249, 4
        %v3251 = vand.u32 %v3249, 15
        %v3252 = vsub.s32 0, %v3251
        %v3253 = vsel %vm3247, %v3252, %v3251
        %vm3254 = vcmp.lt.s32.totalorder %v902, 0
        %v3255 = vsub.s32 0, %v902
        %v3256 = vsel %vm3254, %v3255, %v902
        %v3257 = vshrl.u32 %v3256, 4
        %v3258 = vand.u32 %v3256, 15
        %v3259 = vsub.s32 0, %v3258
        %v3260 = vsel %vm3254, %v3259, %v3258
        %vm3261 = vcmp.lt.s32.totalorder %v903, 0
        %v3262 = vsub.s32 0, %v903
        %v3263 = vsel %vm3261, %v3262, %v903
        %v3264 = vshrl.u32 %v3263, 4
        %v3265 = vand.u32 %v3263, 15
        %v3266 = vsub.s32 0, %v3265
        %v3267 = vsel %vm3261, %v3266, %v3265
        %vm3268 = vcmp.lt.s32.totalorder %v904, 0
        %v3269 = vsub.s32 0, %v904
        %v3270 = vsel %vm3268, %v3269, %v904
        %v3271 = vshrl.u32 %v3270, 4
        %v3272 = vand.u32 %v3270, 15
        %v3273 = vsub.s32 0, %v3272
        %v3274 = vsel %vm3268, %v3273, %v3272
        %vm3275 = vcmp.lt.s32.totalorder %v905, 0
        %v3276 = vsub.s32 0, %v905
        %v3277 = vsel %vm3275, %v3276, %v905
        %v3278 = vshrl.u32 %v3277, 4
        %v3279 = vand.u32 %v3277, 15
        %v3280 = vsub.s32 0, %v3279
        %v3281 = vsel %vm3275, %v3280, %v3279
        %vm3282 = vcmp.lt.s32.totalorder %v3202, 0
        %v3283 = vsub.s32 0, %v3202
        %v3284 = vsel %vm3282, %v3283, %v3202
        %v3285 = vshrl.u32 %v3284, 4
        %v3286 = vand.u32 %v3284, 15
        %v3287 = vsub.s32 0, %v3286
        %v3288 = vsel %vm3282, %v3287, %v3286
        %vm3289 = vcmp.lt.s32.totalorder %v3203, 0
        %v3290 = vsub.s32 0, %v3203
        %v3291 = vsel %vm3289, %v3290, %v3203
        %v3292 = vshrl.u32 %v3291, 4
        %v3293 = vand.u32 %v3291, 15
        %v3294 = vsub.s32 0, %v3293
        %v3295 = vsel %vm3289, %v3294, %v3293
        %vm3296 = vcmp.lt.s32.totalorder %v3204, 0
        %v3297 = vsub.s32 0, %v3204
        %v3298 = vsel %vm3296, %v3297, %v3204
        %v3299 = vshrl.u32 %v3298, 4
        %v3300 = vand.u32 %v3298, 15
        %v3301 = vsub.s32 0, %v3300
        %v3302 = vsel %vm3296, %v3301, %v3300
        %vm3303 = vcmp.lt.s32.totalorder %v3205, 0
        %v3304 = vsub.s32 0, %v3205
        %v3305 = vsel %vm3303, %v3304, %v3205
        %v3306 = vshrl.u32 %v3305, 4
        %v3307 = vand.u32 %v3305, 15
        %v3308 = vsub.s32 0, %v3307
        %v3309 = vsel %vm3303, %v3308, %v3307
        %vm3310 = vcmp.lt.s32.totalorder %v3206, 0
        %v3311 = vsub.s32 0, %v3206
        %v3312 = vsel %vm3310, %v3311, %v3206
        %v3313 = vshrl.u32 %v3312, 4
        %v3314 = vand.u32 %v3312, 15
        %v3315 = vsub.s32 0, %v3314
        %v3316 = vsel %vm3310, %v3315, %v3314
        %vm3317 = vcmp.lt.s32.totalorder %v3207, 0
        %v3318 = vsub.s32 0, %v3207
        %v3319 = vsel %vm3317, %v3318, %v3207
        %v3320 = vshrl.u32 %v3319, 4
        %v3321 = vand.u32 %v3319, 15
        %v3322 = vsub.s32 0, %v3321
        %v3323 = vsel %vm3317, %v3322, %v3321
        %vm3324 = vcmp.lt.s32.totalorder %v3208, 0
        %v3325 = vsub.s32 0, %v3208
        %v3326 = vsel %vm3324, %v3325, %v3208
        %v3327 = vshrl.u32 %v3326, 4
        %v3328 = vand.u32 %v3326, 15
        %v3329 = vsub.s32 0, %v3328
        %v3330 = vsel %vm3324, %v3329, %v3328
        %vm3331 = vcmp.lt.s32.totalorder %v3209, 0
        %v3332 = vsub.s32 0, %v3209
        %v3333 = vsel %vm3331, %v3332, %v3209
        %v3334 = vshrl.u32 %v3333, 4
        %v3335 = vand.u32 %v3333, 15
        %v3336 = vsub.s32 0, %v3335
        %v3337 = vsel %vm3331, %v3336, %v3335
        %vm3338 = vcmp.lt.s32.totalorder %v3210, 0
        %v3339 = vsub.s32 0, %v3210
        %v3340 = vsel %vm3338, %v3339, %v3210
        %v3341 = vshrl.u32 %v3340, 4
        %v3342 = vand.u32 %v3340, 15
        %v3343 = vsub.s32 0, %v3342
        %v3344 = vsel %vm3338, %v3343, %v3342
        %vm3345 = vcmp.lt.s32.totalorder %v3211, 0
        %v3346 = vsub.s32 0, %v3211
        %v3347 = vsel %vm3345, %v3346, %v3211
        %v3348 = vshrl.u32 %v3347, 4
        %v3349 = vand.u32 %v3347, 15
        %v3350 = vsub.s32 0, %v3349
        %v3351 = vsel %vm3345, %v3350, %v3349
        %vm3352 = vcmp.lt.s32.totalorder %v3212, 0
        %v3353 = vsub.s32 0, %v3212
        %v3354 = vsel %vm3352, %v3353, %v3212
        %v3355 = vshrl.u32 %v3354, 4
        %v3356 = vand.u32 %v3354, 15
        %v3357 = vsub.s32 0, %v3356
        %v3358 = vsel %vm3352, %v3357, %v3356
        %vm3359 = vcmp.lt.s32.totalorder %v3213, 0
        %v3360 = vsub.s32 0, %v3213
        %v3361 = vsel %vm3359, %v3360, %v3213
        %v3362 = vshrl.u32 %v3361, 4
        %v3363 = vand.u32 %v3361, 15
        %v3364 = vsub.s32 0, %v3363
        %v3365 = vsel %vm3359, %v3364, %v3363
        %vm3366 = vcmp.lt.s32.totalorder %v3214, 0
        %v3367 = vsub.s32 0, %v3214
        %v3368 = vsel %vm3366, %v3367, %v3214
        %v3369 = vshrl.u32 %v3368, 4
        %v3370 = vand.u32 %v3368, 15
        %v3371 = vsub.s32 0, %v3370
        %v3372 = vsel %vm3366, %v3371, %v3370
        %vm3373 = vcmp.lt.s32.totalorder %v3215, 0
        %v3374 = vsub.s32 0, %v3215
        %v3375 = vsel %vm3373, %v3374, %v3215
        %v3376 = vshrl.u32 %v3375, 4
        %v3377 = vand.u32 %v3375, 15
        %v3378 = vsub.s32 0, %v3377
        %v3379 = vsel %vm3373, %v3378, %v3377
        %vm3380 = vcmp.lt.s32.totalorder %v3216, 0
        %v3381 = vsub.s32 0, %v3216
        %v3382 = vsel %vm3380, %v3381, %v3216
        %v3383 = vshrl.u32 %v3382, 4
        %v3384 = vand.u32 %v3382, 15
        %v3385 = vsub.s32 0, %v3384
        %v3386 = vsel %vm3380, %v3385, %v3384
        %vm3387 = vcmp.lt.s32.totalorder %v3217, 0
        %v3388 = vsub.s32 0, %v3217
        %v3389 = vsel %vm3387, %v3388, %v3217
        %v3390 = vshrl.u32 %v3389, 4
        %v3391 = vand.u32 %v3389, 15
        %v3392 = vsub.s32 0, %v3391
        %v3393 = vsel %vm3387, %v3392, %v3391
        %vm3394 = vcmp.lt.s32.totalorder %v3218, 0
        %v3395 = vsub.s32 0, %v3218
        %v3396 = vsel %vm3394, %v3395, %v3218
        %v3397 = vshrl.u32 %v3396, 4
        %v3398 = vand.u32 %v3396, 15
        %v3399 = vsub.s32 0, %v3398
        %v3400 = vsel %vm3394, %v3399, %v3398
        %vm3401 = vcmp.lt.s32.totalorder %v3219, 0
        %v3402 = vsub.s32 0, %v3219
        %v3403 = vsel %vm3401, %v3402, %v3219
        %v3404 = vshrl.u32 %v3403, 4
        %v3405 = vand.u32 %v3403, 15
        %v3406 = vsub.s32 0, %v3405
        %v3407 = vsel %vm3401, %v3406, %v3405
        %vm3408 = vcmp.lt.s32.totalorder %v3220, 0
        %v3409 = vsub.s32 0, %v3220
        %v3410 = vsel %vm3408, %v3409, %v3220
        %v3411 = vshrl.u32 %v3410, 4
        %v3412 = vand.u32 %v3410, 15
        %v3413 = vsub.s32 0, %v3412
        %v3414 = vsel %vm3408, %v3413, %v3412
        %vm3415 = vcmp.lt.s32.totalorder %v3221, 0
        %v3416 = vsub.s32 0, %v3221
        %v3417 = vsel %vm3415, %v3416, %v3221
        %v3418 = vshrl.u32 %v3417, 4
        %v3419 = vand.u32 %v3417, 15
        %v3420 = vsub.s32 0, %v3419
        %v3421 = vsel %vm3415, %v3420, %v3419
        %vm3422 = vcmp.lt.s32.totalorder %v3222, 0
        %v3423 = vsub.s32 0, %v3222
        %v3424 = vsel %vm3422, %v3423, %v3222
        %v3425 = vshrl.u32 %v3424, 4
        %v3426 = vand.u32 %v3424, 15
        %v3427 = vsub.s32 0, %v3426
        %v3428 = vsel %vm3422, %v3427, %v3426
        %vm3429 = vcmp.lt.s32.totalorder %v3223, 0
        %v3430 = vsub.s32 0, %v3223
        %v3431 = vsel %vm3429, %v3430, %v3223
        %v3432 = vshrl.u32 %v3431, 4
        %v3433 = vand.u32 %v3431, 15
        %v3434 = vsub.s32 0, %v3433
        %v3435 = vsel %vm3429, %v3434, %v3433
        %vm3436 = vcmp.lt.s32.totalorder %v3224, 0
        %v3437 = vsub.s32 0, %v3224
        %v3438 = vsel %vm3436, %v3437, %v3224
        %v3439 = vshrl.u32 %v3438, 4
        %v3440 = vand.u32 %v3438, 15
        %v3441 = vsub.s32 0, %v3440
        %v3442 = vsel %vm3436, %v3441, %v3440
        %vm3443 = vcmp.lt.s32.totalorder %v3225, 0
        %v3444 = vsub.s32 0, %v3225
        %v3445 = vsel %vm3443, %v3444, %v3225
        %v3446 = vshrl.u32 %v3445, 4
        %v3447 = vand.u32 %v3445, 15
        %v3448 = vsub.s32 0, %v3447
        %v3449 = vsel %vm3443, %v3448, %v3447
        %vm3450 = vcmp.ne.s32.totalorder %v3232, 0
        %vm3451 = vcmp.ne.s32.totalorder %v3239, 0
        %vm3452 = vcmp.ne.s32.totalorder %v3246, 0
        %vm3453 = vcmp.ne.s32.totalorder %v3253, 0
        %vm3454 = vcmp.ne.s32.totalorder %v3260, 0
        %vm3455 = vcmp.ne.s32.totalorder %v3267, 0
        %vm3456 = vcmp.ne.s32.totalorder %v3274, 0
        %vm3457 = vcmp.ne.s32.totalorder %v3281, 0
        %vm3458 = vcmp.ne.s32.totalorder %v3288, 0
        %vm3459 = vcmp.ne.s32.totalorder %v3295, 0
        %vm3460 = vcmp.ne.s32.totalorder %v3302, 0
        %vm3461 = vcmp.ne.s32.totalorder %v3309, 0
        %vm3462 = vcmp.ne.s32.totalorder %v3316, 0
        %vm3463 = vcmp.ne.s32.totalorder %v3323, 0
        %vm3464 = vcmp.ne.s32.totalorder %v3330, 0
        %vm3465 = vcmp.ne.s32.totalorder %v3337, 0
        %vm3466 = vcmp.ne.s32.totalorder %v3344, 0
        %vm3467 = vcmp.ne.s32.totalorder %v3351, 0
        %vm3468 = vcmp.ne.s32.totalorder %v3358, 0
        %vm3469 = vcmp.ne.s32.totalorder %v3365, 0
        %vm3470 = vcmp.ne.s32.totalorder %v3372, 0
        %vm3471 = vcmp.ne.s32.totalorder %v3379, 0
        %vm3472 = vcmp.ne.s32.totalorder %v3386, 0
        %vm3473 = vcmp.ne.s32.totalorder %v3393, 0
        %vm3474 = vcmp.ne.s32.totalorder %v3400, 0
        %vm3475 = vcmp.ne.s32.totalorder %v3407, 0
        %vm3476 = vcmp.ne.s32.totalorder %v3414, 0
        %vm3477 = vcmp.ne.s32.totalorder %v3421, 0
        %vm3478 = vcmp.ne.s32.totalorder %v3428, 0
        %vm3479 = vcmp.ne.s32.totalorder %v3435, 0
        %vm3480 = vcmp.ne.s32.totalorder %v3442, 0
        %vm3481 = vcmp.ne.s32.totalorder %v3449, 0
        %vm3482 = vcmp.lt.s32.totalorder %v3232, 0
        %vm3483 = vcmp.lt.s32.totalorder %v3239, 0
        %vm3484 = vcmp.lt.s32.totalorder %v3246, 0
        %vm3485 = vcmp.lt.s32.totalorder %v3253, 0
        %vm3486 = vcmp.lt.s32.totalorder %v3260, 0
        %vm3487 = vcmp.lt.s32.totalorder %v3267, 0
        %vm3488 = vcmp.lt.s32.totalorder %v3274, 0
        %vm3489 = vcmp.lt.s32.totalorder %v3281, 0
        %vm3490 = vcmp.lt.s32.totalorder %v3288, 0
        %vm3491 = vcmp.lt.s32.totalorder %v3295, 0
        %vm3492 = vcmp.lt.s32.totalorder %v3302, 0
        %vm3493 = vcmp.lt.s32.totalorder %v3309, 0
        %vm3494 = vcmp.lt.s32.totalorder %v3316, 0
        %vm3495 = vcmp.lt.s32.totalorder %v3323, 0
        %vm3496 = vcmp.lt.s32.totalorder %v3330, 0
        %vm3497 = vcmp.lt.s32.totalorder %v3337, 0
        %vm3498 = vcmp.lt.s32.totalorder %v3344, 0
        %vm3499 = vcmp.lt.s32.totalorder %v3351, 0
        %vm3500 = vcmp.lt.s32.totalorder %v3358, 0
        %vm3501 = vcmp.lt.s32.totalorder %v3365, 0
        %vm3502 = vcmp.lt.s32.totalorder %v3372, 0
        %vm3503 = vcmp.lt.s32.totalorder %v3379, 0
        %vm3504 = vcmp.lt.s32.totalorder %v3386, 0
        %vm3505 = vcmp.lt.s32.totalorder %v3393, 0
        %vm3506 = vcmp.lt.s32.totalorder %v3400, 0
        %vm3507 = vcmp.lt.s32.totalorder %v3407, 0
        %vm3508 = vcmp.lt.s32.totalorder %v3414, 0
        %vm3509 = vcmp.lt.s32.totalorder %v3421, 0
        %vm3510 = vcmp.lt.s32.totalorder %v3428, 0
        %vm3511 = vcmp.lt.s32.totalorder %v3435, 0
        %vm3512 = vcmp.lt.s32.totalorder %v3442, 0
        %vm3513 = vcmp.lt.s32.totalorder %v3449, 0
        %vm3514 = vmand %vm3482, %vm3450
        %vm3515 = vmand %vm3483, %vm3451
        %vm3516 = vmand %vm3484, %vm3452
        %vm3517 = vmand %vm3485, %vm3453
        %vm3518 = vmand %vm3486, %vm3454
        %vm3519 = vmand %vm3487, %vm3455
        %vm3520 = vmand %vm3488, %vm3456
        %vm3521 = vmand %vm3489, %vm3457
        %vm3522 = vmand %vm3490, %vm3458
        %vm3523 = vmand %vm3491, %vm3459
        %vm3524 = vmand %vm3492, %vm3460
        %vm3525 = vmand %vm3493, %vm3461
        %vm3526 = vmand %vm3494, %vm3462
        %vm3527 = vmand %vm3495, %vm3463
        %vm3528 = vmand %vm3496, %vm3464
        %vm3529 = vmand %vm3497, %vm3465
        %vm3530 = vmand %vm3498, %vm3466
        %vm3531 = vmand %vm3499, %vm3467
        %vm3532 = vmand %vm3500, %vm3468
        %vm3533 = vmand %vm3501, %vm3469
        %vm3534 = vmand %vm3502, %vm3470
        %vm3535 = vmand %vm3503, %vm3471
        %vm3536 = vmand %vm3504, %vm3472
        %vm3537 = vmand %vm3505, %vm3473
        %vm3538 = vmand %vm3506, %vm3474
        %vm3539 = vmand %vm3507, %vm3475
        %vm3540 = vmand %vm3508, %vm3476
        %vm3541 = vmand %vm3509, %vm3477
        %vm3542 = vmand %vm3510, %vm3478
        %vm3543 = vmand %vm3511, %vm3479
        %vm3544 = vmand %vm3512, %vm3480
        %vm3545 = vmand %vm3513, %vm3481
        %v3546 = vadd.s32 %v3232, 16
        %v3547 = vadd.s32 %v3239, 16
        %v3548 = vadd.s32 %v3246, 16
        %v3549 = vadd.s32 %v3253, 16
        %v3550 = vadd.s32 %v3260, 16
        %v3551 = vadd.s32 %v3267, 16
        %v3552 = vadd.s32 %v3274, 16
        %v3553 = vadd.s32 %v3281, 16
        %v3554 = vadd.s32 %v3288, 16
        %v3555 = vadd.s32 %v3295, 16
        %v3556 = vadd.s32 %v3302, 16
        %v3557 = vadd.s32 %v3309, 16
        %v3558 = vadd.s32 %v3316, 16
        %v3559 = vadd.s32 %v3323, 16
        %v3560 = vadd.s32 %v3330, 16
        %v3561 = vadd.s32 %v3337, 16
        %v3562 = vadd.s32 %v3344, 16
        %v3563 = vadd.s32 %v3351, 16
        %v3564 = vadd.s32 %v3358, 16
        %v3565 = vadd.s32 %v3365, 16
        %v3566 = vadd.s32 %v3372, 16
        %v3567 = vadd.s32 %v3379, 16
        %v3568 = vadd.s32 %v3386, 16
        %v3569 = vadd.s32 %v3393, 16
        %v3570 = vadd.s32 %v3400, 16
        %v3571 = vadd.s32 %v3407, 16
        %v3572 = vadd.s32 %v3414, 16
        %v3573 = vadd.s32 %v3421, 16
        %v3574 = vadd.s32 %v3428, 16
        %v3575 = vadd.s32 %v3435, 16
        %v3576 = vadd.s32 %v3442, 16
        %v3577 = vadd.s32 %v3449, 16
        %v3578 = vsel %vm3514, %v3546, %v3232
        %v3579 = vsel %vm3515, %v3547, %v3239
        %v3580 = vsel %vm3516, %v3548, %v3246
        %v3581 = vsel %vm3517, %v3549, %v3253
        %v3582 = vsel %vm3518, %v3550, %v3260
        %v3583 = vsel %vm3519, %v3551, %v3267
        %v3584 = vsel %vm3520, %v3552, %v3274
        %v3585 = vsel %vm3521, %v3553, %v3281
        %v3586 = vsel %vm3522, %v3554, %v3288
        %v3587 = vsel %vm3523, %v3555, %v3295
        %v3588 = vsel %vm3524, %v3556, %v3302
        %v3589 = vsel %vm3525, %v3557, %v3309
        %v3590 = vsel %vm3526, %v3558, %v3316
        %v3591 = vsel %vm3527, %v3559, %v3323
        %v3592 = vsel %vm3528, %v3560, %v3330
        %v3593 = vsel %vm3529, %v3561, %v3337
        %v3594 = vsel %vm3530, %v3562, %v3344
        %v3595 = vsel %vm3531, %v3563, %v3351
        %v3596 = vsel %vm3532, %v3564, %v3358
        %v3597 = vsel %vm3533, %v3565, %v3365
        %v3598 = vsel %vm3534, %v3566, %v3372
        %v3599 = vsel %vm3535, %v3567, %v3379
        %v3600 = vsel %vm3536, %v3568, %v3386
        %v3601 = vsel %vm3537, %v3569, %v3393
        %v3602 = vsel %vm3538, %v3570, %v3400
        %v3603 = vsel %vm3539, %v3571, %v3407
        %v3604 = vsel %vm3540, %v3572, %v3414
        %v3605 = vsel %vm3541, %v3573, %v3421
        %v3606 = vsel %vm3542, %v3574, %v3428
        %v3607 = vsel %vm3543, %v3575, %v3435
        %v3608 = vsel %vm3544, %v3576, %v3442
        %v3609 = vsel %vm3545, %v3577, %v3449
        %vm3610 = vcmp.gt.s32.totalorder %v3578, 0
        %vm3611 = vcmp.gt.s32.totalorder %v3579, 0
        %vm3612 = vcmp.gt.s32.totalorder %v3580, 0
        %vm3613 = vcmp.gt.s32.totalorder %v3581, 0
        %vm3614 = vcmp.gt.s32.totalorder %v3582, 0
        %vm3615 = vcmp.gt.s32.totalorder %v3583, 0
        %vm3616 = vcmp.gt.s32.totalorder %v3584, 0
        %vm3617 = vcmp.gt.s32.totalorder %v3585, 0
        %vm3618 = vcmp.gt.s32.totalorder %v3586, 0
        %vm3619 = vcmp.gt.s32.totalorder %v3587, 0
        %vm3620 = vcmp.gt.s32.totalorder %v3588, 0
        %vm3621 = vcmp.gt.s32.totalorder %v3589, 0
        %vm3622 = vcmp.gt.s32.totalorder %v3590, 0
        %vm3623 = vcmp.gt.s32.totalorder %v3591, 0
        %vm3624 = vcmp.gt.s32.totalorder %v3592, 0
        %vm3625 = vcmp.gt.s32.totalorder %v3593, 0
        %vm3626 = vcmp.gt.s32.totalorder %v3594, 0
        %vm3627 = vcmp.gt.s32.totalorder %v3595, 0
        %vm3628 = vcmp.gt.s32.totalorder %v3596, 0
        %vm3629 = vcmp.gt.s32.totalorder %v3597, 0
        %vm3630 = vcmp.gt.s32.totalorder %v3598, 0
        %vm3631 = vcmp.gt.s32.totalorder %v3599, 0
        %vm3632 = vcmp.gt.s32.totalorder %v3600, 0
        %vm3633 = vcmp.gt.s32.totalorder %v3601, 0
        %vm3634 = vcmp.gt.s32.totalorder %v3602, 0
        %vm3635 = vcmp.gt.s32.totalorder %v3603, 0
        %vm3636 = vcmp.gt.s32.totalorder %v3604, 0
        %vm3637 = vcmp.gt.s32.totalorder %v3605, 0
        %vm3638 = vcmp.gt.s32.totalorder %v3606, 0
        %vm3639 = vcmp.gt.s32.totalorder %v3607, 0
        %vm3640 = vcmp.gt.s32.totalorder %v3608, 0
        %vm3641 = vcmp.gt.s32.totalorder %v3609, 0
        %v3642 = vsel %vm3610, 1, 0
        %v3643 = vsel %vm3611, 1, 0
        %v3644 = vsel %vm3612, 1, 0
        %v3645 = vsel %vm3613, 1, 0
        %v3646 = vsel %vm3614, 1, 0
        %v3647 = vsel %vm3615, 1, 0
        %v3648 = vsel %vm3616, 1, 0
        %v3649 = vsel %vm3617, 1, 0
        %v3650 = vsel %vm3618, 1, 0
        %v3651 = vsel %vm3619, 1, 0
        %v3652 = vsel %vm3620, 1, 0
        %v3653 = vsel %vm3621, 1, 0
        %v3654 = vsel %vm3622, 1, 0
        %v3655 = vsel %vm3623, 1, 0
        %v3656 = vsel %vm3624, 1, 0
        %v3657 = vsel %vm3625, 1, 0
        %v3658 = vsel %vm3626, 1, 0
        %v3659 = vsel %vm3627, 1, 0
        %v3660 = vsel %vm3628, 1, 0
        %v3661 = vsel %vm3629, 1, 0
        %v3662 = vsel %vm3630, 1, 0
        %v3663 = vsel %vm3631, 1, 0
        %v3664 = vsel %vm3632, 1, 0
        %v3665 = vsel %vm3633, 1, 0
        %v3666 = vsel %vm3634, 1, 0
        %v3667 = vsel %vm3635, 1, 0
        %v3668 = vsel %vm3636, 1, 0
        %v3669 = vsel %vm3637, 1, 0
        %v3670 = vsel %vm3638, 1, 0
        %v3671 = vsel %vm3639, 1, 0
        %v3672 = vsel %vm3640, 1, 0
        %v3673 = vsel %vm3641, 1, 0
        %v3674 = vcvt.s32.f32 %v3642
        %v3675 = vcvt.s32.f32 %v3643
        %v3676 = vcvt.s32.f32 %v3644
        %v3677 = vcvt.s32.f32 %v3645
        %v3678 = vcvt.s32.f32 %v3646
        %v3679 = vcvt.s32.f32 %v3647
        %v3680 = vcvt.s32.f32 %v3648
        %v3681 = vcvt.s32.f32 %v3649
        %v3682 = vcvt.s32.f32 %v3650
        %v3683 = vcvt.s32.f32 %v3651
        %v3684 = vcvt.s32.f32 %v3652
        %v3685 = vcvt.s32.f32 %v3653
        %v3686 = vcvt.s32.f32 %v3654
        %v3687 = vcvt.s32.f32 %v3655
        %v3688 = vcvt.s32.f32 %v3656
        %v3689 = vcvt.s32.f32 %v3657
        %v3690 = vcvt.s32.f32 %v3658
        %v3691 = vcvt.s32.f32 %v3659
        %v3692 = vcvt.s32.f32 %v3660
        %v3693 = vcvt.s32.f32 %v3661
        %v3694 = vcvt.s32.f32 %v3662
        %v3695 = vcvt.s32.f32 %v3663
        %v3696 = vcvt.s32.f32 %v3664
        %v3697 = vcvt.s32.f32 %v3665
        %v3698 = vcvt.s32.f32 %v3666
        %v3699 = vcvt.s32.f32 %v3667
        %v3700 = vcvt.s32.f32 %v3668
        %v3701 = vcvt.s32.f32 %v3669
        %v3702 = vcvt.s32.f32 %v3670
        %v3703 = vcvt.s32.f32 %v3671
        %v3704 = vcvt.s32.f32 %v3672
        %v3705 = vcvt.s32.f32 %v3673
        %v3706 = vpack.c.bf16 %v3674, %v3674
        %v3707 = vpack.c.bf16 %v3675, %v3675
        %v3708 = vpack.c.bf16 %v3676, %v3676
        %v3709 = vpack.c.bf16 %v3677, %v3677
        %v3710 = vpack.c.bf16 %v3678, %v3678
        %v3711 = vpack.c.bf16 %v3679, %v3679
        %v3712 = vpack.c.bf16 %v3680, %v3680
        %v3713 = vpack.c.bf16 %v3681, %v3681
        %v3714 = vpack.c.bf16 %v3682, %v3682
        %v3715 = vpack.c.bf16 %v3683, %v3683
        %v3716 = vpack.c.bf16 %v3684, %v3684
        %v3717 = vpack.c.bf16 %v3685, %v3685
        %v3718 = vpack.c.bf16 %v3686, %v3686
        %v3719 = vpack.c.bf16 %v3687, %v3687
        %v3720 = vpack.c.bf16 %v3688, %v3688
        %v3721 = vpack.c.bf16 %v3689, %v3689
        %v3722 = vpack.c.bf16 %v3690, %v3690
        %v3723 = vpack.c.bf16 %v3691, %v3691
        %v3724 = vpack.c.bf16 %v3692, %v3692
        %v3725 = vpack.c.bf16 %v3693, %v3693
        %v3726 = vpack.c.bf16 %v3694, %v3694
        %v3727 = vpack.c.bf16 %v3695, %v3695
        %v3728 = vpack.c.bf16 %v3696, %v3696
        %v3729 = vpack.c.bf16 %v3697, %v3697
        %v3730 = vpack.c.bf16 %v3698, %v3698
        %v3731 = vpack.c.bf16 %v3699, %v3699
        %v3732 = vpack.c.bf16 %v3700, %v3700
        %v3733 = vpack.c.bf16 %v3701, %v3701
        %v3734 = vpack.c.bf16 %v3702, %v3702
        %v3735 = vpack.c.bf16 %v3703, %v3703
        %v3736 = vpack.c.bf16 %v3704, %v3704
        %v3737 = vpack.c.bf16 %v3705, %v3705
        %vm3738 = vcmp.lt.s32.totalorder %v3578, 15
        %vm3739 = vcmp.lt.s32.totalorder %v3579, 15
        %vm3740 = vcmp.lt.s32.totalorder %v3580, 15
        %vm3741 = vcmp.lt.s32.totalorder %v3581, 15
        %vm3742 = vcmp.lt.s32.totalorder %v3582, 15
        %vm3743 = vcmp.lt.s32.totalorder %v3583, 15
        %vm3744 = vcmp.lt.s32.totalorder %v3584, 15
        %vm3745 = vcmp.lt.s32.totalorder %v3585, 15
        %vm3746 = vcmp.lt.s32.totalorder %v3586, 15
        %vm3747 = vcmp.lt.s32.totalorder %v3587, 15
        %vm3748 = vcmp.lt.s32.totalorder %v3588, 15
        %vm3749 = vcmp.lt.s32.totalorder %v3589, 15
        %vm3750 = vcmp.lt.s32.totalorder %v3590, 15
        %vm3751 = vcmp.lt.s32.totalorder %v3591, 15
        %vm3752 = vcmp.lt.s32.totalorder %v3592, 15
        %vm3753 = vcmp.lt.s32.totalorder %v3593, 15
        %vm3754 = vcmp.lt.s32.totalorder %v3594, 15
        %vm3755 = vcmp.lt.s32.totalorder %v3595, 15
        %vm3756 = vcmp.lt.s32.totalorder %v3596, 15
        %vm3757 = vcmp.lt.s32.totalorder %v3597, 15
        %vm3758 = vcmp.lt.s32.totalorder %v3598, 15
        %vm3759 = vcmp.lt.s32.totalorder %v3599, 15
        %vm3760 = vcmp.lt.s32.totalorder %v3600, 15
        %vm3761 = vcmp.lt.s32.totalorder %v3601, 15
        %vm3762 = vcmp.lt.s32.totalorder %v3602, 15
        %vm3763 = vcmp.lt.s32.totalorder %v3603, 15
        %vm3764 = vcmp.lt.s32.totalorder %v3604, 15
        %vm3765 = vcmp.lt.s32.totalorder %v3605, 15
        %vm3766 = vcmp.lt.s32.totalorder %v3606, 15
        %vm3767 = vcmp.lt.s32.totalorder %v3607, 15
        %vm3768 = vcmp.lt.s32.totalorder %v3608, 15
        %vm3769 = vcmp.lt.s32.totalorder %v3609, 15
        %v3770 = vsel %vm3738, 1, 0
        %v3771 = vsel %vm3739, 1, 0
        %v3772 = vsel %vm3740, 1, 0
        %v3773 = vsel %vm3741, 1, 0
        %v3774 = vsel %vm3742, 1, 0
        %v3775 = vsel %vm3743, 1, 0
        %v3776 = vsel %vm3744, 1, 0
        %v3777 = vsel %vm3745, 1, 0
        %v3778 = vsel %vm3746, 1, 0
        %v3779 = vsel %vm3747, 1, 0
        %v3780 = vsel %vm3748, 1, 0
        %v3781 = vsel %vm3749, 1, 0
        %v3782 = vsel %vm3750, 1, 0
        %v3783 = vsel %vm3751, 1, 0
        %v3784 = vsel %vm3752, 1, 0
        %v3785 = vsel %vm3753, 1, 0
        %v3786 = vsel %vm3754, 1, 0
        %v3787 = vsel %vm3755, 1, 0
        %v3788 = vsel %vm3756, 1, 0
        %v3789 = vsel %vm3757, 1, 0
        %v3790 = vsel %vm3758, 1, 0
        %v3791 = vsel %vm3759, 1, 0
        %v3792 = vsel %vm3760, 1, 0
        %v3793 = vsel %vm3761, 1, 0
        %v3794 = vsel %vm3762, 1, 0
        %v3795 = vsel %vm3763, 1, 0
        %v3796 = vsel %vm3764, 1, 0
        %v3797 = vsel %vm3765, 1, 0
        %v3798 = vsel %vm3766, 1, 0
        %v3799 = vsel %vm3767, 1, 0
        %v3800 = vsel %vm3768, 1, 0
        %v3801 = vsel %vm3769, 1, 0
        %v3802 = vcvt.s32.f32 %v3770
        %v3803 = vcvt.s32.f32 %v3771
        %v3804 = vcvt.s32.f32 %v3772
        %v3805 = vcvt.s32.f32 %v3773
        %v3806 = vcvt.s32.f32 %v3774
        %v3807 = vcvt.s32.f32 %v3775
        %v3808 = vcvt.s32.f32 %v3776
        %v3809 = vcvt.s32.f32 %v3777
        %v3810 = vcvt.s32.f32 %v3778
        %v3811 = vcvt.s32.f32 %v3779
        %v3812 = vcvt.s32.f32 %v3780
        %v3813 = vcvt.s32.f32 %v3781
        %v3814 = vcvt.s32.f32 %v3782
        %v3815 = vcvt.s32.f32 %v3783
        %v3816 = vcvt.s32.f32 %v3784
        %v3817 = vcvt.s32.f32 %v3785
        %v3818 = vcvt.s32.f32 %v3786
        %v3819 = vcvt.s32.f32 %v3787
        %v3820 = vcvt.s32.f32 %v3788
        %v3821 = vcvt.s32.f32 %v3789
        %v3822 = vcvt.s32.f32 %v3790
        %v3823 = vcvt.s32.f32 %v3791
        %v3824 = vcvt.s32.f32 %v3792
        %v3825 = vcvt.s32.f32 %v3793
        %v3826 = vcvt.s32.f32 %v3794
        %v3827 = vcvt.s32.f32 %v3795
        %v3828 = vcvt.s32.f32 %v3796
        %v3829 = vcvt.s32.f32 %v3797
        %v3830 = vcvt.s32.f32 %v3798
        %v3831 = vcvt.s32.f32 %v3799
        %v3832 = vcvt.s32.f32 %v3800
        %v3833 = vcvt.s32.f32 %v3801
        %v3834 = vpack.c.bf16 %v3802, %v3802
        %v3835 = vpack.c.bf16 %v3803, %v3803
        %v3836 = vpack.c.bf16 %v3804, %v3804
        %v3837 = vpack.c.bf16 %v3805, %v3805
        %v3838 = vpack.c.bf16 %v3806, %v3806
        %v3839 = vpack.c.bf16 %v3807, %v3807
        %v3840 = vpack.c.bf16 %v3808, %v3808
        %v3841 = vpack.c.bf16 %v3809, %v3809
        %v3842 = vpack.c.bf16 %v3810, %v3810
        %v3843 = vpack.c.bf16 %v3811, %v3811
        %v3844 = vpack.c.bf16 %v3812, %v3812
        %v3845 = vpack.c.bf16 %v3813, %v3813
        %v3846 = vpack.c.bf16 %v3814, %v3814
        %v3847 = vpack.c.bf16 %v3815, %v3815
        %v3848 = vpack.c.bf16 %v3816, %v3816
        %v3849 = vpack.c.bf16 %v3817, %v3817
        %v3850 = vpack.c.bf16 %v3818, %v3818
        %v3851 = vpack.c.bf16 %v3819, %v3819
        %v3852 = vpack.c.bf16 %v3820, %v3820
        %v3853 = vpack.c.bf16 %v3821, %v3821
        %v3854 = vpack.c.bf16 %v3822, %v3822
        %v3855 = vpack.c.bf16 %v3823, %v3823
        %v3856 = vpack.c.bf16 %v3824, %v3824
        %v3857 = vpack.c.bf16 %v3825, %v3825
        %v3858 = vpack.c.bf16 %v3826, %v3826
        %v3859 = vpack.c.bf16 %v3827, %v3827
        %v3860 = vpack.c.bf16 %v3828, %v3828
        %v3861 = vpack.c.bf16 %v3829, %v3829
        %v3862 = vpack.c.bf16 %v3830, %v3830
        %v3863 = vpack.c.bf16 %v3831, %v3831
        %v3864 = vpack.c.bf16 %v3832, %v3832
        %v3865 = vpack.c.bf16 %v3833, %v3833
        %v3866 = vld [vmem:[#allocation2] sm:$0xf]
        %v3867 = vld [vmem:[#allocation2 + $0x4] sm:$0xf]
        %v3868 = vld [vmem:[#allocation2 + $0x8] sm:$0xf]
        %v3869 = vld [vmem:[#allocation2 + $0xc] sm:$0xf]
        %v3870 = vld [vmem:[#allocation2 + $0x10] sm:$0xf]
        %v3871 = vld [vmem:[#allocation2 + $0x14] sm:$0xf]
        %v3872 = vld [vmem:[#allocation2 + $0x18] sm:$0xf]
        %v3873 = vld [vmem:[#allocation2 + $0x1c] sm:$0xf]
        %v3874 = vld [vmem:[#allocation2 + $0x20] sm:$0xf]
        %v3875 = vld [vmem:[#allocation2 + $0x24] sm:$0xf]
        %v3876 = vld [vmem:[#allocation2 + $0x28] sm:$0xf]
        %v3877 = vld [vmem:[#allocation2 + $0x2c] sm:$0xf]
        %v3878 = vld [vmem:[#allocation2 + $0x30] sm:$0xf]
        %v3879 = vld [vmem:[#allocation2 + $0x34] sm:$0xf]
        %v3880 = vld [vmem:[#allocation2 + $0x38] sm:$0xf]
        %v3881 = vld [vmem:[#allocation2 + $0x3c] sm:$0xf]
        %v3882 = vld [vmem:[#allocation2 + $0x40] sm:$0xf]
        %v3883 = vld [vmem:[#allocation2 + $0x44] sm:$0xf]
        %v3884 = vld [vmem:[#allocation2 + $0x48] sm:$0xf]
        %v3885 = vld [vmem:[#allocation2 + $0x4c] sm:$0xf]
        %v3886 = vld [vmem:[#allocation2 + $0x50] sm:$0xf]
        %v3887 = vld [vmem:[#allocation2 + $0x54] sm:$0xf]
        %v3888 = vld [vmem:[#allocation2 + $0x58] sm:$0xf]
        %v3889 = vld [vmem:[#allocation2 + $0x5c] sm:$0xf]
        %v3890 = vld [vmem:[#allocation2 + $0x60] sm:$0xf]
        %v3891 = vld [vmem:[#allocation2 + $0x64] sm:$0xf]
        %v3892 = vld [vmem:[#allocation2 + $0x68] sm:$0xf]
        %v3893 = vld [vmem:[#allocation2 + $0x6c] sm:$0xf]
        %v3894 = vld [vmem:[#allocation2 + $0x70] sm:$0xf]
        %v3895 = vld [vmem:[#allocation2 + $0x74] sm:$0xf]
        %v3896 = vld [vmem:[#allocation2 + $0x78] sm:$0xf]
        %v3897 = vld [vmem:[#allocation2 + $0x7c] sm:$0xf]
        %v3898 = vunpack.c.l.bf16 %v3866
        %v3899 = vunpack.c.l.bf16 %v3867
        %v3900 = vunpack.c.l.bf16 %v3868
        %v3901 = vunpack.c.l.bf16 %v3869
        %v3902 = vunpack.c.l.bf16 %v3870
        %v3903 = vunpack.c.l.bf16 %v3871
        %v3904 = vunpack.c.l.bf16 %v3872
        %v3905 = vunpack.c.l.bf16 %v3873
        %v3906 = vunpack.c.l.bf16 %v3874
        %v3907 = vunpack.c.l.bf16 %v3875
        %v3908 = vunpack.c.l.bf16 %v3876
        %v3909 = vunpack.c.l.bf16 %v3877
        %v3910 = vunpack.c.l.bf16 %v3878
        %v3911 = vunpack.c.l.bf16 %v3879
        %v3912 = vunpack.c.l.bf16 %v3880
        %v3913 = vunpack.c.l.bf16 %v3881
        %v3914 = vunpack.c.l.bf16 %v3882
        %v3915 = vunpack.c.l.bf16 %v3883
        %v3916 = vunpack.c.l.bf16 %v3884
        %v3917 = vunpack.c.l.bf16 %v3885
        %v3918 = vunpack.c.l.bf16 %v3886
        %v3919 = vunpack.c.l.bf16 %v3887
        %v3920 = vunpack.c.l.bf16 %v3888
        %v3921 = vunpack.c.l.bf16 %v3889
        %v3922 = vunpack.c.l.bf16 %v3890
        %v3923 = vunpack.c.l.bf16 %v3891
        %v3924 = vunpack.c.l.bf16 %v3892
        %v3925 = vunpack.c.l.bf16 %v3893
        %v3926 = vunpack.c.l.bf16 %v3894
        %v3927 = vunpack.c.l.bf16 %v3895
        %v3928 = vunpack.c.l.bf16 %v3896
        %v3929 = vunpack.c.l.bf16 %v3897
        %v3930 = vunpack.c.l.bf16 %v3706
        %v3931 = vunpack.c.l.bf16 %v3707
        %v3932 = vunpack.c.l.bf16 %v3708
        %v3933 = vunpack.c.l.bf16 %v3709
        %v3934 = vunpack.c.l.bf16 %v3710
        %v3935 = vunpack.c.l.bf16 %v3711
        %v3936 = vunpack.c.l.bf16 %v3712
        %v3937 = vunpack.c.l.bf16 %v3713
        %v3938 = vunpack.c.l.bf16 %v3714
        %v3939 = vunpack.c.l.bf16 %v3715
        %v3940 = vunpack.c.l.bf16 %v3716
        %v3941 = vunpack.c.l.bf16 %v3717
        %v3942 = vunpack.c.l.bf16 %v3718
        %v3943 = vunpack.c.l.bf16 %v3719
        %v3944 = vunpack.c.l.bf16 %v3720
        %v3945 = vunpack.c.l.bf16 %v3721
        %v3946 = vunpack.c.l.bf16 %v3722
        %v3947 = vunpack.c.l.bf16 %v3723
        %v3948 = vunpack.c.l.bf16 %v3724
        %v3949 = vunpack.c.l.bf16 %v3725
        %v3950 = vunpack.c.l.bf16 %v3726
        %v3951 = vunpack.c.l.bf16 %v3727
        %v3952 = vunpack.c.l.bf16 %v3728
        %v3953 = vunpack.c.l.bf16 %v3729
        %v3954 = vunpack.c.l.bf16 %v3730
        %v3955 = vunpack.c.l.bf16 %v3731
        %v3956 = vunpack.c.l.bf16 %v3732
        %v3957 = vunpack.c.l.bf16 %v3733
        %v3958 = vunpack.c.l.bf16 %v3734
        %v3959 = vunpack.c.l.bf16 %v3735
        %v3960 = vunpack.c.l.bf16 %v3736
        %v3961 = vunpack.c.l.bf16 %v3737
        %v3962 = vmul.f32 %v3898, %v3930
        %v3963 = vmul.f32 %v3899, %v3931
        %v3964 = vmul.f32 %v3900, %v3932
        %v3965 = vmul.f32 %v3901, %v3933
        %v3966 = vmul.f32 %v3902, %v3934
        %v3967 = vmul.f32 %v3903, %v3935
        %v3968 = vmul.f32 %v3904, %v3936
        %v3969 = vmul.f32 %v3905, %v3937
        %v3970 = vmul.f32 %v3906, %v3938
        %v3971 = vmul.f32 %v3907, %v3939
        %v3972 = vmul.f32 %v3908, %v3940
        %v3973 = vmul.f32 %v3909, %v3941
        %v3974 = vmul.f32 %v3910, %v3942
        %v3975 = vmul.f32 %v3911, %v3943
        %v3976 = vmul.f32 %v3912, %v3944
        %v3977 = vmul.f32 %v3913, %v3945
        %v3978 = vmul.f32 %v3914, %v3946
        %v3979 = vmul.f32 %v3915, %v3947
        %v3980 = vmul.f32 %v3916, %v3948
        %v3981 = vmul.f32 %v3917, %v3949
        %v3982 = vmul.f32 %v3918, %v3950
        %v3983 = vmul.f32 %v3919, %v3951
        %v3984 = vmul.f32 %v3920, %v3952
        %v3985 = vmul.f32 %v3921, %v3953
        %v3986 = vmul.f32 %v3922, %v3954
        %v3987 = vmul.f32 %v3923, %v3955
        %v3988 = vmul.f32 %v3924, %v3956
        %v3989 = vmul.f32 %v3925, %v3957
        %v3990 = vmul.f32 %v3926, %v3958
        %v3991 = vmul.f32 %v3927, %v3959
        %v3992 = vmul.f32 %v3928, %v3960
        %v3993 = vmul.f32 %v3929, %v3961
        %v3994 = vpack.c.bf16 %v3963, %v3962
        %v3995 = vpack.c.bf16 %v3965, %v3964
        %v3996 = vpack.c.bf16 %v3967, %v3966
        %v3997 = vpack.c.bf16 %v3969, %v3968
        %v3998 = vpack.c.bf16 %v3971, %v3970
        %v3999 = vpack.c.bf16 %v3973, %v3972
        %v4000 = vpack.c.bf16 %v3975, %v3974
        %v4001 = vpack.c.bf16 %v3977, %v3976
        %v4002 = vpack.c.bf16 %v3979, %v3978
        %v4003 = vpack.c.bf16 %v3981, %v3980
        %v4004 = vpack.c.bf16 %v3983, %v3982
        %v4005 = vpack.c.bf16 %v3985, %v3984
        %v4006 = vpack.c.bf16 %v3987, %v3986
        %v4007 = vpack.c.bf16 %v3989, %v3988
        %v4008 = vpack.c.bf16 %v3991, %v3990
        %v4009 = vpack.c.bf16 %v3993, %v3992
        %v4010 = vld [vmem:[%s8] sm:$0xf]
        %v4011 = vld [vmem:[%s8 + $0x4] sm:$0x3]
        %v4012 = vld [vmem:[#allocation2 + $0x80] sm:$0x1]
        %s4013 = scalar_lea.vmem %s8, 8
        %v4014 = vld [vmem:[%s4013] sm:$0xf]
        %v4015 = vld [vmem:[%s4013 + $0x4] sm:$0x3]
        %v4049 = vunpack.c.l.b16 %v3866
        %v4050 = vunpack.c.l.b16 %v3867
        %v4051 = vunpack.c.l.b16 %v3868
        %v4052 = vunpack.c.l.b16 %v3869
        %v4053 = vunpack.c.l.b16 %v3870
        %v4054 = vunpack.c.l.b16 %v3871
        %v4055 = vunpack.c.l.b16 %v3872
        %v4056 = vunpack.c.l.b16 %v3873
        %v4057 = vunpack.c.l.b16 %v3874
        %v4058 = vunpack.c.l.b16 %v3875
        %v4059 = vunpack.c.l.b16 %v3876
        %v4060 = vunpack.c.l.b16 %v3877
        %v4061 = vunpack.c.l.b16 %v3878
        %v4062 = vunpack.c.l.b16 %v3879
        %v4063 = vunpack.c.l.b16 %v3880
        %v4064 = vunpack.c.l.b16 %v3881
        %v4065 = vunpack.c.l.b16 %v3882
        %v4066 = vunpack.c.l.b16 %v3883
        %v4067 = vunpack.c.l.b16 %v3884
        %v4068 = vunpack.c.l.b16 %v3885
        %v4069 = vunpack.c.l.b16 %v3886
        %v4070 = vunpack.c.l.b16 %v3887
        %v4071 = vunpack.c.l.b16 %v3888
        %v4072 = vunpack.c.l.b16 %v3889
        %v4073 = vunpack.c.l.b16 %v3890
        %v4074 = vunpack.c.l.b16 %v3891
        %v4075 = vunpack.c.l.b16 %v3892
        %v4076 = vunpack.c.l.b16 %v3893
        %v4077 = vunpack.c.l.b16 %v3894
        %v4078 = vunpack.c.l.b16 %v3895
        %v4079 = vunpack.c.l.b16 %v3896
        %v4080 = vunpack.c.l.b16 %v3897
        %v4081 = vunpack.c.l.b16 %v4012
        %v4082 = vpack.c.b16 %v4050, %v4049
        %v4083 = vpack.c.b16 %v4052, %v4051
        %v4084 = vpack.c.b16 %v4054, %v4053
        %v4085 = vpack.c.b16 %v4056, %v4055
        %v4086 = vpack.c.b16 %v4058, %v4057
        %v4087 = vpack.c.b16 %v4060, %v4059
        %v4088 = vpack.c.b16 %v4062, %v4061
        %v4089 = vpack.c.b16 %v4064, %v4063
        %v4090 = vpack.c.b16 %v4066, %v4065
        %v4091 = vpack.c.b16 %v4068, %v4067
        %v4092 = vpack.c.b16 %v4070, %v4069
        %v4093 = vpack.c.b16 %v4072, %v4071
        %v4094 = vpack.c.b16 %v4074, %v4073
        %v4095 = vpack.c.b16 %v4076, %v4075
        %v4096 = vpack.c.b16 %v4078, %v4077
        %v4097 = vpack.c.b16 %v4080, %v4079
        %v4098 = vpack.c.b16 %v4081, %v4081
        %v4100 = vshrl.u32 %v4082, 16
        %v4102 = vshll.u32 %v4082, 16
        %v4104 = vrot.slane %v4102, 1
        %v4105 = vor.u32 %v4100, %v4104
        %v4107 = vshll.u32 %v4083, 16
        %v4109 = vrot.slane %v4107, 1
        %v4110 = vsel %vm1133, %v4105, %v4109
        %v4111 = vshrl.u32 %v4083, 16
        %v4113 = vor.u32 %v4111, %v4109
        %v4115 = vshll.u32 %v4084, 16
        %v4117 = vrot.slane %v4115, 1
        %v4118 = vsel %vm1133, %v4113, %v4117
        %v4119 = vshrl.u32 %v4084, 16
        %v4121 = vor.u32 %v4119, %v4117
        %v4123 = vshll.u32 %v4085, 16
        %v4125 = vrot.slane %v4123, 1
        %v4126 = vsel %vm1133, %v4121, %v4125
        %v4127 = vshrl.u32 %v4085, 16
        %v4129 = vor.u32 %v4127, %v4125
        %v4131 = vshll.u32 %v4086, 16
        %v4133 = vrot.slane %v4131, 1
        %v4134 = vsel %vm1133, %v4129, %v4133
        %v4135 = vshrl.u32 %v4086, 16
        %v4137 = vor.u32 %v4135, %v4133
        %v4139 = vshll.u32 %v4087, 16
        %v4141 = vrot.slane %v4139, 1
        %v4142 = vsel %vm1133, %v4137, %v4141
        %v4143 = vshrl.u32 %v4087, 16
        %v4145 = vor.u32 %v4143, %v4141
        %v4147 = vshll.u32 %v4088, 16
        %v4149 = vrot.slane %v4147, 1
        %v4150 = vsel %vm1133, %v4145, %v4149
        %v4151 = vshrl.u32 %v4088, 16
        %v4153 = vor.u32 %v4151, %v4149
        %v4155 = vshll.u32 %v4089, 16
        %v4157 = vrot.slane %v4155, 1
        %v4158 = vsel %vm1133, %v4153, %v4157
        %v4159 = vshrl.u32 %v4089, 16
        %v4161 = vor.u32 %v4159, %v4157
        %v4163 = vshll.u32 %v4090, 16
        %v4165 = vrot.slane %v4163, 1
        %v4166 = vsel %vm1133, %v4161, %v4165
        %v4167 = vshrl.u32 %v4090, 16
        %v4169 = vor.u32 %v4167, %v4165
        %v4171 = vshll.u32 %v4091, 16
        %v4173 = vrot.slane %v4171, 1
        %v4174 = vsel %vm1133, %v4169, %v4173
        %v4175 = vshrl.u32 %v4091, 16
        %v4177 = vor.u32 %v4175, %v4173
        %v4179 = vshll.u32 %v4092, 16
        %v4181 = vrot.slane %v4179, 1
        %v4182 = vsel %vm1133, %v4177, %v4181
        %v4183 = vshrl.u32 %v4092, 16
        %v4185 = vor.u32 %v4183, %v4181
        %v4187 = vshll.u32 %v4093, 16
        %v4189 = vrot.slane %v4187, 1
        %v4190 = vsel %vm1133, %v4185, %v4189
        %v4191 = vshrl.u32 %v4093, 16
        %v4193 = vor.u32 %v4191, %v4189
        %v4195 = vshll.u32 %v4094, 16
        %v4197 = vrot.slane %v4195, 1
        %v4198 = vsel %vm1133, %v4193, %v4197
        %v4199 = vshrl.u32 %v4094, 16
        %v4201 = vor.u32 %v4199, %v4197
        %v4203 = vshll.u32 %v4095, 16
        %v4205 = vrot.slane %v4203, 1
        %v4206 = vsel %vm1133, %v4201, %v4205
        %v4207 = vshrl.u32 %v4095, 16
        %v4209 = vor.u32 %v4207, %v4205
        %v4211 = vshll.u32 %v4096, 16
        %v4213 = vrot.slane %v4211, 1
        %v4214 = vsel %vm1133, %v4209, %v4213
        %v4215 = vshrl.u32 %v4096, 16
        %v4217 = vor.u32 %v4215, %v4213
        %v4219 = vshll.u32 %v4097, 16
        %v4221 = vrot.slane %v4219, 1
        %v4222 = vsel %vm1133, %v4217, %v4221
        %v4223 = vshrl.u32 %v4097, 16
        %v4225 = vor.u32 %v4223, %v4221
        %v4227 = vshll.u32 %v4098, 16
        %v4229 = vrot.slane %v4227, 1
        %v4230 = vsel %vm1133, %v4225, %v4229
        %v4233 = vunpack.c.l.b16 %v4014
        %v4234 = vunpack.c.l.b16 %v4015
        %v4235 = vpack.c.b16 %v4234, %v4233
        %vm4236 = vcmask 97280
        %v4238 = vsel %vm4236, %v4110, 0
        %v4241 = vsel %vm4236, %v4118, 0
        %v4244 = vsel %vm4236, %v4126, 0
        %v4247 = vsel %vm4236, %v4134, 0
        %v4250 = vsel %vm4236, %v4142, 0
        %v4253 = vsel %vm4236, %v4150, 0
        %v4256 = vsel %vm4236, %v4158, 0
        %v4259 = vsel %vm4236, %v4166, 0
        %v4262 = vsel %vm4236, %v4174, 0
        %v4265 = vsel %vm4236, %v4182, 0
        %v4268 = vsel %vm4236, %v4190, 0
        %v4271 = vsel %vm4236, %v4198, 0
        %v4274 = vsel %vm4236, %v4206, 0
        %v4277 = vsel %vm4236, %v4214, 0
        %v4280 = vsel %vm4236, %v4222, 0
        %v4283 = vsel %vm4236, %v4230, 0
        %vm4285 = vcmask 1045504
        %v4287 = vsel %vm4285, %v4235, 0
        %4289 = vmatpush.bf16.msra.mxu0 0
        %4290 = vmatpush.bf16.msra.mxu0 0
        %4291 = vmatpush.bf16.msra.mxu0 0
        %4292 = vmatpush.bf16.msra.mxu0 0
        %4293 = vmatpush.bf16.msra.mxu0 0
        %4294 = vmatpush.bf16.msra.mxu0 0
        %4295 = vmatpush.bf16.msra.mxu0 0
        %4296 = vmatpush.bf16.msra.mxu0 %v4287
        %4297 = vmatmul.bf16.gmra.mxu0 %v4238
        %v4298 = vpop.f32.mrf.mxu0
        %v4299 = vadd.f32 0.0, %v4298
        %v4300 = vpop.f32.mrf.mxu0
        %v4301 = vadd.f32 0.0, %v4300
        %4302 = vmatmul.bf16.gmra.mxu0 %v4241
        %v4303 = vpop.f32.mrf.mxu0
        %v4304 = vadd.f32 0.0, %v4303
        %v4305 = vpop.f32.mrf.mxu0
        %v4306 = vadd.f32 0.0, %v4305
        %4307 = vmatmul.bf16.gmra.mxu0 %v4244
        %v4308 = vpop.f32.mrf.mxu0
        %v4309 = vadd.f32 0.0, %v4308
        %v4310 = vpop.f32.mrf.mxu0
        %v4311 = vadd.f32 0.0, %v4310
        %4312 = vmatmul.bf16.gmra.mxu0 %v4247
        %v4313 = vpop.f32.mrf.mxu0
        %v4314 = vadd.f32 0.0, %v4313
        %v4315 = vpop.f32.mrf.mxu0
        %v4316 = vadd.f32 0.0, %v4315
        %4317 = vmatmul.bf16.gmra.mxu0 %v4250
        %v4318 = vpop.f32.mrf.mxu0
        %v4319 = vadd.f32 0.0, %v4318
        %v4320 = vpop.f32.mrf.mxu0
        %v4321 = vadd.f32 0.0, %v4320
        %4322 = vmatmul.bf16.gmra.mxu0 %v4253
        %v4323 = vpop.f32.mrf.mxu0
        %v4324 = vadd.f32 0.0, %v4323
        %v4325 = vpop.f32.mrf.mxu0
        %v4326 = vadd.f32 0.0, %v4325
        %4327 = vmatmul.bf16.gmra.mxu0 %v4256
        %v4328 = vpop.f32.mrf.mxu0
        %v4329 = vadd.f32 0.0, %v4328
        %v4330 = vpop.f32.mrf.mxu0
        %v4331 = vadd.f32 0.0, %v4330
        %4332 = vmatmul.bf16.gmra.mxu0 %v4259
        %v4333 = vpop.f32.mrf.mxu0
        %v4334 = vadd.f32 0.0, %v4333
        %v4335 = vpop.f32.mrf.mxu0
        %v4336 = vadd.f32 0.0, %v4335
        %4337 = vmatmul.bf16.gmra.mxu0 %v4262
        %v4338 = vpop.f32.mrf.mxu0
        %v4339 = vadd.f32 0.0, %v4338
        %v4340 = vpop.f32.mrf.mxu0
        %v4341 = vadd.f32 0.0, %v4340
        %4342 = vmatmul.bf16.gmra.mxu0 %v4265
        %v4343 = vpop.f32.mrf.mxu0
        %v4344 = vadd.f32 0.0, %v4343
        %v4345 = vpop.f32.mrf.mxu0
        %v4346 = vadd.f32 0.0, %v4345
        %4347 = vmatmul.bf16.gmra.mxu0 %v4268
        %v4348 = vpop.f32.mrf.mxu0
        %v4349 = vadd.f32 0.0, %v4348
        %v4350 = vpop.f32.mrf.mxu0
        %v4351 = vadd.f32 0.0, %v4350
        %4352 = vmatmul.bf16.gmra.mxu0 %v4271
        %v4353 = vpop.f32.mrf.mxu0
        %v4354 = vadd.f32 0.0, %v4353
        %v4355 = vpop.f32.mrf.mxu0
        %v4356 = vadd.f32 0.0, %v4355
        %4357 = vmatmul.bf16.gmra.mxu0 %v4274
        %v4358 = vpop.f32.mrf.mxu0
        %v4359 = vadd.f32 0.0, %v4358
        %v4360 = vpop.f32.mrf.mxu0
        %v4361 = vadd.f32 0.0, %v4360
        %4362 = vmatmul.bf16.gmra.mxu0 %v4277
        %v4363 = vpop.f32.mrf.mxu0
        %v4364 = vadd.f32 0.0, %v4363
        %v4365 = vpop.f32.mrf.mxu0
        %v4366 = vadd.f32 0.0, %v4365
        %4367 = vmatmul.bf16.gmra.mxu0 %v4280
        %v4368 = vpop.f32.mrf.mxu0
        %v4369 = vadd.f32 0.0, %v4368
        %v4370 = vpop.f32.mrf.mxu0
        %v4371 = vadd.f32 0.0, %v4370
        %4372 = vmatmul.bf16.gmra.mxu0 %v4283
        %v4373 = vpop.f32.mrf.mxu0
        %v4374 = vadd.f32 0.0, %v4373
        %v4375 = vpop.f32.mrf.mxu0
        %v4376 = vadd.f32 0.0, %v4375
        %4377 = vdwg.mxu0
        %v4380 = vunpack.c.l.b16 %v4010
        %v4381 = vunpack.c.l.b16 %v4011
        %v4382 = vpack.c.b16 %v4381, %v4380
        %v4384 = vsel %vm4236, %v3994, 0
        %v4387 = vsel %vm4236, %v3995, 0
        %v4390 = vsel %vm4236, %v3996, 0
        %v4393 = vsel %vm4236, %v3997, 0
        %v4396 = vsel %vm4236, %v3998, 0
        %v4399 = vsel %vm4236, %v3999, 0
        %v4402 = vsel %vm4236, %v4000, 0
        %v4405 = vsel %vm4236, %v4001, 0
        %v4408 = vsel %vm4236, %v4002, 0
        %v4411 = vsel %vm4236, %v4003, 0
        %v4414 = vsel %vm4236, %v4004, 0
        %v4417 = vsel %vm4236, %v4005, 0
        %v4420 = vsel %vm4236, %v4006, 0
        %v4423 = vsel %vm4236, %v4007, 0
        %v4426 = vsel %vm4236, %v4008, 0
        %v4429 = vsel %vm4236, %v4009, 0
        %v4432 = vsel %vm4285, %v4382, 0
        %4434 = vmatpush.bf16.msra.mxu0 0
        %4435 = vmatpush.bf16.msra.mxu0 0
        %4436 = vmatpush.bf16.msra.mxu0 0
        %4437 = vmatpush.bf16.msra.mxu0 0
        %4438 = vmatpush.bf16.msra.mxu0 0
        %4439 = vmatpush.bf16.msra.mxu0 0
        %4440 = vmatpush.bf16.msra.mxu0 0
        %4441 = vmatpush.bf16.msra.mxu0 %v4432
        %4442 = vmatmul.bf16.gmra.mxu0 %v4384
        %v4443 = vpop.f32.mrf.mxu0
        %v4444 = vadd.f32 %v4299, %v4443
        %v4445 = vpop.f32.mrf.mxu0
        %v4446 = vadd.f32 %v4301, %v4445
        %4447 = vmatmul.bf16.gmra.mxu0 %v4387
        %v4448 = vpop.f32.mrf.mxu0
        %v4449 = vadd.f32 %v4304, %v4448
        %v4450 = vpop.f32.mrf.mxu0
        %v4451 = vadd.f32 %v4306, %v4450
        %4452 = vmatmul.bf16.gmra.mxu0 %v4390
        %v4453 = vpop.f32.mrf.mxu0
        %v4454 = vadd.f32 %v4309, %v4453
        %v4455 = vpop.f32.mrf.mxu0
        %v4456 = vadd.f32 %v4311, %v4455
        %4457 = vmatmul.bf16.gmra.mxu0 %v4393
        %v4458 = vpop.f32.mrf.mxu0
        %v4459 = vadd.f32 %v4314, %v4458
        %v4460 = vpop.f32.mrf.mxu0
        %v4461 = vadd.f32 %v4316, %v4460
        %4462 = vmatmul.bf16.gmra.mxu0 %v4396
        %v4463 = vpop.f32.mrf.mxu0
        %v4464 = vadd.f32 %v4319, %v4463
        %v4465 = vpop.f32.mrf.mxu0
        %v4466 = vadd.f32 %v4321, %v4465
        %4467 = vmatmul.bf16.gmra.mxu0 %v4399
        %v4468 = vpop.f32.mrf.mxu0
        %v4469 = vadd.f32 %v4324, %v4468
        %v4470 = vpop.f32.mrf.mxu0
        %v4471 = vadd.f32 %v4326, %v4470
        %4472 = vmatmul.bf16.gmra.mxu0 %v4402
        %v4473 = vpop.f32.mrf.mxu0
        %v4474 = vadd.f32 %v4329, %v4473
        %v4475 = vpop.f32.mrf.mxu0
        %v4476 = vadd.f32 %v4331, %v4475
        %4477 = vmatmul.bf16.gmra.mxu0 %v4405
        %v4478 = vpop.f32.mrf.mxu0
        %v4479 = vadd.f32 %v4334, %v4478
        %v4480 = vpop.f32.mrf.mxu0
        %v4481 = vadd.f32 %v4336, %v4480
        %4482 = vmatmul.bf16.gmra.mxu0 %v4408
        %v4483 = vpop.f32.mrf.mxu0
        %v4484 = vadd.f32 %v4339, %v4483
        %v4485 = vpop.f32.mrf.mxu0
        %v4486 = vadd.f32 %v4341, %v4485
        %4487 = vmatmul.bf16.gmra.mxu0 %v4411
        %v4488 = vpop.f32.mrf.mxu0
        %v4489 = vadd.f32 %v4344, %v4488
        %v4490 = vpop.f32.mrf.mxu0
        %v4491 = vadd.f32 %v4346, %v4490
        %4492 = vmatmul.bf16.gmra.mxu0 %v4414
        %v4493 = vpop.f32.mrf.mxu0
        %v4494 = vadd.f32 %v4349, %v4493
        %v4495 = vpop.f32.mrf.mxu0
        %v4496 = vadd.f32 %v4351, %v4495
        %4497 = vmatmul.bf16.gmra.mxu0 %v4417
        %v4498 = vpop.f32.mrf.mxu0
        %v4499 = vadd.f32 %v4354, %v4498
        %v4500 = vpop.f32.mrf.mxu0
        %v4501 = vadd.f32 %v4356, %v4500
        %4502 = vmatmul.bf16.gmra.mxu0 %v4420
        %v4503 = vpop.f32.mrf.mxu0
        %v4504 = vadd.f32 %v4359, %v4503
        %v4505 = vpop.f32.mrf.mxu0
        %v4506 = vadd.f32 %v4361, %v4505
        %4507 = vmatmul.bf16.gmra.mxu0 %v4423
        %v4508 = vpop.f32.mrf.mxu0
        %v4509 = vadd.f32 %v4364, %v4508
        %v4510 = vpop.f32.mrf.mxu0
        %v4511 = vadd.f32 %v4366, %v4510
        %4512 = vmatmul.bf16.gmra.mxu0 %v4426
        %v4513 = vpop.f32.mrf.mxu0
        %v4514 = vadd.f32 %v4369, %v4513
        %v4515 = vpop.f32.mrf.mxu0
        %v4516 = vadd.f32 %v4371, %v4515
        %4517 = vmatmul.bf16.gmra.mxu0 %v4429
        %v4518 = vpop.f32.mrf.mxu0
        %v4519 = vadd.f32 %v4374, %v4518
        %v4520 = vpop.f32.mrf.mxu0
        %v4521 = vadd.f32 %v4376, %v4520
        %4522 = vdwg.mxu0
        %v4523 = vld [vmem:[#allocation2] sm:$0xe]
        %v4524 = vunpack.c.l.bf16 %v4523
        %v4525 = vunpack.c.l.bf16 %v4012
        %v4526 = vunpack.c.l.bf16 %v3834
        %v4527 = vunpack.c.l.bf16 %v3835
        %v4528 = vunpack.c.l.bf16 %v3836
        %v4529 = vunpack.c.l.bf16 %v3837
        %v4530 = vunpack.c.l.bf16 %v3838
        %v4531 = vunpack.c.l.bf16 %v3839
        %v4532 = vunpack.c.l.bf16 %v3840
        %v4533 = vunpack.c.l.bf16 %v3841
        %v4534 = vunpack.c.l.bf16 %v3842
        %v4535 = vunpack.c.l.bf16 %v3843
        %v4536 = vunpack.c.l.bf16 %v3844
        %v4537 = vunpack.c.l.bf16 %v3845
        %v4538 = vunpack.c.l.bf16 %v3846
        %v4539 = vunpack.c.l.bf16 %v3847
        %v4540 = vunpack.c.l.bf16 %v3848
        %v4541 = vunpack.c.l.bf16 %v3849
        %v4542 = vunpack.c.l.bf16 %v3850
        %v4543 = vunpack.c.l.bf16 %v3851
        %v4544 = vunpack.c.l.bf16 %v3852
        %v4545 = vunpack.c.l.bf16 %v3853
        %v4546 = vunpack.c.l.bf16 %v3854
        %v4547 = vunpack.c.l.bf16 %v3855
        %v4548 = vunpack.c.l.bf16 %v3856
        %v4549 = vunpack.c.l.bf16 %v3857
        %v4550 = vunpack.c.l.bf16 %v3858
        %v4551 = vunpack.c.l.bf16 %v3859
        %v4552 = vunpack.c.l.bf16 %v3860
        %v4553 = vunpack.c.l.bf16 %v3861
        %v4554 = vunpack.c.l.bf16 %v3862
        %v4555 = vunpack.c.l.bf16 %v3863
        %v4556 = vunpack.c.l.bf16 %v3864
        %v4557 = vunpack.c.l.bf16 %v3865
        %v4590 = vrot.slane %v4526, 6
        %v4591 = vrot.slane %v4527, 6
        %v4592 = vsel %vm1297, %v4590, %v4591
        %v4593 = vrot.slane %v4528, 6
        %v4594 = vsel %vm1297, %v4591, %v4593
        %v4595 = vrot.slane %v4529, 6
        %v4596 = vsel %vm1297, %v4593, %v4595
        %v4597 = vrot.slane %v4530, 6
        %v4598 = vsel %vm1297, %v4595, %v4597
        %v4599 = vrot.slane %v4531, 6
        %v4600 = vsel %vm1297, %v4597, %v4599
        %v4601 = vrot.slane %v4532, 6
        %v4602 = vsel %vm1297, %v4599, %v4601
        %v4603 = vrot.slane %v4533, 6
        %v4604 = vsel %vm1297, %v4601, %v4603
        %v4605 = vrot.slane %v4534, 6
        %v4606 = vsel %vm1297, %v4603, %v4605
        %v4607 = vrot.slane %v4535, 6
        %v4608 = vsel %vm1297, %v4605, %v4607
        %v4609 = vrot.slane %v4536, 6
        %v4610 = vsel %vm1297, %v4607, %v4609
        %v4611 = vrot.slane %v4537, 6
        %v4612 = vsel %vm1297, %v4609, %v4611
        %v4613 = vrot.slane %v4538, 6
        %v4614 = vsel %vm1297, %v4611, %v4613
        %v4615 = vrot.slane %v4539, 6
        %v4616 = vsel %vm1297, %v4613, %v4615
        %v4617 = vrot.slane %v4540, 6
        %v4618 = vsel %vm1297, %v4615, %v4617
        %v4619 = vrot.slane %v4541, 6
        %v4620 = vsel %vm1297, %v4617, %v4619
        %v4621 = vrot.slane %v4542, 6
        %v4622 = vsel %vm1297, %v4619, %v4621
        %v4623 = vrot.slane %v4543, 6
        %v4624 = vsel %vm1297, %v4621, %v4623
        %v4625 = vrot.slane %v4544, 6
        %v4626 = vsel %vm1297, %v4623, %v4625
        %v4627 = vrot.slane %v4545, 6
        %v4628 = vsel %vm1297, %v4625, %v4627
        %v4629 = vrot.slane %v4546, 6
        %v4630 = vsel %vm1297, %v4627, %v4629
        %v4631 = vrot.slane %v4547, 6
        %v4632 = vsel %vm1297, %v4629, %v4631
        %v4633 = vrot.slane %v4548, 6
        %v4634 = vsel %vm1297, %v4631, %v4633
        %v4635 = vrot.slane %v4549, 6
        %v4636 = vsel %vm1297, %v4633, %v4635
        %v4637 = vrot.slane %v4550, 6
        %v4638 = vsel %vm1297, %v4635, %v4637
        %v4639 = vrot.slane %v4551, 6
        %v4640 = vsel %vm1297, %v4637, %v4639
        %v4641 = vrot.slane %v4552, 6
        %v4642 = vsel %vm1297, %v4639, %v4641
        %v4643 = vrot.slane %v4553, 6
        %v4644 = vsel %vm1297, %v4641, %v4643
        %v4645 = vrot.slane %v4554, 6
        %v4646 = vsel %vm1297, %v4643, %v4645
        %v4647 = vrot.slane %v4555, 6
        %v4648 = vsel %vm1297, %v4645, %v4647
        %v4649 = vrot.slane %v4556, 6
        %v4650 = vsel %vm1297, %v4647, %v4649
        %v4651 = vrot.slane %v4557, 6
        %v4652 = vsel %vm1297, %v4649, %v4651
        %v4686 = vmul.f32 %v4524, %v4590
        %v4687 = vmul.f32 %v3899, %v4592
        %v4688 = vmul.f32 %v3900, %v4594
        %v4689 = vmul.f32 %v3901, %v4596
        %v4690 = vmul.f32 %v3902, %v4598
        %v4691 = vmul.f32 %v3903, %v4600
        %v4692 = vmul.f32 %v3904, %v4602
        %v4693 = vmul.f32 %v3905, %v4604
        %v4694 = vmul.f32 %v3906, %v4606
        %v4695 = vmul.f32 %v3907, %v4608
        %v4696 = vmul.f32 %v3908, %v4610
        %v4697 = vmul.f32 %v3909, %v4612
        %v4698 = vmul.f32 %v3910, %v4614
        %v4699 = vmul.f32 %v3911, %v4616
        %v4700 = vmul.f32 %v3912, %v4618
        %v4701 = vmul.f32 %v3913, %v4620
        %v4702 = vmul.f32 %v3914, %v4622
        %v4703 = vmul.f32 %v3915, %v4624
        %v4704 = vmul.f32 %v3916, %v4626
        %v4705 = vmul.f32 %v3917, %v4628
        %v4706 = vmul.f32 %v3918, %v4630
        %v4707 = vmul.f32 %v3919, %v4632
        %v4708 = vmul.f32 %v3920, %v4634
        %v4709 = vmul.f32 %v3921, %v4636
        %v4710 = vmul.f32 %v3922, %v4638
        %v4711 = vmul.f32 %v3923, %v4640
        %v4712 = vmul.f32 %v3924, %v4642
        %v4713 = vmul.f32 %v3925, %v4644
        %v4714 = vmul.f32 %v3926, %v4646
        %v4715 = vmul.f32 %v3927, %v4648
        %v4716 = vmul.f32 %v3928, %v4650
        %v4717 = vmul.f32 %v3929, %v4652
        %v4718 = vmul.f32 %v4525, %v4651
        %v4719 = vpack.c.bf16 %v4687, %v4686
        %v4720 = vpack.c.bf16 %v4689, %v4688
        %v4721 = vpack.c.bf16 %v4691, %v4690
        %v4722 = vpack.c.bf16 %v4693, %v4692
        %v4723 = vpack.c.bf16 %v4695, %v4694
        %v4724 = vpack.c.bf16 %v4697, %v4696
        %v4725 = vpack.c.bf16 %v4699, %v4698
        %v4726 = vpack.c.bf16 %v4701, %v4700
        %v4727 = vpack.c.bf16 %v4703, %v4702
        %v4728 = vpack.c.bf16 %v4705, %v4704
        %v4729 = vpack.c.bf16 %v4707, %v4706
        %v4730 = vpack.c.bf16 %v4709, %v4708
        %v4731 = vpack.c.bf16 %v4711, %v4710
        %v4732 = vpack.c.bf16 %v4713, %v4712
        %v4733 = vpack.c.bf16 %v4715, %v4714
        %v4734 = vpack.c.bf16 %v4717, %v4716
        %v4735 = vpack.c.bf16 %v4718, %v4718
        %s4736 = scalar_lea.vmem %s8, 16
        %v4737 = vld [vmem:[%s4736] sm:$0xf]
        %v4738 = vld [vmem:[%s4736 + $0x4] sm:$0x3]
        %v4756 = vrot.slane %v4719, 1
        %v4757 = vrot.slane %v4720, 1
        %v4758 = vsel %vm1345, %v4756, %v4757
        %v4759 = vrot.slane %v4721, 1
        %v4760 = vsel %vm1345, %v4757, %v4759
        %v4761 = vrot.slane %v4722, 1
        %v4762 = vsel %vm1345, %v4759, %v4761
        %v4763 = vrot.slane %v4723, 1
        %v4764 = vsel %vm1345, %v4761, %v4763
        %v4765 = vrot.slane %v4724, 1
        %v4766 = vsel %vm1345, %v4763, %v4765
        %v4767 = vrot.slane %v4725, 1
        %v4768 = vsel %vm1345, %v4765, %v4767
        %v4769 = vrot.slane %v4726, 1
        %v4770 = vsel %vm1345, %v4767, %v4769
        %v4771 = vrot.slane %v4727, 1
        %v4772 = vsel %vm1345, %v4769, %v4771
        %v4773 = vrot.slane %v4728, 1
        %v4774 = vsel %vm1345, %v4771, %v4773
        %v4775 = vrot.slane %v4729, 1
        %v4776 = vsel %vm1345, %v4773, %v4775
        %v4777 = vrot.slane %v4730, 1
        %v4778 = vsel %vm1345, %v4775, %v4777
        %v4779 = vrot.slane %v4731, 1
        %v4780 = vsel %vm1345, %v4777, %v4779
        %v4781 = vrot.slane %v4732, 1
        %v4782 = vsel %vm1345, %v4779, %v4781
        %v4783 = vrot.slane %v4733, 1
        %v4784 = vsel %vm1345, %v4781, %v4783
        %v4785 = vrot.slane %v4734, 1
        %v4786 = vsel %vm1345, %v4783, %v4785
        %v4787 = vrot.slane %v4735, 1
        %v4788 = vsel %vm1345, %v4785, %v4787
        %v4791 = vunpack.c.l.b16 %v4737
        %v4792 = vunpack.c.l.b16 %v4738
        %v4793 = vpack.c.b16 %v4792, %v4791
        %v4795 = vsel %vm4236, %v4758, 0
        %v4798 = vsel %vm4236, %v4760, 0
        %v4801 = vsel %vm4236, %v4762, 0
        %v4804 = vsel %vm4236, %v4764, 0
        %v4807 = vsel %vm4236, %v4766, 0
        %v4810 = vsel %vm4236, %v4768, 0
        %v4813 = vsel %vm4236, %v4770, 0
        %v4816 = vsel %vm4236, %v4772, 0
        %v4819 = vsel %vm4236, %v4774, 0
        %v4822 = vsel %vm4236, %v4776, 0
        %v4825 = vsel %vm4236, %v4778, 0
        %v4828 = vsel %vm4236, %v4780, 0
        %v4831 = vsel %vm4236, %v4782, 0
        %v4834 = vsel %vm4236, %v4784, 0
        %v4837 = vsel %vm4236, %v4786, 0
        %v4840 = vsel %vm4236, %v4788, 0
        %v4843 = vsel %vm4285, %v4793, 0
        %4845 = vmatpush.bf16.msra.mxu0 0
        %4846 = vmatpush.bf16.msra.mxu0 0
        %4847 = vmatpush.bf16.msra.mxu0 0
        %4848 = vmatpush.bf16.msra.mxu0 0
        %4849 = vmatpush.bf16.msra.mxu0 0
        %4850 = vmatpush.bf16.msra.mxu0 0
        %4851 = vmatpush.bf16.msra.mxu0 0
        %4852 = vmatpush.bf16.msra.mxu0 %v4843
        %4853 = vmatmul.bf16.gmra.mxu0 %v4795
        %v4854 = vpop.f32.mrf.mxu0
        %v4855 = vadd.f32 0.0, %v4854
        %v4856 = vpop.f32.mrf.mxu0
        %v4857 = vadd.f32 0.0, %v4856
        %4858 = vmatmul.bf16.gmra.mxu0 %v4798
        %v4859 = vpop.f32.mrf.mxu0
        %v4860 = vadd.f32 0.0, %v4859
        %v4861 = vpop.f32.mrf.mxu0
        %v4862 = vadd.f32 0.0, %v4861
        %4863 = vmatmul.bf16.gmra.mxu0 %v4801
        %v4864 = vpop.f32.mrf.mxu0
        %v4865 = vadd.f32 0.0, %v4864
        %v4866 = vpop.f32.mrf.mxu0
        %v4867 = vadd.f32 0.0, %v4866
        %4868 = vmatmul.bf16.gmra.mxu0 %v4804
        %v4869 = vpop.f32.mrf.mxu0
        %v4870 = vadd.f32 0.0, %v4869
        %v4871 = vpop.f32.mrf.mxu0
        %v4872 = vadd.f32 0.0, %v4871
        %4873 = vmatmul.bf16.gmra.mxu0 %v4807
        %v4874 = vpop.f32.mrf.mxu0
        %v4875 = vadd.f32 0.0, %v4874
        %v4876 = vpop.f32.mrf.mxu0
        %v4877 = vadd.f32 0.0, %v4876
        %4878 = vmatmul.bf16.gmra.mxu0 %v4810
        %v4879 = vpop.f32.mrf.mxu0
        %v4880 = vadd.f32 0.0, %v4879
        %v4881 = vpop.f32.mrf.mxu0
        %v4882 = vadd.f32 0.0, %v4881
        %4883 = vmatmul.bf16.gmra.mxu0 %v4813
        %v4884 = vpop.f32.mrf.mxu0
        %v4885 = vadd.f32 0.0, %v4884
        %v4886 = vpop.f32.mrf.mxu0
        %v4887 = vadd.f32 0.0, %v4886
        %4888 = vmatmul.bf16.gmra.mxu0 %v4816
        %v4889 = vpop.f32.mrf.mxu0
        %v4890 = vadd.f32 0.0, %v4889
        %v4891 = vpop.f32.mrf.mxu0
        %v4892 = vadd.f32 0.0, %v4891
        %4893 = vmatmul.bf16.gmra.mxu0 %v4819
        %v4894 = vpop.f32.mrf.mxu0
        %v4895 = vadd.f32 0.0, %v4894
        %v4896 = vpop.f32.mrf.mxu0
        %v4897 = vadd.f32 0.0, %v4896
        %4898 = vmatmul.bf16.gmra.mxu0 %v4822
        %v4899 = vpop.f32.mrf.mxu0
        %v4900 = vadd.f32 0.0, %v4899
        %v4901 = vpop.f32.mrf.mxu0
        %v4902 = vadd.f32 0.0, %v4901
        %4903 = vmatmul.bf16.gmra.mxu0 %v4825
        %v4904 = vpop.f32.mrf.mxu0
        %v4905 = vadd.f32 0.0, %v4904
        %v4906 = vpop.f32.mrf.mxu0
        %v4907 = vadd.f32 0.0, %v4906
        %4908 = vmatmul.bf16.gmra.mxu0 %v4828
        %v4909 = vpop.f32.mrf.mxu0
        %v4910 = vadd.f32 0.0, %v4909
        %v4911 = vpop.f32.mrf.mxu0
        %v4912 = vadd.f32 0.0, %v4911
        %4913 = vmatmul.bf16.gmra.mxu0 %v4831
        %v4914 = vpop.f32.mrf.mxu0
        %v4915 = vadd.f32 0.0, %v4914
        %v4916 = vpop.f32.mrf.mxu0
        %v4917 = vadd.f32 0.0, %v4916
        %4918 = vmatmul.bf16.gmra.mxu0 %v4834
        %v4919 = vpop.f32.mrf.mxu0
        %v4920 = vadd.f32 0.0, %v4919
        %v4921 = vpop.f32.mrf.mxu0
        %v4922 = vadd.f32 0.0, %v4921
        %4923 = vmatmul.bf16.gmra.mxu0 %v4837
        %v4924 = vpop.f32.mrf.mxu0
        %v4925 = vadd.f32 0.0, %v4924
        %v4926 = vpop.f32.mrf.mxu0
        %v4927 = vadd.f32 0.0, %v4926
        %4928 = vmatmul.bf16.gmra.mxu0 %v4840
        %v4929 = vpop.f32.mrf.mxu0
        %v4930 = vadd.f32 0.0, %v4929
        %v4931 = vpop.f32.mrf.mxu0
        %v4932 = vadd.f32 0.0, %v4931
        %4933 = vdwg.mxu0
        %v4934 = vadd.f32 %v4444, %v4855
        %v4935 = vadd.f32 %v4446, %v4857
        %v4936 = vadd.f32 %v4449, %v4860
        %v4937 = vadd.f32 %v4451, %v4862
        %v4938 = vadd.f32 %v4454, %v4865
        %v4939 = vadd.f32 %v4456, %v4867
        %v4940 = vadd.f32 %v4459, %v4870
        %v4941 = vadd.f32 %v4461, %v4872
        %v4942 = vadd.f32 %v4464, %v4875
        %v4943 = vadd.f32 %v4466, %v4877
        %v4944 = vadd.f32 %v4469, %v4880
        %v4945 = vadd.f32 %v4471, %v4882
        %v4946 = vadd.f32 %v4474, %v4885
        %v4947 = vadd.f32 %v4476, %v4887
        %v4948 = vadd.f32 %v4479, %v4890
        %v4949 = vadd.f32 %v4481, %v4892
        %v4950 = vadd.f32 %v4484, %v4895
        %v4951 = vadd.f32 %v4486, %v4897
        %v4952 = vadd.f32 %v4489, %v4900
        %v4953 = vadd.f32 %v4491, %v4902
        %v4954 = vadd.f32 %v4494, %v4905
        %v4955 = vadd.f32 %v4496, %v4907
        %v4956 = vadd.f32 %v4499, %v4910
        %v4957 = vadd.f32 %v4501, %v4912
        %v4958 = vadd.f32 %v4504, %v4915
        %v4959 = vadd.f32 %v4506, %v4917
        %v4960 = vadd.f32 %v4509, %v4920
        %v4961 = vadd.f32 %v4511, %v4922
        %v4962 = vadd.f32 %v4514, %v4925
        %v4963 = vadd.f32 %v4516, %v4927
        %v4964 = vadd.f32 %v4519, %v4930
        %v4965 = vadd.f32 %v4521, %v4932
        %v4966 = vld [vmem:[#allocation2 + $0x8] sm:$0xf]
        %v4967 = vld [vmem:[#allocation2 + $0xc] sm:$0xf]
        %v4968 = vld [vmem:[#allocation2 + $0x10] sm:$0xf]
        %v4969 = vld [vmem:[#allocation2 + $0x14] sm:$0xf]
        %v4970 = vld [vmem:[#allocation2 + $0x18] sm:$0xf]
        %v4971 = vld [vmem:[#allocation2 + $0x1c] sm:$0xf]
        %v4972 = vld [vmem:[#allocation2 + $0x20] sm:$0xf]
        %v4973 = vld [vmem:[#allocation2 + $0x24] sm:$0xf]
        %v4974 = vld [vmem:[#allocation2 + $0x28] sm:$0xf]
        %v4975 = vld [vmem:[#allocation2 + $0x2c] sm:$0xf]
        %v4976 = vld [vmem:[#allocation2 + $0x30] sm:$0xf]
        %v4977 = vld [vmem:[#allocation2 + $0x34] sm:$0xf]
        %v4978 = vld [vmem:[#allocation2 + $0x38] sm:$0xf]
        %v4979 = vld [vmem:[#allocation2 + $0x3c] sm:$0xf]
        %v4980 = vld [vmem:[#allocation2 + $0x40] sm:$0xf]
        %v4981 = vld [vmem:[#allocation2 + $0x44] sm:$0xf]
        %v4982 = vld [vmem:[#allocation2 + $0x48] sm:$0xf]
        %v4983 = vld [vmem:[#allocation2 + $0x4c] sm:$0xf]
        %v4984 = vld [vmem:[#allocation2 + $0x50] sm:$0xf]
        %v4985 = vld [vmem:[#allocation2 + $0x54] sm:$0xf]
        %v4986 = vld [vmem:[#allocation2 + $0x58] sm:$0xf]
        %v4987 = vld [vmem:[#allocation2 + $0x5c] sm:$0xf]
        %v4988 = vld [vmem:[#allocation2 + $0x60] sm:$0xf]
        %v4989 = vld [vmem:[#allocation2 + $0x64] sm:$0xf]
        %v4990 = vld [vmem:[#allocation2 + $0x68] sm:$0xf]
        %v4991 = vld [vmem:[#allocation2 + $0x6c] sm:$0xf]
        %v4992 = vld [vmem:[#allocation2 + $0x70] sm:$0xf]
        %v4993 = vld [vmem:[#allocation2 + $0x74] sm:$0xf]
        %v4994 = vld [vmem:[#allocation2 + $0x78] sm:$0xf]
        %v4995 = vld [vmem:[#allocation2 + $0x7c] sm:$0xf]
        %v4996 = vld [vmem:[#allocation2 + $0x80] sm:$0xf]
        %v4997 = vld [vmem:[#allocation2 + $0x84] sm:$0xf]
        %v4998 = vunpack.c.l.bf16 %v4966
        %v4999 = vunpack.c.l.bf16 %v4967
        %v5000 = vunpack.c.l.bf16 %v4968
        %v5001 = vunpack.c.l.bf16 %v4969
        %v5002 = vunpack.c.l.bf16 %v4970
        %v5003 = vunpack.c.l.bf16 %v4971
        %v5004 = vunpack.c.l.bf16 %v4972
        %v5005 = vunpack.c.l.bf16 %v4973
        %v5006 = vunpack.c.l.bf16 %v4974
        %v5007 = vunpack.c.l.bf16 %v4975
        %v5008 = vunpack.c.l.bf16 %v4976
        %v5009 = vunpack.c.l.bf16 %v4977
        %v5010 = vunpack.c.l.bf16 %v4978
        %v5011 = vunpack.c.l.bf16 %v4979
        %v5012 = vunpack.c.l.bf16 %v4980
        %v5013 = vunpack.c.l.bf16 %v4981
        %v5014 = vunpack.c.l.bf16 %v4982
        %v5015 = vunpack.c.l.bf16 %v4983
        %v5016 = vunpack.c.l.bf16 %v4984
        %v5017 = vunpack.c.l.bf16 %v4985
        %v5018 = vunpack.c.l.bf16 %v4986
        %v5019 = vunpack.c.l.bf16 %v4987
        %v5020 = vunpack.c.l.bf16 %v4988
        %v5021 = vunpack.c.l.bf16 %v4989
        %v5022 = vunpack.c.l.bf16 %v4990
        %v5023 = vunpack.c.l.bf16 %v4991
        %v5024 = vunpack.c.l.bf16 %v4992
        %v5025 = vunpack.c.l.bf16 %v4993
        %v5026 = vunpack.c.l.bf16 %v4994
        %v5027 = vunpack.c.l.bf16 %v4995
        %v5028 = vunpack.c.l.bf16 %v4996
        %v5029 = vunpack.c.l.bf16 %v4997
        %v5030 = vmul.f32 %v4998, %v3930
        %v5031 = vmul.f32 %v4999, %v3931
        %v5032 = vmul.f32 %v5000, %v3932
        %v5033 = vmul.f32 %v5001, %v3933
        %v5034 = vmul.f32 %v5002, %v3934
        %v5035 = vmul.f32 %v5003, %v3935
        %v5036 = vmul.f32 %v5004, %v3936
        %v5037 = vmul.f32 %v5005, %v3937
        %v5038 = vmul.f32 %v5006, %v3938
        %v5039 = vmul.f32 %v5007, %v3939
        %v5040 = vmul.f32 %v5008, %v3940
        %v5041 = vmul.f32 %v5009, %v3941
        %v5042 = vmul.f32 %v5010, %v3942
        %v5043 = vmul.f32 %v5011, %v3943
        %v5044 = vmul.f32 %v5012, %v3944
        %v5045 = vmul.f32 %v5013, %v3945
        %v5046 = vmul.f32 %v5014, %v3946
        %v5047 = vmul.f32 %v5015, %v3947
        %v5048 = vmul.f32 %v5016, %v3948
        %v5049 = vmul.f32 %v5017, %v3949
        %v5050 = vmul.f32 %v5018, %v3950
        %v5051 = vmul.f32 %v5019, %v3951
        %v5052 = vmul.f32 %v5020, %v3952
        %v5053 = vmul.f32 %v5021, %v3953
        %v5054 = vmul.f32 %v5022, %v3954
        %v5055 = vmul.f32 %v5023, %v3955
        %v5056 = vmul.f32 %v5024, %v3956
        %v5057 = vmul.f32 %v5025, %v3957
        %v5058 = vmul.f32 %v5026, %v3958
        %v5059 = vmul.f32 %v5027, %v3959
        %v5060 = vmul.f32 %v5028, %v3960
        %v5061 = vmul.f32 %v5029, %v3961
        %v5062 = vpack.c.bf16 %v5031, %v5030
        %v5063 = vpack.c.bf16 %v5033, %v5032
        %v5064 = vpack.c.bf16 %v5035, %v5034
        %v5065 = vpack.c.bf16 %v5037, %v5036
        %v5066 = vpack.c.bf16 %v5039, %v5038
        %v5067 = vpack.c.bf16 %v5041, %v5040
        %v5068 = vpack.c.bf16 %v5043, %v5042
        %v5069 = vpack.c.bf16 %v5045, %v5044
        %v5070 = vpack.c.bf16 %v5047, %v5046
        %v5071 = vpack.c.bf16 %v5049, %v5048
        %v5072 = vpack.c.bf16 %v5051, %v5050
        %v5073 = vpack.c.bf16 %v5053, %v5052
        %v5074 = vpack.c.bf16 %v5055, %v5054
        %v5075 = vpack.c.bf16 %v5057, %v5056
        %v5076 = vpack.c.bf16 %v5059, %v5058
        %v5077 = vpack.c.bf16 %v5061, %v5060
        %s5078 = scalar_lea.vmem %s8, 24
        %v5079 = vld [vmem:[%s5078] sm:$0xf]
        %v5080 = vld [vmem:[%s5078 + $0x4] sm:$0x3]
        %v5083 = vunpack.c.l.b16 %v5079
        %v5084 = vunpack.c.l.b16 %v5080
        %v5085 = vpack.c.b16 %v5084, %v5083
        %v5087 = vsel %vm4236, %v5062, 0
        %v5090 = vsel %vm4236, %v5063, 0
        %v5093 = vsel %vm4236, %v5064, 0
        %v5096 = vsel %vm4236, %v5065, 0
        %v5099 = vsel %vm4236, %v5066, 0
        %v5102 = vsel %vm4236, %v5067, 0
        %v5105 = vsel %vm4236, %v5068, 0
        %v5108 = vsel %vm4236, %v5069, 0
        %v5111 = vsel %vm4236, %v5070, 0
        %v5114 = vsel %vm4236, %v5071, 0
        %v5117 = vsel %vm4236, %v5072, 0
        %v5120 = vsel %vm4236, %v5073, 0
        %v5123 = vsel %vm4236, %v5074, 0
        %v5126 = vsel %vm4236, %v5075, 0
        %v5129 = vsel %vm4236, %v5076, 0
        %v5132 = vsel %vm4236, %v5077, 0
        %v5135 = vsel %vm4285, %v5085, 0
        %5137 = vmatpush.bf16.msra.mxu0 0
        %5138 = vmatpush.bf16.msra.mxu0 0
        %5139 = vmatpush.bf16.msra.mxu0 0
        %5140 = vmatpush.bf16.msra.mxu0 0
        %5141 = vmatpush.bf16.msra.mxu0 0
        %5142 = vmatpush.bf16.msra.mxu0 0
        %5143 = vmatpush.bf16.msra.mxu0 0
        %5144 = vmatpush.bf16.msra.mxu0 %v5135
        %5145 = vmatmul.bf16.gmra.mxu0 %v5087
        %v5146 = vpop.f32.mrf.mxu0
        %v5147 = vadd.f32 0.0, %v5146
        %v5148 = vpop.f32.mrf.mxu0
        %v5149 = vadd.f32 0.0, %v5148
        %5150 = vmatmul.bf16.gmra.mxu0 %v5090
        %v5151 = vpop.f32.mrf.mxu0
        %v5152 = vadd.f32 0.0, %v5151
        %v5153 = vpop.f32.mrf.mxu0
        %v5154 = vadd.f32 0.0, %v5153
        %5155 = vmatmul.bf16.gmra.mxu0 %v5093
        %v5156 = vpop.f32.mrf.mxu0
        %v5157 = vadd.f32 0.0, %v5156
        %v5158 = vpop.f32.mrf.mxu0
        %v5159 = vadd.f32 0.0, %v5158
        %5160 = vmatmul.bf16.gmra.mxu0 %v5096
        %v5161 = vpop.f32.mrf.mxu0
        %v5162 = vadd.f32 0.0, %v5161
        %v5163 = vpop.f32.mrf.mxu0
        %v5164 = vadd.f32 0.0, %v5163
        %5165 = vmatmul.bf16.gmra.mxu0 %v5099
        %v5166 = vpop.f32.mrf.mxu0
        %v5167 = vadd.f32 0.0, %v5166
        %v5168 = vpop.f32.mrf.mxu0
        %v5169 = vadd.f32 0.0, %v5168
        %5170 = vmatmul.bf16.gmra.mxu0 %v5102
        %v5171 = vpop.f32.mrf.mxu0
        %v5172 = vadd.f32 0.0, %v5171
        %v5173 = vpop.f32.mrf.mxu0
        %v5174 = vadd.f32 0.0, %v5173
        %5175 = vmatmul.bf16.gmra.mxu0 %v5105
        %v5176 = vpop.f32.mrf.mxu0
        %v5177 = vadd.f32 0.0, %v5176
        %v5178 = vpop.f32.mrf.mxu0
        %v5179 = vadd.f32 0.0, %v5178
        %5180 = vmatmul.bf16.gmra.mxu0 %v5108
        %v5181 = vpop.f32.mrf.mxu0
        %v5182 = vadd.f32 0.0, %v5181
        %v5183 = vpop.f32.mrf.mxu0
        %v5184 = vadd.f32 0.0, %v5183
        %5185 = vmatmul.bf16.gmra.mxu0 %v5111
        %v5186 = vpop.f32.mrf.mxu0
        %v5187 = vadd.f32 0.0, %v5186
        %v5188 = vpop.f32.mrf.mxu0
        %v5189 = vadd.f32 0.0, %v5188
        %5190 = vmatmul.bf16.gmra.mxu0 %v5114
        %v5191 = vpop.f32.mrf.mxu0
        %v5192 = vadd.f32 0.0, %v5191
        %v5193 = vpop.f32.mrf.mxu0
        %v5194 = vadd.f32 0.0, %v5193
        %5195 = vmatmul.bf16.gmra.mxu0 %v5117
        %v5196 = vpop.f32.mrf.mxu0
        %v5197 = vadd.f32 0.0, %v5196
        %v5198 = vpop.f32.mrf.mxu0
        %v5199 = vadd.f32 0.0, %v5198
        %5200 = vmatmul.bf16.gmra.mxu0 %v5120
        %v5201 = vpop.f32.mrf.mxu0
        %v5202 = vadd.f32 0.0, %v5201
        %v5203 = vpop.f32.mrf.mxu0
        %v5204 = vadd.f32 0.0, %v5203
        %5205 = vmatmul.bf16.gmra.mxu0 %v5123
        %v5206 = vpop.f32.mrf.mxu0
        %v5207 = vadd.f32 0.0, %v5206
        %v5208 = vpop.f32.mrf.mxu0
        %v5209 = vadd.f32 0.0, %v5208
        %5210 = vmatmul.bf16.gmra.mxu0 %v5126
        %v5211 = vpop.f32.mrf.mxu0
        %v5212 = vadd.f32 0.0, %v5211
        %v5213 = vpop.f32.mrf.mxu0
        %v5214 = vadd.f32 0.0, %v5213
        %5215 = vmatmul.bf16.gmra.mxu0 %v5129
        %v5216 = vpop.f32.mrf.mxu0
        %v5217 = vadd.f32 0.0, %v5216
        %v5218 = vpop.f32.mrf.mxu0
        %v5219 = vadd.f32 0.0, %v5218
        %5220 = vmatmul.bf16.gmra.mxu0 %v5132
        %v5221 = vpop.f32.mrf.mxu0
        %v5222 = vadd.f32 0.0, %v5221
        %v5223 = vpop.f32.mrf.mxu0
        %v5224 = vadd.f32 0.0, %v5223
        %5225 = vdwg.mxu0
        %v5226 = vadd.f32 %v4934, %v5147
        %v5227 = vadd.f32 %v4935, %v5149
        %v5228 = vadd.f32 %v4936, %v5152
        %v5229 = vadd.f32 %v4937, %v5154
        %v5230 = vadd.f32 %v4938, %v5157
        %v5231 = vadd.f32 %v4939, %v5159
        %v5232 = vadd.f32 %v4940, %v5162
        %v5233 = vadd.f32 %v4941, %v5164
        %v5234 = vadd.f32 %v4942, %v5167
        %v5235 = vadd.f32 %v4943, %v5169
        %v5236 = vadd.f32 %v4944, %v5172
        %v5237 = vadd.f32 %v4945, %v5174
        %v5238 = vadd.f32 %v4946, %v5177
        %v5239 = vadd.f32 %v4947, %v5179
        %v5240 = vadd.f32 %v4948, %v5182
        %v5241 = vadd.f32 %v4949, %v5184
        %v5242 = vadd.f32 %v4950, %v5187
        %v5243 = vadd.f32 %v4951, %v5189
        %v5244 = vadd.f32 %v4952, %v5192
        %v5245 = vadd.f32 %v4953, %v5194
        %v5246 = vadd.f32 %v4954, %v5197
        %v5247 = vadd.f32 %v4955, %v5199
        %v5248 = vadd.f32 %v4956, %v5202
        %v5249 = vadd.f32 %v4957, %v5204
        %v5250 = vadd.f32 %v4958, %v5207
        %v5251 = vadd.f32 %v4959, %v5209
        %v5252 = vadd.f32 %v4960, %v5212
        %v5253 = vadd.f32 %v4961, %v5214
        %v5254 = vadd.f32 %v4962, %v5217
        %v5255 = vadd.f32 %v4963, %v5219
        %v5256 = vadd.f32 %v4964, %v5222
        %v5257 = vadd.f32 %v4965, %v5224
        %v5258 = vld [vmem:[#allocation2 + $0x8] sm:$0xf]
        %v5259 = vld [vmem:[#allocation2 + $0xc] sm:$0xf]
        %v5260 = vld [vmem:[#allocation2 + $0x10] sm:$0xf]
        %v5261 = vld [vmem:[#allocation2 + $0x14] sm:$0xf]
        %v5262 = vld [vmem:[#allocation2 + $0x18] sm:$0xf]
        %v5263 = vld [vmem:[#allocation2 + $0x1c] sm:$0xf]
        %v5264 = vld [vmem:[#allocation2 + $0x20] sm:$0xf]
        %v5265 = vld [vmem:[#allocation2 + $0x24] sm:$0xf]
        %v5266 = vld [vmem:[#allocation2 + $0x28] sm:$0xf]
        %v5267 = vld [vmem:[#allocation2 + $0x2c] sm:$0xf]
        %v5268 = vld [vmem:[#allocation2 + $0x30] sm:$0xf]
        %v5269 = vld [vmem:[#allocation2 + $0x34] sm:$0xf]
        %v5270 = vld [vmem:[#allocation2 + $0x38] sm:$0xf]
        %v5271 = vld [vmem:[#allocation2 + $0x3c] sm:$0xf]
        %v5272 = vld [vmem:[#allocation2 + $0x40] sm:$0xf]
        %v5273 = vld [vmem:[#allocation2 + $0x44] sm:$0xf]
        %v5274 = vld [vmem:[#allocation2 + $0x48] sm:$0xf]
        %v5275 = vld [vmem:[#allocation2 + $0x4c] sm:$0xf]
        %v5276 = vld [vmem:[#allocation2 + $0x50] sm:$0xf]
        %v5277 = vld [vmem:[#allocation2 + $0x54] sm:$0xf]
        %v5278 = vld [vmem:[#allocation2 + $0x58] sm:$0xf]
        %v5279 = vld [vmem:[#allocation2 + $0x5c] sm:$0xf]
        %v5280 = vld [vmem:[#allocation2 + $0x60] sm:$0xf]
        %v5281 = vld [vmem:[#allocation2 + $0x64] sm:$0xf]
        %v5282 = vld [vmem:[#allocation2 + $0x68] sm:$0xf]
        %v5283 = vld [vmem:[#allocation2 + $0x6c] sm:$0xf]
        %v5284 = vld [vmem:[#allocation2 + $0x70] sm:$0xf]
        %v5285 = vld [vmem:[#allocation2 + $0x74] sm:$0xf]
        %v5286 = vld [vmem:[#allocation2 + $0x78] sm:$0xf]
        %v5287 = vld [vmem:[#allocation2 + $0x7c] sm:$0xf]
        %v5288 = vld [vmem:[#allocation2 + $0x80] sm:$0xf]
        %v5289 = vld [vmem:[#allocation2 + $0x84] sm:$0xf]
        %v5290 = vld [vmem:[#allocation2 + $0x88] sm:$0x1]
        %s5291 = scalar_lea.vmem %s8, 32
        %v5292 = vld [vmem:[%s5291] sm:$0xf]
        %v5293 = vld [vmem:[%s5291 + $0x4] sm:$0x3]
        %v5327 = vunpack.c.l.b16 %v5258
        %v5328 = vunpack.c.l.b16 %v5259
        %v5329 = vunpack.c.l.b16 %v5260
        %v5330 = vunpack.c.l.b16 %v5261
        %v5331 = vunpack.c.l.b16 %v5262
        %v5332 = vunpack.c.l.b16 %v5263
        %v5333 = vunpack.c.l.b16 %v5264
        %v5334 = vunpack.c.l.b16 %v5265
        %v5335 = vunpack.c.l.b16 %v5266
        %v5336 = vunpack.c.l.b16 %v5267
        %v5337 = vunpack.c.l.b16 %v5268
        %v5338 = vunpack.c.l.b16 %v5269
        %v5339 = vunpack.c.l.b16 %v5270
        %v5340 = vunpack.c.l.b16 %v5271
        %v5341 = vunpack.c.l.b16 %v5272
        %v5342 = vunpack.c.l.b16 %v5273
        %v5343 = vunpack.c.l.b16 %v5274
        %v5344 = vunpack.c.l.b16 %v5275
        %v5345 = vunpack.c.l.b16 %v5276
        %v5346 = vunpack.c.l.b16 %v5277
        %v5347 = vunpack.c.l.b16 %v5278
        %v5348 = vunpack.c.l.b16 %v5279
        %v5349 = vunpack.c.l.b16 %v5280
        %v5350 = vunpack.c.l.b16 %v5281
        %v5351 = vunpack.c.l.b16 %v5282
        %v5352 = vunpack.c.l.b16 %v5283
        %v5353 = vunpack.c.l.b16 %v5284
        %v5354 = vunpack.c.l.b16 %v5285
        %v5355 = vunpack.c.l.b16 %v5286
        %v5356 = vunpack.c.l.b16 %v5287
        %v5357 = vunpack.c.l.b16 %v5288
        %v5358 = vunpack.c.l.b16 %v5289
        %v5359 = vunpack.c.l.b16 %v5290
        %v5360 = vpack.c.b16 %v5328, %v5327
        %v5361 = vpack.c.b16 %v5330, %v5329
        %v5362 = vpack.c.b16 %v5332, %v5331
        %v5363 = vpack.c.b16 %v5334, %v5333
        %v5364 = vpack.c.b16 %v5336, %v5335
        %v5365 = vpack.c.b16 %v5338, %v5337
        %v5366 = vpack.c.b16 %v5340, %v5339
        %v5367 = vpack.c.b16 %v5342, %v5341
        %v5368 = vpack.c.b16 %v5344, %v5343
        %v5369 = vpack.c.b16 %v5346, %v5345
        %v5370 = vpack.c.b16 %v5348, %v5347
        %v5371 = vpack.c.b16 %v5350, %v5349
        %v5372 = vpack.c.b16 %v5352, %v5351
        %v5373 = vpack.c.b16 %v5354, %v5353
        %v5374 = vpack.c.b16 %v5356, %v5355
        %v5375 = vpack.c.b16 %v5358, %v5357
        %v5376 = vpack.c.b16 %v5359, %v5359
        %v5378 = vshrl.u32 %v5360, 16
        %v5380 = vshll.u32 %v5360, 16
        %v5382 = vrot.slane %v5380, 1
        %v5383 = vor.u32 %v5378, %v5382
        %v5385 = vshll.u32 %v5361, 16
        %v5387 = vrot.slane %v5385, 1
        %v5388 = vsel %vm1133, %v5383, %v5387
        %v5389 = vshrl.u32 %v5361, 16
        %v5391 = vor.u32 %v5389, %v5387
        %v5393 = vshll.u32 %v5362, 16
        %v5395 = vrot.slane %v5393, 1
        %v5396 = vsel %vm1133, %v5391, %v5395
        %v5397 = vshrl.u32 %v5362, 16
        %v5399 = vor.u32 %v5397, %v5395
        %v5401 = vshll.u32 %v5363, 16
        %v5403 = vrot.slane %v5401, 1
        %v5404 = vsel %vm1133, %v5399, %v5403
        %v5405 = vshrl.u32 %v5363, 16
        %v5407 = vor.u32 %v5405, %v5403
        %v5409 = vshll.u32 %v5364, 16
        %v5411 = vrot.slane %v5409, 1
        %v5412 = vsel %vm1133, %v5407, %v5411
        %v5413 = vshrl.u32 %v5364, 16
        %v5415 = vor.u32 %v5413, %v5411
        %v5417 = vshll.u32 %v5365, 16
        %v5419 = vrot.slane %v5417, 1
        %v5420 = vsel %vm1133, %v5415, %v5419
        %v5421 = vshrl.u32 %v5365, 16
        %v5423 = vor.u32 %v5421, %v5419
        %v5425 = vshll.u32 %v5366, 16
        %v5427 = vrot.slane %v5425, 1
        %v5428 = vsel %vm1133, %v5423, %v5427
        %v5429 = vshrl.u32 %v5366, 16
        %v5431 = vor.u32 %v5429, %v5427
        %v5433 = vshll.u32 %v5367, 16
        %v5435 = vrot.slane %v5433, 1
        %v5436 = vsel %vm1133, %v5431, %v5435
        %v5437 = vshrl.u32 %v5367, 16
        %v5439 = vor.u32 %v5437, %v5435
        %v5441 = vshll.u32 %v5368, 16
        %v5443 = vrot.slane %v5441, 1
        %v5444 = vsel %vm1133, %v5439, %v5443
        %v5445 = vshrl.u32 %v5368, 16
        %v5447 = vor.u32 %v5445, %v5443
        %v5449 = vshll.u32 %v5369, 16
        %v5451 = vrot.slane %v5449, 1
        %v5452 = vsel %vm1133, %v5447, %v5451
        %v5453 = vshrl.u32 %v5369, 16
        %v5455 = vor.u32 %v5453, %v5451
        %v5457 = vshll.u32 %v5370, 16
        %v5459 = vrot.slane %v5457, 1
        %v5460 = vsel %vm1133, %v5455, %v5459
        %v5461 = vshrl.u32 %v5370, 16
        %v5463 = vor.u32 %v5461, %v5459
        %v5465 = vshll.u32 %v5371, 16
        %v5467 = vrot.slane %v5465, 1
        %v5468 = vsel %vm1133, %v5463, %v5467
        %v5469 = vshrl.u32 %v5371, 16
        %v5471 = vor.u32 %v5469, %v5467
        %v5473 = vshll.u32 %v5372, 16
        %v5475 = vrot.slane %v5473, 1
        %v5476 = vsel %vm1133, %v5471, %v5475
        %v5477 = vshrl.u32 %v5372, 16
        %v5479 = vor.u32 %v5477, %v5475
        %v5481 = vshll.u32 %v5373, 16
        %v5483 = vrot.slane %v5481, 1
        %v5484 = vsel %vm1133, %v5479, %v5483
        %v5485 = vshrl.u32 %v5373, 16
        %v5487 = vor.u32 %v5485, %v5483
        %v5489 = vshll.u32 %v5374, 16
        %v5491 = vrot.slane %v5489, 1
        %v5492 = vsel %vm1133, %v5487, %v5491
        %v5493 = vshrl.u32 %v5374, 16
        %v5495 = vor.u32 %v5493, %v5491
        %v5497 = vshll.u32 %v5375, 16
        %v5499 = vrot.slane %v5497, 1
        %v5500 = vsel %vm1133, %v5495, %v5499
        %v5501 = vshrl.u32 %v5375, 16
        %v5503 = vor.u32 %v5501, %v5499
        %v5505 = vshll.u32 %v5376, 16
        %v5507 = vrot.slane %v5505, 1
        %v5508 = vsel %vm1133, %v5503, %v5507
        %v5511 = vunpack.c.l.b16 %v5292
        %v5512 = vunpack.c.l.b16 %v5293
        %v5513 = vpack.c.b16 %v5512, %v5511
        %v5515 = vsel %vm4236, %v5388, 0
        %v5518 = vsel %vm4236, %v5396, 0
        %v5521 = vsel %vm4236, %v5404, 0
        %v5524 = vsel %vm4236, %v5412, 0
        %v5527 = vsel %vm4236, %v5420, 0
        %v5530 = vsel %vm4236, %v5428, 0
        %v5533 = vsel %vm4236, %v5436, 0
        %v5536 = vsel %vm4236, %v5444, 0
        %v5539 = vsel %vm4236, %v5452, 0
        %v5542 = vsel %vm4236, %v5460, 0
        %v5545 = vsel %vm4236, %v5468, 0
        %v5548 = vsel %vm4236, %v5476, 0
        %v5551 = vsel %vm4236, %v5484, 0
        %v5554 = vsel %vm4236, %v5492, 0
        %v5557 = vsel %vm4236, %v5500, 0
        %v5560 = vsel %vm4236, %v5508, 0
        %v5563 = vsel %vm4285, %v5513, 0
        %5565 = vmatpush.bf16.msra.mxu0 0
        %5566 = vmatpush.bf16.msra.mxu0 0
        %5567 = vmatpush.bf16.msra.mxu0 0
        %5568 = vmatpush.bf16.msra.mxu0 0
        %5569 = vmatpush.bf16.msra.mxu0 0
        %5570 = vmatpush.bf16.msra.mxu0 0
        %5571 = vmatpush.bf16.msra.mxu0 0
        %5572 = vmatpush.bf16.msra.mxu0 %v5563
        %5573 = vmatmul.bf16.gmra.mxu0 %v5515
        %v5574 = vpop.f32.mrf.mxu0
        %v5575 = vadd.f32 0.0, %v5574
        %v5576 = vpop.f32.mrf.mxu0
        %v5577 = vadd.f32 0.0, %v5576
        %5578 = vmatmul.bf16.gmra.mxu0 %v5518
        %v5579 = vpop.f32.mrf.mxu0
        %v5580 = vadd.f32 0.0, %v5579
        %v5581 = vpop.f32.mrf.mxu0
        %v5582 = vadd.f32 0.0, %v5581
        %5583 = vmatmul.bf16.gmra.mxu0 %v5521
        %v5584 = vpop.f32.mrf.mxu0
        %v5585 = vadd.f32 0.0, %v5584
        %v5586 = vpop.f32.mrf.mxu0
        %v5587 = vadd.f32 0.0, %v5586
        %5588 = vmatmul.bf16.gmra.mxu0 %v5524
        %v5589 = vpop.f32.mrf.mxu0
        %v5590 = vadd.f32 0.0, %v5589
        %v5591 = vpop.f32.mrf.mxu0
        %v5592 = vadd.f32 0.0, %v5591
        %5593 = vmatmul.bf16.gmra.mxu0 %v5527
        %v5594 = vpop.f32.mrf.mxu0
        %v5595 = vadd.f32 0.0, %v5594
        %v5596 = vpop.f32.mrf.mxu0
        %v5597 = vadd.f32 0.0, %v5596
        %5598 = vmatmul.bf16.gmra.mxu0 %v5530
        %v5599 = vpop.f32.mrf.mxu0
        %v5600 = vadd.f32 0.0, %v5599
        %v5601 = vpop.f32.mrf.mxu0
        %v5602 = vadd.f32 0.0, %v5601
        %5603 = vmatmul.bf16.gmra.mxu0 %v5533
        %v5604 = vpop.f32.mrf.mxu0
        %v5605 = vadd.f32 0.0, %v5604
        %v5606 = vpop.f32.mrf.mxu0
        %v5607 = vadd.f32 0.0, %v5606
        %5608 = vmatmul.bf16.gmra.mxu0 %v5536
        %v5609 = vpop.f32.mrf.mxu0
        %v5610 = vadd.f32 0.0, %v5609
        %v5611 = vpop.f32.mrf.mxu0
        %v5612 = vadd.f32 0.0, %v5611
        %5613 = vmatmul.bf16.gmra.mxu0 %v5539
        %v5614 = vpop.f32.mrf.mxu0
        %v5615 = vadd.f32 0.0, %v5614
        %v5616 = vpop.f32.mrf.mxu0
        %v5617 = vadd.f32 0.0, %v5616
        %5618 = vmatmul.bf16.gmra.mxu0 %v5542
        %v5619 = vpop.f32.mrf.mxu0
        %v5620 = vadd.f32 0.0, %v5619
        %v5621 = vpop.f32.mrf.mxu0
        %v5622 = vadd.f32 0.0, %v5621
        %5623 = vmatmul.bf16.gmra.mxu0 %v5545
        %v5624 = vpop.f32.mrf.mxu0
        %v5625 = vadd.f32 0.0, %v5624
        %v5626 = vpop.f32.mrf.mxu0
        %v5627 = vadd.f32 0.0, %v5626
        %5628 = vmatmul.bf16.gmra.mxu0 %v5548
        %v5629 = vpop.f32.mrf.mxu0
        %v5630 = vadd.f32 0.0, %v5629
        %v5631 = vpop.f32.mrf.mxu0
        %v5632 = vadd.f32 0.0, %v5631
        %5633 = vmatmul.bf16.gmra.mxu0 %v5551
        %v5634 = vpop.f32.mrf.mxu0
        %v5635 = vadd.f32 0.0, %v5634
        %v5636 = vpop.f32.mrf.mxu0
        %v5637 = vadd.f32 0.0, %v5636
        %5638 = vmatmul.bf16.gmra.mxu0 %v5554
        %v5639 = vpop.f32.mrf.mxu0
        %v5640 = vadd.f32 0.0, %v5639
        %v5641 = vpop.f32.mrf.mxu0
        %v5642 = vadd.f32 0.0, %v5641
        %5643 = vmatmul.bf16.gmra.mxu0 %v5557
        %v5644 = vpop.f32.mrf.mxu0
        %v5645 = vadd.f32 0.0, %v5644
        %v5646 = vpop.f32.mrf.mxu0
        %v5647 = vadd.f32 0.0, %v5646
        %5648 = vmatmul.bf16.gmra.mxu0 %v5560
        %v5649 = vpop.f32.mrf.mxu0
        %v5650 = vadd.f32 0.0, %v5649
        %v5651 = vpop.f32.mrf.mxu0
        %v5652 = vadd.f32 0.0, %v5651
        %5653 = vdwg.mxu0
        %v5654 = vadd.f32 %v5226, %v5575
        %v5655 = vadd.f32 %v5227, %v5577
        %v5656 = vadd.f32 %v5228, %v5580
        %v5657 = vadd.f32 %v5229, %v5582
        %v5658 = vadd.f32 %v5230, %v5585
        %v5659 = vadd.f32 %v5231, %v5587
        %v5660 = vadd.f32 %v5232, %v5590
        %v5661 = vadd.f32 %v5233, %v5592
        %v5662 = vadd.f32 %v5234, %v5595
        %v5663 = vadd.f32 %v5235, %v5597
        %v5664 = vadd.f32 %v5236, %v5600
        %v5665 = vadd.f32 %v5237, %v5602
        %v5666 = vadd.f32 %v5238, %v5605
        %v5667 = vadd.f32 %v5239, %v5607
        %v5668 = vadd.f32 %v5240, %v5610
        %v5669 = vadd.f32 %v5241, %v5612
        %v5670 = vadd.f32 %v5242, %v5615
        %v5671 = vadd.f32 %v5243, %v5617
        %v5672 = vadd.f32 %v5244, %v5620
        %v5673 = vadd.f32 %v5245, %v5622
        %v5674 = vadd.f32 %v5246, %v5625
        %v5675 = vadd.f32 %v5247, %v5627
        %v5676 = vadd.f32 %v5248, %v5630
        %v5677 = vadd.f32 %v5249, %v5632
        %v5678 = vadd.f32 %v5250, %v5635
        %v5679 = vadd.f32 %v5251, %v5637
        %v5680 = vadd.f32 %v5252, %v5640
        %v5681 = vadd.f32 %v5253, %v5642
        %v5682 = vadd.f32 %v5254, %v5645
        %v5683 = vadd.f32 %v5255, %v5647
        %v5684 = vadd.f32 %v5256, %v5650
        %v5685 = vadd.f32 %v5257, %v5652
        %v5686 = vld [vmem:[#allocation2 + $0x8] sm:$0xe]
        %v5687 = vunpack.c.l.bf16 %v5686
        %v5688 = vunpack.c.l.bf16 %v5259
        %v5689 = vunpack.c.l.bf16 %v5260
        %v5690 = vunpack.c.l.bf16 %v5261
        %v5691 = vunpack.c.l.bf16 %v5262
        %v5692 = vunpack.c.l.bf16 %v5263
        %v5693 = vunpack.c.l.bf16 %v5264
        %v5694 = vunpack.c.l.bf16 %v5265
        %v5695 = vunpack.c.l.bf16 %v5266
        %v5696 = vunpack.c.l.bf16 %v5267
        %v5697 = vunpack.c.l.bf16 %v5268
        %v5698 = vunpack.c.l.bf16 %v5269
        %v5699 = vunpack.c.l.bf16 %v5270
        %v5700 = vunpack.c.l.bf16 %v5271
        %v5701 = vunpack.c.l.bf16 %v5272
        %v5702 = vunpack.c.l.bf16 %v5273
        %v5703 = vunpack.c.l.bf16 %v5274
        %v5704 = vunpack.c.l.bf16 %v5275
        %v5705 = vunpack.c.l.bf16 %v5276
        %v5706 = vunpack.c.l.bf16 %v5277
        %v5707 = vunpack.c.l.bf16 %v5278
        %v5708 = vunpack.c.l.bf16 %v5279
        %v5709 = vunpack.c.l.bf16 %v5280
        %v5710 = vunpack.c.l.bf16 %v5281
        %v5711 = vunpack.c.l.bf16 %v5282
        %v5712 = vunpack.c.l.bf16 %v5283
        %v5713 = vunpack.c.l.bf16 %v5284
        %v5714 = vunpack.c.l.bf16 %v5285
        %v5715 = vunpack.c.l.bf16 %v5286
        %v5716 = vunpack.c.l.bf16 %v5287
        %v5717 = vunpack.c.l.bf16 %v5288
        %v5718 = vunpack.c.l.bf16 %v5289
        %v5719 = vunpack.c.l.bf16 %v5290
        %v5720 = vmul.f32 %v5687, %v4590
        %v5721 = vmul.f32 %v5688, %v4592
        %v5722 = vmul.f32 %v5689, %v4594
        %v5723 = vmul.f32 %v5690, %v4596
        %v5724 = vmul.f32 %v5691, %v4598
        %v5725 = vmul.f32 %v5692, %v4600
        %v5726 = vmul.f32 %v5693, %v4602
        %v5727 = vmul.f32 %v5694, %v4604
        %v5728 = vmul.f32 %v5695, %v4606
        %v5729 = vmul.f32 %v5696, %v4608
        %v5730 = vmul.f32 %v5697, %v4610
        %v5731 = vmul.f32 %v5698, %v4612
        %v5732 = vmul.f32 %v5699, %v4614
        %v5733 = vmul.f32 %v5700, %v4616
        %v5734 = vmul.f32 %v5701, %v4618
        %v5735 = vmul.f32 %v5702, %v4620
        %v5736 = vmul.f32 %v5703, %v4622
        %v5737 = vmul.f32 %v5704, %v4624
        %v5738 = vmul.f32 %v5705, %v4626
        %v5739 = vmul.f32 %v5706, %v4628
        %v5740 = vmul.f32 %v5707, %v4630
        %v5741 = vmul.f32 %v5708, %v4632
        %v5742 = vmul.f32 %v5709, %v4634
        %v5743 = vmul.f32 %v5710, %v4636
        %v5744 = vmul.f32 %v5711, %v4638
        %v5745 = vmul.f32 %v5712, %v4640
        %v5746 = vmul.f32 %v5713, %v4642
        %v5747 = vmul.f32 %v5714, %v4644
        %v5748 = vmul.f32 %v5715, %v4646
        %v5749 = vmul.f32 %v5716, %v4648
        %v5750 = vmul.f32 %v5717, %v4650
        %v5751 = vmul.f32 %v5718, %v4652
        %v5752 = vmul.f32 %v5719, %v4651
        %v5753 = vpack.c.bf16 %v5721, %v5720
        %v5754 = vpack.c.bf16 %v5723, %v5722
        %v5755 = vpack.c.bf16 %v5725, %v5724
        %v5756 = vpack.c.bf16 %v5727, %v5726
        %v5757 = vpack.c.bf16 %v5729, %v5728
        %v5758 = vpack.c.bf16 %v5731, %v5730
        %v5759 = vpack.c.bf16 %v5733, %v5732
        %v5760 = vpack.c.bf16 %v5735, %v5734
        %v5761 = vpack.c.bf16 %v5737, %v5736
        %v5762 = vpack.c.bf16 %v5739, %v5738
        %v5763 = vpack.c.bf16 %v5741, %v5740
        %v5764 = vpack.c.bf16 %v5743, %v5742
        %v5765 = vpack.c.bf16 %v5745, %v5744
        %v5766 = vpack.c.bf16 %v5747, %v5746
        %v5767 = vpack.c.bf16 %v5749, %v5748
        %v5768 = vpack.c.bf16 %v5751, %v5750
        %v5769 = vpack.c.bf16 %v5752, %v5752
        %s5770 = scalar_lea.vmem %s8, 40
        %v5771 = vld [vmem:[%s5770] sm:$0xf]
        %v5772 = vld [vmem:[%s5770 + $0x4] sm:$0x3]
        %v5790 = vrot.slane %v5753, 1
        %v5791 = vrot.slane %v5754, 1
        %v5792 = vsel %vm1345, %v5790, %v5791
        %v5793 = vrot.slane %v5755, 1
        %v5794 = vsel %vm1345, %v5791, %v5793
        %v5795 = vrot.slane %v5756, 1
        %v5796 = vsel %vm1345, %v5793, %v5795
        %v5797 = vrot.slane %v5757, 1
        %v5798 = vsel %vm1345, %v5795, %v5797
        %v5799 = vrot.slane %v5758, 1
        %v5800 = vsel %vm1345, %v5797, %v5799
        %v5801 = vrot.slane %v5759, 1
        %v5802 = vsel %vm1345, %v5799, %v5801
        %v5803 = vrot.slane %v5760, 1
        %v5804 = vsel %vm1345, %v5801, %v5803
        %v5805 = vrot.slane %v5761, 1
        %v5806 = vsel %vm1345, %v5803, %v5805
        %v5807 = vrot.slane %v5762, 1
        %v5808 = vsel %vm1345, %v5805, %v5807
        %v5809 = vrot.slane %v5763, 1
        %v5810 = vsel %vm1345, %v5807, %v5809
        %v5811 = vrot.slane %v5764, 1
        %v5812 = vsel %vm1345, %v5809, %v5811
        %v5813 = vrot.slane %v5765, 1
        %v5814 = vsel %vm1345, %v5811, %v5813
        %v5815 = vrot.slane %v5766, 1
        %v5816 = vsel %vm1345, %v5813, %v5815
        %v5817 = vrot.slane %v5767, 1
        %v5818 = vsel %vm1345, %v5815, %v5817
        %v5819 = vrot.slane %v5768, 1
        %v5820 = vsel %vm1345, %v5817, %v5819
        %v5821 = vrot.slane %v5769, 1
        %v5822 = vsel %vm1345, %v5819, %v5821
        %v5825 = vunpack.c.l.b16 %v5771
        %v5826 = vunpack.c.l.b16 %v5772
        %v5827 = vpack.c.b16 %v5826, %v5825
        %v5829 = vsel %vm4236, %v5792, 0
        %v5832 = vsel %vm4236, %v5794, 0
        %v5835 = vsel %vm4236, %v5796, 0
        %v5838 = vsel %vm4236, %v5798, 0
        %v5841 = vsel %vm4236, %v5800, 0
        %v5844 = vsel %vm4236, %v5802, 0
        %v5847 = vsel %vm4236, %v5804, 0
        %v5850 = vsel %vm4236, %v5806, 0
        %v5853 = vsel %vm4236, %v5808, 0
        %v5856 = vsel %vm4236, %v5810, 0
        %v5859 = vsel %vm4236, %v5812, 0
        %v5862 = vsel %vm4236, %v5814, 0
        %v5865 = vsel %vm4236, %v5816, 0
        %v5868 = vsel %vm4236, %v5818, 0
        %v5871 = vsel %vm4236, %v5820, 0
        %v5874 = vsel %vm4236, %v5822, 0
        %v5877 = vsel %vm4285, %v5827, 0
        %5879 = vmatpush.bf16.msra.mxu0 0
        %5880 = vmatpush.bf16.msra.mxu0 0
        %5881 = vmatpush.bf16.msra.mxu0 0
        %5882 = vmatpush.bf16.msra.mxu0 0
        %5883 = vmatpush.bf16.msra.mxu0 0
        %5884 = vmatpush.bf16.msra.mxu0 0
        %5885 = vmatpush.bf16.msra.mxu0 0
        %5886 = vmatpush.bf16.msra.mxu0 %v5877
        %5887 = vmatmul.bf16.gmra.mxu0 %v5829
        %v5888 = vpop.f32.mrf.mxu0
        %v5889 = vadd.f32 0.0, %v5888
        %v5890 = vpop.f32.mrf.mxu0
        %v5891 = vadd.f32 0.0, %v5890
        %5892 = vmatmul.bf16.gmra.mxu0 %v5832
        %v5893 = vpop.f32.mrf.mxu0
        %v5894 = vadd.f32 0.0, %v5893
        %v5895 = vpop.f32.mrf.mxu0
        %v5896 = vadd.f32 0.0, %v5895
        %5897 = vmatmul.bf16.gmra.mxu0 %v5835
        %v5898 = vpop.f32.mrf.mxu0
        %v5899 = vadd.f32 0.0, %v5898
        %v5900 = vpop.f32.mrf.mxu0
        %v5901 = vadd.f32 0.0, %v5900
        %5902 = vmatmul.bf16.gmra.mxu0 %v5838
        %v5903 = vpop.f32.mrf.mxu0
        %v5904 = vadd.f32 0.0, %v5903
        %v5905 = vpop.f32.mrf.mxu0
        %v5906 = vadd.f32 0.0, %v5905
        %5907 = vmatmul.bf16.gmra.mxu0 %v5841
        %v5908 = vpop.f32.mrf.mxu0
        %v5909 = vadd.f32 0.0, %v5908
        %v5910 = vpop.f32.mrf.mxu0
        %v5911 = vadd.f32 0.0, %v5910
        %5912 = vmatmul.bf16.gmra.mxu0 %v5844
        %v5913 = vpop.f32.mrf.mxu0
        %v5914 = vadd.f32 0.0, %v5913
        %v5915 = vpop.f32.mrf.mxu0
        %v5916 = vadd.f32 0.0, %v5915
        %5917 = vmatmul.bf16.gmra.mxu0 %v5847
        %v5918 = vpop.f32.mrf.mxu0
        %v5919 = vadd.f32 0.0, %v5918
        %v5920 = vpop.f32.mrf.mxu0
        %v5921 = vadd.f32 0.0, %v5920
        %5922 = vmatmul.bf16.gmra.mxu0 %v5850
        %v5923 = vpop.f32.mrf.mxu0
        %v5924 = vadd.f32 0.0, %v5923
        %v5925 = vpop.f32.mrf.mxu0
        %v5926 = vadd.f32 0.0, %v5925
        %5927 = vmatmul.bf16.gmra.mxu0 %v5853
        %v5928 = vpop.f32.mrf.mxu0
        %v5929 = vadd.f32 0.0, %v5928
        %v5930 = vpop.f32.mrf.mxu0
        %v5931 = vadd.f32 0.0, %v5930
        %5932 = vmatmul.bf16.gmra.mxu0 %v5856
        %v5933 = vpop.f32.mrf.mxu0
        %v5934 = vadd.f32 0.0, %v5933
        %v5935 = vpop.f32.mrf.mxu0
        %v5936 = vadd.f32 0.0, %v5935
        %5937 = vmatmul.bf16.gmra.mxu0 %v5859
        %v5938 = vpop.f32.mrf.mxu0
        %v5939 = vadd.f32 0.0, %v5938
        %v5940 = vpop.f32.mrf.mxu0
        %v5941 = vadd.f32 0.0, %v5940
        %5942 = vmatmul.bf16.gmra.mxu0 %v5862
        %v5943 = vpop.f32.mrf.mxu0
        %v5944 = vadd.f32 0.0, %v5943
        %v5945 = vpop.f32.mrf.mxu0
        %v5946 = vadd.f32 0.0, %v5945
        %5947 = vmatmul.bf16.gmra.mxu0 %v5865
        %v5948 = vpop.f32.mrf.mxu0
        %v5949 = vadd.f32 0.0, %v5948
        %v5950 = vpop.f32.mrf.mxu0
        %v5951 = vadd.f32 0.0, %v5950
        %5952 = vmatmul.bf16.gmra.mxu0 %v5868
        %v5953 = vpop.f32.mrf.mxu0
        %v5954 = vadd.f32 0.0, %v5953
        %v5955 = vpop.f32.mrf.mxu0
        %v5956 = vadd.f32 0.0, %v5955
        %5957 = vmatmul.bf16.gmra.mxu0 %v5871
        %v5958 = vpop.f32.mrf.mxu0
        %v5959 = vadd.f32 0.0, %v5958
        %v5960 = vpop.f32.mrf.mxu0
        %v5961 = vadd.f32 0.0, %v5960
        %5962 = vmatmul.bf16.gmra.mxu0 %v5874
        %v5963 = vpop.f32.mrf.mxu0
        %v5964 = vadd.f32 0.0, %v5963
        %v5965 = vpop.f32.mrf.mxu0
        %v5966 = vadd.f32 0.0, %v5965
        %5967 = vdwg.mxu0
        %v5968 = vadd.f32 %v5654, %v5889
        %v5969 = vadd.f32 %v5655, %v5891
        %v5970 = vadd.f32 %v5656, %v5894
        %v5971 = vadd.f32 %v5657, %v5896
        %v5972 = vadd.f32 %v5658, %v5899
        %v5973 = vadd.f32 %v5659, %v5901
        %v5974 = vadd.f32 %v5660, %v5904
        %v5975 = vadd.f32 %v5661, %v5906
        %v5976 = vadd.f32 %v5662, %v5909
        %v5977 = vadd.f32 %v5663, %v5911
        %v5978 = vadd.f32 %v5664, %v5914
        %v5979 = vadd.f32 %v5665, %v5916
        %v5980 = vadd.f32 %v5666, %v5919
        %v5981 = vadd.f32 %v5667, %v5921
        %v5982 = vadd.f32 %v5668, %v5924
        %v5983 = vadd.f32 %v5669, %v5926
        %v5984 = vadd.f32 %v5670, %v5929
        %v5985 = vadd.f32 %v5671, %v5931
        %v5986 = vadd.f32 %v5672, %v5934
        %v5987 = vadd.f32 %v5673, %v5936
        %v5988 = vadd.f32 %v5674, %v5939
        %v5989 = vadd.f32 %v5675, %v5941
        %v5990 = vadd.f32 %v5676, %v5944
        %v5991 = vadd.f32 %v5677, %v5946
        %v5992 = vadd.f32 %v5678, %v5949
        %v5993 = vadd.f32 %v5679, %v5951
        %v5994 = vadd.f32 %v5680, %v5954
        %v5995 = vadd.f32 %v5681, %v5956
        %v5996 = vadd.f32 %v5682, %v5959
        %v5997 = vadd.f32 %v5683, %v5961
        %v5998 = vadd.f32 %v5684, %v5964
        %v5999 = vadd.f32 %v5685, %v5966
        %v6000 = vld [vmem:[#allocation2 + $0x10] sm:$0xf]
        %v6001 = vld [vmem:[#allocation2 + $0x14] sm:$0xf]
        %v6002 = vld [vmem:[#allocation2 + $0x18] sm:$0xf]
        %v6003 = vld [vmem:[#allocation2 + $0x1c] sm:$0xf]
        %v6004 = vld [vmem:[#allocation2 + $0x20] sm:$0xf]
        %v6005 = vld [vmem:[#allocation2 + $0x24] sm:$0xf]
        %v6006 = vld [vmem:[#allocation2 + $0x28] sm:$0xf]
        %v6007 = vld [vmem:[#allocation2 + $0x2c] sm:$0xf]
        %v6008 = vld [vmem:[#allocation2 + $0x30] sm:$0xf]
        %v6009 = vld [vmem:[#allocation2 + $0x34] sm:$0xf]
        %v6010 = vld [vmem:[#allocation2 + $0x38] sm:$0xf]
        %v6011 = vld [vmem:[#allocation2 + $0x3c] sm:$0xf]
        %v6012 = vld [vmem:[#allocation2 + $0x40] sm:$0xf]
        %v6013 = vld [vmem:[#allocation2 + $0x44] sm:$0xf]
        %v6014 = vld [vmem:[#allocation2 + $0x48] sm:$0xf]
        %v6015 = vld [vmem:[#allocation2 + $0x4c] sm:$0xf]
        %v6016 = vld [vmem:[#allocation2 + $0x50] sm:$0xf]
        %v6017 = vld [vmem:[#allocation2 + $0x54] sm:$0xf]
        %v6018 = vld [vmem:[#allocation2 + $0x58] sm:$0xf]
        %v6019 = vld [vmem:[#allocation2 + $0x5c] sm:$0xf]
        %v6020 = vld [vmem:[#allocation2 + $0x60] sm:$0xf]
        %v6021 = vld [vmem:[#allocation2 + $0x64] sm:$0xf]
        %v6022 = vld [vmem:[#allocation2 + $0x68] sm:$0xf]
        %v6023 = vld [vmem:[#allocation2 + $0x6c] sm:$0xf]
        %v6024 = vld [vmem:[#allocation2 + $0x70] sm:$0xf]
        %v6025 = vld [vmem:[#allocation2 + $0x74] sm:$0xf]
        %v6026 = vld [vmem:[#allocation2 + $0x78] sm:$0xf]
        %v6027 = vld [vmem:[#allocation2 + $0x7c] sm:$0xf]
        %v6028 = vld [vmem:[#allocation2 + $0x80] sm:$0xf]
        %v6029 = vld [vmem:[#allocation2 + $0x84] sm:$0xf]
        %v6030 = vld [vmem:[#allocation2 + $0x88] sm:$0xf]
        %v6031 = vld [vmem:[#allocation2 + $0x8c] sm:$0xf]
        %v6032 = vunpack.c.l.bf16 %v6000
        %v6033 = vunpack.c.l.bf16 %v6001
        %v6034 = vunpack.c.l.bf16 %v6002
        %v6035 = vunpack.c.l.bf16 %v6003
        %v6036 = vunpack.c.l.bf16 %v6004
        %v6037 = vunpack.c.l.bf16 %v6005
        %v6038 = vunpack.c.l.bf16 %v6006
        %v6039 = vunpack.c.l.bf16 %v6007
        %v6040 = vunpack.c.l.bf16 %v6008
        %v6041 = vunpack.c.l.bf16 %v6009
        %v6042 = vunpack.c.l.bf16 %v6010
        %v6043 = vunpack.c.l.bf16 %v6011
        %v6044 = vunpack.c.l.bf16 %v6012
        %v6045 = vunpack.c.l.bf16 %v6013
        %v6046 = vunpack.c.l.bf16 %v6014
        %v6047 = vunpack.c.l.bf16 %v6015
        %v6048 = vunpack.c.l.bf16 %v6016
        %v6049 = vunpack.c.l.bf16 %v6017
        %v6050 = vunpack.c.l.bf16 %v6018
        %v6051 = vunpack.c.l.bf16 %v6019
        %v6052 = vunpack.c.l.bf16 %v6020
        %v6053 = vunpack.c.l.bf16 %v6021
        %v6054 = vunpack.c.l.bf16 %v6022
        %v6055 = vunpack.c.l.bf16 %v6023
        %v6056 = vunpack.c.l.bf16 %v6024
        %v6057 = vunpack.c.l.bf16 %v6025
        %v6058 = vunpack.c.l.bf16 %v6026
        %v6059 = vunpack.c.l.bf16 %v6027
        %v6060 = vunpack.c.l.bf16 %v6028
        %v6061 = vunpack.c.l.bf16 %v6029
        %v6062 = vunpack.c.l.bf16 %v6030
        %v6063 = vunpack.c.l.bf16 %v6031
        %v6064 = vmul.f32 %v6032, %v3930
        %v6065 = vmul.f32 %v6033, %v3931
        %v6066 = vmul.f32 %v6034, %v3932
        %v6067 = vmul.f32 %v6035, %v3933
        %v6068 = vmul.f32 %v6036, %v3934
        %v6069 = vmul.f32 %v6037, %v3935
        %v6070 = vmul.f32 %v6038, %v3936
        %v6071 = vmul.f32 %v6039, %v3937
        %v6072 = vmul.f32 %v6040, %v3938
        %v6073 = vmul.f32 %v6041, %v3939
        %v6074 = vmul.f32 %v6042, %v3940
        %v6075 = vmul.f32 %v6043, %v3941
        %v6076 = vmul.f32 %v6044, %v3942
        %v6077 = vmul.f32 %v6045, %v3943
        %v6078 = vmul.f32 %v6046, %v3944
        %v6079 = vmul.f32 %v6047, %v3945
        %v6080 = vmul.f32 %v6048, %v3946
        %v6081 = vmul.f32 %v6049, %v3947
        %v6082 = vmul.f32 %v6050, %v3948
        %v6083 = vmul.f32 %v6051, %v3949
        %v6084 = vmul.f32 %v6052, %v3950
        %v6085 = vmul.f32 %v6053, %v3951
        %v6086 = vmul.f32 %v6054, %v3952
        %v6087 = vmul.f32 %v6055, %v3953
        %v6088 = vmul.f32 %v6056, %v3954
        %v6089 = vmul.f32 %v6057, %v3955
        %v6090 = vmul.f32 %v6058, %v3956
        %v6091 = vmul.f32 %v6059, %v3957
        %v6092 = vmul.f32 %v6060, %v3958
        %v6093 = vmul.f32 %v6061, %v3959
        %v6094 = vmul.f32 %v6062, %v3960
        %v6095 = vmul.f32 %v6063, %v3961
        %v6096 = vpack.c.bf16 %v6065, %v6064
        %v6097 = vpack.c.bf16 %v6067, %v6066
        %v6098 = vpack.c.bf16 %v6069, %v6068
        %v6099 = vpack.c.bf16 %v6071, %v6070
        %v6100 = vpack.c.bf16 %v6073, %v6072
        %v6101 = vpack.c.bf16 %v6075, %v6074
        %v6102 = vpack.c.bf16 %v6077, %v6076
        %v6103 = vpack.c.bf16 %v6079, %v6078
        %v6104 = vpack.c.bf16 %v6081, %v6080
        %v6105 = vpack.c.bf16 %v6083, %v6082
        %v6106 = vpack.c.bf16 %v6085, %v6084
        %v6107 = vpack.c.bf16 %v6087, %v6086
        %v6108 = vpack.c.bf16 %v6089, %v6088
        %v6109 = vpack.c.bf16 %v6091, %v6090
        %v6110 = vpack.c.bf16 %v6093, %v6092
        %v6111 = vpack.c.bf16 %v6095, %v6094
        %s6112 = scalar_lea.vmem %s8, 48
        %v6113 = vld [vmem:[%s6112] sm:$0xf]
        %v6114 = vld [vmem:[%s6112 + $0x4] sm:$0x3]
        %v6117 = vunpack.c.l.b16 %v6113
        %v6118 = vunpack.c.l.b16 %v6114
        %v6119 = vpack.c.b16 %v6118, %v6117
        %v6121 = vsel %vm4236, %v6096, 0
        %v6124 = vsel %vm4236, %v6097, 0
        %v6127 = vsel %vm4236, %v6098, 0
        %v6130 = vsel %vm4236, %v6099, 0
        %v6133 = vsel %vm4236, %v6100, 0
        %v6136 = vsel %vm4236, %v6101, 0
        %v6139 = vsel %vm4236, %v6102, 0
        %v6142 = vsel %vm4236, %v6103, 0
        %v6145 = vsel %vm4236, %v6104, 0
        %v6148 = vsel %vm4236, %v6105, 0
        %v6151 = vsel %vm4236, %v6106, 0
        %v6154 = vsel %vm4236, %v6107, 0
        %v6157 = vsel %vm4236, %v6108, 0
        %v6160 = vsel %vm4236, %v6109, 0
        %v6163 = vsel %vm4236, %v6110, 0
        %v6166 = vsel %vm4236, %v6111, 0
        %v6169 = vsel %vm4285, %v6119, 0
        %6171 = vmatpush.bf16.msra.mxu0 0
        %6172 = vmatpush.bf16.msra.mxu0 0
        %6173 = vmatpush.bf16.msra.mxu0 0
        %6174 = vmatpush.bf16.msra.mxu0 0
        %6175 = vmatpush.bf16.msra.mxu0 0
        %6176 = vmatpush.bf16.msra.mxu0 0
        %6177 = vmatpush.bf16.msra.mxu0 0
        %6178 = vmatpush.bf16.msra.mxu0 %v6169
        %6179 = vmatmul.bf16.gmra.mxu0 %v6121
        %v6180 = vpop.f32.mrf.mxu0
        %v6181 = vadd.f32 0.0, %v6180
        %v6182 = vpop.f32.mrf.mxu0
        %v6183 = vadd.f32 0.0, %v6182
        %6184 = vmatmul.bf16.gmra.mxu0 %v6124
        %v6185 = vpop.f32.mrf.mxu0
        %v6186 = vadd.f32 0.0, %v6185
        %v6187 = vpop.f32.mrf.mxu0
        %v6188 = vadd.f32 0.0, %v6187
        %6189 = vmatmul.bf16.gmra.mxu0 %v6127
        %v6190 = vpop.f32.mrf.mxu0
        %v6191 = vadd.f32 0.0, %v6190
        %v6192 = vpop.f32.mrf.mxu0
        %v6193 = vadd.f32 0.0, %v6192
        %6194 = vmatmul.bf16.gmra.mxu0 %v6130
        %v6195 = vpop.f32.mrf.mxu0
        %v6196 = vadd.f32 0.0, %v6195
        %v6197 = vpop.f32.mrf.mxu0
        %v6198 = vadd.f32 0.0, %v6197
        %6199 = vmatmul.bf16.gmra.mxu0 %v6133
        %v6200 = vpop.f32.mrf.mxu0
        %v6201 = vadd.f32 0.0, %v6200
        %v6202 = vpop.f32.mrf.mxu0
        %v6203 = vadd.f32 0.0, %v6202
        %6204 = vmatmul.bf16.gmra.mxu0 %v6136
        %v6205 = vpop.f32.mrf.mxu0
        %v6206 = vadd.f32 0.0, %v6205
        %v6207 = vpop.f32.mrf.mxu0
        %v6208 = vadd.f32 0.0, %v6207
        %6209 = vmatmul.bf16.gmra.mxu0 %v6139
        %v6210 = vpop.f32.mrf.mxu0
        %v6211 = vadd.f32 0.0, %v6210
        %v6212 = vpop.f32.mrf.mxu0
        %v6213 = vadd.f32 0.0, %v6212
        %6214 = vmatmul.bf16.gmra.mxu0 %v6142
        %v6215 = vpop.f32.mrf.mxu0
        %v6216 = vadd.f32 0.0, %v6215
        %v6217 = vpop.f32.mrf.mxu0
        %v6218 = vadd.f32 0.0, %v6217
        %6219 = vmatmul.bf16.gmra.mxu0 %v6145
        %v6220 = vpop.f32.mrf.mxu0
        %v6221 = vadd.f32 0.0, %v6220
        %v6222 = vpop.f32.mrf.mxu0
        %v6223 = vadd.f32 0.0, %v6222
        %6224 = vmatmul.bf16.gmra.mxu0 %v6148
        %v6225 = vpop.f32.mrf.mxu0
        %v6226 = vadd.f32 0.0, %v6225
        %v6227 = vpop.f32.mrf.mxu0
        %v6228 = vadd.f32 0.0, %v6227
        %6229 = vmatmul.bf16.gmra.mxu0 %v6151
        %v6230 = vpop.f32.mrf.mxu0
        %v6231 = vadd.f32 0.0, %v6230
        %v6232 = vpop.f32.mrf.mxu0
        %v6233 = vadd.f32 0.0, %v6232
        %6234 = vmatmul.bf16.gmra.mxu0 %v6154
        %v6235 = vpop.f32.mrf.mxu0
        %v6236 = vadd.f32 0.0, %v6235
        %v6237 = vpop.f32.mrf.mxu0
        %v6238 = vadd.f32 0.0, %v6237
        %6239 = vmatmul.bf16.gmra.mxu0 %v6157
        %v6240 = vpop.f32.mrf.mxu0
        %v6241 = vadd.f32 0.0, %v6240
        %v6242 = vpop.f32.mrf.mxu0
        %v6243 = vadd.f32 0.0, %v6242
        %6244 = vmatmul.bf16.gmra.mxu0 %v6160
        %v6245 = vpop.f32.mrf.mxu0
        %v6246 = vadd.f32 0.0, %v6245
        %v6247 = vpop.f32.mrf.mxu0
        %v6248 = vadd.f32 0.0, %v6247
        %6249 = vmatmul.bf16.gmra.mxu0 %v6163
        %v6250 = vpop.f32.mrf.mxu0
        %v6251 = vadd.f32 0.0, %v6250
        %v6252 = vpop.f32.mrf.mxu0
        %v6253 = vadd.f32 0.0, %v6252
        %6254 = vmatmul.bf16.gmra.mxu0 %v6166
        %v6255 = vpop.f32.mrf.mxu0
        %v6256 = vadd.f32 0.0, %v6255
        %v6257 = vpop.f32.mrf.mxu0
        %v6258 = vadd.f32 0.0, %v6257
        %6259 = vdwg.mxu0
        %v6260 = vadd.f32 %v5968, %v6181
        %v6261 = vadd.f32 %v5969, %v6183
        %v6262 = vadd.f32 %v5970, %v6186
        %v6263 = vadd.f32 %v5971, %v6188
        %v6264 = vadd.f32 %v5972, %v6191
        %v6265 = vadd.f32 %v5973, %v6193
        %v6266 = vadd.f32 %v5974, %v6196
        %v6267 = vadd.f32 %v5975, %v6198
        %v6268 = vadd.f32 %v5976, %v6201
        %v6269 = vadd.f32 %v5977, %v6203
        %v6270 = vadd.f32 %v5978, %v6206
        %v6271 = vadd.f32 %v5979, %v6208
        %v6272 = vadd.f32 %v5980, %v6211
        %v6273 = vadd.f32 %v5981, %v6213
        %v6274 = vadd.f32 %v5982, %v6216
        %v6275 = vadd.f32 %v5983, %v6218
        %v6276 = vadd.f32 %v5984, %v6221
        %v6277 = vadd.f32 %v5985, %v6223
        %v6278 = vadd.f32 %v5986, %v6226
        %v6279 = vadd.f32 %v5987, %v6228
        %v6280 = vadd.f32 %v5988, %v6231
        %v6281 = vadd.f32 %v5989, %v6233
        %v6282 = vadd.f32 %v5990, %v6236
        %v6283 = vadd.f32 %v5991, %v6238
        %v6284 = vadd.f32 %v5992, %v6241
        %v6285 = vadd.f32 %v5993, %v6243
        %v6286 = vadd.f32 %v5994, %v6246
        %v6287 = vadd.f32 %v5995, %v6248
        %v6288 = vadd.f32 %v5996, %v6251
        %v6289 = vadd.f32 %v5997, %v6253
        %v6290 = vadd.f32 %v5998, %v6256
        %v6291 = vadd.f32 %v5999, %v6258
        %v6292 = vld [vmem:[#allocation2 + $0x10] sm:$0xf]
        %v6293 = vld [vmem:[#allocation2 + $0x14] sm:$0xf]
        %v6294 = vld [vmem:[#allocation2 + $0x18] sm:$0xf]
        %v6295 = vld [vmem:[#allocation2 + $0x1c] sm:$0xf]
        %v6296 = vld [vmem:[#allocation2 + $0x20] sm:$0xf]
        %v6297 = vld [vmem:[#allocation2 + $0x24] sm:$0xf]
        %v6298 = vld [vmem:[#allocation2 + $0x28] sm:$0xf]
        %v6299 = vld [vmem:[#allocation2 + $0x2c] sm:$0xf]
        %v6300 = vld [vmem:[#allocation2 + $0x30] sm:$0xf]
        %v6301 = vld [vmem:[#allocation2 + $0x34] sm:$0xf]
        %v6302 = vld [vmem:[#allocation2 + $0x38] sm:$0xf]
        %v6303 = vld [vmem:[#allocation2 + $0x3c] sm:$0xf]
        %v6304 = vld [vmem:[#allocation2 + $0x40] sm:$0xf]
        %v6305 = vld [vmem:[#allocation2 + $0x44] sm:$0xf]
        %v6306 = vld [vmem:[#allocation2 + $0x48] sm:$0xf]
        %v6307 = vld [vmem:[#allocation2 + $0x4c] sm:$0xf]
        %v6308 = vld [vmem:[#allocation2 + $0x50] sm:$0xf]
        %v6309 = vld [vmem:[#allocation2 + $0x54] sm:$0xf]
        %v6310 = vld [vmem:[#allocation2 + $0x58] sm:$0xf]
        %v6311 = vld [vmem:[#allocation2 + $0x5c] sm:$0xf]
        %v6312 = vld [vmem:[#allocation2 + $0x60] sm:$0xf]
        %v6313 = vld [vmem:[#allocation2 + $0x64] sm:$0xf]
        %v6314 = vld [vmem:[#allocation2 + $0x68] sm:$0xf]
        %v6315 = vld [vmem:[#allocation2 + $0x6c] sm:$0xf]
        %v6316 = vld [vmem:[#allocation2 + $0x70] sm:$0xf]
        %v6317 = vld [vmem:[#allocation2 + $0x74] sm:$0xf]
        %v6318 = vld [vmem:[#allocation2 + $0x78] sm:$0xf]
        %v6319 = vld [vmem:[#allocation2 + $0x7c] sm:$0xf]
        %v6320 = vld [vmem:[#allocation2 + $0x80] sm:$0xf]
        %v6321 = vld [vmem:[#allocation2 + $0x84] sm:$0xf]
        %v6322 = vld [vmem:[#allocation2 + $0x88] sm:$0xf]
        %v6323 = vld [vmem:[#allocation2 + $0x8c] sm:$0xf]
        %v6324 = vld [vmem:[#allocation2 + $0x90] sm:$0x1]
        %s6325 = scalar_lea.vmem %s8, 56
        %v6326 = vld [vmem:[%s6325] sm:$0xf]
        %v6327 = vld [vmem:[%s6325 + $0x4] sm:$0x3]
        %v6361 = vunpack.c.l.b16 %v6292
        %v6362 = vunpack.c.l.b16 %v6293
        %v6363 = vunpack.c.l.b16 %v6294
        %v6364 = vunpack.c.l.b16 %v6295
        %v6365 = vunpack.c.l.b16 %v6296
        %v6366 = vunpack.c.l.b16 %v6297
        %v6367 = vunpack.c.l.b16 %v6298
        %v6368 = vunpack.c.l.b16 %v6299
        %v6369 = vunpack.c.l.b16 %v6300
        %v6370 = vunpack.c.l.b16 %v6301
        %v6371 = vunpack.c.l.b16 %v6302
        %v6372 = vunpack.c.l.b16 %v6303
        %v6373 = vunpack.c.l.b16 %v6304
        %v6374 = vunpack.c.l.b16 %v6305
        %v6375 = vunpack.c.l.b16 %v6306
        %v6376 = vunpack.c.l.b16 %v6307
        %v6377 = vunpack.c.l.b16 %v6308
        %v6378 = vunpack.c.l.b16 %v6309
        %v6379 = vunpack.c.l.b16 %v6310
        %v6380 = vunpack.c.l.b16 %v6311
        %v6381 = vunpack.c.l.b16 %v6312
        %v6382 = vunpack.c.l.b16 %v6313
        %v6383 = vunpack.c.l.b16 %v6314
        %v6384 = vunpack.c.l.b16 %v6315
        %v6385 = vunpack.c.l.b16 %v6316
        %v6386 = vunpack.c.l.b16 %v6317
        %v6387 = vunpack.c.l.b16 %v6318
        %v6388 = vunpack.c.l.b16 %v6319
        %v6389 = vunpack.c.l.b16 %v6320
        %v6390 = vunpack.c.l.b16 %v6321
        %v6391 = vunpack.c.l.b16 %v6322
        %v6392 = vunpack.c.l.b16 %v6323
        %v6393 = vunpack.c.l.b16 %v6324
        %v6394 = vpack.c.b16 %v6362, %v6361
        %v6395 = vpack.c.b16 %v6364, %v6363
        %v6396 = vpack.c.b16 %v6366, %v6365
        %v6397 = vpack.c.b16 %v6368, %v6367
        %v6398 = vpack.c.b16 %v6370, %v6369
        %v6399 = vpack.c.b16 %v6372, %v6371
        %v6400 = vpack.c.b16 %v6374, %v6373
        %v6401 = vpack.c.b16 %v6376, %v6375
        %v6402 = vpack.c.b16 %v6378, %v6377
        %v6403 = vpack.c.b16 %v6380, %v6379
        %v6404 = vpack.c.b16 %v6382, %v6381
        %v6405 = vpack.c.b16 %v6384, %v6383
        %v6406 = vpack.c.b16 %v6386, %v6385
        %v6407 = vpack.c.b16 %v6388, %v6387
        %v6408 = vpack.c.b16 %v6390, %v6389
        %v6409 = vpack.c.b16 %v6392, %v6391
        %v6410 = vpack.c.b16 %v6393, %v6393
        %v6412 = vshrl.u32 %v6394, 16
        %v6414 = vshll.u32 %v6394, 16
        %v6416 = vrot.slane %v6414, 1
        %v6417 = vor.u32 %v6412, %v6416
        %v6419 = vshll.u32 %v6395, 16
        %v6421 = vrot.slane %v6419, 1
        %v6422 = vsel %vm1133, %v6417, %v6421
        %v6423 = vshrl.u32 %v6395, 16
        %v6425 = vor.u32 %v6423, %v6421
        %v6427 = vshll.u32 %v6396, 16
        %v6429 = vrot.slane %v6427, 1
        %v6430 = vsel %vm1133, %v6425, %v6429
        %v6431 = vshrl.u32 %v6396, 16
        %v6433 = vor.u32 %v6431, %v6429
        %v6435 = vshll.u32 %v6397, 16
        %v6437 = vrot.slane %v6435, 1
        %v6438 = vsel %vm1133, %v6433, %v6437
        %v6439 = vshrl.u32 %v6397, 16
        %v6441 = vor.u32 %v6439, %v6437
        %v6443 = vshll.u32 %v6398, 16
        %v6445 = vrot.slane %v6443, 1
        %v6446 = vsel %vm1133, %v6441, %v6445
        %v6447 = vshrl.u32 %v6398, 16
        %v6449 = vor.u32 %v6447, %v6445
        %v6451 = vshll.u32 %v6399, 16
        %v6453 = vrot.slane %v6451, 1
        %v6454 = vsel %vm1133, %v6449, %v6453
        %v6455 = vshrl.u32 %v6399, 16
        %v6457 = vor.u32 %v6455, %v6453
        %v6459 = vshll.u32 %v6400, 16
        %v6461 = vrot.slane %v6459, 1
        %v6462 = vsel %vm1133, %v6457, %v6461
        %v6463 = vshrl.u32 %v6400, 16
        %v6465 = vor.u32 %v6463, %v6461
        %v6467 = vshll.u32 %v6401, 16
        %v6469 = vrot.slane %v6467, 1
        %v6470 = vsel %vm1133, %v6465, %v6469
        %v6471 = vshrl.u32 %v6401, 16
        %v6473 = vor.u32 %v6471, %v6469
        %v6475 = vshll.u32 %v6402, 16
        %v6477 = vrot.slane %v6475, 1
        %v6478 = vsel %vm1133, %v6473, %v6477
        %v6479 = vshrl.u32 %v6402, 16
        %v6481 = vor.u32 %v6479, %v6477
        %v6483 = vshll.u32 %v6403, 16
        %v6485 = vrot.slane %v6483, 1
        %v6486 = vsel %vm1133, %v6481, %v6485
        %v6487 = vshrl.u32 %v6403, 16
        %v6489 = vor.u32 %v6487, %v6485
        %v6491 = vshll.u32 %v6404, 16
        %v6493 = vrot.slane %v6491, 1
        %v6494 = vsel %vm1133, %v6489, %v6493
        %v6495 = vshrl.u32 %v6404, 16
        %v6497 = vor.u32 %v6495, %v6493
        %v6499 = vshll.u32 %v6405, 16
        %v6501 = vrot.slane %v6499, 1
        %v6502 = vsel %vm1133, %v6497, %v6501
        %v6503 = vshrl.u32 %v6405, 16
        %v6505 = vor.u32 %v6503, %v6501
        %v6507 = vshll.u32 %v6406, 16
        %v6509 = vrot.slane %v6507, 1
        %v6510 = vsel %vm1133, %v6505, %v6509
        %v6511 = vshrl.u32 %v6406, 16
        %v6513 = vor.u32 %v6511, %v6509
        %v6515 = vshll.u32 %v6407, 16
        %v6517 = vrot.slane %v6515, 1
        %v6518 = vsel %vm1133, %v6513, %v6517
        %v6519 = vshrl.u32 %v6407, 16
        %v6521 = vor.u32 %v6519, %v6517
        %v6523 = vshll.u32 %v6408, 16
        %v6525 = vrot.slane %v6523, 1
        %v6526 = vsel %vm1133, %v6521, %v6525
        %v6527 = vshrl.u32 %v6408, 16
        %v6529 = vor.u32 %v6527, %v6525
        %v6531 = vshll.u32 %v6409, 16
        %v6533 = vrot.slane %v6531, 1
        %v6534 = vsel %vm1133, %v6529, %v6533
        %v6535 = vshrl.u32 %v6409, 16
        %v6537 = vor.u32 %v6535, %v6533
        %v6539 = vshll.u32 %v6410, 16
        %v6541 = vrot.slane %v6539, 1
        %v6542 = vsel %vm1133, %v6537, %v6541
        %v6545 = vunpack.c.l.b16 %v6326
        %v6546 = vunpack.c.l.b16 %v6327
        %v6547 = vpack.c.b16 %v6546, %v6545
        %v6549 = vsel %vm4236, %v6422, 0
        %v6552 = vsel %vm4236, %v6430, 0
        %v6555 = vsel %vm4236, %v6438, 0
        %v6558 = vsel %vm4236, %v6446, 0
        %v6561 = vsel %vm4236, %v6454, 0
        %v6564 = vsel %vm4236, %v6462, 0
        %v6567 = vsel %vm4236, %v6470, 0
        %v6570 = vsel %vm4236, %v6478, 0
        %v6573 = vsel %vm4236, %v6486, 0
        %v6576 = vsel %vm4236, %v6494, 0
        %v6579 = vsel %vm4236, %v6502, 0
        %v6582 = vsel %vm4236, %v6510, 0
        %v6585 = vsel %vm4236, %v6518, 0
        %v6588 = vsel %vm4236, %v6526, 0
        %v6591 = vsel %vm4236, %v6534, 0
        %v6594 = vsel %vm4236, %v6542, 0
        %v6597 = vsel %vm4285, %v6547, 0
        %6599 = vmatpush.bf16.msra.mxu0 0
        %6600 = vmatpush.bf16.msra.mxu0 0
        %6601 = vmatpush.bf16.msra.mxu0 0
        %6602 = vmatpush.bf16.msra.mxu0 0
        %6603 = vmatpush.bf16.msra.mxu0 0
        %6604 = vmatpush.bf16.msra.mxu0 0
        %6605 = vmatpush.bf16.msra.mxu0 0
        %6606 = vmatpush.bf16.msra.mxu0 %v6597
        %6607 = vmatmul.bf16.gmra.mxu0 %v6549
        %v6608 = vpop.f32.mrf.mxu0
        %v6609 = vadd.f32 0.0, %v6608
        %v6610 = vpop.f32.mrf.mxu0
        %v6611 = vadd.f32 0.0, %v6610
        %6612 = vmatmul.bf16.gmra.mxu0 %v6552
        %v6613 = vpop.f32.mrf.mxu0
        %v6614 = vadd.f32 0.0, %v6613
        %v6615 = vpop.f32.mrf.mxu0
        %v6616 = vadd.f32 0.0, %v6615
        %6617 = vmatmul.bf16.gmra.mxu0 %v6555
        %v6618 = vpop.f32.mrf.mxu0
        %v6619 = vadd.f32 0.0, %v6618
        %v6620 = vpop.f32.mrf.mxu0
        %v6621 = vadd.f32 0.0, %v6620
        %6622 = vmatmul.bf16.gmra.mxu0 %v6558
        %v6623 = vpop.f32.mrf.mxu0
        %v6624 = vadd.f32 0.0, %v6623
        %v6625 = vpop.f32.mrf.mxu0
        %v6626 = vadd.f32 0.0, %v6625
        %6627 = vmatmul.bf16.gmra.mxu0 %v6561
        %v6628 = vpop.f32.mrf.mxu0
        %v6629 = vadd.f32 0.0, %v6628
        %v6630 = vpop.f32.mrf.mxu0
        %v6631 = vadd.f32 0.0, %v6630
        %6632 = vmatmul.bf16.gmra.mxu0 %v6564
        %v6633 = vpop.f32.mrf.mxu0
        %v6634 = vadd.f32 0.0, %v6633
        %v6635 = vpop.f32.mrf.mxu0
        %v6636 = vadd.f32 0.0, %v6635
        %6637 = vmatmul.bf16.gmra.mxu0 %v6567
        %v6638 = vpop.f32.mrf.mxu0
        %v6639 = vadd.f32 0.0, %v6638
        %v6640 = vpop.f32.mrf.mxu0
        %v6641 = vadd.f32 0.0, %v6640
        %6642 = vmatmul.bf16.gmra.mxu0 %v6570
        %v6643 = vpop.f32.mrf.mxu0
        %v6644 = vadd.f32 0.0, %v6643
        %v6645 = vpop.f32.mrf.mxu0
        %v6646 = vadd.f32 0.0, %v6645
        %6647 = vmatmul.bf16.gmra.mxu0 %v6573
        %v6648 = vpop.f32.mrf.mxu0
        %v6649 = vadd.f32 0.0, %v6648
        %v6650 = vpop.f32.mrf.mxu0
        %v6651 = vadd.f32 0.0, %v6650
        %6652 = vmatmul.bf16.gmra.mxu0 %v6576
        %v6653 = vpop.f32.mrf.mxu0
        %v6654 = vadd.f32 0.0, %v6653
        %v6655 = vpop.f32.mrf.mxu0
        %v6656 = vadd.f32 0.0, %v6655
        %6657 = vmatmul.bf16.gmra.mxu0 %v6579
        %v6658 = vpop.f32.mrf.mxu0
        %v6659 = vadd.f32 0.0, %v6658
        %v6660 = vpop.f32.mrf.mxu0
        %v6661 = vadd.f32 0.0, %v6660
        %6662 = vmatmul.bf16.gmra.mxu0 %v6582
        %v6663 = vpop.f32.mrf.mxu0
        %v6664 = vadd.f32 0.0, %v6663
        %v6665 = vpop.f32.mrf.mxu0
        %v6666 = vadd.f32 0.0, %v6665
        %6667 = vmatmul.bf16.gmra.mxu0 %v6585
        %v6668 = vpop.f32.mrf.mxu0
        %v6669 = vadd.f32 0.0, %v6668
        %v6670 = vpop.f32.mrf.mxu0
        %v6671 = vadd.f32 0.0, %v6670
        %6672 = vmatmul.bf16.gmra.mxu0 %v6588
        %v6673 = vpop.f32.mrf.mxu0
        %v6674 = vadd.f32 0.0, %v6673
        %v6675 = vpop.f32.mrf.mxu0
        %v6676 = vadd.f32 0.0, %v6675
        %6677 = vmatmul.bf16.gmra.mxu0 %v6591
        %v6678 = vpop.f32.mrf.mxu0
        %v6679 = vadd.f32 0.0, %v6678
        %v6680 = vpop.f32.mrf.mxu0
        %v6681 = vadd.f32 0.0, %v6680
        %6682 = vmatmul.bf16.gmra.mxu0 %v6594
        %v6683 = vpop.f32.mrf.mxu0
        %v6684 = vadd.f32 0.0, %v6683
        %v6685 = vpop.f32.mrf.mxu0
        %v6686 = vadd.f32 0.0, %v6685
        %6687 = vdwg.mxu0
        %v6688 = vadd.f32 %v6260, %v6609
        %v6689 = vadd.f32 %v6261, %v6611
        %v6690 = vadd.f32 %v6262, %v6614
        %v6691 = vadd.f32 %v6263, %v6616
        %v6692 = vadd.f32 %v6264, %v6619
        %v6693 = vadd.f32 %v6265, %v6621
        %v6694 = vadd.f32 %v6266, %v6624
        %v6695 = vadd.f32 %v6267, %v6626
        %v6696 = vadd.f32 %v6268, %v6629
        %v6697 = vadd.f32 %v6269, %v6631
        %v6698 = vadd.f32 %v6270, %v6634
        %v6699 = vadd.f32 %v6271, %v6636
        %v6700 = vadd.f32 %v6272, %v6639
        %v6701 = vadd.f32 %v6273, %v6641
        %v6702 = vadd.f32 %v6274, %v6644
        %v6703 = vadd.f32 %v6275, %v6646
        %v6704 = vadd.f32 %v6276, %v6649
        %v6705 = vadd.f32 %v6277, %v6651
        %v6706 = vadd.f32 %v6278, %v6654
        %v6707 = vadd.f32 %v6279, %v6656
        %v6708 = vadd.f32 %v6280, %v6659
        %v6709 = vadd.f32 %v6281, %v6661
        %v6710 = vadd.f32 %v6282, %v6664
        %v6711 = vadd.f32 %v6283, %v6666
        %v6712 = vadd.f32 %v6284, %v6669
        %v6713 = vadd.f32 %v6285, %v6671
        %v6714 = vadd.f32 %v6286, %v6674
        %v6715 = vadd.f32 %v6287, %v6676
        %v6716 = vadd.f32 %v6288, %v6679
        %v6717 = vadd.f32 %v6289, %v6681
        %v6718 = vadd.f32 %v6290, %v6684
        %v6719 = vadd.f32 %v6291, %v6686
        %v6720 = vld [vmem:[#allocation2 + $0x10] sm:$0xe]
        %v6721 = vunpack.c.l.bf16 %v6720
        %v6722 = vunpack.c.l.bf16 %v6293
        %v6723 = vunpack.c.l.bf16 %v6294
        %v6724 = vunpack.c.l.bf16 %v6295
        %v6725 = vunpack.c.l.bf16 %v6296
        %v6726 = vunpack.c.l.bf16 %v6297
        %v6727 = vunpack.c.l.bf16 %v6298
        %v6728 = vunpack.c.l.bf16 %v6299
        %v6729 = vunpack.c.l.bf16 %v6300
        %v6730 = vunpack.c.l.bf16 %v6301
        %v6731 = vunpack.c.l.bf16 %v6302
        %v6732 = vunpack.c.l.bf16 %v6303
        %v6733 = vunpack.c.l.bf16 %v6304
        %v6734 = vunpack.c.l.bf16 %v6305
        %v6735 = vunpack.c.l.bf16 %v6306
        %v6736 = vunpack.c.l.bf16 %v6307
        %v6737 = vunpack.c.l.bf16 %v6308
        %v6738 = vunpack.c.l.bf16 %v6309
        %v6739 = vunpack.c.l.bf16 %v6310
        %v6740 = vunpack.c.l.bf16 %v6311
        %v6741 = vunpack.c.l.bf16 %v6312
        %v6742 = vunpack.c.l.bf16 %v6313
        %v6743 = vunpack.c.l.bf16 %v6314
        %v6744 = vunpack.c.l.bf16 %v6315
        %v6745 = vunpack.c.l.bf16 %v6316
        %v6746 = vunpack.c.l.bf16 %v6317
        %v6747 = vunpack.c.l.bf16 %v6318
        %v6748 = vunpack.c.l.bf16 %v6319
        %v6749 = vunpack.c.l.bf16 %v6320
        %v6750 = vunpack.c.l.bf16 %v6321
        %v6751 = vunpack.c.l.bf16 %v6322
        %v6752 = vunpack.c.l.bf16 %v6323
        %v6753 = vunpack.c.l.bf16 %v6324
        %v6754 = vmul.f32 %v6721, %v4590
        %v6755 = vmul.f32 %v6722, %v4592
        %v6756 = vmul.f32 %v6723, %v4594
        %v6757 = vmul.f32 %v6724, %v4596
        %v6758 = vmul.f32 %v6725, %v4598
        %v6759 = vmul.f32 %v6726, %v4600
        %v6760 = vmul.f32 %v6727, %v4602
        %v6761 = vmul.f32 %v6728, %v4604
        %v6762 = vmul.f32 %v6729, %v4606
        %v6763 = vmul.f32 %v6730, %v4608
        %v6764 = vmul.f32 %v6731, %v4610
        %v6765 = vmul.f32 %v6732, %v4612
        %v6766 = vmul.f32 %v6733, %v4614
        %v6767 = vmul.f32 %v6734, %v4616
        %v6768 = vmul.f32 %v6735, %v4618
        %v6769 = vmul.f32 %v6736, %v4620
        %v6770 = vmul.f32 %v6737, %v4622
        %v6771 = vmul.f32 %v6738, %v4624
        %v6772 = vmul.f32 %v6739, %v4626
        %v6773 = vmul.f32 %v6740, %v4628
        %v6774 = vmul.f32 %v6741, %v4630
        %v6775 = vmul.f32 %v6742, %v4632
        %v6776 = vmul.f32 %v6743, %v4634
        %v6777 = vmul.f32 %v6744, %v4636
        %v6778 = vmul.f32 %v6745, %v4638
        %v6779 = vmul.f32 %v6746, %v4640
        %v6780 = vmul.f32 %v6747, %v4642
        %v6781 = vmul.f32 %v6748, %v4644
        %v6782 = vmul.f32 %v6749, %v4646
        %v6783 = vmul.f32 %v6750, %v4648
        %v6784 = vmul.f32 %v6751, %v4650
        %v6785 = vmul.f32 %v6752, %v4652
        %v6786 = vmul.f32 %v6753, %v4651
        %v6787 = vpack.c.bf16 %v6755, %v6754
        %v6788 = vpack.c.bf16 %v6757, %v6756
        %v6789 = vpack.c.bf16 %v6759, %v6758
        %v6790 = vpack.c.bf16 %v6761, %v6760
        %v6791 = vpack.c.bf16 %v6763, %v6762
        %v6792 = vpack.c.bf16 %v6765, %v6764
        %v6793 = vpack.c.bf16 %v6767, %v6766
        %v6794 = vpack.c.bf16 %v6769, %v6768
        %v6795 = vpack.c.bf16 %v6771, %v6770
        %v6796 = vpack.c.bf16 %v6773, %v6772
        %v6797 = vpack.c.bf16 %v6775, %v6774
        %v6798 = vpack.c.bf16 %v6777, %v6776
        %v6799 = vpack.c.bf16 %v6779, %v6778
        %v6800 = vpack.c.bf16 %v6781, %v6780
        %v6801 = vpack.c.bf16 %v6783, %v6782
        %v6802 = vpack.c.bf16 %v6785, %v6784
        %v6803 = vpack.c.bf16 %v6786, %v6786
        %s6804 = scalar_lea.vmem %s8, 64
        %v6805 = vld [vmem:[%s6804] sm:$0xf]
        %v6806 = vld [vmem:[%s6804 + $0x4] sm:$0x3]
        %v6824 = vrot.slane %v6787, 1
        %v6825 = vrot.slane %v6788, 1
        %v6826 = vsel %vm1345, %v6824, %v6825
        %v6827 = vrot.slane %v6789, 1
        %v6828 = vsel %vm1345, %v6825, %v6827
        %v6829 = vrot.slane %v6790, 1
        %v6830 = vsel %vm1345, %v6827, %v6829
        %v6831 = vrot.slane %v6791, 1
        %v6832 = vsel %vm1345, %v6829, %v6831
        %v6833 = vrot.slane %v6792, 1
        %v6834 = vsel %vm1345, %v6831, %v6833
        %v6835 = vrot.slane %v6793, 1
        %v6836 = vsel %vm1345, %v6833, %v6835
        %v6837 = vrot.slane %v6794, 1
        %v6838 = vsel %vm1345, %v6835, %v6837
        %v6839 = vrot.slane %v6795, 1
        %v6840 = vsel %vm1345, %v6837, %v6839
        %v6841 = vrot.slane %v6796, 1
        %v6842 = vsel %vm1345, %v6839, %v6841
        %v6843 = vrot.slane %v6797, 1
        %v6844 = vsel %vm1345, %v6841, %v6843
        %v6845 = vrot.slane %v6798, 1
        %v6846 = vsel %vm1345, %v6843, %v6845
        %v6847 = vrot.slane %v6799, 1
        %v6848 = vsel %vm1345, %v6845, %v6847
        %v6849 = vrot.slane %v6800, 1
        %v6850 = vsel %vm1345, %v6847, %v6849
        %v6851 = vrot.slane %v6801, 1
        %v6852 = vsel %vm1345, %v6849, %v6851
        %v6853 = vrot.slane %v6802, 1
        %v6854 = vsel %vm1345, %v6851, %v6853
        %v6855 = vrot.slane %v6803, 1
        %v6856 = vsel %vm1345, %v6853, %v6855
        %v6859 = vunpack.c.l.b16 %v6805
        %v6860 = vunpack.c.l.b16 %v6806
        %v6861 = vpack.c.b16 %v6860, %v6859
        %v6863 = vsel %vm4236, %v6826, 0
        %v6866 = vsel %vm4236, %v6828, 0
        %v6869 = vsel %vm4236, %v6830, 0
        %v6872 = vsel %vm4236, %v6832, 0
        %v6875 = vsel %vm4236, %v6834, 0
        %v6878 = vsel %vm4236, %v6836, 0
        %v6881 = vsel %vm4236, %v6838, 0
        %v6884 = vsel %vm4236, %v6840, 0
        %v6887 = vsel %vm4236, %v6842, 0
        %v6890 = vsel %vm4236, %v6844, 0
        %v6893 = vsel %vm4236, %v6846, 0
        %v6896 = vsel %vm4236, %v6848, 0
        %v6899 = vsel %vm4236, %v6850, 0
        %v6902 = vsel %vm4236, %v6852, 0
        %v6905 = vsel %vm4236, %v6854, 0
        %v6908 = vsel %vm4236, %v6856, 0
        %v6911 = vsel %vm4285, %v6861, 0
        %6913 = vmatpush.bf16.msra.mxu0 0
        %6914 = vmatpush.bf16.msra.mxu0 0
        %6915 = vmatpush.bf16.msra.mxu0 0
        %6916 = vmatpush.bf16.msra.mxu0 0
        %6917 = vmatpush.bf16.msra.mxu0 0
        %6918 = vmatpush.bf16.msra.mxu0 0
        %6919 = vmatpush.bf16.msra.mxu0 0
        %6920 = vmatpush.bf16.msra.mxu0 %v6911
        %6921 = vmatmul.bf16.gmra.mxu0 %v6863
        %v6922 = vpop.f32.mrf.mxu0
        %v6923 = vadd.f32 0.0, %v6922
        %v6924 = vpop.f32.mrf.mxu0
        %v6925 = vadd.f32 0.0, %v6924
        %6926 = vmatmul.bf16.gmra.mxu0 %v6866
        %v6927 = vpop.f32.mrf.mxu0
        %v6928 = vadd.f32 0.0, %v6927
        %v6929 = vpop.f32.mrf.mxu0
        %v6930 = vadd.f32 0.0, %v6929
        %6931 = vmatmul.bf16.gmra.mxu0 %v6869
        %v6932 = vpop.f32.mrf.mxu0
        %v6933 = vadd.f32 0.0, %v6932
        %v6934 = vpop.f32.mrf.mxu0
        %v6935 = vadd.f32 0.0, %v6934
        %6936 = vmatmul.bf16.gmra.mxu0 %v6872
        %v6937 = vpop.f32.mrf.mxu0
        %v6938 = vadd.f32 0.0, %v6937
        %v6939 = vpop.f32.mrf.mxu0
        %v6940 = vadd.f32 0.0, %v6939
        %6941 = vmatmul.bf16.gmra.mxu0 %v6875
        %v6942 = vpop.f32.mrf.mxu0
        %v6943 = vadd.f32 0.0, %v6942
        %v6944 = vpop.f32.mrf.mxu0
        %v6945 = vadd.f32 0.0, %v6944
        %6946 = vmatmul.bf16.gmra.mxu0 %v6878
        %v6947 = vpop.f32.mrf.mxu0
        %v6948 = vadd.f32 0.0, %v6947
        %v6949 = vpop.f32.mrf.mxu0
        %v6950 = vadd.f32 0.0, %v6949
        %6951 = vmatmul.bf16.gmra.mxu0 %v6881
        %v6952 = vpop.f32.mrf.mxu0
        %v6953 = vadd.f32 0.0, %v6952
        %v6954 = vpop.f32.mrf.mxu0
        %v6955 = vadd.f32 0.0, %v6954
        %6956 = vmatmul.bf16.gmra.mxu0 %v6884
        %v6957 = vpop.f32.mrf.mxu0
        %v6958 = vadd.f32 0.0, %v6957
        %v6959 = vpop.f32.mrf.mxu0
        %v6960 = vadd.f32 0.0, %v6959
        %6961 = vmatmul.bf16.gmra.mxu0 %v6887
        %v6962 = vpop.f32.mrf.mxu0
        %v6963 = vadd.f32 0.0, %v6962
        %v6964 = vpop.f32.mrf.mxu0
        %v6965 = vadd.f32 0.0, %v6964
        %6966 = vmatmul.bf16.gmra.mxu0 %v6890
        %v6967 = vpop.f32.mrf.mxu0
        %v6968 = vadd.f32 0.0, %v6967
        %v6969 = vpop.f32.mrf.mxu0
        %v6970 = vadd.f32 0.0, %v6969
        %6971 = vmatmul.bf16.gmra.mxu0 %v6893
        %v6972 = vpop.f32.mrf.mxu0
        %v6973 = vadd.f32 0.0, %v6972
        %v6974 = vpop.f32.mrf.mxu0
        %v6975 = vadd.f32 0.0, %v6974
        %6976 = vmatmul.bf16.gmra.mxu0 %v6896
        %v6977 = vpop.f32.mrf.mxu0
        %v6978 = vadd.f32 0.0, %v6977
        %v6979 = vpop.f32.mrf.mxu0
        %v6980 = vadd.f32 0.0, %v6979
        %6981 = vmatmul.bf16.gmra.mxu0 %v6899
        %v6982 = vpop.f32.mrf.mxu0
        %v6983 = vadd.f32 0.0, %v6982
        %v6984 = vpop.f32.mrf.mxu0
        %v6985 = vadd.f32 0.0, %v6984
        %6986 = vmatmul.bf16.gmra.mxu0 %v6902
        %v6987 = vpop.f32.mrf.mxu0
        %v6988 = vadd.f32 0.0, %v6987
        %v6989 = vpop.f32.mrf.mxu0
        %v6990 = vadd.f32 0.0, %v6989
        %6991 = vmatmul.bf16.gmra.mxu0 %v6905
        %v6992 = vpop.f32.mrf.mxu0
        %v6993 = vadd.f32 0.0, %v6992
        %v6994 = vpop.f32.mrf.mxu0
        %v6995 = vadd.f32 0.0, %v6994
        %6996 = vmatmul.bf16.gmra.mxu0 %v6908
        %v6997 = vpop.f32.mrf.mxu0
        %v6998 = vadd.f32 0.0, %v6997
        %v6999 = vpop.f32.mrf.mxu0
        %v7000 = vadd.f32 0.0, %v6999
        %7001 = vdwg.mxu0
        %v7002 = vadd.f32 %v6688, %v6923
        %v7003 = vadd.f32 %v6689, %v6925
        %v7004 = vadd.f32 %v6690, %v6928
        %v7005 = vadd.f32 %v6691, %v6930
        %v7006 = vadd.f32 %v6692, %v6933
        %v7007 = vadd.f32 %v6693, %v6935
        %v7008 = vadd.f32 %v6694, %v6938
        %v7009 = vadd.f32 %v6695, %v6940
        %v7010 = vadd.f32 %v6696, %v6943
        %v7011 = vadd.f32 %v6697, %v6945
        %v7012 = vadd.f32 %v6698, %v6948
        %v7013 = vadd.f32 %v6699, %v6950
        %v7014 = vadd.f32 %v6700, %v6953
        %v7015 = vadd.f32 %v6701, %v6955
        %v7016 = vadd.f32 %v6702, %v6958
        %v7017 = vadd.f32 %v6703, %v6960
        %v7018 = vadd.f32 %v6704, %v6963
        %v7019 = vadd.f32 %v6705, %v6965
        %v7020 = vadd.f32 %v6706, %v6968
        %v7021 = vadd.f32 %v6707, %v6970
        %v7022 = vadd.f32 %v6708, %v6973
        %v7023 = vadd.f32 %v6709, %v6975
        %v7024 = vadd.f32 %v6710, %v6978
        %v7025 = vadd.f32 %v6711, %v6980
        %v7026 = vadd.f32 %v6712, %v6983
        %v7027 = vadd.f32 %v6713, %v6985
        %v7028 = vadd.f32 %v6714, %v6988
        %v7029 = vadd.f32 %v6715, %v6990
        %v7030 = vadd.f32 %v6716, %v6993
        %v7031 = vadd.f32 %v6717, %v6995
        %v7032 = vadd.f32 %v6718, %v6998
        %v7033 = vadd.f32 %v6719, %v7000
        %v7034 = vld [vmem:[%s9] sm:$0x1]
        %v7036 = vperm.slane %v7034, 0
        %v7038 = vmul.f32 %v7002, %v7036
        %v7039 = vmul.f32 %v7003, %v7036
        %v7040 = vmul.f32 %v7004, %v7036
        %v7041 = vmul.f32 %v7005, %v7036
        %v7042 = vmul.f32 %v7006, %v7036
        %v7043 = vmul.f32 %v7007, %v7036
        %v7044 = vmul.f32 %v7008, %v7036
        %v7045 = vmul.f32 %v7009, %v7036
        %v7046 = vmul.f32 %v7010, %v7036
        %v7047 = vmul.f32 %v7011, %v7036
        %v7048 = vmul.f32 %v7012, %v7036
        %v7049 = vmul.f32 %v7013, %v7036
        %v7050 = vmul.f32 %v7014, %v7036
        %v7051 = vmul.f32 %v7015, %v7036
        %v7052 = vmul.f32 %v7016, %v7036
        %v7053 = vmul.f32 %v7017, %v7036
        %v7054 = vmul.f32 %v7018, %v7036
        %v7055 = vmul.f32 %v7019, %v7036
        %v7056 = vmul.f32 %v7020, %v7036
        %v7057 = vmul.f32 %v7021, %v7036
        %v7058 = vmul.f32 %v7022, %v7036
        %v7059 = vmul.f32 %v7023, %v7036
        %v7060 = vmul.f32 %v7024, %v7036
        %v7061 = vmul.f32 %v7025, %v7036
        %v7062 = vmul.f32 %v7026, %v7036
        %v7063 = vmul.f32 %v7027, %v7036
        %v7064 = vmul.f32 %v7028, %v7036
        %v7065 = vmul.f32 %v7029, %v7036
        %v7066 = vmul.f32 %v7030, %v7036
        %v7067 = vmul.f32 %v7031, %v7036
        %v7068 = vmul.f32 %v7032, %v7036
        %v7069 = vmul.f32 %v7033, %v7036
        %v7070 = vld [vmem:[%s10] sm:$0x1]
        %v7072 = vperm.slane %v7070, 0
        %v7074 = vadd.f32 %v7038, %v7072
        %v7075 = vadd.f32 %v7039, %v7072
        %v7076 = vadd.f32 %v7040, %v7072
        %v7077 = vadd.f32 %v7041, %v7072
        %v7078 = vadd.f32 %v7042, %v7072
        %v7079 = vadd.f32 %v7043, %v7072
        %v7080 = vadd.f32 %v7044, %v7072
        %v7081 = vadd.f32 %v7045, %v7072
        %v7082 = vadd.f32 %v7046, %v7072
        %v7083 = vadd.f32 %v7047, %v7072
        %v7084 = vadd.f32 %v7048, %v7072
        %v7085 = vadd.f32 %v7049, %v7072
        %v7086 = vadd.f32 %v7050, %v7072
        %v7087 = vadd.f32 %v7051, %v7072
        %v7088 = vadd.f32 %v7052, %v7072
        %v7089 = vadd.f32 %v7053, %v7072
        %v7090 = vadd.f32 %v7054, %v7072
        %v7091 = vadd.f32 %v7055, %v7072
        %v7092 = vadd.f32 %v7056, %v7072
        %v7093 = vadd.f32 %v7057, %v7072
        %v7094 = vadd.f32 %v7058, %v7072
        %v7095 = vadd.f32 %v7059, %v7072
        %v7096 = vadd.f32 %v7060, %v7072
        %v7097 = vadd.f32 %v7061, %v7072
        %v7098 = vadd.f32 %v7062, %v7072
        %v7099 = vadd.f32 %v7063, %v7072
        %v7100 = vadd.f32 %v7064, %v7072
        %v7101 = vadd.f32 %v7065, %v7072
        %v7102 = vadd.f32 %v7066, %v7072
        %v7103 = vadd.f32 %v7067, %v7072
        %v7104 = vadd.f32 %v7068, %v7072
        %v7105 = vadd.f32 %v7069, %v7072
        %v7106 = vmax.f32 %v7074, 0.0
        %v7107 = vmax.f32 %v7075, 0.0
        %v7108 = vmax.f32 %v7076, 0.0
        %v7109 = vmax.f32 %v7077, 0.0
        %v7110 = vmax.f32 %v7078, 0.0
        %v7111 = vmax.f32 %v7079, 0.0
        %v7112 = vmax.f32 %v7080, 0.0
        %v7113 = vmax.f32 %v7081, 0.0
        %v7114 = vmax.f32 %v7082, 0.0
        %v7115 = vmax.f32 %v7083, 0.0
        %v7116 = vmax.f32 %v7084, 0.0
        %v7117 = vmax.f32 %v7085, 0.0
        %v7118 = vmax.f32 %v7086, 0.0
        %v7119 = vmax.f32 %v7087, 0.0
        %v7120 = vmax.f32 %v7088, 0.0
        %v7121 = vmax.f32 %v7089, 0.0
        %v7122 = vmax.f32 %v7090, 0.0
        %v7123 = vmax.f32 %v7091, 0.0
        %v7124 = vmax.f32 %v7092, 0.0
        %v7125 = vmax.f32 %v7093, 0.0
        %v7126 = vmax.f32 %v7094, 0.0
        %v7127 = vmax.f32 %v7095, 0.0
        %v7128 = vmax.f32 %v7096, 0.0
        %v7129 = vmax.f32 %v7097, 0.0
        %v7130 = vmax.f32 %v7098, 0.0
        %v7131 = vmax.f32 %v7099, 0.0
        %v7132 = vmax.f32 %v7100, 0.0
        %v7133 = vmax.f32 %v7101, 0.0
        %v7134 = vmax.f32 %v7102, 0.0
        %v7135 = vmax.f32 %v7103, 0.0
        %v7136 = vmax.f32 %v7104, 0.0
        %v7137 = vmax.f32 %v7105, 0.0
        %v7138 = vpack.c.bf16 %v7107, %v7106
        %v7139 = vpack.c.bf16 %v7109, %v7108
        %v7140 = vpack.c.bf16 %v7111, %v7110
        %v7141 = vpack.c.bf16 %v7113, %v7112
        %v7142 = vpack.c.bf16 %v7115, %v7114
        %v7143 = vpack.c.bf16 %v7117, %v7116
        %v7144 = vpack.c.bf16 %v7119, %v7118
        %v7145 = vpack.c.bf16 %v7121, %v7120
        %v7146 = vpack.c.bf16 %v7123, %v7122
        %v7147 = vpack.c.bf16 %v7125, %v7124
        %v7148 = vpack.c.bf16 %v7127, %v7126
        %v7149 = vpack.c.bf16 %v7129, %v7128
        %v7150 = vpack.c.bf16 %v7131, %v7130
        %v7151 = vpack.c.bf16 %v7133, %v7132
        %v7152 = vpack.c.bf16 %v7135, %v7134
        %v7153 = vpack.c.bf16 %v7137, %v7136
        %v7154 = vld [vmem:[%s11] sm:$0x1]
        %v7155 = vld [vmem:[#allocation4] sm:$0x1]
        %7157 = vset.pattern.permute.xlu0 0
        %7158 = vperm.xlu0 %7157, %v7155
        %v7159 = vpop.permute.xlu0 %7158
        %v7161 = vperm.slane %v7159, 0
        %vm7162 = vcmask 31744
        %v7164 = vsel %vm7162, %v7154, 0
        %v7167 = vsel %vm7162, %v7138, 0
        %v7170 = vsel %vm7162, %v7139, 0
        %v7173 = vsel %vm7162, %v7140, 0
        %v7176 = vsel %vm7162, %v7141, 0
        %v7179 = vsel %vm7162, %v7142, 0
        %v7182 = vsel %vm7162, %v7143, 0
        %v7185 = vsel %vm7162, %v7144, 0
        %v7188 = vsel %vm7162, %v7145, 0
        %v7191 = vsel %vm7162, %v7146, 0
        %v7194 = vsel %vm7162, %v7147, 0
        %v7197 = vsel %vm7162, %v7148, 0
        %v7200 = vsel %vm7162, %v7149, 0
        %v7203 = vsel %vm7162, %v7150, 0
        %v7206 = vsel %vm7162, %v7151, 0
        %v7209 = vsel %vm7162, %v7152, 0
        %v7212 = vsel %vm7162, %v7153, 0
        %7214 = vmatpush.bf16.xpose.msra.mxu0 %v7188
        %7215 = vmatpush.bf16.xpose.msra.mxu0 %v7185
        %7216 = vmatpush.bf16.xpose.msra.mxu0 %v7182
        %7217 = vmatpush.bf16.xpose.msra.mxu0 %v7179
        %7218 = vmatpush.bf16.xpose.msra.mxu0 %v7176
        %7219 = vmatpush.bf16.xpose.msra.mxu0 %v7173
        %7220 = vmatpush.bf16.xpose.msra.mxu0 %v7170
        %7221 = vmatpush.bf16.xpose.msra.mxu0 %v7167
        %7222 = vmatmul.bf16.gmra.mxu0 %v7164
        %v7223 = vpop.f32.mrf.mxu0
        %v7224 = vadd.f32 %v7161, %v7223
        %v7225 = vpop.f32.mrf.mxu0
        %7226 = vdwg.mxu0
        %7227 = vmatpush.bf16.xpose.msra.mxu0 %v7212
        %7228 = vmatpush.bf16.xpose.msra.mxu0 %v7209
        %7229 = vmatpush.bf16.xpose.msra.mxu0 %v7206
        %7230 = vmatpush.bf16.xpose.msra.mxu0 %v7203
        %7231 = vmatpush.bf16.xpose.msra.mxu0 %v7200
        %7232 = vmatpush.bf16.xpose.msra.mxu0 %v7197
        %7233 = vmatpush.bf16.xpose.msra.mxu0 %v7194
        %7234 = vmatpush.bf16.xpose.msra.mxu0 %v7191
        %7235 = vmatmul.bf16.gmra.mxu0 %v7164
        %v7236 = vpop.f32.mrf.mxu0
        %v7237 = vadd.f32 %v7161, %v7236
        %v7238 = vpop.f32.mrf.mxu0
        %7239 = vdwg.mxu0
        %vm7240 = vcmask 122880
        %7241 = vst.msk [vmem:[#allocation3] sm:$0x1] %vm7240, %v7224
        %7243 = vrot.lane.b32.xlu0 %v7224, 112
        %v7244 = vpop.permute.xlu0 %7243
        %7246 = vst.msk [vmem:[#allocation3 + $0x1] sm:$0x1] %vm7240, %v7244
        %7247 = vrot.lane.b32.xlu0 %v7224, 96
        %v7248 = vpop.permute.xlu0 %7247
        %7250 = vst.msk [vmem:[#allocation3 + $0x2] sm:$0x1] %vm7240, %v7248
        %7251 = vrot.lane.b32.xlu0 %v7224, 80
        %v7252 = vpop.permute.xlu0 %7251
        %7254 = vst.msk [vmem:[#allocation3 + $0x3] sm:$0x1] %vm7240, %v7252
        %7255 = vrot.lane.b32.xlu0 %v7224, 64
        %v7256 = vpop.permute.xlu0 %7255
        %7258 = vst.msk [vmem:[#allocation3 + $0x4] sm:$0x1] %vm7240, %v7256
        %7259 = vrot.lane.b32.xlu0 %v7224, 48
        %v7260 = vpop.permute.xlu0 %7259
        %7262 = vst.msk [vmem:[#allocation3 + $0x5] sm:$0x1] %vm7240, %v7260
        %7263 = vrot.lane.b32.xlu0 %v7224, 32
        %v7264 = vpop.permute.xlu0 %7263
        %7266 = vst.msk [vmem:[#allocation3 + $0x6] sm:$0x1] %vm7240, %v7264
        %7267 = vrot.lane.b32.xlu0 %v7224, 16
        %v7268 = vpop.permute.xlu0 %7267
        %7270 = vst.msk [vmem:[#allocation3 + $0x7] sm:$0x1] %vm7240, %v7268
        %7271 = vst.msk [vmem:[#allocation3 + $0x8] sm:$0x1] %vm7240, %v7237
        %7273 = vrot.lane.b32.xlu0 %v7237, 112
        %v7274 = vpop.permute.xlu0 %7273
        %7276 = vst.msk [vmem:[#allocation3 + $0x9] sm:$0x1] %vm7240, %v7274
        %7277 = vrot.lane.b32.xlu0 %v7237, 96
        %v7278 = vpop.permute.xlu0 %7277
        %7280 = vst.msk [vmem:[#allocation3 + $0xa] sm:$0x1] %vm7240, %v7278
        %7281 = vrot.lane.b32.xlu0 %v7237, 80
        %v7282 = vpop.permute.xlu0 %7281
        %7284 = vst.msk [vmem:[#allocation3 + $0xb] sm:$0x1] %vm7240, %v7282
        %7285 = vrot.lane.b32.xlu0 %v7237, 64
        %v7286 = vpop.permute.xlu0 %7285
        %7288 = vst.msk [vmem:[#allocation3 + $0xc] sm:$0x1] %vm7240, %v7286
        %7289 = vrot.lane.b32.xlu0 %v7237, 48
        %v7290 = vpop.permute.xlu0 %7289
        %7292 = vst.msk [vmem:[#allocation3 + $0xd] sm:$0x1] %vm7240, %v7290
        %7293 = vrot.lane.b32.xlu0 %v7237, 32
        %v7294 = vpop.permute.xlu0 %7293
        %7296 = vst.msk [vmem:[#allocation3 + $0xe] sm:$0x1] %vm7240, %v7294
        %7297 = vrot.lane.b32.xlu0 %v7237, 16
        %v7298 = vpop.permute.xlu0 %7297
        %7300 = vst.msk [vmem:[#allocation3 + $0xf] sm:$0x1] %vm7240, %v7298
        %v7301 = vld [vmem:[#allocation3] sm:$0xff]
        %v7302 = vld [vmem:[#allocation3 + $0x8] sm:$0xff]
        %v7303 = vpack.c.bf16 %v7302, %v7301
        %v7304 = vld [vmem:[%s14] sm:$0xf]
        %v7305 = vld [vmem:[%s14 + $0x4] sm:$0xf]
        %v7308 = vunpack.c.l.b16 %v7304
        %v7309 = vunpack.c.l.b16 %v7305
        %v7310 = vpack.c.b16 %v7309, %v7308
        %v7313 = vsel %vm615, %v7303, 0
        %7315 = vmatpush.bf16.msra.mxu0 0
        %7316 = vmatpush.bf16.msra.mxu0 0
        %7317 = vmatpush.bf16.msra.mxu0 0
        %7318 = vmatpush.bf16.msra.mxu0 0
        %7319 = vmatpush.bf16.msra.mxu0 0
        %7320 = vmatpush.bf16.msra.mxu0 0
        %7321 = vmatpush.bf16.msra.mxu0 0
        %7322 = vmatpush.bf16.msra.mxu0 %v7310
        %7323 = vmatmul.bf16.gmra.mxu0 %v7313
        %v7324 = vpop.f32.mrf.mxu0
        %v7325 = vadd.f32 0.0, %v7324
        %v7326 = vpop.f32.mrf.mxu0
        %v7327 = vadd.f32 0.0, %v7326
        %7328 = vdwg.mxu0
        %v7329 = vld [vmem:[%s13] sm:$0xf]
        %v7330 = vld [vmem:[%s13 + $0x4] sm:$0xf]
        %v7331 = vld [vmem:[%s13 + $0x8] sm:$0xf]
        %v7332 = vld [vmem:[%s13 + $0xc] sm:$0xf]
        %v7333 = vld [vmem:[%s13 + $0x10] sm:$0xf]
        %v7334 = vld [vmem:[%s13 + $0x14] sm:$0xf]
        %v7335 = vld [vmem:[%s13 + $0x18] sm:$0xf]
        %v7336 = vld [vmem:[%s13 + $0x1c] sm:$0xf]
        %v7337 = vpack.c.bf16 %v7327, %v7325
        %v7346 = vunpack.c.l.b16 %v7329
        %v7347 = vunpack.c.l.b16 %v7330
        %v7348 = vunpack.c.l.b16 %v7331
        %v7349 = vunpack.c.l.b16 %v7332
        %v7350 = vunpack.c.l.b16 %v7333
        %v7351 = vunpack.c.l.b16 %v7334
        %v7352 = vunpack.c.l.b16 %v7335
        %v7353 = vunpack.c.l.b16 %v7336
        %v7354 = vpack.c.b16 %v7347, %v7346
        %v7355 = vpack.c.b16 %v7349, %v7348
        %v7356 = vpack.c.b16 %v7351, %v7350
        %v7357 = vpack.c.b16 %v7353, %v7352
        %v7359 = vsel %vm615, %v7354, 0
        %v7362 = vsel %vm615, %v7355, 0
        %v7365 = vsel %vm615, %v7356, 0
        %v7368 = vsel %vm615, %v7357, 0
        %7370 = vmatpush.bf16.msra.mxu0 0
        %7371 = vmatpush.bf16.msra.mxu0 0
        %7372 = vmatpush.bf16.msra.mxu0 0
        %7373 = vmatpush.bf16.msra.mxu0 0
        %7374 = vmatpush.bf16.msra.mxu0 0
        %7375 = vmatpush.bf16.msra.mxu0 0
        %7376 = vmatpush.bf16.msra.mxu0 0
        %7377 = vmatpush.bf16.msra.mxu0 %v7337
        %7378 = vmatmul.bf16.gmra.mxu0 %v7359
        %v7379 = vpop.f32.mrf.mxu0
        %v7380 = vadd.f32 0.0, %v7379
        %v7381 = vpop.f32.mrf.mxu0
        %v7382 = vadd.f32 0.0, %v7381
        %7383 = vmatmul.bf16.gmra.mxu0 %v7362
        %v7384 = vpop.f32.mrf.mxu0
        %v7385 = vadd.f32 0.0, %v7384
        %v7386 = vpop.f32.mrf.mxu0
        %v7387 = vadd.f32 0.0, %v7386
        %7388 = vmatmul.bf16.gmra.mxu0 %v7365
        %v7389 = vpop.f32.mrf.mxu0
        %v7390 = vadd.f32 0.0, %v7389
        %v7391 = vpop.f32.mrf.mxu0
        %v7392 = vadd.f32 0.0, %v7391
        %7393 = vmatmul.bf16.gmra.mxu0 %v7368
        %v7394 = vpop.f32.mrf.mxu0
        %v7395 = vadd.f32 0.0, %v7394
        %v7396 = vpop.f32.mrf.mxu0
        %v7397 = vadd.f32 0.0, %v7396
        %7398 = vdwg.mxu0
        %7399 = vst.msk [vmem:[%s519] sm:$0xff] %vm2226, %v7380
        %7400 = vst.msk [vmem:[%s519 + $0x8] sm:$0xff] %vm2226, %v7382
        %7401 = vst.msk [vmem:[%s519 + $0x10] sm:$0xff] %vm2226, %v7385
        %7402 = vst.msk [vmem:[%s519 + $0x18] sm:$0xff] %vm2226, %v7387
        %7403 = vst.msk [vmem:[%s519 + $0x20] sm:$0xff] %vm2226, %v7390
        %7404 = vst.msk [vmem:[%s519 + $0x28] sm:$0xff] %vm2226, %v7392
        %7405 = vst.msk [vmem:[%s519 + $0x30] sm:$0xff] %vm2226, %v7395
        %7406 = vst.msk [vmem:[%s519 + $0x38] sm:$0xff] %vm2226, %v7397
        %s7407 = sand.u32 %s369, 1
        %s7408 = scalar_lea.sflag [#allocation6], %s7407
        %s7409 = sand.u32 %s369, 1
        %s7410 = smul.addr %s7409, 64
        %s7411 = scalar_lea.vmem [#allocation5], %s7410
        // Predicated region
        $region81: #{tpu_custom_call.1} parent=79 // pred_check
          %p7412 = pneg %p379
        $region82: #{tpu_custom_call.1} parent=79 // pred_check_branch
          %7414 = sbr.rel (%p7412) target = $region84
        $region83: #{tpu_custom_call.1} parent=79 // pred_region
          %7416 = vsyncadd %s7408, 0
          %s7417 = smul.addr %s31, 8
          %s7418 = smul.addr %s7417, 8
          %s7419 = scalar_lea.hbm %s15, %s7418
          %s7420 = sshll.u32 %s7411, 4
          %s7421 = int_to_ptr.vmem [resolvable:$true] %s7420
          %s7422 = sshll.u32 %s7419, 4
          %s7423 = int_to_ptr.hbm [resolvable:$true] %s7422
          %7428 = dma.vmem_to_hbm [thread:$0]  %s7421, 1024, %s7423, %s7408, 128, 128, 8
        $region84: #{tpu_custom_call.1} parent=79 // pred_fallthru
          _
      $region80: #{tpu_custom_call.1} parent=5 // pred_fallthru
        _
      %p7429 = scmp.le.s32.totalorder 2, %s26
      // Predicated region
      $region85: #{tpu_custom_call.1} parent=5 // pred_check
        %p7430 = pneg %p7429
      $region86: #{tpu_custom_call.1} parent=5 // pred_check_branch
        %7432 = sbr.rel (%p7430) target = $region88
      $region87: #{tpu_custom_call.1} parent=5 // pred_region
        %s7433 = ssub.s32 %s26, 2
        // Predicated region
        $region89: #{tpu_custom_call.1} parent=87 // pred_check
          %p7434 = pneg %p385
        $region90: #{tpu_custom_call.1} parent=87 // pred_check_branch
          %7436 = sbr.rel (%p7434) target = $region92
        $region91: #{tpu_custom_call.1} parent=87 // pred_region
          %s7437 = sand.u32 %s370, 1
          %s7438 = scalar_lea.sflag [#allocation6], %s7437
          %s7439 = sand.u32 %s370, 1
          %s7440 = smul.addr %s7439, 64
          %s7441 = scalar_lea.vmem [#allocation5], %s7440
          %7443 = dma.done %s7438, 1024
        $region92: #{tpu_custom_call.1} parent=87 // pred_fallthru
          _
      $region88: #{tpu_custom_call.1} parent=5 // pred_fallthru
        _
    $region6: #{tpu_custom_call.1} parent=1 // loop_footer
      %s30 = sadd.s32 1, %s26
    $region7: #{tpu_custom_call.1} parent=1 // loop_footer_branch
      %25 = sbr.rel target = $region3
    $region8: #{tpu_custom_call.1} parent=1 // loop_exit
      _
    %7444 = vsyncpa [#allocation6], 1
    %s7445 = scalar_lea.sflag [#allocation6], 1
    %7446 = vsyncpa %s7445, 1

</llo_original>
